<compile_context>
chip_gen: v6e
topology: v6e:2x2x1
jax: 0.10.0
libtpu: 0.0.40
codegen_flags: <defaults>
</compile_context>

<pallas_src>
import functools

import jax
import jax.numpy as jnp
from jax.experimental import pallas as pl
from jax.experimental.pallas import tpu as pltpu

H = 768              # hidden_size (the PyTorch module hardcodes 768 in mlp_layer)
V = 512              # vocab_size (small synthetic vocab)
LN_EPS = 1e-5        # config.layer_norm_eps (Roberta default)
IGNORE_INDEX = -100  # nn.CrossEntropyLoss default ignore_index
TILE_M_MAX = 512     # rows per grid step (perf review: 512 >> 128)
OUT_LANES = 128      # lane-dense width of the per-core partial-loss output


# ----------------------------- in-kernel math -------------------------------
def _gelu(x):
    # tanh-approx GELU: the transcendental goes to the EUP slot (relieves the
    # VALU, which saturates first on v6e/v7x).  NOTE: torch.nn.functional.gelu
    # defaults to the exact erf form; the tanh form deviates by ~1e-3 max.
    c = 0.7978845608028654  # sqrt(2/pi)
    return 0.5 * x * (1.0 + jnp.tanh(c * (x + 0.044715 * x * x * x)))


# ------------------------------- kernels ------------------------------------
def lmhead_ce_kernel(x_ref, lab_ref, wd_ref, bd_ref, g_ref, b_ref,
                     wdec_ref, bdec_ref, loss_ref):
    """Fused RobertaLMHead + masked-LM cross-entropy (loss-sum accumulator).

    Per row tile: dense (bf16 MXU) -> gelu -> layernorm -> decoder (bf16 MXU)
    -> per-row CE with ignore_index.  The (TM, V) logits never leave VMEM; the
    masked loss sum accumulates into a lane-dense (1, OUT_LANES) resident
    block, one block per parallel grid slice.
    """
    @pl.when(pl.program_id(1) == 0)
    def _():
        loss_ref[...] = jnp.zeros_like(loss_ref)

    x = x_ref[...]                                                  # (TM,H) bf16
    h = jnp.dot(x, wd_ref[...],
                preferred_element_type=jnp.float32) + bd_ref[...]   # (TM,H) f32
    h = _gelu(h)
    # Single-pass LayerNorm statistics: sum and sum-of-squares together.
    s1 = jnp.sum(h, axis=-1, keepdims=True)
    s2 = jnp.sum(h * h, axis=-1, keepdims=True)
    mu = s1 * (1.0 / H)
    var = s2 * (1.0 / H) - mu * mu                                  # biased var
    h = (h - mu) * jax.lax.rsqrt(var + LN_EPS) * g_ref[...] + b_ref[...]
    logits = (jnp.dot(h.astype(jnp.bfloat16), wdec_ref[...],
                      preferred_element_type=jnp.float32)
              + bdec_ref[...])                                      # (TM,V) f32

    labels = lab_ref[...]                                           # (TM,1) i32
    m = jnp.max(logits, axis=-1, keepdims=True)
    lse = m + jnp.log(jnp.sum(jnp.exp(logits - m), axis=-1, keepdims=True))
    col = jax.lax.broadcasted_iota(jnp.int32, logits.shape, 1)
    tgt = jnp.sum(jnp.where(col == labels, logits, 0.0), axis=-1,
                  keepdims=True)
    valid = labels != IGNORE_INDEX
    per_row = jnp.where(valid, lse - tgt, 0.0)                      # (TM,1)
    # Scalar broadcast over the (1, OUT_LANES) accumulator block.
    loss_ref[...] += jnp.sum(per_row)


def mlp_ntxent_kernel(cls_ref, w1_ref, b1_ref, w2_ref, b2_ref, loss_ref, *,
                      temperature, n_rows, half):
    """Fused mlp_layer (Linear-ReLU-Linear) + NT-Xent loss.

    Input rows are [cls1; cls2] (concatenated, padded to a 128-row multiple).
    Pairing row i with row (i +/- half) on this layout is equivalent to the
    PyTorch interleave (stack(dim=1).view(-1,768)) with its xor-1 target.
    """
    c = cls_ref[...]                                                # (Mp,H) bf16
    h = jnp.dot(c, w1_ref[...],
                preferred_element_type=jnp.float32) + b1_ref[...]
    h = jnp.maximum(h, 0.0)
    z = jnp.dot(h.astype(jnp.bfloat16), w2_ref[...],
                preferred_element_type=jnp.float32) + b2_ref[...]   # (Mp,H) f32

    sq = jnp.sum(z * z, axis=-1, keepdims=True)
    zn = z * jax.lax.rsqrt(jnp.maximum(sq, 1e-24))                  # cos-sim eps
    znb = zn.astype(jnp.bfloat16)                                   # bf16 MXU
    sim = jax.lax.dot_general(znb, znb, (((1,), (1,)), ((), ())),
                              preferred_element_type=jnp.float32)   # (Mp,Mp) f32
    mp = sim.shape[0]
    logits = sim * jnp.float32(1.0 / temperature)
    row = jax.lax.broadcasted_iota(jnp.int32, (mp, mp), 0)
    col = jax.lax.broadcasted_iota(jnp.int32, (mp, mp), 1)
    # Mask diagonal and pad rows/cols with a large negative finite value
    # (avoids -inf-driven NaNs while contributing exp(-huge)=0 to the LSE).
    invalid = (row == col) | (row >= n_rows) | (col >= n_rows)
    logits = jnp.where(invalid, jnp.float32(-1e30), logits)

    mx = jnp.max(logits, axis=-1, keepdims=True)
    lse = mx + jnp.log(jnp.sum(jnp.exp(logits - mx), axis=-1, keepdims=True))
    target = jnp.where(row < half, row + half, row - half)
    tgt = jnp.sum(jnp.where(col == target, logits, 0.0), axis=-1,
                  keepdims=True)
    rid = jax.lax.broadcasted_iota(jnp.int32, (mp, 1), 0)
    per_row = jnp.where(rid < n_rows, lse - tgt, 0.0)               # (Mp,1)
    loss_ref[...] = jnp.sum(per_row, keepdims=True) / jnp.float32(n_rows)


# ------------------------------- wrappers ------------------------------------
def _mlm_stream_loss_sum(feats, labs, p):
    """One encoder stream: fused LM-head + CE, row-tiled, returns loss sum."""
    feats = feats.astype(jnp.bfloat16)        # no-op if already bf16
    labs = labs.astype(jnp.int32)
    n = feats.shape[0]

    n16 = pl.cdiv(n, 16) * 16                 # bf16 sublane-friendly rounding
    tile = min(TILE_M_MAX, n16)
    n_pad = pl.cdiv(n16, tile) * tile
    if n_pad != n:
        feats = jnp.pad(feats, ((0, n_pad - n), (0, 0)))
        labs = jnp.pad(labs, (0, n_pad - n), constant_values=IGNORE_INDEX)
    labs = labs.reshape(n_pad, 1)

    tiles = n_pad // tile
    p_cores = 2 if (tiles >= 2 and tiles % 2 == 0) else 1   # v7x megacore split
    tiles_per_core = tiles // p_cores

    def const_spec(shape):
        # Resident weight: constant index_map; single buffer (no wasted copy).
        return pl.BlockSpec(shape, lambda pc, t: (0, 0),
                            pipeline_mode=pl.Buffered(1))

    flops = 2 * n_pad * H * (H + V)
    transc = n_pad * (H + V)                  # tanh (gelu) + exp (softmax)
    bytes_acc = (n_pad * H * 2 + n_pad * 4 + H * H * 2 + H * V * 2
                 + 3 * H * 4 + V * 4 + OUT_LANES * p_cores * 4)

    partial = pl.pallas_call(
        lmhead_ce_kernel,
        out_shape=jax.ShapeDtypeStruct((1, OUT_LANES * p_cores), jnp.float32),
        grid_spec=pltpu.PrefetchScalarGridSpec(
            num_scalar_prefetch=0,
            grid=(p_cores, tiles_per_core),
            in_specs=[
                pl.BlockSpec((tile, H),
                             lambda pc, t: (pc * tiles_per_core + t, 0)),
                pl.BlockSpec((tile, 1),
                             lambda pc, t: (pc * tiles_per_core + t, 0)),
                const_spec((H, H)),            # wd (resident)
                const_spec((1, H)),            # bd
                const_spec((1, H)),            # gamma
                const_spec((1, H)),            # beta
                const_spec((H, V)),            # wdec (resident)
                const_spec((1, V)),            # bdec
            ],
            out_specs=pl.BlockSpec((1, OUT_LANES), lambda pc, t: (0, pc))),
        compiler_params=pltpu.CompilerParams(
            dimension_semantics=("parallel", "arbitrary"),
            vmem_limit_bytes=32 * 1024 * 1024),
        cost_estimate=pl.CostEstimate(flops=int(flops),
                                      transcendentals=int(transc),
                                      bytes_accessed=int(bytes_acc)),
    )(feats, labs, p["wd"], p["bd"], p["g"], p["b"], p["wdec"], p["bdec"])

    # Each parallel slice broadcast its partial sum across its 128 lanes.
    return jnp.sum(partial.reshape(p_cores, OUT_LANES)[:, 0])


def mlm_loss(h1, h2, labels, p):
    """Masked-LM branch: two fused, row-tiled pallas_calls (one per stream)."""
    labs = labels.reshape(-1).astype(jnp.int32)
    s1 = _mlm_stream_loss_sum(h1.reshape(-1, H), labs, p)
    s2 = _mlm_stream_loss_sum(h2.reshape(-1, H), labs, p)
    cnt = jnp.sum((labs != IGNORE_INDEX).astype(jnp.float32))
    # (CE(stream1) + CE(stream2)) / 2 == (sum1 + sum2) / (2 * valid) because
    # both streams share the same labels.  Guard the all-ignored case (PyTorch
    # would return NaN there).
    return (s1 + s2) / jnp.maximum(2.0 * cnt, 1.0)


def contrastive_loss(h1, h2, p, temperature):
    """Contrastive branch: MLP head + NT-Xent fused in one pallas_call."""
    b = h1.shape[0]
    n_rows = 2 * b
    cls = jnp.concatenate([h1[:, 0, :], h2[:, 0, :]],
                          axis=0).astype(jnp.bfloat16)              # (2B,H), tiny
    m_pad = max(128, pl.cdiv(n_rows, 128) * 128)                    # lane-dense sim
    if m_pad != n_rows:
        cls = jnp.pad(cls, ((0, m_pad - n_rows), (0, 0)))

    # TODO(synk): for realistic batch sizes (2B >~ 1k) this should be row-tiled
    # with an online LSE instead of a single (m_pad, m_pad) block.
    flops = 4 * m_pad * H * H + 2 * m_pad * m_pad * H
    bytes_acc = cls.size * 2 + 2 * H * H * 2 + 2 * H * 4 + 4

    loss = pl.pallas_call(
        functools.partial(mlp_ntxent_kernel, temperature=temperature,
                          n_rows=n_rows, half=b),
        out_shape=jax.ShapeDtypeStruct((1, 1), jnp.float32),
        grid=(1,),
        in_specs=[
            pl.BlockSpec((m_pad, H), lambda i: (0, 0)),
            pl.BlockSpec((H, H), lambda i: (0, 0)),
            pl.BlockSpec((1, H), lambda i: (0, 0)),
            pl.BlockSpec((H, H), lambda i: (0, 0)),
            pl.BlockSpec((1, H), lambda i: (0, 0)),
        ],
        out_specs=pl.BlockSpec((1, 1), lambda i: (0, 0)),
        compiler_params=pltpu.CompilerParams(
            dimension_semantics=("arbitrary",),
            vmem_limit_bytes=32 * 1024 * 1024),
        cost_estimate=pl.CostEstimate(flops=int(flops),
                                      transcendentals=int(m_pad * m_pad),
                                      bytes_accessed=int(bytes_acc)),
    )(cls, p["w1"], p["b1"], p["w2"], p["b2"])
    return loss[0, 0]


@functools.partial(jax.jit, static_argnames=("temperature",))
def forward(h1, h2, labels, lm_params, mlp_params, temperature):
    mlm = mlm_loss(h1, h2, labels, lm_params)                    # args.do_mlm
    contra = contrastive_loss(h1, h2, mlp_params, temperature)   # do_contrastive
    return contra, mlm


# --------------------------------- main --------------------------------------
if __name__ == "__main__":
    key = jax.random.PRNGKey(0)
    keys = jax.random.split(key, 8)
    B, S = 2, 8

    # TODO(synk): the HuggingFace Roberta encoder (and its dropout) has no
    # clean Pallas equivalent; its two forward passes are emulated by two
    # synthetic hidden-state tensors (bf16, as the kernels now consume).
    h1 = jax.random.normal(keys[0], (B, S, H), jnp.float32)
    h2 = h1 + 0.05 * jax.random.normal(keys[1], (B, S, H), jnp.float32)
    h1 = h1.astype(jnp.bfloat16)
    h2 = h2.astype(jnp.bfloat16)

    labels = jax.random.randint(keys[2], (B, S), 0, V)
    masked = jax.random.bernoulli(keys[3], 0.25, (B, S))
    labels = jnp.where(masked, labels, IGNORE_INDEX).astype(jnp.int32)
    labels = labels.at[0, 0].set(7)   # guarantee at least one non-ignored token

    scale = 0.02
    # Matmul weights stored bf16 ((in, out) layout: kernels compute x @ W + b);
    # biases / LayerNorm params stay f32.
    lm_params = dict(
        wd=(scale * jax.random.normal(keys[4], (H, H), jnp.float32)
            ).astype(jnp.bfloat16),
        bd=jnp.zeros((1, H), jnp.float32),
        g=jnp.ones((1, H), jnp.float32),
        b=jnp.zeros((1, H), jnp.float32),
        wdec=(scale * jax.random.normal(keys[5], (H, V), jnp.float32)
              ).astype(jnp.bfloat16),
        bdec=jnp.zeros((1, V), jnp.float32),
    )
    mlp_params = dict(
        w1=(scale * jax.random.normal(keys[6], (H, H), jnp.float32)
            ).astype(jnp.bfloat16),
        b1=jnp.zeros((1, H), jnp.float32),
        w2=(scale * jax.random.normal(keys[7], (H, H), jnp.float32)
            ).astype(jnp.bfloat16),
        b2=jnp.zeros((1, H), jnp.float32),
    )
    temperature = 0.05

    contra, mlm = forward(h1, h2, labels, lm_params, mlp_params, temperature)
    contra, mlm = jax.block_until_ready((contra, mlm))
    assert bool(jnp.isfinite(contra)) and bool(jnp.isfinite(mlm))
    print("KERNEL_OK")
</pallas_src>

<mosaic_0001>
module attributes {stable_mosaic.version = 11 : i64} {
  func.func @mlp_ntxent_kernel(%arg0: i32, %arg1: memref<128x768xbf16, #tpu.memory_space<vmem>>, %arg2: memref<768x768xbf16, #tpu.memory_space<vmem>>, %arg3: memref<1x768xf32, #tpu.memory_space<vmem>>, %arg4: memref<768x768xbf16, #tpu.memory_space<vmem>>, %arg5: memref<1x768xf32, #tpu.memory_space<vmem>>, %arg6: memref<1x1xf32, #tpu.memory_space<vmem>>) attributes {dimension_semantics = [#tpu.dimension_semantics<arbitrary>], iteration_bounds = array<i64: 1>, scalar_prefetch = 0 : i64, scratch_operands = 0 : i64, tpu.core_type = #tpu.core_type<tc>, window_params = [{pipeline_mode = #tpu.pipeline_mode<synchronous>, transform_indices = @transform_0, window_bounds = array<i64: 128, 768>}, {pipeline_mode = #tpu.pipeline_mode<synchronous>, transform_indices = @transform_1, window_bounds = array<i64: 768, 768>}, {pipeline_mode = #tpu.pipeline_mode<synchronous>, transform_indices = @transform_2, window_bounds = array<i64: 1, 768>}, {pipeline_mode = #tpu.pipeline_mode<synchronous>, transform_indices = @transform_3, window_bounds = array<i64: 768, 768>}, {pipeline_mode = #tpu.pipeline_mode<synchronous>, transform_indices = @transform_4, window_bounds = array<i64: 1, 768>}, {pipeline_mode = #tpu.pipeline_mode<synchronous>, transform_indices = @transform_5, window_bounds = array<i64: 1, 1>}]} {
    %c0 = arith.constant 0 : index
    %c0_0 = arith.constant 0 : index
    %0 = vector.load %arg1[%c0, %c0_0] : memref<128x768xbf16, #tpu.memory_space<vmem>>, vector<128x768xbf16>
    %c0_1 = arith.constant 0 : index
    %c0_2 = arith.constant 0 : index
    %1 = vector.load %arg2[%c0_1, %c0_2] : memref<768x768xbf16, #tpu.memory_space<vmem>>, vector<768x768xbf16>
    %cst = arith.constant dense<0.000000e+00> : vector<128x768xf32>
    %2 = tpu.matmul %0, %1, %cst {dimension_numbers = #tpu.dot_dimension_numbers<[1], [0], [0], [1], [0, 0, 1, 1], [], []>} : vector<128x768xbf16>, vector<768x768xbf16>, vector<128x768xf32> -> vector<128x768xf32>
    %c0_3 = arith.constant 0 : index
    %c0_4 = arith.constant 0 : index
    %3 = vector.load %arg3[%c0_3, %c0_4] : memref<1x768xf32, #tpu.memory_space<vmem>>, vector<1x768xf32>
    %4 = vector.broadcast %3 : vector<1x768xf32> to vector<128x768xf32>
    %5 = arith.addf %2, %4 : vector<128x768xf32>
    %cst_5 = arith.constant 0.000000e+00 : f32
    %6 = vector.broadcast %cst_5 : f32 to vector<128x768xf32>
    %7 = arith.maximumf %5, %6 : vector<128x768xf32>
    %8 = arith.truncf %7 : vector<128x768xf32> to vector<128x768xbf16>
    %c0_6 = arith.constant 0 : index
    %c0_7 = arith.constant 0 : index
    %9 = vector.load %arg4[%c0_6, %c0_7] : memref<768x768xbf16, #tpu.memory_space<vmem>>, vector<768x768xbf16>
    %cst_8 = arith.constant dense<0.000000e+00> : vector<128x768xf32>
    %10 = tpu.matmul %8, %9, %cst_8 {dimension_numbers = #tpu.dot_dimension_numbers<[1], [0], [0], [1], [0, 0, 1, 1], [], []>} : vector<128x768xbf16>, vector<768x768xbf16>, vector<128x768xf32> -> vector<128x768xf32>
    %c0_9 = arith.constant 0 : index
    %c0_10 = arith.constant 0 : index
    %11 = vector.load %arg5[%c0_9, %c0_10] : memref<1x768xf32, #tpu.memory_space<vmem>>, vector<1x768xf32>
    %12 = vector.broadcast %11 : vector<1x768xf32> to vector<128x768xf32>
    %13 = arith.addf %10, %12 : vector<128x768xf32>
    %14 = arith.mulf %13, %13 : vector<128x768xf32>
    %cst_11 = arith.constant dense<0.000000e+00> : vector<128xf32>
    %15 = vector.multi_reduction <add>, %14, %cst_11 [1] : vector<128x768xf32> to vector<128xf32>
    %16 = vector.shape_cast %15 : vector<128xf32> to vector<128x1xf32>
    %cst_12 = arith.constant 1.000000e-24 : f32
    %17 = vector.broadcast %cst_12 : f32 to vector<128x1xf32>
    %18 = arith.maximumf %16, %17 : vector<128x1xf32>
    %19 = math.rsqrt %18 : vector<128x1xf32>
    %20 = vector.broadcast %19 : vector<128x1xf32> to vector<128x768xf32>
    %21 = arith.mulf %13, %20 : vector<128x768xf32>
    %22 = arith.truncf %21 : vector<128x768xf32> to vector<128x768xbf16>
    %cst_13 = arith.constant dense<0.000000e+00> : vector<128x128xf32>
    %23 = tpu.matmul %22, %22, %cst_13 {dimension_numbers = #tpu.dot_dimension_numbers<[1], [1], [0], [0], [0, 0, 1, 0], [], []>} : vector<128x768xbf16>, vector<128x768xbf16>, vector<128x128xf32> -> vector<128x128xf32>
    %cst_14 = arith.constant 2.000000e+01 : f32
    %24 = vector.broadcast %cst_14 : f32 to vector<128x128xf32>
    %25 = arith.mulf %23, %24 : vector<128x128xf32>
    %26 = tpu.iota {dimensions = array<i32: 0>} : vector<128x128xi32>
    %27 = tpu.iota {dimensions = array<i32: 1>} : vector<128x128xi32>
    %28 = arith.cmpi eq, %26, %27 : vector<128x128xi32>
    %c4_i32 = arith.constant 4 : i32
    %29 = vector.broadcast %c4_i32 : i32 to vector<128x128xi32>
    %30 = arith.cmpi sge, %26, %29 : vector<128x128xi32>
    %31 = arith.ori %28, %30 : vector<128x128xi1>
    %c4_i32_15 = arith.constant 4 : i32
    %32 = vector.broadcast %c4_i32_15 : i32 to vector<128x128xi32>
    %33 = arith.cmpi sge, %27, %32 : vector<128x128xi32>
    %34 = arith.ori %31, %33 : vector<128x128xi1>
    %cst_16 = arith.constant -1.000000e+30 : f32
    %35 = vector.broadcast %cst_16 : f32 to vector<128x128xf32>
    %36 = arith.select %34, %35, %25 : vector<128x128xi1>, vector<128x128xf32>
    %cst_17 = arith.constant dense<0xFF800000> : vector<128xf32>
    %37 = vector.multi_reduction <maximumf>, %36, %cst_17 [1] : vector<128x128xf32> to vector<128xf32>
    %38 = vector.shape_cast %37 : vector<128xf32> to vector<128x1xf32>
    %39 = vector.broadcast %38 : vector<128x1xf32> to vector<128x128xf32>
    %40 = arith.subf %36, %39 : vector<128x128xf32>
    %41 = math.exp %40 : vector<128x128xf32>
    %cst_18 = arith.constant dense<0.000000e+00> : vector<128xf32>
    %42 = vector.multi_reduction <add>, %41, %cst_18 [1] : vector<128x128xf32> to vector<128xf32>
    %43 = vector.shape_cast %42 : vector<128xf32> to vector<128x1xf32>
    %44 = math.log %43 : vector<128x1xf32>
    %45 = arith.addf %38, %44 : vector<128x1xf32>
    %c2_i32 = arith.constant 2 : i32
    %46 = vector.broadcast %c2_i32 : i32 to vector<128x128xi32>
    %47 = arith.cmpi slt, %26, %46 : vector<128x128xi32>
    %c2_i32_19 = arith.constant 2 : i32
    %48 = vector.broadcast %c2_i32_19 : i32 to vector<128x128xi32>
    %49 = arith.addi %26, %48 : vector<128x128xi32>
    %c2_i32_20 = arith.constant 2 : i32
    %50 = vector.broadcast %c2_i32_20 : i32 to vector<128x128xi32>
    %51 = arith.subi %26, %50 : vector<128x128xi32>
    %52 = arith.select %47, %49, %51 : vector<128x128xi1>, vector<128x128xi32>
    %53 = arith.cmpi eq, %27, %52 : vector<128x128xi32>
    %cst_21 = arith.constant 0.000000e+00 : f32
    %54 = vector.broadcast %cst_21 : f32 to vector<128x128xf32>
    %55 = arith.select %53, %36, %54 : vector<128x128xi1>, vector<128x128xf32>
    %cst_22 = arith.constant dense<0.000000e+00> : vector<128xf32>
    %56 = vector.multi_reduction <add>, %55, %cst_22 [1] : vector<128x128xf32> to vector<128xf32>
    %57 = vector.shape_cast %56 : vector<128xf32> to vector<128x1xf32>
    %58 = tpu.iota {dimensions = array<i32: 0>} : vector<128x1xi32>
    %c4_i32_23 = arith.constant 4 : i32
    %59 = vector.broadcast %c4_i32_23 : i32 to vector<128x1xi32>
    %60 = arith.cmpi slt, %58, %59 : vector<128x1xi32>
    %61 = arith.subf %45, %57 : vector<128x1xf32>
    %cst_24 = arith.constant 0.000000e+00 : f32
    %62 = vector.broadcast %cst_24 : f32 to vector<128x1xf32>
    %63 = arith.select %60, %61, %62 : vector<128x1xi1>, vector<128x1xf32>
    %64 = vector.shape_cast %63 : vector<128x1xf32> to vector<1x128x1xf32>
    %cst_25 = arith.constant dense<0.000000e+00> : vector<1xf32>
    %65 = vector.multi_reduction <add>, %64, %cst_25 [1, 2] : vector<1x128x1xf32> to vector<1xf32>
    %66 = vector.shape_cast %65 : vector<1xf32> to vector<1x1x1xf32>
    %67 = vector.extract %66[0, 0, 0] : f32 from vector<1x1x1xf32>
    %68 = vector.broadcast %67 : f32 to vector<1x1xf32>
    %cst_26 = arith.constant 4.000000e+00 : f32
    %69 = vector.broadcast %cst_26 : f32 to vector<1x1xf32>
    %70 = arith.divf %68, %69 : vector<1x1xf32>
    %c0_27 = arith.constant 0 : index
    %c0_28 = arith.constant 0 : index
    %71 = vector.load %arg6[%c0_27, %c0_28] : memref<1x1xf32, #tpu.memory_space<vmem>>, vector<1x1xf32>
    tpu.vector_store %arg6[%c0_27, %c0_28], %70 {strides = array<i32>} : memref<1x1xf32, #tpu.memory_space<vmem>>, vector<1x1xf32>,
    return
  }
  func.func @transform_0(%arg0: i32) -> (i32, i32) {
    %c0_i32 = arith.constant 0 : i32
    %c0_i32_0 = arith.constant 0 : i32
    %c0_i32_1 = arith.constant 0 : i32
    return %c0_i32, %c0_i32_0 : i32, i32
  }
  func.func @transform_1(%arg0: i32) -> (i32, i32) {
    %c0_i32 = arith.constant 0 : i32
    %c0_i32_0 = arith.constant 0 : i32
    %c0_i32_1 = arith.constant 0 : i32
    return %c0_i32, %c0_i32_0 : i32, i32
  }
  func.func @transform_2(%arg0: i32) -> (i32, i32) {
    %c0_i32 = arith.constant 0 : i32
    %c0_i32_0 = arith.constant 0 : i32
    %c0_i32_1 = arith.constant 0 : i32
    return %c0_i32, %c0_i32_0 : i32, i32
  }
  func.func @transform_3(%arg0: i32) -> (i32, i32) {
    %c0_i32 = arith.constant 0 : i32
    %c0_i32_0 = arith.constant 0 : i32
    %c0_i32_1 = arith.constant 0 : i32
    return %c0_i32, %c0_i32_0 : i32, i32
  }
  func.func @transform_4(%arg0: i32) -> (i32, i32) {
    %c0_i32 = arith.constant 0 : i32
    %c0_i32_0 = arith.constant 0 : i32
    %c0_i32_1 = arith.constant 0 : i32
    return %c0_i32, %c0_i32_0 : i32, i32
  }
  func.func @transform_5(%arg0: i32) -> (i32, i32) {
    %c0_i32 = arith.constant 0 : i32
    %c0_i32_0 = arith.constant 0 : i32
    %c0_i32_1 = arith.constant 0 : i32
    return %c0_i32, %c0_i32_0 : i32, i32
  }
}

module attributes {stable_mosaic.version = 11 : i64} {
  func.func @lmhead_ce_kernel(%arg0: i32, %arg1: i32, %arg2: memref<16x768xbf16, #tpu.memory_space<vmem>>, %arg3: memref<16x1xi32, #tpu.memory_space<vmem>>, %arg4: memref<768x768xbf16, #tpu.memory_space<vmem>>, %arg5: memref<1x768xf32, #tpu.memory_space<vmem>>, %arg6: memref<1x768xf32, #tpu.memory_space<vmem>>, %arg7: memref<1x768xf32, #tpu.memory_space<vmem>>, %arg8: memref<768x512xbf16, #tpu.memory_space<vmem>>, %arg9: memref<1x512xf32, #tpu.memory_space<vmem>>, %arg10: memref<1x128xf32, #tpu.memory_space<vmem>>) attributes {dimension_semantics = [#tpu.dimension_semantics<parallel>, #tpu.dimension_semantics<arbitrary>], iteration_bounds = array<i64: 1, 1>, scalar_prefetch = 0 : i64, scratch_operands = 0 : i64, tpu.core_type = #tpu.core_type<tc>, window_params = [{transform_indices = @transform_0, window_bounds = array<i64: 16, 768>}, {transform_indices = @transform_1, window_bounds = array<i64: 16, 1>}, {pipeline_mode = #tpu.pipeline_mode<synchronous>, transform_indices = @transform_2, window_bounds = array<i64: 768, 768>}, {pipeline_mode = #tpu.pipeline_mode<synchronous>, transform_indices = @transform_3, window_bounds = array<i64: 1, 768>}, {pipeline_mode = #tpu.pipeline_mode<synchronous>, transform_indices = @transform_4, window_bounds = array<i64: 1, 768>}, {pipeline_mode = #tpu.pipeline_mode<synchronous>, transform_indices = @transform_5, window_bounds = array<i64: 1, 768>}, {pipeline_mode = #tpu.pipeline_mode<synchronous>, transform_indices = @transform_6, window_bounds = array<i64: 768, 512>}, {pipeline_mode = #tpu.pipeline_mode<synchronous>, transform_indices = @transform_7, window_bounds = array<i64: 1, 512>}, {transform_indices = @transform_8, window_bounds = array<i64: 1, 128>}]} {
    %c0_i32 = arith.constant 0 : i32
    %0 = arith.cmpi eq, %arg1, %c0_i32 : i32
    %1 = arith.extui %0 : i1 to i32
    %c0_i32_0 = arith.constant 0 : i32
    %2 = arith.cmpi ne, %1, %c0_i32_0 : i32
    scf.if %2 {
      %cst_36 = arith.constant 0.000000e+00 : f32
      %82 = vector.broadcast %cst_36 : f32 to vector<1x128xf32>
      %c0_37 = arith.constant 0 : index
      %c0_38 = arith.constant 0 : index
      %83 = vector.load %arg10[%c0_37, %c0_38] : memref<1x128xf32, #tpu.memory_space<vmem>>, vector<1x128xf32>
      tpu.vector_store %arg10[%c0_37, %c0_38], %82 {strides = array<i32>} : memref<1x128xf32, #tpu.memory_space<vmem>>, vector<1x128xf32>,
    } else {
    }
    %c0 = arith.constant 0 : index
    %c0_1 = arith.constant 0 : index
    %3 = vector.load %arg2[%c0, %c0_1] : memref<16x768xbf16, #tpu.memory_space<vmem>>, vector<16x768xbf16>
    %c0_2 = arith.constant 0 : index
    %c0_3 = arith.constant 0 : index
    %4 = vector.load %arg4[%c0_2, %c0_3] : memref<768x768xbf16, #tpu.memory_space<vmem>>, vector<768x768xbf16>
    %cst = arith.constant dense<0.000000e+00> : vector<16x768xf32>
    %5 = tpu.matmul %3, %4, %cst {dimension_numbers = #tpu.dot_dimension_numbers<[1], [0], [0], [1], [0, 0, 1, 1], [], []>} : vector<16x768xbf16>, vector<768x768xbf16>, vector<16x768xf32> -> vector<16x768xf32>
    %c0_4 = arith.constant 0 : index
    %c0_5 = arith.constant 0 : index
    %6 = vector.load %arg5[%c0_4, %c0_5] : memref<1x768xf32, #tpu.memory_space<vmem>>, vector<1x768xf32>
    %7 = vector.broadcast %6 : vector<1x768xf32> to vector<16x768xf32>
    %8 = arith.addf %5, %7 : vector<16x768xf32>
    %cst_6 = arith.constant 5.000000e-01 : f32
    %9 = vector.broadcast %cst_6 : f32 to vector<16x768xf32>
    %10 = arith.mulf %9, %8 : vector<16x768xf32>
    %cst_7 = arith.constant 4.471500e-02 : f32
    %11 = vector.broadcast %cst_7 : f32 to vector<16x768xf32>
    %12 = arith.mulf %11, %8 : vector<16x768xf32>
    %13 = arith.mulf %12, %8 : vector<16x768xf32>
    %14 = arith.mulf %13, %8 : vector<16x768xf32>
    %15 = arith.addf %8, %14 : vector<16x768xf32>
    %cst_8 = arith.constant 0.797884583 : f32
    %16 = vector.broadcast %cst_8 : f32 to vector<16x768xf32>
    %17 = arith.mulf %16, %15 : vector<16x768xf32>
    %18 = math.tanh %17 : vector<16x768xf32>
    %cst_9 = arith.constant 1.000000e+00 : f32
    %19 = vector.broadcast %cst_9 : f32 to vector<16x768xf32>
    %20 = arith.addf %19, %18 : vector<16x768xf32>
    %21 = arith.mulf %10, %20 : vector<16x768xf32>
    %cst_10 = arith.constant dense<0.000000e+00> : vector<16xf32>
    %22 = vector.multi_reduction <add>, %21, %cst_10 [1] : vector<16x768xf32> to vector<16xf32>
    %23 = vector.shape_cast %22 : vector<16xf32> to vector<16x1xf32>
    %24 = arith.mulf %21, %21 : vector<16x768xf32>
    %cst_11 = arith.constant dense<0.000000e+00> : vector<16xf32>
    %25 = vector.multi_reduction <add>, %24, %cst_11 [1] : vector<16x768xf32> to vector<16xf32>
    %26 = vector.shape_cast %25 : vector<16xf32> to vector<16x1xf32>
    %cst_12 = arith.constant 0.00130208337 : f32
    %27 = vector.broadcast %cst_12 : f32 to vector<16x1xf32>
    %28 = arith.mulf %23, %27 : vector<16x1xf32>
    %cst_13 = arith.constant 0.00130208337 : f32
    %29 = vector.broadcast %cst_13 : f32 to vector<16x1xf32>
    %30 = arith.mulf %26, %29 : vector<16x1xf32>
    %31 = arith.mulf %28, %28 : vector<16x1xf32>
    %32 = arith.subf %30, %31 : vector<16x1xf32>
    %33 = vector.broadcast %28 : vector<16x1xf32> to vector<16x768xf32>
    %34 = arith.subf %21, %33 : vector<16x768xf32>
    %cst_14 = arith.constant 9.99999974E-6 : f32
    %35 = vector.broadcast %cst_14 : f32 to vector<16x1xf32>
    %36 = arith.addf %32, %35 : vector<16x1xf32>
    %37 = math.rsqrt %36 : vector<16x1xf32>
    %38 = vector.broadcast %37 : vector<16x1xf32> to vector<16x768xf32>
    %39 = arith.mulf %34, %38 : vector<16x768xf32>
    %c0_15 = arith.constant 0 : index
    %c0_16 = arith.constant 0 : index
    %40 = vector.load %arg6[%c0_15, %c0_16] : memref<1x768xf32, #tpu.memory_space<vmem>>, vector<1x768xf32>
    %41 = vector.broadcast %40 : vector<1x768xf32> to vector<16x768xf32>
    %42 = arith.mulf %39, %41 : vector<16x768xf32>
    %c0_17 = arith.constant 0 : index
    %c0_18 = arith.constant 0 : index
    %43 = vector.load %arg7[%c0_17, %c0_18] : memref<1x768xf32, #tpu.memory_space<vmem>>, vector<1x768xf32>
    %44 = vector.broadcast %43 : vector<1x768xf32> to vector<16x768xf32>
    %45 = arith.addf %42, %44 : vector<16x768xf32>
    %46 = arith.truncf %45 : vector<16x768xf32> to vector<16x768xbf16>
    %c0_19 = arith.constant 0 : index
    %c0_20 = arith.constant 0 : index
    %47 = vector.load %arg8[%c0_19, %c0_20] : memref<768x512xbf16, #tpu.memory_space<vmem>>, vector<768x512xbf16>
    %cst_21 = arith.constant dense<0.000000e+00> : vector<16x512xf32>
    %48 = tpu.matmul %46, %47, %cst_21 {dimension_numbers = #tpu.dot_dimension_numbers<[1], [0], [0], [1], [0, 0, 1, 1], [], []>} : vector<16x768xbf16>, vector<768x512xbf16>, vector<16x512xf32> -> vector<16x512xf32>
    %c0_22 = arith.constant 0 : index
    %c0_23 = arith.constant 0 : index
    %49 = vector.load %arg9[%c0_22, %c0_23] : memref<1x512xf32, #tpu.memory_space<vmem>>, vector<1x512xf32>
    %50 = vector.broadcast %49 : vector<1x512xf32> to vector<16x512xf32>
    %51 = arith.addf %48, %50 : vector<16x512xf32>
    %c0_24 = arith.constant 0 : index
    %c0_25 = arith.constant 0 : index
    %52 = vector.load %arg3[%c0_24, %c0_25] : memref<16x1xi32, #tpu.memory_space<vmem>>, vector<16x1xi32>
    %cst_26 = arith.constant dense<0xFF800000> : vector<16xf32>
    %53 = vector.multi_reduction <maximumf>, %51, %cst_26 [1] : vector<16x512xf32> to vector<16xf32>
    %54 = vector.shape_cast %53 : vector<16xf32> to vector<16x1xf32>
    %55 = vector.broadcast %54 : vector<16x1xf32> to vector<16x512xf32>
    %56 = arith.subf %51, %55 : vector<16x512xf32>
    %57 = math.exp %56 : vector<16x512xf32>
    %cst_27 = arith.constant dense<0.000000e+00> : vector<16xf32>
    %58 = vector.multi_reduction <add>, %57, %cst_27 [1] : vector<16x512xf32> to vector<16xf32>
    %59 = vector.shape_cast %58 : vector<16xf32> to vector<16x1xf32>
    %60 = math.log %59 : vector<16x1xf32>
    %61 = arith.addf %54, %60 : vector<16x1xf32>
    %62 = tpu.iota {dimensions = array<i32: 1>} : vector<16x512xi32>
    %63 = vector.broadcast %52 : vector<16x1xi32> to vector<16x512xi32>
    %64 = arith.cmpi eq, %62, %63 : vector<16x512xi32>
    %cst_28 = arith.constant 0.000000e+00 : f32
    %65 = vector.broadcast %cst_28 : f32 to vector<16x512xf32>
    %66 = arith.select %64, %51, %65 : vector<16x512xi1>, vector<16x512xf32>
    %cst_29 = arith.constant dense<0.000000e+00> : vector<16xf32>
    %67 = vector.multi_reduction <add>, %66, %cst_29 [1] : vector<16x512xf32> to vector<16xf32>
    %68 = vector.shape_cast %67 : vector<16xf32> to vector<16x1xf32>
    %c-100_i32 = arith.constant -100 : i32
    %69 = vector.broadcast %c-100_i32 : i32 to vector<16x1xi32>
    %70 = arith.cmpi ne, %52, %69 : vector<16x1xi32>
    %71 = arith.subf %61, %68 : vector<16x1xf32>
    %cst_30 = arith.constant 0.000000e+00 : f32
    %72 = vector.broadcast %cst_30 : f32 to vector<16x1xf32>
    %73 = arith.select %70, %71, %72 : vector<16x1xi1>, vector<16x1xf32>
    %c0_31 = arith.constant 0 : index
    %c0_32 = arith.constant 0 : index
    %74 = vector.load %arg10[%c0_31, %c0_32] : memref<1x128xf32, #tpu.memory_space<vmem>>, vector<1x128xf32>
    %75 = vector.shape_cast %73 : vector<16x1xf32> to vector<1x16x1xf32>
    %cst_33 = arith.constant dense<0.000000e+00> : vector<1xf32>
    %76 = vector.multi_reduction <add>, %75, %cst_33 [1, 2] : vector<1x16x1xf32> to vector<1xf32>
    %77 = vector.shape_cast %76 : vector<1xf32> to vector<1x1x1xf32>
    %78 = vector.extract %77[0, 0, 0] : f32 from vector<1x1x1xf32>
    %79 = vector.broadcast %78 : f32 to vector<1x128xf32>
    %80 = arith.addf %74, %79 : vector<1x128xf32>
    %c0_34 = arith.constant 0 : index
    %c0_35 = arith.constant 0 : index
    %81 = vector.load %arg10[%c0_34, %c0_35] : memref<1x128xf32, #tpu.memory_space<vmem>>, vector<1x128xf32>
    tpu.vector_store %arg10[%c0_34, %c0_35], %80 {strides = array<i32>} : memref<1x128xf32, #tpu.memory_space<vmem>>, vector<1x128xf32>,
    return
  }
  func.func @transform_0(%arg0: i32, %arg1: i32) -> (i32, i32) {
    %c1_i32 = arith.constant 1 : i32
    %0 = arith.muli %arg0, %c1_i32 : i32
    %1 = arith.addi %0, %arg1 : i32
    %c0_i32 = arith.constant 0 : i32
    %c0_i32_0 = arith.constant 0 : i32
    return %1, %c0_i32 : i32, i32
  }
  func.func @transform_1(%arg0: i32, %arg1: i32) -> (i32, i32) {
    %c1_i32 = arith.constant 1 : i32
    %0 = arith.muli %arg0, %c1_i32 : i32
    %1 = arith.addi %0, %arg1 : i32
    %c0_i32 = arith.constant 0 : i32
    %c0_i32_0 = arith.constant 0 : i32
    return %1, %c0_i32 : i32, i32
  }
  func.func @transform_2(%arg0: i32, %arg1: i32) -> (i32, i32) {
    %c0_i32 = arith.constant 0 : i32
    %c0_i32_0 = arith.constant 0 : i32
    %c0_i32_1 = arith.constant 0 : i32
    return %c0_i32, %c0_i32_0 : i32, i32
  }
  func.func @transform_3(%arg0: i32, %arg1: i32) -> (i32, i32) {
    %c0_i32 = arith.constant 0 : i32
    %c0_i32_0 = arith.constant 0 : i32
    %c0_i32_1 = arith.constant 0 : i32
    return %c0_i32, %c0_i32_0 : i32, i32
  }
  func.func @transform_4(%arg0: i32, %arg1: i32) -> (i32, i32) {
    %c0_i32 = arith.constant 0 : i32
    %c0_i32_0 = arith.constant 0 : i32
    %c0_i32_1 = arith.constant 0 : i32
    return %c0_i32, %c0_i32_0 : i32, i32
  }
  func.func @transform_5(%arg0: i32, %arg1: i32) -> (i32, i32) {
    %c0_i32 = arith.constant 0 : i32
    %c0_i32_0 = arith.constant 0 : i32
    %c0_i32_1 = arith.constant 0 : i32
    return %c0_i32, %c0_i32_0 : i32, i32
  }
  func.func @transform_6(%arg0: i32, %arg1: i32) -> (i32, i32) {
    %c0_i32 = arith.constant 0 : i32
    %c0_i32_0 = arith.constant 0 : i32
    %c0_i32_1 = arith.constant 0 : i32
    return %c0_i32, %c0_i32_0 : i32, i32
  }
  func.func @transform_7(%arg0: i32, %arg1: i32) -> (i32, i32) {
    %c0_i32 = arith.constant 0 : i32
    %c0_i32_0 = arith.constant 0 : i32
    %c0_i32_1 = arith.constant 0 : i32
    return %c0_i32, %c0_i32_0 : i32, i32
  }
  func.func @transform_8(%arg0: i32, %arg1: i32) -> (i32, i32) {
    %c0_i32 = arith.constant 0 : i32
    %c0_i32_0 = arith.constant 0 : i32
    return %c0_i32, %arg0 : i32, i32
  }
}

</mosaic_0001>

<llo_original>
// kernel: forward.3
$region0: #{forward.3}
  #allocation0 [shape = 'u32[]', space=smem, size = 0x4, offset = 0x4, fixed_abs, tag = 'smem constant byte address 0x4 - core index']
  #allocation1 [shape = 'u32[144,128]{1,0:T(1,128)}', space=vmem, size = 0x12000, scoped, tag = 'internal scratch']
  %s0 = inlined_call_operand.vmem [shape: bf16[16,768], index: 0, kind: input, shape index: {}]
  %s1 = inlined_call_operand.vmem [shape: s32[16,1], index: 1, kind: input, shape index: {}]
  %s2 = inlined_call_operand.vmem [shape: bf16[768,768], index: 2, kind: input, shape index: {}]
  %s3 = inlined_call_operand.vmem [shape: f32[1,768], index: 3, kind: input, shape index: {}]
  %s4 = inlined_call_operand.vmem [shape: f32[1,768], index: 4, kind: input, shape index: {}]
  %s5 = inlined_call_operand.vmem [shape: f32[1,768], index: 5, kind: input, shape index: {}]
  %s6 = inlined_call_operand.vmem [shape: bf16[768,512], index: 6, kind: input, shape index: {}]
  %s7 = inlined_call_operand.vmem [shape: f32[1,512], index: 7, kind: input, shape index: {}]
  %s8 = inlined_call_operand.vmem [shape: f32[1,128], index: 8, kind: output, shape index: {}]
  %s9 = sld [smem:[#allocation0]]
  $region46: #{forward.3} parent=0
    _
  %s11 = ssub.s32 1, %s9
  %s12 = scalar_select 0, %s11, %s9
  // Predicated region
  $region2: #{forward.3} parent=0 // pred_check
    _
  $region3: #{forward.3} parent=0 // pred_check_branch
    %14 = sbr.rel (0) target = $region5
  $region4: #{forward.3} parent=0 // pred_region
    %s15 = sadd.s32 0, 0
    %s16 = smul.u32 2, %s15
    %p17 = scmp.lt.s32.totalorder %s16, 1
    %s18 = scalar_select %p17, %s16, 1
    %s19 = smul.addr %s18, 6
    %s20 = smul.addr %s19, 4
    %s21 = scalar_lea.vmem %s0, %s20
    %s22 = sadd.s32 0, 0
    %s23 = smul.u32 2, %s22
  $region5: #{forward.3} parent=0 // pred_fallthru
    _
  // Predicated region
  $region6: #{forward.3} parent=0 // pred_check
    _
  $region7: #{forward.3} parent=0 // pred_check_branch
    %25 = sbr.rel (0) target = $region9
  $region8: #{forward.3} parent=0 // pred_region
    %s26 = sadd.s32 0, 0
    %s27 = smul.u32 2, %s26
    %p28 = scmp.lt.s32.totalorder %s27, 1
    %s29 = scalar_select %p28, %s27, 1
    %s30 = smul.addr %s29, 8
    %s31 = scalar_lea.vmem %s1, %s30
    %s32 = sadd.s32 0, 0
    %s33 = smul.u32 2, %s32
  $region9: #{forward.3} parent=0 // pred_fallthru
    _
  // Predicated region
  $region10: #{forward.3} parent=0 // pred_check
    _
  $region11: #{forward.3} parent=0 // pred_check_branch
    %35 = sbr.rel (0) target = $region13
  $region12: #{forward.3} parent=0 // pred_region
    _
  $region13: #{forward.3} parent=0 // pred_fallthru
    _
  // Predicated region
  $region14: #{forward.3} parent=0 // pred_check
    _
  $region15: #{forward.3} parent=0 // pred_check_branch
    %37 = sbr.rel (0) target = $region17
  $region16: #{forward.3} parent=0 // pred_region
    _
  $region17: #{forward.3} parent=0 // pred_fallthru
    _
  // Predicated region
  $region18: #{forward.3} parent=0 // pred_check
    _
  $region19: #{forward.3} parent=0 // pred_check_branch
    %39 = sbr.rel (0) target = $region21
  $region20: #{forward.3} parent=0 // pred_region
    _
  $region21: #{forward.3} parent=0 // pred_fallthru
    _
  // Predicated region
  $region22: #{forward.3} parent=0 // pred_check
    _
  $region23: #{forward.3} parent=0 // pred_check_branch
    %41 = sbr.rel (0) target = $region25
  $region24: #{forward.3} parent=0 // pred_region
    _
  $region25: #{forward.3} parent=0 // pred_fallthru
    _
  // Predicated region
  $region26: #{forward.3} parent=0 // pred_check
    _
  $region27: #{forward.3} parent=0 // pred_check_branch
    %43 = sbr.rel (0) target = $region29
  $region28: #{forward.3} parent=0 // pred_region
    _
  $region29: #{forward.3} parent=0 // pred_fallthru
    _
  // Predicated region
  $region30: #{forward.3} parent=0 // pred_check
    _
  $region31: #{forward.3} parent=0 // pred_check_branch
    %45 = sbr.rel (0) target = $region33
  $region32: #{forward.3} parent=0 // pred_region
    _
  $region33: #{forward.3} parent=0 // pred_fallthru
    _
  %s46 = sadd.s32 0, 0
  %s47 = smul.u32 2, %s46
  %p48 = scmp.lt.s32.totalorder %s47, 1
  %s49 = scalar_select %p48, %s47, 1
  %s50 = smul.addr %s49, 6
  %s51 = smul.addr %s50, 4
  %s52 = scalar_lea.vmem %s0, %s51
  %s53 = sadd.s32 0, 0
  %s54 = smul.u32 2, %s53
  %p55 = scmp.lt.s32.totalorder %s54, 1
  %s56 = scalar_select %p55, %s54, 1
  %s57 = smul.addr %s56, 8
  %s58 = scalar_lea.vmem %s1, %s57
  %s59 = sadd.s32 0, 0
  %s60 = smul.u32 2, %s59
  %p61 = scmp.lt.s32.totalorder %s60, 1
  %s62 = scalar_select %p61, %s60, 1
  %s63 = smul.addr %s62, 6
  %s64 = smul.addr %s63, 4
  %s65 = scalar_lea.vmem %s0, %s64
  %s66 = sadd.s32 0, 0
  %s67 = smul.u32 2, %s66
  %s68 = sadd.s32 0, 0
  %s69 = smul.u32 2, %s68
  %p70 = scmp.lt.s32.totalorder %s69, 1
  %s71 = scalar_select %p70, %s69, 1
  %s72 = smul.addr %s71, 8
  %s73 = scalar_lea.vmem %s1, %s72
  %s74 = sadd.s32 0, 0
  %s75 = smul.u32 2, %s74
  %p76 = scmp.eq.s32.totalorder 0, 0
  // Predicated region
  $region34: #{forward.3} parent=0 // pred_check
    %p77 = pneg %p76
  $region35: #{forward.3} parent=0 // pred_check_branch
    %79 = sbr.rel (%p77) target = $region37
  $region36: #{forward.3} parent=0 // pred_region
    %80 = vst [vmem:[%s8] sm:$0x1] 0.0
  $region37: #{forward.3} parent=0 // pred_fallthru
    _
  %v81 = vld [vmem:[%s65] sm:$0xff]
  %v82 = vld [vmem:[%s65 + $0x8] sm:$0xff]
  %v83 = vld [vmem:[%s65 + $0x10] sm:$0xff]
  %v84 = vld [vmem:[%s65 + $0x18] sm:$0xff]
  %v85 = vld [vmem:[%s65 + $0x20] sm:$0xff]
  %v86 = vld [vmem:[%s65 + $0x28] sm:$0xff]
  %v87 = vld [vmem:[%s2] sm:$0xff]
  %v88 = vld [vmem:[%s2 + $0x8] sm:$0xff]
  %v89 = vld [vmem:[%s2 + $0x10] sm:$0xff]
  %v90 = vld [vmem:[%s2 + $0x18] sm:$0xff]
  %v91 = vld [vmem:[%s2 + $0x20] sm:$0xff]
  %v92 = vld [vmem:[%s2 + $0x28] sm:$0xff]
  %v93 = vld [vmem:[%s2 + $0x30] sm:$0xff]
  %v94 = vld [vmem:[%s2 + $0x38] sm:$0xff]
  %v95 = vld [vmem:[%s2 + $0x40] sm:$0xff]
  %v96 = vld [vmem:[%s2 + $0x48] sm:$0xff]
  %v97 = vld [vmem:[%s2 + $0x50] sm:$0xff]
  %v98 = vld [vmem:[%s2 + $0x58] sm:$0xff]
  %v99 = vld [vmem:[%s2 + $0x60] sm:$0xff]
  %v100 = vld [vmem:[%s2 + $0x68] sm:$0xff]
  %v101 = vld [vmem:[%s2 + $0x70] sm:$0xff]
  %v102 = vld [vmem:[%s2 + $0x78] sm:$0xff]
  %v103 = vld [vmem:[%s2 + $0x80] sm:$0xff]
  %v104 = vld [vmem:[%s2 + $0x88] sm:$0xff]
  %v105 = vld [vmem:[%s2 + $0x90] sm:$0xff]
  %v106 = vld [vmem:[%s2 + $0x98] sm:$0xff]
  %v107 = vld [vmem:[%s2 + $0xa0] sm:$0xff]
  %v108 = vld [vmem:[%s2 + $0xa8] sm:$0xff]
  %v109 = vld [vmem:[%s2 + $0xb0] sm:$0xff]
  %v110 = vld [vmem:[%s2 + $0xb8] sm:$0xff]
  %v111 = vld [vmem:[%s2 + $0xc0] sm:$0xff]
  %v112 = vld [vmem:[%s2 + $0xc8] sm:$0xff]
  %v113 = vld [vmem:[%s2 + $0xd0] sm:$0xff]
  %v114 = vld [vmem:[%s2 + $0xd8] sm:$0xff]
  %v115 = vld [vmem:[%s2 + $0xe0] sm:$0xff]
  %v116 = vld [vmem:[%s2 + $0xe8] sm:$0xff]
  %v117 = vld [vmem:[%s2 + $0xf0] sm:$0xff]
  %v118 = vld [vmem:[%s2 + $0xf8] sm:$0xff]
  %v119 = vld [vmem:[%s2 + $0x100] sm:$0xff]
  %v120 = vld [vmem:[%s2 + $0x108] sm:$0xff]
  %v121 = vld [vmem:[%s2 + $0x110] sm:$0xff]
  %v122 = vld [vmem:[%s2 + $0x118] sm:$0xff]
  %v123 = vld [vmem:[%s2 + $0x120] sm:$0xff]
  %v124 = vld [vmem:[%s2 + $0x128] sm:$0xff]
  %v125 = vld [vmem:[%s2 + $0x130] sm:$0xff]
  %v126 = vld [vmem:[%s2 + $0x138] sm:$0xff]
  %v127 = vld [vmem:[%s2 + $0x140] sm:$0xff]
  %v128 = vld [vmem:[%s2 + $0x148] sm:$0xff]
  %v129 = vld [vmem:[%s2 + $0x150] sm:$0xff]
  %v130 = vld [vmem:[%s2 + $0x158] sm:$0xff]
  %v131 = vld [vmem:[%s2 + $0x160] sm:$0xff]
  %v132 = vld [vmem:[%s2 + $0x168] sm:$0xff]
  %v133 = vld [vmem:[%s2 + $0x170] sm:$0xff]
  %v134 = vld [vmem:[%s2 + $0x178] sm:$0xff]
  %v135 = vld [vmem:[%s2 + $0x180] sm:$0xff]
  %v136 = vld [vmem:[%s2 + $0x188] sm:$0xff]
  %v137 = vld [vmem:[%s2 + $0x190] sm:$0xff]
  %v138 = vld [vmem:[%s2 + $0x198] sm:$0xff]
  %v139 = vld [vmem:[%s2 + $0x1a0] sm:$0xff]
  %v140 = vld [vmem:[%s2 + $0x1a8] sm:$0xff]
  %v141 = vld [vmem:[%s2 + $0x1b0] sm:$0xff]
  %v142 = vld [vmem:[%s2 + $0x1b8] sm:$0xff]
  %v143 = vld [vmem:[%s2 + $0x1c0] sm:$0xff]
  %v144 = vld [vmem:[%s2 + $0x1c8] sm:$0xff]
  %v145 = vld [vmem:[%s2 + $0x1d0] sm:$0xff]
  %v146 = vld [vmem:[%s2 + $0x1d8] sm:$0xff]
  %v147 = vld [vmem:[%s2 + $0x1e0] sm:$0xff]
  %v148 = vld [vmem:[%s2 + $0x1e8] sm:$0xff]
  %v149 = vld [vmem:[%s2 + $0x1f0] sm:$0xff]
  %v150 = vld [vmem:[%s2 + $0x1f8] sm:$0xff]
  %v151 = vld [vmem:[%s2 + $0x200] sm:$0xff]
  %v152 = vld [vmem:[%s2 + $0x208] sm:$0xff]
  %v153 = vld [vmem:[%s2 + $0x210] sm:$0xff]
  %v154 = vld [vmem:[%s2 + $0x218] sm:$0xff]
  %v155 = vld [vmem:[%s2 + $0x220] sm:$0xff]
  %v156 = vld [vmem:[%s2 + $0x228] sm:$0xff]
  %v157 = vld [vmem:[%s2 + $0x230] sm:$0xff]
  %v158 = vld [vmem:[%s2 + $0x238] sm:$0xff]
  %v159 = vld [vmem:[%s2 + $0x240] sm:$0xff]
  %v160 = vld [vmem:[%s2 + $0x248] sm:$0xff]
  %v161 = vld [vmem:[%s2 + $0x250] sm:$0xff]
  %v162 = vld [vmem:[%s2 + $0x258] sm:$0xff]
  %v163 = vld [vmem:[%s2 + $0x260] sm:$0xff]
  %v164 = vld [vmem:[%s2 + $0x268] sm:$0xff]
  %v165 = vld [vmem:[%s2 + $0x270] sm:$0xff]
  %v166 = vld [vmem:[%s2 + $0x278] sm:$0xff]
  %v167 = vld [vmem:[%s2 + $0x280] sm:$0xff]
  %v168 = vld [vmem:[%s2 + $0x288] sm:$0xff]
  %v169 = vld [vmem:[%s2 + $0x290] sm:$0xff]
  %v170 = vld [vmem:[%s2 + $0x298] sm:$0xff]
  %v171 = vld [vmem:[%s2 + $0x2a0] sm:$0xff]
  %v172 = vld [vmem:[%s2 + $0x2a8] sm:$0xff]
  %v173 = vld [vmem:[%s2 + $0x2b0] sm:$0xff]
  %v174 = vld [vmem:[%s2 + $0x2b8] sm:$0xff]
  %v175 = vld [vmem:[%s2 + $0x2c0] sm:$0xff]
  %v176 = vld [vmem:[%s2 + $0x2c8] sm:$0xff]
  %v177 = vld [vmem:[%s2 + $0x2d0] sm:$0xff]
  %v178 = vld [vmem:[%s2 + $0x2d8] sm:$0xff]
  %v179 = vld [vmem:[%s2 + $0x2e0] sm:$0xff]
  %v180 = vld [vmem:[%s2 + $0x2e8] sm:$0xff]
  %v181 = vld [vmem:[%s2 + $0x2f0] sm:$0xff]
  %v182 = vld [vmem:[%s2 + $0x2f8] sm:$0xff]
  %v183 = vld [vmem:[%s2 + $0x300] sm:$0xff]
  %v184 = vld [vmem:[%s2 + $0x308] sm:$0xff]
  %v185 = vld [vmem:[%s2 + $0x310] sm:$0xff]
  %v186 = vld [vmem:[%s2 + $0x318] sm:$0xff]
  %v187 = vld [vmem:[%s2 + $0x320] sm:$0xff]
  %v188 = vld [vmem:[%s2 + $0x328] sm:$0xff]
  %v189 = vld [vmem:[%s2 + $0x330] sm:$0xff]
  %v190 = vld [vmem:[%s2 + $0x338] sm:$0xff]
  %v191 = vld [vmem:[%s2 + $0x340] sm:$0xff]
  %v192 = vld [vmem:[%s2 + $0x348] sm:$0xff]
  %v193 = vld [vmem:[%s2 + $0x350] sm:$0xff]
  %v194 = vld [vmem:[%s2 + $0x358] sm:$0xff]
  %v195 = vld [vmem:[%s2 + $0x360] sm:$0xff]
  %v196 = vld [vmem:[%s2 + $0x368] sm:$0xff]
  %v197 = vld [vmem:[%s2 + $0x370] sm:$0xff]
  %v198 = vld [vmem:[%s2 + $0x378] sm:$0xff]
  %v199 = vld [vmem:[%s2 + $0x380] sm:$0xff]
  %v200 = vld [vmem:[%s2 + $0x388] sm:$0xff]
  %v201 = vld [vmem:[%s2 + $0x390] sm:$0xff]
  %v202 = vld [vmem:[%s2 + $0x398] sm:$0xff]
  %v203 = vld [vmem:[%s2 + $0x3a0] sm:$0xff]
  %v204 = vld [vmem:[%s2 + $0x3a8] sm:$0xff]
  %v205 = vld [vmem:[%s2 + $0x3b0] sm:$0xff]
  %v206 = vld [vmem:[%s2 + $0x3b8] sm:$0xff]
  %v207 = vld [vmem:[%s2 + $0x3c0] sm:$0xff]
  %v208 = vld [vmem:[%s2 + $0x3c8] sm:$0xff]
  %v209 = vld [vmem:[%s2 + $0x3d0] sm:$0xff]
  %v210 = vld [vmem:[%s2 + $0x3d8] sm:$0xff]
  %v211 = vld [vmem:[%s2 + $0x3e0] sm:$0xff]
  %v212 = vld [vmem:[%s2 + $0x3e8] sm:$0xff]
  %v213 = vld [vmem:[%s2 + $0x3f0] sm:$0xff]
  %v214 = vld [vmem:[%s2 + $0x3f8] sm:$0xff]
  %v215 = vld [vmem:[%s2 + $0x400] sm:$0xff]
  %v216 = vld [vmem:[%s2 + $0x408] sm:$0xff]
  %v217 = vld [vmem:[%s2 + $0x410] sm:$0xff]
  %v218 = vld [vmem:[%s2 + $0x418] sm:$0xff]
  %v219 = vld [vmem:[%s2 + $0x420] sm:$0xff]
  %v220 = vld [vmem:[%s2 + $0x428] sm:$0xff]
  %v221 = vld [vmem:[%s2 + $0x430] sm:$0xff]
  %v222 = vld [vmem:[%s2 + $0x438] sm:$0xff]
  %v223 = vld [vmem:[%s2 + $0x440] sm:$0xff]
  %v224 = vld [vmem:[%s2 + $0x448] sm:$0xff]
  %v225 = vld [vmem:[%s2 + $0x450] sm:$0xff]
  %v226 = vld [vmem:[%s2 + $0x458] sm:$0xff]
  %v227 = vld [vmem:[%s2 + $0x460] sm:$0xff]
  %v228 = vld [vmem:[%s2 + $0x468] sm:$0xff]
  %v229 = vld [vmem:[%s2 + $0x470] sm:$0xff]
  %v230 = vld [vmem:[%s2 + $0x478] sm:$0xff]
  %v231 = vld [vmem:[%s2 + $0x480] sm:$0xff]
  %v232 = vld [vmem:[%s2 + $0x488] sm:$0xff]
  %v233 = vld [vmem:[%s2 + $0x490] sm:$0xff]
  %v234 = vld [vmem:[%s2 + $0x498] sm:$0xff]
  %v235 = vld [vmem:[%s2 + $0x4a0] sm:$0xff]
  %v236 = vld [vmem:[%s2 + $0x4a8] sm:$0xff]
  %v237 = vld [vmem:[%s2 + $0x4b0] sm:$0xff]
  %v238 = vld [vmem:[%s2 + $0x4b8] sm:$0xff]
  %v239 = vld [vmem:[%s2 + $0x4c0] sm:$0xff]
  %v240 = vld [vmem:[%s2 + $0x4c8] sm:$0xff]
  %v241 = vld [vmem:[%s2 + $0x4d0] sm:$0xff]
  %v242 = vld [vmem:[%s2 + $0x4d8] sm:$0xff]
  %v243 = vld [vmem:[%s2 + $0x4e0] sm:$0xff]
  %v244 = vld [vmem:[%s2 + $0x4e8] sm:$0xff]
  %v245 = vld [vmem:[%s2 + $0x4f0] sm:$0xff]
  %v246 = vld [vmem:[%s2 + $0x4f8] sm:$0xff]
  %v247 = vld [vmem:[%s2 + $0x500] sm:$0xff]
  %v248 = vld [vmem:[%s2 + $0x508] sm:$0xff]
  %v249 = vld [vmem:[%s2 + $0x510] sm:$0xff]
  %v250 = vld [vmem:[%s2 + $0x518] sm:$0xff]
  %v251 = vld [vmem:[%s2 + $0x520] sm:$0xff]
  %v252 = vld [vmem:[%s2 + $0x528] sm:$0xff]
  %v253 = vld [vmem:[%s2 + $0x530] sm:$0xff]
  %v254 = vld [vmem:[%s2 + $0x538] sm:$0xff]
  %v255 = vld [vmem:[%s2 + $0x540] sm:$0xff]
  %v256 = vld [vmem:[%s2 + $0x548] sm:$0xff]
  %v257 = vld [vmem:[%s2 + $0x550] sm:$0xff]
  %v258 = vld [vmem:[%s2 + $0x558] sm:$0xff]
  %v259 = vld [vmem:[%s2 + $0x560] sm:$0xff]
  %v260 = vld [vmem:[%s2 + $0x568] sm:$0xff]
  %v261 = vld [vmem:[%s2 + $0x570] sm:$0xff]
  %v262 = vld [vmem:[%s2 + $0x578] sm:$0xff]
  %v263 = vld [vmem:[%s2 + $0x580] sm:$0xff]
  %v264 = vld [vmem:[%s2 + $0x588] sm:$0xff]
  %v265 = vld [vmem:[%s2 + $0x590] sm:$0xff]
  %v266 = vld [vmem:[%s2 + $0x598] sm:$0xff]
  %v267 = vld [vmem:[%s2 + $0x5a0] sm:$0xff]
  %v268 = vld [vmem:[%s2 + $0x5a8] sm:$0xff]
  %v269 = vld [vmem:[%s2 + $0x5b0] sm:$0xff]
  %v270 = vld [vmem:[%s2 + $0x5b8] sm:$0xff]
  %v271 = vld [vmem:[%s2 + $0x5c0] sm:$0xff]
  %v272 = vld [vmem:[%s2 + $0x5c8] sm:$0xff]
  %v273 = vld [vmem:[%s2 + $0x5d0] sm:$0xff]
  %v274 = vld [vmem:[%s2 + $0x5d8] sm:$0xff]
  %v275 = vld [vmem:[%s2 + $0x5e0] sm:$0xff]
  %v276 = vld [vmem:[%s2 + $0x5e8] sm:$0xff]
  %v277 = vld [vmem:[%s2 + $0x5f0] sm:$0xff]
  %v278 = vld [vmem:[%s2 + $0x5f8] sm:$0xff]
  %v279 = vld [vmem:[%s2 + $0x600] sm:$0xff]
  %v280 = vld [vmem:[%s2 + $0x608] sm:$0xff]
  %v281 = vld [vmem:[%s2 + $0x610] sm:$0xff]
  %v282 = vld [vmem:[%s2 + $0x618] sm:$0xff]
  %v283 = vld [vmem:[%s2 + $0x620] sm:$0xff]
  %v284 = vld [vmem:[%s2 + $0x628] sm:$0xff]
  %v285 = vld [vmem:[%s2 + $0x630] sm:$0xff]
  %v286 = vld [vmem:[%s2 + $0x638] sm:$0xff]
  %v287 = vld [vmem:[%s2 + $0x640] sm:$0xff]
  %v288 = vld [vmem:[%s2 + $0x648] sm:$0xff]
  %v289 = vld [vmem:[%s2 + $0x650] sm:$0xff]
  %v290 = vld [vmem:[%s2 + $0x658] sm:$0xff]
  %v291 = vld [vmem:[%s2 + $0x660] sm:$0xff]
  %v292 = vld [vmem:[%s2 + $0x668] sm:$0xff]
  %v293 = vld [vmem:[%s2 + $0x670] sm:$0xff]
  %v294 = vld [vmem:[%s2 + $0x678] sm:$0xff]
  %v295 = vld [vmem:[%s2 + $0x680] sm:$0xff]
  %v296 = vld [vmem:[%s2 + $0x688] sm:$0xff]
  %v297 = vld [vmem:[%s2 + $0x690] sm:$0xff]
  %v298 = vld [vmem:[%s2 + $0x698] sm:$0xff]
  %v299 = vld [vmem:[%s2 + $0x6a0] sm:$0xff]
  %v300 = vld [vmem:[%s2 + $0x6a8] sm:$0xff]
  %v301 = vld [vmem:[%s2 + $0x6b0] sm:$0xff]
  %v302 = vld [vmem:[%s2 + $0x6b8] sm:$0xff]
  %v303 = vld [vmem:[%s2 + $0x6c0] sm:$0xff]
  %v304 = vld [vmem:[%s2 + $0x6c8] sm:$0xff]
  %v305 = vld [vmem:[%s2 + $0x6d0] sm:$0xff]
  %v306 = vld [vmem:[%s2 + $0x6d8] sm:$0xff]
  %v307 = vld [vmem:[%s2 + $0x6e0] sm:$0xff]
  %v308 = vld [vmem:[%s2 + $0x6e8] sm:$0xff]
  %v309 = vld [vmem:[%s2 + $0x6f0] sm:$0xff]
  %v310 = vld [vmem:[%s2 + $0x6f8] sm:$0xff]
  %v311 = vld [vmem:[%s2 + $0x700] sm:$0xff]
  %v312 = vld [vmem:[%s2 + $0x708] sm:$0xff]
  %v313 = vld [vmem:[%s2 + $0x710] sm:$0xff]
  %v314 = vld [vmem:[%s2 + $0x718] sm:$0xff]
  %v315 = vld [vmem:[%s2 + $0x720] sm:$0xff]
  %v316 = vld [vmem:[%s2 + $0x728] sm:$0xff]
  %v317 = vld [vmem:[%s2 + $0x730] sm:$0xff]
  %v318 = vld [vmem:[%s2 + $0x738] sm:$0xff]
  %v319 = vld [vmem:[%s2 + $0x740] sm:$0xff]
  %v320 = vld [vmem:[%s2 + $0x748] sm:$0xff]
  %v321 = vld [vmem:[%s2 + $0x750] sm:$0xff]
  %v322 = vld [vmem:[%s2 + $0x758] sm:$0xff]
  %v323 = vld [vmem:[%s2 + $0x760] sm:$0xff]
  %v324 = vld [vmem:[%s2 + $0x768] sm:$0xff]
  %v325 = vld [vmem:[%s2 + $0x770] sm:$0xff]
  %v326 = vld [vmem:[%s2 + $0x778] sm:$0xff]
  %v327 = vld [vmem:[%s2 + $0x780] sm:$0xff]
  %v328 = vld [vmem:[%s2 + $0x788] sm:$0xff]
  %v329 = vld [vmem:[%s2 + $0x790] sm:$0xff]
  %v330 = vld [vmem:[%s2 + $0x798] sm:$0xff]
  %v331 = vld [vmem:[%s2 + $0x7a0] sm:$0xff]
  %v332 = vld [vmem:[%s2 + $0x7a8] sm:$0xff]
  %v333 = vld [vmem:[%s2 + $0x7b0] sm:$0xff]
  %v334 = vld [vmem:[%s2 + $0x7b8] sm:$0xff]
  %v335 = vld [vmem:[%s2 + $0x7c0] sm:$0xff]
  %v336 = vld [vmem:[%s2 + $0x7c8] sm:$0xff]
  %v337 = vld [vmem:[%s2 + $0x7d0] sm:$0xff]
  %v338 = vld [vmem:[%s2 + $0x7d8] sm:$0xff]
  %v339 = vld [vmem:[%s2 + $0x7e0] sm:$0xff]
  %v340 = vld [vmem:[%s2 + $0x7e8] sm:$0xff]
  %v341 = vld [vmem:[%s2 + $0x7f0] sm:$0xff]
  %v342 = vld [vmem:[%s2 + $0x7f8] sm:$0xff]
  %v343 = vld [vmem:[%s2 + $0x800] sm:$0xff]
  %v344 = vld [vmem:[%s2 + $0x808] sm:$0xff]
  %v345 = vld [vmem:[%s2 + $0x810] sm:$0xff]
  %v346 = vld [vmem:[%s2 + $0x818] sm:$0xff]
  %v347 = vld [vmem:[%s2 + $0x820] sm:$0xff]
  %v348 = vld [vmem:[%s2 + $0x828] sm:$0xff]
  %v349 = vld [vmem:[%s2 + $0x830] sm:$0xff]
  %v350 = vld [vmem:[%s2 + $0x838] sm:$0xff]
  %v351 = vld [vmem:[%s2 + $0x840] sm:$0xff]
  %v352 = vld [vmem:[%s2 + $0x848] sm:$0xff]
  %v353 = vld [vmem:[%s2 + $0x850] sm:$0xff]
  %v354 = vld [vmem:[%s2 + $0x858] sm:$0xff]
  %v355 = vld [vmem:[%s2 + $0x860] sm:$0xff]
  %v356 = vld [vmem:[%s2 + $0x868] sm:$0xff]
  %v357 = vld [vmem:[%s2 + $0x870] sm:$0xff]
  %v358 = vld [vmem:[%s2 + $0x878] sm:$0xff]
  %v359 = vld [vmem:[%s2 + $0x880] sm:$0xff]
  %v360 = vld [vmem:[%s2 + $0x888] sm:$0xff]
  %v361 = vld [vmem:[%s2 + $0x890] sm:$0xff]
  %v362 = vld [vmem:[%s2 + $0x898] sm:$0xff]
  %v363 = vld [vmem:[%s2 + $0x8a0] sm:$0xff]
  %v364 = vld [vmem:[%s2 + $0x8a8] sm:$0xff]
  %v365 = vld [vmem:[%s2 + $0x8b0] sm:$0xff]
  %v366 = vld [vmem:[%s2 + $0x8b8] sm:$0xff]
  %v367 = vld [vmem:[%s2 + $0x8c0] sm:$0xff]
  %v368 = vld [vmem:[%s2 + $0x8c8] sm:$0xff]
  %v369 = vld [vmem:[%s2 + $0x8d0] sm:$0xff]
  %v370 = vld [vmem:[%s2 + $0x8d8] sm:$0xff]
  %v371 = vld [vmem:[%s2 + $0x8e0] sm:$0xff]
  %v372 = vld [vmem:[%s2 + $0x8e8] sm:$0xff]
  %v373 = vld [vmem:[%s2 + $0x8f0] sm:$0xff]
  %v374 = vld [vmem:[%s2 + $0x8f8] sm:$0xff]
  %v375 = vld [vmem:[%s3] sm:$0x3f]
  %v377 = vlaneseq
  %v378 = vshrl.u32 %v377, 7
  %v379 = vsub.s32 0, %v378
  %v380 = vrot.slane %v375, %v379
  %v381 = vlaneseq
  %v382 = vshrl.u32 %v381, 7
  %v383 = vsub.s32 1, %v382
  %v384 = vrot.slane %v375, %v383
  %v385 = vlaneseq
  %v386 = vshrl.u32 %v385, 7
  %v387 = vsub.s32 2, %v386
  %v388 = vrot.slane %v375, %v387
  %v389 = vlaneseq
  %v390 = vshrl.u32 %v389, 7
  %v391 = vsub.s32 3, %v390
  %v392 = vrot.slane %v375, %v391
  %v393 = vlaneseq
  %v394 = vshrl.u32 %v393, 7
  %v395 = vsub.s32 4, %v394
  %v396 = vrot.slane %v375, %v395
  %v397 = vlaneseq
  %v398 = vshrl.u32 %v397, 7
  %v399 = vsub.s32 5, %v398
  %v400 = vrot.slane %v375, %v399
  %v413 = vunpack.c.l.b16 %v81
  %v414 = vunpack.c.h.b16 %v81
  %v415 = vunpack.c.l.b16 %v82
  %v416 = vunpack.c.h.b16 %v82
  %v417 = vunpack.c.l.b16 %v83
  %v418 = vunpack.c.h.b16 %v83
  %v419 = vunpack.c.l.b16 %v84
  %v420 = vunpack.c.h.b16 %v84
  %v421 = vunpack.c.l.b16 %v85
  %v422 = vunpack.c.h.b16 %v85
  %v423 = vunpack.c.l.b16 %v86
  %v424 = vunpack.c.h.b16 %v86
  %v425 = vpack.c.b16 %v419, %v413
  %v426 = vpack.c.b16 %v420, %v414
  %v427 = vpack.c.b16 %v421, %v415
  %v428 = vpack.c.b16 %v422, %v416
  %v429 = vpack.c.b16 %v423, %v417
  %v430 = vpack.c.b16 %v424, %v418
  %v725 = vunpack.c.l.b16 %v87
  %v726 = vunpack.c.h.b16 %v87
  %v727 = vunpack.c.l.b16 %v88
  %v728 = vunpack.c.h.b16 %v88
  %v729 = vunpack.c.l.b16 %v89
  %v730 = vunpack.c.h.b16 %v89
  %v731 = vunpack.c.l.b16 %v90
  %v732 = vunpack.c.h.b16 %v90
  %v733 = vunpack.c.l.b16 %v91
  %v734 = vunpack.c.h.b16 %v91
  %v735 = vunpack.c.l.b16 %v92
  %v736 = vunpack.c.h.b16 %v92
  %v737 = vunpack.c.l.b16 %v93
  %v738 = vunpack.c.h.b16 %v93
  %v739 = vunpack.c.l.b16 %v94
  %v740 = vunpack.c.h.b16 %v94
  %v741 = vunpack.c.l.b16 %v95
  %v742 = vunpack.c.h.b16 %v95
  %v743 = vunpack.c.l.b16 %v96
  %v744 = vunpack.c.h.b16 %v96
  %v745 = vunpack.c.l.b16 %v97
  %v746 = vunpack.c.h.b16 %v97
  %v747 = vunpack.c.l.b16 %v98
  %v748 = vunpack.c.h.b16 %v98
  %v749 = vunpack.c.l.b16 %v99
  %v750 = vunpack.c.h.b16 %v99
  %v751 = vunpack.c.l.b16 %v100
  %v752 = vunpack.c.h.b16 %v100
  %v753 = vunpack.c.l.b16 %v101
  %v754 = vunpack.c.h.b16 %v101
  %v755 = vunpack.c.l.b16 %v102
  %v756 = vunpack.c.h.b16 %v102
  %v757 = vunpack.c.l.b16 %v103
  %v758 = vunpack.c.h.b16 %v103
  %v759 = vunpack.c.l.b16 %v104
  %v760 = vunpack.c.h.b16 %v104
  %v761 = vunpack.c.l.b16 %v105
  %v762 = vunpack.c.h.b16 %v105
  %v763 = vunpack.c.l.b16 %v106
  %v764 = vunpack.c.h.b16 %v106
  %v765 = vunpack.c.l.b16 %v107
  %v766 = vunpack.c.h.b16 %v107
  %v767 = vunpack.c.l.b16 %v108
  %v768 = vunpack.c.h.b16 %v108
  %v769 = vunpack.c.l.b16 %v109
  %v770 = vunpack.c.h.b16 %v109
  %v771 = vunpack.c.l.b16 %v110
  %v772 = vunpack.c.h.b16 %v110
  %v773 = vunpack.c.l.b16 %v111
  %v774 = vunpack.c.h.b16 %v111
  %v775 = vunpack.c.l.b16 %v112
  %v776 = vunpack.c.h.b16 %v112
  %v777 = vunpack.c.l.b16 %v113
  %v778 = vunpack.c.h.b16 %v113
  %v779 = vunpack.c.l.b16 %v114
  %v780 = vunpack.c.h.b16 %v114
  %v781 = vunpack.c.l.b16 %v115
  %v782 = vunpack.c.h.b16 %v115
  %v783 = vunpack.c.l.b16 %v116
  %v784 = vunpack.c.h.b16 %v116
  %v785 = vunpack.c.l.b16 %v117
  %v786 = vunpack.c.h.b16 %v117
  %v787 = vunpack.c.l.b16 %v118
  %v788 = vunpack.c.h.b16 %v118
  %v789 = vunpack.c.l.b16 %v119
  %v790 = vunpack.c.h.b16 %v119
  %v791 = vunpack.c.l.b16 %v120
  %v792 = vunpack.c.h.b16 %v120
  %v793 = vunpack.c.l.b16 %v121
  %v794 = vunpack.c.h.b16 %v121
  %v795 = vunpack.c.l.b16 %v122
  %v796 = vunpack.c.h.b16 %v122
  %v797 = vunpack.c.l.b16 %v123
  %v798 = vunpack.c.h.b16 %v123
  %v799 = vunpack.c.l.b16 %v124
  %v800 = vunpack.c.h.b16 %v124
  %v801 = vunpack.c.l.b16 %v125
  %v802 = vunpack.c.h.b16 %v125
  %v803 = vunpack.c.l.b16 %v126
  %v804 = vunpack.c.h.b16 %v126
  %v805 = vunpack.c.l.b16 %v127
  %v806 = vunpack.c.h.b16 %v127
  %v807 = vunpack.c.l.b16 %v128
  %v808 = vunpack.c.h.b16 %v128
  %v809 = vunpack.c.l.b16 %v129
  %v810 = vunpack.c.h.b16 %v129
  %v811 = vunpack.c.l.b16 %v130
  %v812 = vunpack.c.h.b16 %v130
  %v813 = vunpack.c.l.b16 %v131
  %v814 = vunpack.c.h.b16 %v131
  %v815 = vunpack.c.l.b16 %v132
  %v816 = vunpack.c.h.b16 %v132
  %v817 = vunpack.c.l.b16 %v133
  %v818 = vunpack.c.h.b16 %v133
  %v819 = vunpack.c.l.b16 %v134
  %v820 = vunpack.c.h.b16 %v134
  %v821 = vunpack.c.l.b16 %v135
  %v822 = vunpack.c.h.b16 %v135
  %v823 = vunpack.c.l.b16 %v136
  %v824 = vunpack.c.h.b16 %v136
  %v825 = vunpack.c.l.b16 %v137
  %v826 = vunpack.c.h.b16 %v137
  %v827 = vunpack.c.l.b16 %v138
  %v828 = vunpack.c.h.b16 %v138
  %v829 = vunpack.c.l.b16 %v139
  %v830 = vunpack.c.h.b16 %v139
  %v831 = vunpack.c.l.b16 %v140
  %v832 = vunpack.c.h.b16 %v140
  %v833 = vunpack.c.l.b16 %v141
  %v834 = vunpack.c.h.b16 %v141
  %v835 = vunpack.c.l.b16 %v142
  %v836 = vunpack.c.h.b16 %v142
  %v837 = vunpack.c.l.b16 %v143
  %v838 = vunpack.c.h.b16 %v143
  %v839 = vunpack.c.l.b16 %v144
  %v840 = vunpack.c.h.b16 %v144
  %v841 = vunpack.c.l.b16 %v145
  %v842 = vunpack.c.h.b16 %v145
  %v843 = vunpack.c.l.b16 %v146
  %v844 = vunpack.c.h.b16 %v146
  %v845 = vunpack.c.l.b16 %v147
  %v846 = vunpack.c.h.b16 %v147
  %v847 = vunpack.c.l.b16 %v148
  %v848 = vunpack.c.h.b16 %v148
  %v849 = vunpack.c.l.b16 %v149
  %v850 = vunpack.c.h.b16 %v149
  %v851 = vunpack.c.l.b16 %v150
  %v852 = vunpack.c.h.b16 %v150
  %v853 = vunpack.c.l.b16 %v151
  %v854 = vunpack.c.h.b16 %v151
  %v855 = vunpack.c.l.b16 %v152
  %v856 = vunpack.c.h.b16 %v152
  %v857 = vunpack.c.l.b16 %v153
  %v858 = vunpack.c.h.b16 %v153
  %v859 = vunpack.c.l.b16 %v154
  %v860 = vunpack.c.h.b16 %v154
  %v861 = vunpack.c.l.b16 %v155
  %v862 = vunpack.c.h.b16 %v155
  %v863 = vunpack.c.l.b16 %v156
  %v864 = vunpack.c.h.b16 %v156
  %v865 = vunpack.c.l.b16 %v157
  %v866 = vunpack.c.h.b16 %v157
  %v867 = vunpack.c.l.b16 %v158
  %v868 = vunpack.c.h.b16 %v158
  %v869 = vunpack.c.l.b16 %v159
  %v870 = vunpack.c.h.b16 %v159
  %v871 = vunpack.c.l.b16 %v160
  %v872 = vunpack.c.h.b16 %v160
  %v873 = vunpack.c.l.b16 %v161
  %v874 = vunpack.c.h.b16 %v161
  %v875 = vunpack.c.l.b16 %v162
  %v876 = vunpack.c.h.b16 %v162
  %v877 = vunpack.c.l.b16 %v163
  %v878 = vunpack.c.h.b16 %v163
  %v879 = vunpack.c.l.b16 %v164
  %v880 = vunpack.c.h.b16 %v164
  %v881 = vunpack.c.l.b16 %v165
  %v882 = vunpack.c.h.b16 %v165
  %v883 = vunpack.c.l.b16 %v166
  %v884 = vunpack.c.h.b16 %v166
  %v885 = vunpack.c.l.b16 %v167
  %v886 = vunpack.c.h.b16 %v167
  %v887 = vunpack.c.l.b16 %v168
  %v888 = vunpack.c.h.b16 %v168
  %v889 = vunpack.c.l.b16 %v169
  %v890 = vunpack.c.h.b16 %v169
  %v891 = vunpack.c.l.b16 %v170
  %v892 = vunpack.c.h.b16 %v170
  %v893 = vunpack.c.l.b16 %v171
  %v894 = vunpack.c.h.b16 %v171
  %v895 = vunpack.c.l.b16 %v172
  %v896 = vunpack.c.h.b16 %v172
  %v897 = vunpack.c.l.b16 %v173
  %v898 = vunpack.c.h.b16 %v173
  %v899 = vunpack.c.l.b16 %v174
  %v900 = vunpack.c.h.b16 %v174
  %v901 = vunpack.c.l.b16 %v175
  %v902 = vunpack.c.h.b16 %v175
  %v903 = vunpack.c.l.b16 %v176
  %v904 = vunpack.c.h.b16 %v176
  %v905 = vunpack.c.l.b16 %v177
  %v906 = vunpack.c.h.b16 %v177
  %v907 = vunpack.c.l.b16 %v178
  %v908 = vunpack.c.h.b16 %v178
  %v909 = vunpack.c.l.b16 %v179
  %v910 = vunpack.c.h.b16 %v179
  %v911 = vunpack.c.l.b16 %v180
  %v912 = vunpack.c.h.b16 %v180
  %v913 = vunpack.c.l.b16 %v181
  %v914 = vunpack.c.h.b16 %v181
  %v915 = vunpack.c.l.b16 %v182
  %v916 = vunpack.c.h.b16 %v182
  %v917 = vunpack.c.l.b16 %v183
  %v918 = vunpack.c.h.b16 %v183
  %v919 = vunpack.c.l.b16 %v184
  %v920 = vunpack.c.h.b16 %v184
  %v921 = vunpack.c.l.b16 %v185
  %v922 = vunpack.c.h.b16 %v185
  %v923 = vunpack.c.l.b16 %v186
  %v924 = vunpack.c.h.b16 %v186
  %v925 = vunpack.c.l.b16 %v187
  %v926 = vunpack.c.h.b16 %v187
  %v927 = vunpack.c.l.b16 %v188
  %v928 = vunpack.c.h.b16 %v188
  %v929 = vunpack.c.l.b16 %v189
  %v930 = vunpack.c.h.b16 %v189
  %v931 = vunpack.c.l.b16 %v190
  %v932 = vunpack.c.h.b16 %v190
  %v933 = vunpack.c.l.b16 %v191
  %v934 = vunpack.c.h.b16 %v191
  %v935 = vunpack.c.l.b16 %v192
  %v936 = vunpack.c.h.b16 %v192
  %v937 = vunpack.c.l.b16 %v193
  %v938 = vunpack.c.h.b16 %v193
  %v939 = vunpack.c.l.b16 %v194
  %v940 = vunpack.c.h.b16 %v194
  %v941 = vunpack.c.l.b16 %v195
  %v942 = vunpack.c.h.b16 %v195
  %v943 = vunpack.c.l.b16 %v196
  %v944 = vunpack.c.h.b16 %v196
  %v945 = vunpack.c.l.b16 %v197
  %v946 = vunpack.c.h.b16 %v197
  %v947 = vunpack.c.l.b16 %v198
  %v948 = vunpack.c.h.b16 %v198
  %v949 = vunpack.c.l.b16 %v199
  %v950 = vunpack.c.h.b16 %v199
  %v951 = vunpack.c.l.b16 %v200
  %v952 = vunpack.c.h.b16 %v200
  %v953 = vunpack.c.l.b16 %v201
  %v954 = vunpack.c.h.b16 %v201
  %v955 = vunpack.c.l.b16 %v202
  %v956 = vunpack.c.h.b16 %v202
  %v957 = vunpack.c.l.b16 %v203
  %v958 = vunpack.c.h.b16 %v203
  %v959 = vunpack.c.l.b16 %v204
  %v960 = vunpack.c.h.b16 %v204
  %v961 = vunpack.c.l.b16 %v205
  %v962 = vunpack.c.h.b16 %v205
  %v963 = vunpack.c.l.b16 %v206
  %v964 = vunpack.c.h.b16 %v206
  %v965 = vunpack.c.l.b16 %v207
  %v966 = vunpack.c.h.b16 %v207
  %v967 = vunpack.c.l.b16 %v208
  %v968 = vunpack.c.h.b16 %v208
  %v969 = vunpack.c.l.b16 %v209
  %v970 = vunpack.c.h.b16 %v209
  %v971 = vunpack.c.l.b16 %v210
  %v972 = vunpack.c.h.b16 %v210
  %v973 = vunpack.c.l.b16 %v211
  %v974 = vunpack.c.h.b16 %v211
  %v975 = vunpack.c.l.b16 %v212
  %v976 = vunpack.c.h.b16 %v212
  %v977 = vunpack.c.l.b16 %v213
  %v978 = vunpack.c.h.b16 %v213
  %v979 = vunpack.c.l.b16 %v214
  %v980 = vunpack.c.h.b16 %v214
  %v981 = vunpack.c.l.b16 %v215
  %v982 = vunpack.c.h.b16 %v215
  %v983 = vunpack.c.l.b16 %v216
  %v984 = vunpack.c.h.b16 %v216
  %v985 = vunpack.c.l.b16 %v217
  %v986 = vunpack.c.h.b16 %v217
  %v987 = vunpack.c.l.b16 %v218
  %v988 = vunpack.c.h.b16 %v218
  %v989 = vunpack.c.l.b16 %v219
  %v990 = vunpack.c.h.b16 %v219
  %v991 = vunpack.c.l.b16 %v220
  %v992 = vunpack.c.h.b16 %v220
  %v993 = vunpack.c.l.b16 %v221
  %v994 = vunpack.c.h.b16 %v221
  %v995 = vunpack.c.l.b16 %v222
  %v996 = vunpack.c.h.b16 %v222
  %v997 = vunpack.c.l.b16 %v223
  %v998 = vunpack.c.h.b16 %v223
  %v999 = vunpack.c.l.b16 %v224
  %v1000 = vunpack.c.h.b16 %v224
  %v1001 = vunpack.c.l.b16 %v225
  %v1002 = vunpack.c.h.b16 %v225
  %v1003 = vunpack.c.l.b16 %v226
  %v1004 = vunpack.c.h.b16 %v226
  %v1005 = vunpack.c.l.b16 %v227
  %v1006 = vunpack.c.h.b16 %v227
  %v1007 = vunpack.c.l.b16 %v228
  %v1008 = vunpack.c.h.b16 %v228
  %v1009 = vunpack.c.l.b16 %v229
  %v1010 = vunpack.c.h.b16 %v229
  %v1011 = vunpack.c.l.b16 %v230
  %v1012 = vunpack.c.h.b16 %v230
  %v1013 = vunpack.c.l.b16 %v231
  %v1014 = vunpack.c.h.b16 %v231
  %v1015 = vunpack.c.l.b16 %v232
  %v1016 = vunpack.c.h.b16 %v232
  %v1017 = vunpack.c.l.b16 %v233
  %v1018 = vunpack.c.h.b16 %v233
  %v1019 = vunpack.c.l.b16 %v234
  %v1020 = vunpack.c.h.b16 %v234
  %v1021 = vunpack.c.l.b16 %v235
  %v1022 = vunpack.c.h.b16 %v235
  %v1023 = vunpack.c.l.b16 %v236
  %v1024 = vunpack.c.h.b16 %v236
  %v1025 = vunpack.c.l.b16 %v237
  %v1026 = vunpack.c.h.b16 %v237
  %v1027 = vunpack.c.l.b16 %v238
  %v1028 = vunpack.c.h.b16 %v238
  %v1029 = vunpack.c.l.b16 %v239
  %v1030 = vunpack.c.h.b16 %v239
  %v1031 = vunpack.c.l.b16 %v240
  %v1032 = vunpack.c.h.b16 %v240
  %v1033 = vunpack.c.l.b16 %v241
  %v1034 = vunpack.c.h.b16 %v241
  %v1035 = vunpack.c.l.b16 %v242
  %v1036 = vunpack.c.h.b16 %v242
  %v1037 = vunpack.c.l.b16 %v243
  %v1038 = vunpack.c.h.b16 %v243
  %v1039 = vunpack.c.l.b16 %v244
  %v1040 = vunpack.c.h.b16 %v244
  %v1041 = vunpack.c.l.b16 %v245
  %v1042 = vunpack.c.h.b16 %v245
  %v1043 = vunpack.c.l.b16 %v246
  %v1044 = vunpack.c.h.b16 %v246
  %v1045 = vunpack.c.l.b16 %v247
  %v1046 = vunpack.c.h.b16 %v247
  %v1047 = vunpack.c.l.b16 %v248
  %v1048 = vunpack.c.h.b16 %v248
  %v1049 = vunpack.c.l.b16 %v249
  %v1050 = vunpack.c.h.b16 %v249
  %v1051 = vunpack.c.l.b16 %v250
  %v1052 = vunpack.c.h.b16 %v250
  %v1053 = vunpack.c.l.b16 %v251
  %v1054 = vunpack.c.h.b16 %v251
  %v1055 = vunpack.c.l.b16 %v252
  %v1056 = vunpack.c.h.b16 %v252
  %v1057 = vunpack.c.l.b16 %v253
  %v1058 = vunpack.c.h.b16 %v253
  %v1059 = vunpack.c.l.b16 %v254
  %v1060 = vunpack.c.h.b16 %v254
  %v1061 = vunpack.c.l.b16 %v255
  %v1062 = vunpack.c.h.b16 %v255
  %v1063 = vunpack.c.l.b16 %v256
  %v1064 = vunpack.c.h.b16 %v256
  %v1065 = vunpack.c.l.b16 %v257
  %v1066 = vunpack.c.h.b16 %v257
  %v1067 = vunpack.c.l.b16 %v258
  %v1068 = vunpack.c.h.b16 %v258
  %v1069 = vunpack.c.l.b16 %v259
  %v1070 = vunpack.c.h.b16 %v259
  %v1071 = vunpack.c.l.b16 %v260
  %v1072 = vunpack.c.h.b16 %v260
  %v1073 = vunpack.c.l.b16 %v261
  %v1074 = vunpack.c.h.b16 %v261
  %v1075 = vunpack.c.l.b16 %v262
  %v1076 = vunpack.c.h.b16 %v262
  %v1077 = vunpack.c.l.b16 %v263
  %v1078 = vunpack.c.h.b16 %v263
  %v1079 = vunpack.c.l.b16 %v264
  %v1080 = vunpack.c.h.b16 %v264
  %v1081 = vunpack.c.l.b16 %v265
  %v1082 = vunpack.c.h.b16 %v265
  %v1083 = vunpack.c.l.b16 %v266
  %v1084 = vunpack.c.h.b16 %v266
  %v1085 = vunpack.c.l.b16 %v267
  %v1086 = vunpack.c.h.b16 %v267
  %v1087 = vunpack.c.l.b16 %v268
  %v1088 = vunpack.c.h.b16 %v268
  %v1089 = vunpack.c.l.b16 %v269
  %v1090 = vunpack.c.h.b16 %v269
  %v1091 = vunpack.c.l.b16 %v270
  %v1092 = vunpack.c.h.b16 %v270
  %v1093 = vunpack.c.l.b16 %v271
  %v1094 = vunpack.c.h.b16 %v271
  %v1095 = vunpack.c.l.b16 %v272
  %v1096 = vunpack.c.h.b16 %v272
  %v1097 = vunpack.c.l.b16 %v273
  %v1098 = vunpack.c.h.b16 %v273
  %v1099 = vunpack.c.l.b16 %v274
  %v1100 = vunpack.c.h.b16 %v274
  %v1101 = vunpack.c.l.b16 %v275
  %v1102 = vunpack.c.h.b16 %v275
  %v1103 = vunpack.c.l.b16 %v276
  %v1104 = vunpack.c.h.b16 %v276
  %v1105 = vunpack.c.l.b16 %v277
  %v1106 = vunpack.c.h.b16 %v277
  %v1107 = vunpack.c.l.b16 %v278
  %v1108 = vunpack.c.h.b16 %v278
  %v1109 = vunpack.c.l.b16 %v279
  %v1110 = vunpack.c.h.b16 %v279
  %v1111 = vunpack.c.l.b16 %v280
  %v1112 = vunpack.c.h.b16 %v280
  %v1113 = vunpack.c.l.b16 %v281
  %v1114 = vunpack.c.h.b16 %v281
  %v1115 = vunpack.c.l.b16 %v282
  %v1116 = vunpack.c.h.b16 %v282
  %v1117 = vunpack.c.l.b16 %v283
  %v1118 = vunpack.c.h.b16 %v283
  %v1119 = vunpack.c.l.b16 %v284
  %v1120 = vunpack.c.h.b16 %v284
  %v1121 = vunpack.c.l.b16 %v285
  %v1122 = vunpack.c.h.b16 %v285
  %v1123 = vunpack.c.l.b16 %v286
  %v1124 = vunpack.c.h.b16 %v286
  %v1125 = vunpack.c.l.b16 %v287
  %v1126 = vunpack.c.h.b16 %v287
  %v1127 = vunpack.c.l.b16 %v288
  %v1128 = vunpack.c.h.b16 %v288
  %v1129 = vunpack.c.l.b16 %v289
  %v1130 = vunpack.c.h.b16 %v289
  %v1131 = vunpack.c.l.b16 %v290
  %v1132 = vunpack.c.h.b16 %v290
  %v1133 = vunpack.c.l.b16 %v291
  %v1134 = vunpack.c.h.b16 %v291
  %v1135 = vunpack.c.l.b16 %v292
  %v1136 = vunpack.c.h.b16 %v292
  %v1137 = vunpack.c.l.b16 %v293
  %v1138 = vunpack.c.h.b16 %v293
  %v1139 = vunpack.c.l.b16 %v294
  %v1140 = vunpack.c.h.b16 %v294
  %v1141 = vunpack.c.l.b16 %v295
  %v1142 = vunpack.c.h.b16 %v295
  %v1143 = vunpack.c.l.b16 %v296
  %v1144 = vunpack.c.h.b16 %v296
  %v1145 = vunpack.c.l.b16 %v297
  %v1146 = vunpack.c.h.b16 %v297
  %v1147 = vunpack.c.l.b16 %v298
  %v1148 = vunpack.c.h.b16 %v298
  %v1149 = vunpack.c.l.b16 %v299
  %v1150 = vunpack.c.h.b16 %v299
  %v1151 = vunpack.c.l.b16 %v300
  %v1152 = vunpack.c.h.b16 %v300
  %v1153 = vunpack.c.l.b16 %v301
  %v1154 = vunpack.c.h.b16 %v301
  %v1155 = vunpack.c.l.b16 %v302
  %v1156 = vunpack.c.h.b16 %v302
  %v1157 = vunpack.c.l.b16 %v303
  %v1158 = vunpack.c.h.b16 %v303
  %v1159 = vunpack.c.l.b16 %v304
  %v1160 = vunpack.c.h.b16 %v304
  %v1161 = vunpack.c.l.b16 %v305
  %v1162 = vunpack.c.h.b16 %v305
  %v1163 = vunpack.c.l.b16 %v306
  %v1164 = vunpack.c.h.b16 %v306
  %v1165 = vunpack.c.l.b16 %v307
  %v1166 = vunpack.c.h.b16 %v307
  %v1167 = vunpack.c.l.b16 %v308
  %v1168 = vunpack.c.h.b16 %v308
  %v1169 = vunpack.c.l.b16 %v309
  %v1170 = vunpack.c.h.b16 %v309
  %v1171 = vunpack.c.l.b16 %v310
  %v1172 = vunpack.c.h.b16 %v310
  %v1173 = vunpack.c.l.b16 %v311
  %v1174 = vunpack.c.h.b16 %v311
  %v1175 = vunpack.c.l.b16 %v312
  %v1176 = vunpack.c.h.b16 %v312
  %v1177 = vunpack.c.l.b16 %v313
  %v1178 = vunpack.c.h.b16 %v313
  %v1179 = vunpack.c.l.b16 %v314
  %v1180 = vunpack.c.h.b16 %v314
  %v1181 = vunpack.c.l.b16 %v315
  %v1182 = vunpack.c.h.b16 %v315
  %v1183 = vunpack.c.l.b16 %v316
  %v1184 = vunpack.c.h.b16 %v316
  %v1185 = vunpack.c.l.b16 %v317
  %v1186 = vunpack.c.h.b16 %v317
  %v1187 = vunpack.c.l.b16 %v318
  %v1188 = vunpack.c.h.b16 %v318
  %v1189 = vunpack.c.l.b16 %v319
  %v1190 = vunpack.c.h.b16 %v319
  %v1191 = vunpack.c.l.b16 %v320
  %v1192 = vunpack.c.h.b16 %v320
  %v1193 = vunpack.c.l.b16 %v321
  %v1194 = vunpack.c.h.b16 %v321
  %v1195 = vunpack.c.l.b16 %v322
  %v1196 = vunpack.c.h.b16 %v322
  %v1197 = vunpack.c.l.b16 %v323
  %v1198 = vunpack.c.h.b16 %v323
  %v1199 = vunpack.c.l.b16 %v324
  %v1200 = vunpack.c.h.b16 %v324
  %v1201 = vunpack.c.l.b16 %v325
  %v1202 = vunpack.c.h.b16 %v325
  %v1203 = vunpack.c.l.b16 %v326
  %v1204 = vunpack.c.h.b16 %v326
  %v1205 = vunpack.c.l.b16 %v327
  %v1206 = vunpack.c.h.b16 %v327
  %v1207 = vunpack.c.l.b16 %v328
  %v1208 = vunpack.c.h.b16 %v328
  %v1209 = vunpack.c.l.b16 %v329
  %v1210 = vunpack.c.h.b16 %v329
  %v1211 = vunpack.c.l.b16 %v330
  %v1212 = vunpack.c.h.b16 %v330
  %v1213 = vunpack.c.l.b16 %v331
  %v1214 = vunpack.c.h.b16 %v331
  %v1215 = vunpack.c.l.b16 %v332
  %v1216 = vunpack.c.h.b16 %v332
  %v1217 = vunpack.c.l.b16 %v333
  %v1218 = vunpack.c.h.b16 %v333
  %v1219 = vunpack.c.l.b16 %v334
  %v1220 = vunpack.c.h.b16 %v334
  %v1221 = vunpack.c.l.b16 %v335
  %v1222 = vunpack.c.h.b16 %v335
  %v1223 = vunpack.c.l.b16 %v336
  %v1224 = vunpack.c.h.b16 %v336
  %v1225 = vunpack.c.l.b16 %v337
  %v1226 = vunpack.c.h.b16 %v337
  %v1227 = vunpack.c.l.b16 %v338
  %v1228 = vunpack.c.h.b16 %v338
  %v1229 = vunpack.c.l.b16 %v339
  %v1230 = vunpack.c.h.b16 %v339
  %v1231 = vunpack.c.l.b16 %v340
  %v1232 = vunpack.c.h.b16 %v340
  %v1233 = vunpack.c.l.b16 %v341
  %v1234 = vunpack.c.h.b16 %v341
  %v1235 = vunpack.c.l.b16 %v342
  %v1236 = vunpack.c.h.b16 %v342
  %v1237 = vunpack.c.l.b16 %v343
  %v1238 = vunpack.c.h.b16 %v343
  %v1239 = vunpack.c.l.b16 %v344
  %v1240 = vunpack.c.h.b16 %v344
  %v1241 = vunpack.c.l.b16 %v345
  %v1242 = vunpack.c.h.b16 %v345
  %v1243 = vunpack.c.l.b16 %v346
  %v1244 = vunpack.c.h.b16 %v346
  %v1245 = vunpack.c.l.b16 %v347
  %v1246 = vunpack.c.h.b16 %v347
  %v1247 = vunpack.c.l.b16 %v348
  %v1248 = vunpack.c.h.b16 %v348
  %v1249 = vunpack.c.l.b16 %v349
  %v1250 = vunpack.c.h.b16 %v349
  %v1251 = vunpack.c.l.b16 %v350
  %v1252 = vunpack.c.h.b16 %v350
  %v1253 = vunpack.c.l.b16 %v351
  %v1254 = vunpack.c.h.b16 %v351
  %v1255 = vunpack.c.l.b16 %v352
  %v1256 = vunpack.c.h.b16 %v352
  %v1257 = vunpack.c.l.b16 %v353
  %v1258 = vunpack.c.h.b16 %v353
  %v1259 = vunpack.c.l.b16 %v354
  %v1260 = vunpack.c.h.b16 %v354
  %v1261 = vunpack.c.l.b16 %v355
  %v1262 = vunpack.c.h.b16 %v355
  %v1263 = vunpack.c.l.b16 %v356
  %v1264 = vunpack.c.h.b16 %v356
  %v1265 = vunpack.c.l.b16 %v357
  %v1266 = vunpack.c.h.b16 %v357
  %v1267 = vunpack.c.l.b16 %v358
  %v1268 = vunpack.c.h.b16 %v358
  %v1269 = vunpack.c.l.b16 %v359
  %v1270 = vunpack.c.h.b16 %v359
  %v1271 = vunpack.c.l.b16 %v360
  %v1272 = vunpack.c.h.b16 %v360
  %v1273 = vunpack.c.l.b16 %v361
  %v1274 = vunpack.c.h.b16 %v361
  %v1275 = vunpack.c.l.b16 %v362
  %v1276 = vunpack.c.h.b16 %v362
  %v1277 = vunpack.c.l.b16 %v363
  %v1278 = vunpack.c.h.b16 %v363
  %v1279 = vunpack.c.l.b16 %v364
  %v1280 = vunpack.c.h.b16 %v364
  %v1281 = vunpack.c.l.b16 %v365
  %v1282 = vunpack.c.h.b16 %v365
  %v1283 = vunpack.c.l.b16 %v366
  %v1284 = vunpack.c.h.b16 %v366
  %v1285 = vunpack.c.l.b16 %v367
  %v1286 = vunpack.c.h.b16 %v367
  %v1287 = vunpack.c.l.b16 %v368
  %v1288 = vunpack.c.h.b16 %v368
  %v1289 = vunpack.c.l.b16 %v369
  %v1290 = vunpack.c.h.b16 %v369
  %v1291 = vunpack.c.l.b16 %v370
  %v1292 = vunpack.c.h.b16 %v370
  %v1293 = vunpack.c.l.b16 %v371
  %v1294 = vunpack.c.h.b16 %v371
  %v1295 = vunpack.c.l.b16 %v372
  %v1296 = vunpack.c.h.b16 %v372
  %v1297 = vunpack.c.l.b16 %v373
  %v1298 = vunpack.c.h.b16 %v373
  %v1299 = vunpack.c.l.b16 %v374
  %v1300 = vunpack.c.h.b16 %v374
  %v1301 = vpack.c.b16 %v731, %v725
  %v1302 = vpack.c.b16 %v732, %v726
  %v1303 = vpack.c.b16 %v733, %v727
  %v1304 = vpack.c.b16 %v734, %v728
  %v1305 = vpack.c.b16 %v735, %v729
  %v1306 = vpack.c.b16 %v736, %v730
  %v1307 = vpack.c.b16 %v743, %v737
  %v1308 = vpack.c.b16 %v744, %v738
  %v1309 = vpack.c.b16 %v745, %v739
  %v1310 = vpack.c.b16 %v746, %v740
  %v1311 = vpack.c.b16 %v747, %v741
  %v1312 = vpack.c.b16 %v748, %v742
  %v1313 = vpack.c.b16 %v755, %v749
  %v1314 = vpack.c.b16 %v756, %v750
  %v1315 = vpack.c.b16 %v757, %v751
  %v1316 = vpack.c.b16 %v758, %v752
  %v1317 = vpack.c.b16 %v759, %v753
  %v1318 = vpack.c.b16 %v760, %v754
  %v1319 = vpack.c.b16 %v767, %v761
  %v1320 = vpack.c.b16 %v768, %v762
  %v1321 = vpack.c.b16 %v769, %v763
  %v1322 = vpack.c.b16 %v770, %v764
  %v1323 = vpack.c.b16 %v771, %v765
  %v1324 = vpack.c.b16 %v772, %v766
  %v1325 = vpack.c.b16 %v779, %v773
  %v1326 = vpack.c.b16 %v780, %v774
  %v1327 = vpack.c.b16 %v781, %v775
  %v1328 = vpack.c.b16 %v782, %v776
  %v1329 = vpack.c.b16 %v783, %v777
  %v1330 = vpack.c.b16 %v784, %v778
  %v1331 = vpack.c.b16 %v791, %v785
  %v1332 = vpack.c.b16 %v792, %v786
  %v1333 = vpack.c.b16 %v793, %v787
  %v1334 = vpack.c.b16 %v794, %v788
  %v1335 = vpack.c.b16 %v795, %v789
  %v1336 = vpack.c.b16 %v796, %v790
  %v1337 = vpack.c.b16 %v803, %v797
  %v1338 = vpack.c.b16 %v804, %v798
  %v1339 = vpack.c.b16 %v805, %v799
  %v1340 = vpack.c.b16 %v806, %v800
  %v1341 = vpack.c.b16 %v807, %v801
  %v1342 = vpack.c.b16 %v808, %v802
  %v1343 = vpack.c.b16 %v815, %v809
  %v1344 = vpack.c.b16 %v816, %v810
  %v1345 = vpack.c.b16 %v817, %v811
  %v1346 = vpack.c.b16 %v818, %v812
  %v1347 = vpack.c.b16 %v819, %v813
  %v1348 = vpack.c.b16 %v820, %v814
  %v1349 = vpack.c.b16 %v827, %v821
  %v1350 = vpack.c.b16 %v828, %v822
  %v1351 = vpack.c.b16 %v829, %v823
  %v1352 = vpack.c.b16 %v830, %v824
  %v1353 = vpack.c.b16 %v831, %v825
  %v1354 = vpack.c.b16 %v832, %v826
  %v1355 = vpack.c.b16 %v839, %v833
  %v1356 = vpack.c.b16 %v840, %v834
  %v1357 = vpack.c.b16 %v841, %v835
  %v1358 = vpack.c.b16 %v842, %v836
  %v1359 = vpack.c.b16 %v843, %v837
  %v1360 = vpack.c.b16 %v844, %v838
  %v1361 = vpack.c.b16 %v851, %v845
  %v1362 = vpack.c.b16 %v852, %v846
  %v1363 = vpack.c.b16 %v853, %v847
  %v1364 = vpack.c.b16 %v854, %v848
  %v1365 = vpack.c.b16 %v855, %v849
  %v1366 = vpack.c.b16 %v856, %v850
  %v1367 = vpack.c.b16 %v863, %v857
  %v1368 = vpack.c.b16 %v864, %v858
  %v1369 = vpack.c.b16 %v865, %v859
  %v1370 = vpack.c.b16 %v866, %v860
  %v1371 = vpack.c.b16 %v867, %v861
  %v1372 = vpack.c.b16 %v868, %v862
  %v1373 = vpack.c.b16 %v875, %v869
  %v1374 = vpack.c.b16 %v876, %v870
  %v1375 = vpack.c.b16 %v877, %v871
  %v1376 = vpack.c.b16 %v878, %v872
  %v1377 = vpack.c.b16 %v879, %v873
  %v1378 = vpack.c.b16 %v880, %v874
  %v1379 = vpack.c.b16 %v887, %v881
  %v1380 = vpack.c.b16 %v888, %v882
  %v1381 = vpack.c.b16 %v889, %v883
  %v1382 = vpack.c.b16 %v890, %v884
  %v1383 = vpack.c.b16 %v891, %v885
  %v1384 = vpack.c.b16 %v892, %v886
  %v1385 = vpack.c.b16 %v899, %v893
  %v1386 = vpack.c.b16 %v900, %v894
  %v1387 = vpack.c.b16 %v901, %v895
  %v1388 = vpack.c.b16 %v902, %v896
  %v1389 = vpack.c.b16 %v903, %v897
  %v1390 = vpack.c.b16 %v904, %v898
  %v1391 = vpack.c.b16 %v911, %v905
  %v1392 = vpack.c.b16 %v912, %v906
  %v1393 = vpack.c.b16 %v913, %v907
  %v1394 = vpack.c.b16 %v914, %v908
  %v1395 = vpack.c.b16 %v915, %v909
  %v1396 = vpack.c.b16 %v916, %v910
  %v1397 = vpack.c.b16 %v923, %v917
  %v1398 = vpack.c.b16 %v924, %v918
  %v1399 = vpack.c.b16 %v925, %v919
  %v1400 = vpack.c.b16 %v926, %v920
  %v1401 = vpack.c.b16 %v927, %v921
  %v1402 = vpack.c.b16 %v928, %v922
  %v1403 = vpack.c.b16 %v935, %v929
  %v1404 = vpack.c.b16 %v936, %v930
  %v1405 = vpack.c.b16 %v937, %v931
  %v1406 = vpack.c.b16 %v938, %v932
  %v1407 = vpack.c.b16 %v939, %v933
  %v1408 = vpack.c.b16 %v940, %v934
  %v1409 = vpack.c.b16 %v947, %v941
  %v1410 = vpack.c.b16 %v948, %v942
  %v1411 = vpack.c.b16 %v949, %v943
  %v1412 = vpack.c.b16 %v950, %v944
  %v1413 = vpack.c.b16 %v951, %v945
  %v1414 = vpack.c.b16 %v952, %v946
  %v1415 = vpack.c.b16 %v959, %v953
  %v1416 = vpack.c.b16 %v960, %v954
  %v1417 = vpack.c.b16 %v961, %v955
  %v1418 = vpack.c.b16 %v962, %v956
  %v1419 = vpack.c.b16 %v963, %v957
  %v1420 = vpack.c.b16 %v964, %v958
  %v1421 = vpack.c.b16 %v971, %v965
  %v1422 = vpack.c.b16 %v972, %v966
  %v1423 = vpack.c.b16 %v973, %v967
  %v1424 = vpack.c.b16 %v974, %v968
  %v1425 = vpack.c.b16 %v975, %v969
  %v1426 = vpack.c.b16 %v976, %v970
  %v1427 = vpack.c.b16 %v983, %v977
  %v1428 = vpack.c.b16 %v984, %v978
  %v1429 = vpack.c.b16 %v985, %v979
  %v1430 = vpack.c.b16 %v986, %v980
  %v1431 = vpack.c.b16 %v987, %v981
  %v1432 = vpack.c.b16 %v988, %v982
  %v1433 = vpack.c.b16 %v995, %v989
  %v1434 = vpack.c.b16 %v996, %v990
  %v1435 = vpack.c.b16 %v997, %v991
  %v1436 = vpack.c.b16 %v998, %v992
  %v1437 = vpack.c.b16 %v999, %v993
  %v1438 = vpack.c.b16 %v1000, %v994
  %v1439 = vpack.c.b16 %v1007, %v1001
  %v1440 = vpack.c.b16 %v1008, %v1002
  %v1441 = vpack.c.b16 %v1009, %v1003
  %v1442 = vpack.c.b16 %v1010, %v1004
  %v1443 = vpack.c.b16 %v1011, %v1005
  %v1444 = vpack.c.b16 %v1012, %v1006
  %v1445 = vpack.c.b16 %v1019, %v1013
  %v1446 = vpack.c.b16 %v1020, %v1014
  %v1447 = vpack.c.b16 %v1021, %v1015
  %v1448 = vpack.c.b16 %v1022, %v1016
  %v1449 = vpack.c.b16 %v1023, %v1017
  %v1450 = vpack.c.b16 %v1024, %v1018
  %v1451 = vpack.c.b16 %v1031, %v1025
  %v1452 = vpack.c.b16 %v1032, %v1026
  %v1453 = vpack.c.b16 %v1033, %v1027
  %v1454 = vpack.c.b16 %v1034, %v1028
  %v1455 = vpack.c.b16 %v1035, %v1029
  %v1456 = vpack.c.b16 %v1036, %v1030
  %v1457 = vpack.c.b16 %v1043, %v1037
  %v1458 = vpack.c.b16 %v1044, %v1038
  %v1459 = vpack.c.b16 %v1045, %v1039
  %v1460 = vpack.c.b16 %v1046, %v1040
  %v1461 = vpack.c.b16 %v1047, %v1041
  %v1462 = vpack.c.b16 %v1048, %v1042
  %v1463 = vpack.c.b16 %v1055, %v1049
  %v1464 = vpack.c.b16 %v1056, %v1050
  %v1465 = vpack.c.b16 %v1057, %v1051
  %v1466 = vpack.c.b16 %v1058, %v1052
  %v1467 = vpack.c.b16 %v1059, %v1053
  %v1468 = vpack.c.b16 %v1060, %v1054
  %v1469 = vpack.c.b16 %v1067, %v1061
  %v1470 = vpack.c.b16 %v1068, %v1062
  %v1471 = vpack.c.b16 %v1069, %v1063
  %v1472 = vpack.c.b16 %v1070, %v1064
  %v1473 = vpack.c.b16 %v1071, %v1065
  %v1474 = vpack.c.b16 %v1072, %v1066
  %v1475 = vpack.c.b16 %v1079, %v1073
  %v1476 = vpack.c.b16 %v1080, %v1074
  %v1477 = vpack.c.b16 %v1081, %v1075
  %v1478 = vpack.c.b16 %v1082, %v1076
  %v1479 = vpack.c.b16 %v1083, %v1077
  %v1480 = vpack.c.b16 %v1084, %v1078
  %v1481 = vpack.c.b16 %v1091, %v1085
  %v1482 = vpack.c.b16 %v1092, %v1086
  %v1483 = vpack.c.b16 %v1093, %v1087
  %v1484 = vpack.c.b16 %v1094, %v1088
  %v1485 = vpack.c.b16 %v1095, %v1089
  %v1486 = vpack.c.b16 %v1096, %v1090
  %v1487 = vpack.c.b16 %v1103, %v1097
  %v1488 = vpack.c.b16 %v1104, %v1098
  %v1489 = vpack.c.b16 %v1105, %v1099
  %v1490 = vpack.c.b16 %v1106, %v1100
  %v1491 = vpack.c.b16 %v1107, %v1101
  %v1492 = vpack.c.b16 %v1108, %v1102
  %v1493 = vpack.c.b16 %v1115, %v1109
  %v1494 = vpack.c.b16 %v1116, %v1110
  %v1495 = vpack.c.b16 %v1117, %v1111
  %v1496 = vpack.c.b16 %v1118, %v1112
  %v1497 = vpack.c.b16 %v1119, %v1113
  %v1498 = vpack.c.b16 %v1120, %v1114
  %v1499 = vpack.c.b16 %v1127, %v1121
  %v1500 = vpack.c.b16 %v1128, %v1122
  %v1501 = vpack.c.b16 %v1129, %v1123
  %v1502 = vpack.c.b16 %v1130, %v1124
  %v1503 = vpack.c.b16 %v1131, %v1125
  %v1504 = vpack.c.b16 %v1132, %v1126
  %v1505 = vpack.c.b16 %v1139, %v1133
  %v1506 = vpack.c.b16 %v1140, %v1134
  %v1507 = vpack.c.b16 %v1141, %v1135
  %v1508 = vpack.c.b16 %v1142, %v1136
  %v1509 = vpack.c.b16 %v1143, %v1137
  %v1510 = vpack.c.b16 %v1144, %v1138
  %v1511 = vpack.c.b16 %v1151, %v1145
  %v1512 = vpack.c.b16 %v1152, %v1146
  %v1513 = vpack.c.b16 %v1153, %v1147
  %v1514 = vpack.c.b16 %v1154, %v1148
  %v1515 = vpack.c.b16 %v1155, %v1149
  %v1516 = vpack.c.b16 %v1156, %v1150
  %v1517 = vpack.c.b16 %v1163, %v1157
  %v1518 = vpack.c.b16 %v1164, %v1158
  %v1519 = vpack.c.b16 %v1165, %v1159
  %v1520 = vpack.c.b16 %v1166, %v1160
  %v1521 = vpack.c.b16 %v1167, %v1161
  %v1522 = vpack.c.b16 %v1168, %v1162
  %v1523 = vpack.c.b16 %v1175, %v1169
  %v1524 = vpack.c.b16 %v1176, %v1170
  %v1525 = vpack.c.b16 %v1177, %v1171
  %v1526 = vpack.c.b16 %v1178, %v1172
  %v1527 = vpack.c.b16 %v1179, %v1173
  %v1528 = vpack.c.b16 %v1180, %v1174
  %v1529 = vpack.c.b16 %v1187, %v1181
  %v1530 = vpack.c.b16 %v1188, %v1182
  %v1531 = vpack.c.b16 %v1189, %v1183
  %v1532 = vpack.c.b16 %v1190, %v1184
  %v1533 = vpack.c.b16 %v1191, %v1185
  %v1534 = vpack.c.b16 %v1192, %v1186
  %v1535 = vpack.c.b16 %v1199, %v1193
  %v1536 = vpack.c.b16 %v1200, %v1194
  %v1537 = vpack.c.b16 %v1201, %v1195
  %v1538 = vpack.c.b16 %v1202, %v1196
  %v1539 = vpack.c.b16 %v1203, %v1197
  %v1540 = vpack.c.b16 %v1204, %v1198
  %v1541 = vpack.c.b16 %v1211, %v1205
  %v1542 = vpack.c.b16 %v1212, %v1206
  %v1543 = vpack.c.b16 %v1213, %v1207
  %v1544 = vpack.c.b16 %v1214, %v1208
  %v1545 = vpack.c.b16 %v1215, %v1209
  %v1546 = vpack.c.b16 %v1216, %v1210
  %v1547 = vpack.c.b16 %v1223, %v1217
  %v1548 = vpack.c.b16 %v1224, %v1218
  %v1549 = vpack.c.b16 %v1225, %v1219
  %v1550 = vpack.c.b16 %v1226, %v1220
  %v1551 = vpack.c.b16 %v1227, %v1221
  %v1552 = vpack.c.b16 %v1228, %v1222
  %v1553 = vpack.c.b16 %v1235, %v1229
  %v1554 = vpack.c.b16 %v1236, %v1230
  %v1555 = vpack.c.b16 %v1237, %v1231
  %v1556 = vpack.c.b16 %v1238, %v1232
  %v1557 = vpack.c.b16 %v1239, %v1233
  %v1558 = vpack.c.b16 %v1240, %v1234
  %v1559 = vpack.c.b16 %v1247, %v1241
  %v1560 = vpack.c.b16 %v1248, %v1242
  %v1561 = vpack.c.b16 %v1249, %v1243
  %v1562 = vpack.c.b16 %v1250, %v1244
  %v1563 = vpack.c.b16 %v1251, %v1245
  %v1564 = vpack.c.b16 %v1252, %v1246
  %v1565 = vpack.c.b16 %v1259, %v1253
  %v1566 = vpack.c.b16 %v1260, %v1254
  %v1567 = vpack.c.b16 %v1261, %v1255
  %v1568 = vpack.c.b16 %v1262, %v1256
  %v1569 = vpack.c.b16 %v1263, %v1257
  %v1570 = vpack.c.b16 %v1264, %v1258
  %v1571 = vpack.c.b16 %v1271, %v1265
  %v1572 = vpack.c.b16 %v1272, %v1266
  %v1573 = vpack.c.b16 %v1273, %v1267
  %v1574 = vpack.c.b16 %v1274, %v1268
  %v1575 = vpack.c.b16 %v1275, %v1269
  %v1576 = vpack.c.b16 %v1276, %v1270
  %v1577 = vpack.c.b16 %v1283, %v1277
  %v1578 = vpack.c.b16 %v1284, %v1278
  %v1579 = vpack.c.b16 %v1285, %v1279
  %v1580 = vpack.c.b16 %v1286, %v1280
  %v1581 = vpack.c.b16 %v1287, %v1281
  %v1582 = vpack.c.b16 %v1288, %v1282
  %v1583 = vpack.c.b16 %v1295, %v1289
  %v1584 = vpack.c.b16 %v1296, %v1290
  %v1585 = vpack.c.b16 %v1297, %v1291
  %v1586 = vpack.c.b16 %v1298, %v1292
  %v1587 = vpack.c.b16 %v1299, %v1293
  %v1588 = vpack.c.b16 %v1300, %v1294
  %1877 = vmatprep.subr.bf16.mxu0 %v1344
  %1878 = vmatpush1.bf16.msra.mxu0 %v1343
  %1879 = vmatprep.subr.bf16.mxu0 %v1338
  %1880 = vmatpush1.bf16.msra.mxu0 %v1337
  %1881 = vmatprep.subr.bf16.mxu0 %v1332
  %1882 = vmatpush1.bf16.msra.mxu0 %v1331
  %1883 = vmatprep.subr.bf16.mxu0 %v1326
  %1884 = vmatpush1.bf16.msra.mxu0 %v1325
  %1885 = vmatprep.subr.bf16.mxu0 %v1320
  %1886 = vmatpush1.bf16.msra.mxu0 %v1319
  %1887 = vmatprep.subr.bf16.mxu0 %v1314
  %1888 = vmatpush1.bf16.msra.mxu0 %v1313
  %1889 = vmatprep.subr.bf16.mxu0 %v1308
  %1890 = vmatpush1.bf16.msra.mxu0 %v1307
  %1891 = vmatprep.subr.bf16.mxu0 %v1302
  %1892 = vmatpush1.bf16.msra.mxu0 %v1301
  %1893 = vmatprep.subr.bf16.mxu0 %v1392
  %1894 = vmatpush2.bf16.msra.mxu0 %v1391
  %1895 = vmatprep.subr.bf16.mxu0 %v1386
  %1896 = vmatpush2.bf16.msra.mxu0 %v1385
  %1897 = vmatprep.subr.bf16.mxu0 %v1380
  %1898 = vmatpush2.bf16.msra.mxu0 %v1379
  %1899 = vmatprep.subr.bf16.mxu0 %v1374
  %1900 = vmatpush2.bf16.msra.mxu0 %v1373
  %1901 = vmatprep.subr.bf16.mxu0 %v1368
  %1902 = vmatpush2.bf16.msra.mxu0 %v1367
  %1903 = vmatprep.subr.bf16.mxu0 %v1362
  %1904 = vmatpush2.bf16.msra.mxu0 %v1361
  %1905 = vmatprep.subr.bf16.mxu0 %v1356
  %1906 = vmatpush2.bf16.msra.mxu0 %v1355
  %1907 = vmatprep.subr.bf16.mxu0 %v1350
  %1908 = vmatpush2.bf16.msra.mxu0 %v1349
  %1909 = vmatprep.mubr.bf16.mxu0 %v426
  %1910 = vmatmul.mubr.bf16.gmra.mxu0 %v425
  %v1911 = vpop.f32.mrf.mxu0
  %v1912 = vadd.f32 %v380, %v1911
  %v1913 = vpop.f32.mrf.mxu0
  %v1914 = vadd.f32 %v384, %v1913
  %v1915 = vpop.f32.mrf.mxu0
  %v1916 = vadd.f32 %v380, %v1915
  %v1917 = vpop.f32.mrf.mxu0
  %v1918 = vadd.f32 %v384, %v1917
  %1919 = vdwg.mxu0
  %1920 = vmatprep.subr.bf16.mxu0 %v1440
  %1921 = vmatpush1.bf16.msra.mxu0 %v1439
  %1922 = vmatprep.subr.bf16.mxu0 %v1434
  %1923 = vmatpush1.bf16.msra.mxu0 %v1433
  %1924 = vmatprep.subr.bf16.mxu0 %v1428
  %1925 = vmatpush1.bf16.msra.mxu0 %v1427
  %1926 = vmatprep.subr.bf16.mxu0 %v1422
  %1927 = vmatpush1.bf16.msra.mxu0 %v1421
  %1928 = vmatprep.subr.bf16.mxu0 %v1416
  %1929 = vmatpush1.bf16.msra.mxu0 %v1415
  %1930 = vmatprep.subr.bf16.mxu0 %v1410
  %1931 = vmatpush1.bf16.msra.mxu0 %v1409
  %1932 = vmatprep.subr.bf16.mxu0 %v1404
  %1933 = vmatpush1.bf16.msra.mxu0 %v1403
  %1934 = vmatprep.subr.bf16.mxu0 %v1398
  %1935 = vmatpush1.bf16.msra.mxu0 %v1397
  %1936 = vmatprep.subr.bf16.mxu0 %v1488
  %1937 = vmatpush2.bf16.msra.mxu0 %v1487
  %1938 = vmatprep.subr.bf16.mxu0 %v1482
  %1939 = vmatpush2.bf16.msra.mxu0 %v1481
  %1940 = vmatprep.subr.bf16.mxu0 %v1476
  %1941 = vmatpush2.bf16.msra.mxu0 %v1475
  %1942 = vmatprep.subr.bf16.mxu0 %v1470
  %1943 = vmatpush2.bf16.msra.mxu0 %v1469
  %1944 = vmatprep.subr.bf16.mxu0 %v1464
  %1945 = vmatpush2.bf16.msra.mxu0 %v1463
  %1946 = vmatprep.subr.bf16.mxu0 %v1458
  %1947 = vmatpush2.bf16.msra.mxu0 %v1457
  %1948 = vmatprep.subr.bf16.mxu0 %v1452
  %1949 = vmatpush2.bf16.msra.mxu0 %v1451
  %1950 = vmatprep.subr.bf16.mxu0 %v1446
  %1951 = vmatpush2.bf16.msra.mxu0 %v1445
  %1952 = vmatprep.mubr.bf16.mxu0 %v428
  %1953 = vmatmul.mubr.bf16.gmra.mxu0 %v427
  %v1954 = vpop.f32.mrf.mxu0
  %v1955 = vadd.f32 %v1912, %v1954
  %v1956 = vpop.f32.mrf.mxu0
  %v1957 = vadd.f32 %v1914, %v1956
  %v1958 = vpop.f32.mrf.mxu0
  %v1959 = vadd.f32 %v1916, %v1958
  %v1960 = vpop.f32.mrf.mxu0
  %v1961 = vadd.f32 %v1918, %v1960
  %1962 = vdwg.mxu0
  %1963 = vmatprep.subr.bf16.mxu0 %v1536
  %1964 = vmatpush1.bf16.msra.mxu0 %v1535
  %1965 = vmatprep.subr.bf16.mxu0 %v1530
  %1966 = vmatpush1.bf16.msra.mxu0 %v1529
  %1967 = vmatprep.subr.bf16.mxu0 %v1524
  %1968 = vmatpush1.bf16.msra.mxu0 %v1523
  %1969 = vmatprep.subr.bf16.mxu0 %v1518
  %1970 = vmatpush1.bf16.msra.mxu0 %v1517
  %1971 = vmatprep.subr.bf16.mxu0 %v1512
  %1972 = vmatpush1.bf16.msra.mxu0 %v1511
  %1973 = vmatprep.subr.bf16.mxu0 %v1506
  %1974 = vmatpush1.bf16.msra.mxu0 %v1505
  %1975 = vmatprep.subr.bf16.mxu0 %v1500
  %1976 = vmatpush1.bf16.msra.mxu0 %v1499
  %1977 = vmatprep.subr.bf16.mxu0 %v1494
  %1978 = vmatpush1.bf16.msra.mxu0 %v1493
  %1979 = vmatprep.subr.bf16.mxu0 %v1584
  %1980 = vmatpush2.bf16.msra.mxu0 %v1583
  %1981 = vmatprep.subr.bf16.mxu0 %v1578
  %1982 = vmatpush2.bf16.msra.mxu0 %v1577
  %1983 = vmatprep.subr.bf16.mxu0 %v1572
  %1984 = vmatpush2.bf16.msra.mxu0 %v1571
  %1985 = vmatprep.subr.bf16.mxu0 %v1566
  %1986 = vmatpush2.bf16.msra.mxu0 %v1565
  %1987 = vmatprep.subr.bf16.mxu0 %v1560
  %1988 = vmatpush2.bf16.msra.mxu0 %v1559
  %1989 = vmatprep.subr.bf16.mxu0 %v1554
  %1990 = vmatpush2.bf16.msra.mxu0 %v1553
  %1991 = vmatprep.subr.bf16.mxu0 %v1548
  %1992 = vmatpush2.bf16.msra.mxu0 %v1547
  %1993 = vmatprep.subr.bf16.mxu0 %v1542
  %1994 = vmatpush2.bf16.msra.mxu0 %v1541
  %1995 = vmatprep.mubr.bf16.mxu0 %v430
  %1996 = vmatmul.mubr.bf16.gmra.mxu0 %v429
  %v1997 = vpop.f32.mrf.mxu0
  %v1998 = vadd.f32 %v1955, %v1997
  %v1999 = vpop.f32.mrf.mxu0
  %v2000 = vadd.f32 %v1957, %v1999
  %v2001 = vpop.f32.mrf.mxu0
  %v2002 = vadd.f32 %v1959, %v2001
  %v2003 = vpop.f32.mrf.mxu0
  %v2004 = vadd.f32 %v1961, %v2003
  %2005 = vdwg.mxu0
  %2006 = vmatprep.subr.bf16.mxu0 %v1346
  %2007 = vmatpush1.bf16.msra.mxu0 %v1345
  %2008 = vmatprep.subr.bf16.mxu0 %v1340
  %2009 = vmatpush1.bf16.msra.mxu0 %v1339
  %2010 = vmatprep.subr.bf16.mxu0 %v1334
  %2011 = vmatpush1.bf16.msra.mxu0 %v1333
  %2012 = vmatprep.subr.bf16.mxu0 %v1328
  %2013 = vmatpush1.bf16.msra.mxu0 %v1327
  %2014 = vmatprep.subr.bf16.mxu0 %v1322
  %2015 = vmatpush1.bf16.msra.mxu0 %v1321
  %2016 = vmatprep.subr.bf16.mxu0 %v1316
  %2017 = vmatpush1.bf16.msra.mxu0 %v1315
  %2018 = vmatprep.subr.bf16.mxu0 %v1310
  %2019 = vmatpush1.bf16.msra.mxu0 %v1309
  %2020 = vmatprep.subr.bf16.mxu0 %v1304
  %2021 = vmatpush1.bf16.msra.mxu0 %v1303
  %2022 = vmatprep.subr.bf16.mxu0 %v1394
  %2023 = vmatpush2.bf16.msra.mxu0 %v1393
  %2024 = vmatprep.subr.bf16.mxu0 %v1388
  %2025 = vmatpush2.bf16.msra.mxu0 %v1387
  %2026 = vmatprep.subr.bf16.mxu0 %v1382
  %2027 = vmatpush2.bf16.msra.mxu0 %v1381
  %2028 = vmatprep.subr.bf16.mxu0 %v1376
  %2029 = vmatpush2.bf16.msra.mxu0 %v1375
  %2030 = vmatprep.subr.bf16.mxu0 %v1370
  %2031 = vmatpush2.bf16.msra.mxu0 %v1369
  %2032 = vmatprep.subr.bf16.mxu0 %v1364
  %2033 = vmatpush2.bf16.msra.mxu0 %v1363
  %2034 = vmatprep.subr.bf16.mxu0 %v1358
  %2035 = vmatpush2.bf16.msra.mxu0 %v1357
  %2036 = vmatprep.subr.bf16.mxu0 %v1352
  %2037 = vmatpush2.bf16.msra.mxu0 %v1351
  %2038 = vmatprep.mubr.bf16.mxu0 %v426
  %2039 = vmatmul.mubr.bf16.gmra.mxu0 %v425
  %v2040 = vpop.f32.mrf.mxu0
  %v2041 = vadd.f32 %v388, %v2040
  %v2042 = vpop.f32.mrf.mxu0
  %v2043 = vadd.f32 %v392, %v2042
  %v2044 = vpop.f32.mrf.mxu0
  %v2045 = vadd.f32 %v388, %v2044
  %v2046 = vpop.f32.mrf.mxu0
  %v2047 = vadd.f32 %v392, %v2046
  %2048 = vdwg.mxu0
  %2049 = vmatprep.subr.bf16.mxu0 %v1442
  %2050 = vmatpush1.bf16.msra.mxu0 %v1441
  %2051 = vmatprep.subr.bf16.mxu0 %v1436
  %2052 = vmatpush1.bf16.msra.mxu0 %v1435
  %2053 = vmatprep.subr.bf16.mxu0 %v1430
  %2054 = vmatpush1.bf16.msra.mxu0 %v1429
  %2055 = vmatprep.subr.bf16.mxu0 %v1424
  %2056 = vmatpush1.bf16.msra.mxu0 %v1423
  %2057 = vmatprep.subr.bf16.mxu0 %v1418
  %2058 = vmatpush1.bf16.msra.mxu0 %v1417
  %2059 = vmatprep.subr.bf16.mxu0 %v1412
  %2060 = vmatpush1.bf16.msra.mxu0 %v1411
  %2061 = vmatprep.subr.bf16.mxu0 %v1406
  %2062 = vmatpush1.bf16.msra.mxu0 %v1405
  %2063 = vmatprep.subr.bf16.mxu0 %v1400
  %2064 = vmatpush1.bf16.msra.mxu0 %v1399
  %2065 = vmatprep.subr.bf16.mxu0 %v1490
  %2066 = vmatpush2.bf16.msra.mxu0 %v1489
  %2067 = vmatprep.subr.bf16.mxu0 %v1484
  %2068 = vmatpush2.bf16.msra.mxu0 %v1483
  %2069 = vmatprep.subr.bf16.mxu0 %v1478
  %2070 = vmatpush2.bf16.msra.mxu0 %v1477
  %2071 = vmatprep.subr.bf16.mxu0 %v1472
  %2072 = vmatpush2.bf16.msra.mxu0 %v1471
  %2073 = vmatprep.subr.bf16.mxu0 %v1466
  %2074 = vmatpush2.bf16.msra.mxu0 %v1465
  %2075 = vmatprep.subr.bf16.mxu0 %v1460
  %2076 = vmatpush2.bf16.msra.mxu0 %v1459
  %2077 = vmatprep.subr.bf16.mxu0 %v1454
  %2078 = vmatpush2.bf16.msra.mxu0 %v1453
  %2079 = vmatprep.subr.bf16.mxu0 %v1448
  %2080 = vmatpush2.bf16.msra.mxu0 %v1447
  %2081 = vmatprep.mubr.bf16.mxu0 %v428
  %2082 = vmatmul.mubr.bf16.gmra.mxu0 %v427
  %v2083 = vpop.f32.mrf.mxu0
  %v2084 = vadd.f32 %v2041, %v2083
  %v2085 = vpop.f32.mrf.mxu0
  %v2086 = vadd.f32 %v2043, %v2085
  %v2087 = vpop.f32.mrf.mxu0
  %v2088 = vadd.f32 %v2045, %v2087
  %v2089 = vpop.f32.mrf.mxu0
  %v2090 = vadd.f32 %v2047, %v2089
  %2091 = vdwg.mxu0
  %2092 = vmatprep.subr.bf16.mxu0 %v1538
  %2093 = vmatpush1.bf16.msra.mxu0 %v1537
  %2094 = vmatprep.subr.bf16.mxu0 %v1532
  %2095 = vmatpush1.bf16.msra.mxu0 %v1531
  %2096 = vmatprep.subr.bf16.mxu0 %v1526
  %2097 = vmatpush1.bf16.msra.mxu0 %v1525
  %2098 = vmatprep.subr.bf16.mxu0 %v1520
  %2099 = vmatpush1.bf16.msra.mxu0 %v1519
  %2100 = vmatprep.subr.bf16.mxu0 %v1514
  %2101 = vmatpush1.bf16.msra.mxu0 %v1513
  %2102 = vmatprep.subr.bf16.mxu0 %v1508
  %2103 = vmatpush1.bf16.msra.mxu0 %v1507
  %2104 = vmatprep.subr.bf16.mxu0 %v1502
  %2105 = vmatpush1.bf16.msra.mxu0 %v1501
  %2106 = vmatprep.subr.bf16.mxu0 %v1496
  %2107 = vmatpush1.bf16.msra.mxu0 %v1495
  %2108 = vmatprep.subr.bf16.mxu0 %v1586
  %2109 = vmatpush2.bf16.msra.mxu0 %v1585
  %2110 = vmatprep.subr.bf16.mxu0 %v1580
  %2111 = vmatpush2.bf16.msra.mxu0 %v1579
  %2112 = vmatprep.subr.bf16.mxu0 %v1574
  %2113 = vmatpush2.bf16.msra.mxu0 %v1573
  %2114 = vmatprep.subr.bf16.mxu0 %v1568
  %2115 = vmatpush2.bf16.msra.mxu0 %v1567
  %2116 = vmatprep.subr.bf16.mxu0 %v1562
  %2117 = vmatpush2.bf16.msra.mxu0 %v1561
  %2118 = vmatprep.subr.bf16.mxu0 %v1556
  %2119 = vmatpush2.bf16.msra.mxu0 %v1555
  %2120 = vmatprep.subr.bf16.mxu0 %v1550
  %2121 = vmatpush2.bf16.msra.mxu0 %v1549
  %2122 = vmatprep.subr.bf16.mxu0 %v1544
  %2123 = vmatpush2.bf16.msra.mxu0 %v1543
  %2124 = vmatprep.mubr.bf16.mxu0 %v430
  %2125 = vmatmul.mubr.bf16.gmra.mxu0 %v429
  %v2126 = vpop.f32.mrf.mxu0
  %v2127 = vadd.f32 %v2084, %v2126
  %v2128 = vpop.f32.mrf.mxu0
  %v2129 = vadd.f32 %v2086, %v2128
  %v2130 = vpop.f32.mrf.mxu0
  %v2131 = vadd.f32 %v2088, %v2130
  %v2132 = vpop.f32.mrf.mxu0
  %v2133 = vadd.f32 %v2090, %v2132
  %2134 = vdwg.mxu0
  %2135 = vmatprep.subr.bf16.mxu0 %v1348
  %2136 = vmatpush1.bf16.msra.mxu0 %v1347
  %2137 = vmatprep.subr.bf16.mxu0 %v1342
  %2138 = vmatpush1.bf16.msra.mxu0 %v1341
  %2139 = vmatprep.subr.bf16.mxu0 %v1336
  %2140 = vmatpush1.bf16.msra.mxu0 %v1335
  %2141 = vmatprep.subr.bf16.mxu0 %v1330
  %2142 = vmatpush1.bf16.msra.mxu0 %v1329
  %2143 = vmatprep.subr.bf16.mxu0 %v1324
  %2144 = vmatpush1.bf16.msra.mxu0 %v1323
  %2145 = vmatprep.subr.bf16.mxu0 %v1318
  %2146 = vmatpush1.bf16.msra.mxu0 %v1317
  %2147 = vmatprep.subr.bf16.mxu0 %v1312
  %2148 = vmatpush1.bf16.msra.mxu0 %v1311
  %2149 = vmatprep.subr.bf16.mxu0 %v1306
  %2150 = vmatpush1.bf16.msra.mxu0 %v1305
  %2151 = vmatprep.subr.bf16.mxu0 %v1396
  %2152 = vmatpush2.bf16.msra.mxu0 %v1395
  %2153 = vmatprep.subr.bf16.mxu0 %v1390
  %2154 = vmatpush2.bf16.msra.mxu0 %v1389
  %2155 = vmatprep.subr.bf16.mxu0 %v1384
  %2156 = vmatpush2.bf16.msra.mxu0 %v1383
  %2157 = vmatprep.subr.bf16.mxu0 %v1378
  %2158 = vmatpush2.bf16.msra.mxu0 %v1377
  %2159 = vmatprep.subr.bf16.mxu0 %v1372
  %2160 = vmatpush2.bf16.msra.mxu0 %v1371
  %2161 = vmatprep.subr.bf16.mxu0 %v1366
  %2162 = vmatpush2.bf16.msra.mxu0 %v1365
  %2163 = vmatprep.subr.bf16.mxu0 %v1360
  %2164 = vmatpush2.bf16.msra.mxu0 %v1359
  %2165 = vmatprep.subr.bf16.mxu0 %v1354
  %2166 = vmatpush2.bf16.msra.mxu0 %v1353
  %2167 = vmatprep.mubr.bf16.mxu0 %v426
  %2168 = vmatmul.mubr.bf16.gmra.mxu0 %v425
  %v2169 = vpop.f32.mrf.mxu0
  %v2170 = vadd.f32 %v396, %v2169
  %v2171 = vpop.f32.mrf.mxu0
  %v2172 = vadd.f32 %v400, %v2171
  %v2173 = vpop.f32.mrf.mxu0
  %v2174 = vadd.f32 %v396, %v2173
  %v2175 = vpop.f32.mrf.mxu0
  %v2176 = vadd.f32 %v400, %v2175
  %2177 = vdwg.mxu0
  %2178 = vmatprep.subr.bf16.mxu0 %v1444
  %2179 = vmatpush1.bf16.msra.mxu0 %v1443
  %2180 = vmatprep.subr.bf16.mxu0 %v1438
  %2181 = vmatpush1.bf16.msra.mxu0 %v1437
  %2182 = vmatprep.subr.bf16.mxu0 %v1432
  %2183 = vmatpush1.bf16.msra.mxu0 %v1431
  %2184 = vmatprep.subr.bf16.mxu0 %v1426
  %2185 = vmatpush1.bf16.msra.mxu0 %v1425
  %2186 = vmatprep.subr.bf16.mxu0 %v1420
  %2187 = vmatpush1.bf16.msra.mxu0 %v1419
  %2188 = vmatprep.subr.bf16.mxu0 %v1414
  %2189 = vmatpush1.bf16.msra.mxu0 %v1413
  %2190 = vmatprep.subr.bf16.mxu0 %v1408
  %2191 = vmatpush1.bf16.msra.mxu0 %v1407
  %2192 = vmatprep.subr.bf16.mxu0 %v1402
  %2193 = vmatpush1.bf16.msra.mxu0 %v1401
  %2194 = vmatprep.subr.bf16.mxu0 %v1492
  %2195 = vmatpush2.bf16.msra.mxu0 %v1491
  %2196 = vmatprep.subr.bf16.mxu0 %v1486
  %2197 = vmatpush2.bf16.msra.mxu0 %v1485
  %2198 = vmatprep.subr.bf16.mxu0 %v1480
  %2199 = vmatpush2.bf16.msra.mxu0 %v1479
  %2200 = vmatprep.subr.bf16.mxu0 %v1474
  %2201 = vmatpush2.bf16.msra.mxu0 %v1473
  %2202 = vmatprep.subr.bf16.mxu0 %v1468
  %2203 = vmatpush2.bf16.msra.mxu0 %v1467
  %2204 = vmatprep.subr.bf16.mxu0 %v1462
  %2205 = vmatpush2.bf16.msra.mxu0 %v1461
  %2206 = vmatprep.subr.bf16.mxu0 %v1456
  %2207 = vmatpush2.bf16.msra.mxu0 %v1455
  %2208 = vmatprep.subr.bf16.mxu0 %v1450
  %2209 = vmatpush2.bf16.msra.mxu0 %v1449
  %2210 = vmatprep.mubr.bf16.mxu0 %v428
  %2211 = vmatmul.mubr.bf16.gmra.mxu0 %v427
  %v2212 = vpop.f32.mrf.mxu0
  %v2213 = vadd.f32 %v2170, %v2212
  %v2214 = vpop.f32.mrf.mxu0
  %v2215 = vadd.f32 %v2172, %v2214
  %v2216 = vpop.f32.mrf.mxu0
  %v2217 = vadd.f32 %v2174, %v2216
  %v2218 = vpop.f32.mrf.mxu0
  %v2219 = vadd.f32 %v2176, %v2218
  %2220 = vdwg.mxu0
  %2221 = vmatprep.subr.bf16.mxu0 %v1540
  %2222 = vmatpush1.bf16.msra.mxu0 %v1539
  %2223 = vmatprep.subr.bf16.mxu0 %v1534
  %2224 = vmatpush1.bf16.msra.mxu0 %v1533
  %2225 = vmatprep.subr.bf16.mxu0 %v1528
  %2226 = vmatpush1.bf16.msra.mxu0 %v1527
  %2227 = vmatprep.subr.bf16.mxu0 %v1522
  %2228 = vmatpush1.bf16.msra.mxu0 %v1521
  %2229 = vmatprep.subr.bf16.mxu0 %v1516
  %2230 = vmatpush1.bf16.msra.mxu0 %v1515
  %2231 = vmatprep.subr.bf16.mxu0 %v1510
  %2232 = vmatpush1.bf16.msra.mxu0 %v1509
  %2233 = vmatprep.subr.bf16.mxu0 %v1504
  %2234 = vmatpush1.bf16.msra.mxu0 %v1503
  %2235 = vmatprep.subr.bf16.mxu0 %v1498
  %2236 = vmatpush1.bf16.msra.mxu0 %v1497
  %2237 = vmatprep.subr.bf16.mxu0 %v1588
  %2238 = vmatpush2.bf16.msra.mxu0 %v1587
  %2239 = vmatprep.subr.bf16.mxu0 %v1582
  %2240 = vmatpush2.bf16.msra.mxu0 %v1581
  %2241 = vmatprep.subr.bf16.mxu0 %v1576
  %2242 = vmatpush2.bf16.msra.mxu0 %v1575
  %2243 = vmatprep.subr.bf16.mxu0 %v1570
  %2244 = vmatpush2.bf16.msra.mxu0 %v1569
  %2245 = vmatprep.subr.bf16.mxu0 %v1564
  %2246 = vmatpush2.bf16.msra.mxu0 %v1563
  %2247 = vmatprep.subr.bf16.mxu0 %v1558
  %2248 = vmatpush2.bf16.msra.mxu0 %v1557
  %2249 = vmatprep.subr.bf16.mxu0 %v1552
  %2250 = vmatpush2.bf16.msra.mxu0 %v1551
  %2251 = vmatprep.subr.bf16.mxu0 %v1546
  %2252 = vmatpush2.bf16.msra.mxu0 %v1545
  %2253 = vmatprep.mubr.bf16.mxu0 %v430
  %2254 = vmatmul.mubr.bf16.gmra.mxu0 %v429
  %v2255 = vpop.f32.mrf.mxu0
  %v2256 = vadd.f32 %v2213, %v2255
  %v2257 = vpop.f32.mrf.mxu0
  %v2258 = vadd.f32 %v2215, %v2257
  %v2259 = vpop.f32.mrf.mxu0
  %v2260 = vadd.f32 %v2217, %v2259
  %v2261 = vpop.f32.mrf.mxu0
  %v2262 = vadd.f32 %v2219, %v2261
  %2263 = vdwg.mxu0
  %v2264 = vmul.f32 %v1998, 0.5
  %v2265 = vmul.f32 %v2000, 0.5
  %v2266 = vmul.f32 %v2127, 0.5
  %v2267 = vmul.f32 %v2129, 0.5
  %v2268 = vmul.f32 %v2256, 0.5
  %v2269 = vmul.f32 %v2258, 0.5
  %v2270 = vmul.f32 %v2002, 0.5
  %v2271 = vmul.f32 %v2004, 0.5
  %v2272 = vmul.f32 %v2131, 0.5
  %v2273 = vmul.f32 %v2133, 0.5
  %v2274 = vmul.f32 %v2260, 0.5
  %v2275 = vmul.f32 %v2262, 0.5
  %v2276 = vmul.f32 %v1998, 0.044715
  %v2277 = vmul.f32 %v2000, 0.044715
  %v2278 = vmul.f32 %v2127, 0.044715
  %v2279 = vmul.f32 %v2129, 0.044715
  %v2280 = vmul.f32 %v2256, 0.044715
  %v2281 = vmul.f32 %v2258, 0.044715
  %v2282 = vmul.f32 %v2002, 0.044715
  %v2283 = vmul.f32 %v2004, 0.044715
  %v2284 = vmul.f32 %v2131, 0.044715
  %v2285 = vmul.f32 %v2133, 0.044715
  %v2286 = vmul.f32 %v2260, 0.044715
  %v2287 = vmul.f32 %v2262, 0.044715
  %v2288 = vmul.f32 %v2276, %v1998
  %v2289 = vmul.f32 %v2277, %v2000
  %v2290 = vmul.f32 %v2278, %v2127
  %v2291 = vmul.f32 %v2279, %v2129
  %v2292 = vmul.f32 %v2280, %v2256
  %v2293 = vmul.f32 %v2281, %v2258
  %v2294 = vmul.f32 %v2282, %v2002
  %v2295 = vmul.f32 %v2283, %v2004
  %v2296 = vmul.f32 %v2284, %v2131
  %v2297 = vmul.f32 %v2285, %v2133
  %v2298 = vmul.f32 %v2286, %v2260
  %v2299 = vmul.f32 %v2287, %v2262
  %v2300 = vmul.f32 %v2288, %v1998
  %v2301 = vmul.f32 %v2289, %v2000
  %v2302 = vmul.f32 %v2290, %v2127
  %v2303 = vmul.f32 %v2291, %v2129
  %v2304 = vmul.f32 %v2292, %v2256
  %v2305 = vmul.f32 %v2293, %v2258
  %v2306 = vmul.f32 %v2294, %v2002
  %v2307 = vmul.f32 %v2295, %v2004
  %v2308 = vmul.f32 %v2296, %v2131
  %v2309 = vmul.f32 %v2297, %v2133
  %v2310 = vmul.f32 %v2298, %v2260
  %v2311 = vmul.f32 %v2299, %v2262
  %v2312 = vadd.f32 %v1998, %v2300
  %v2313 = vadd.f32 %v2000, %v2301
  %v2314 = vadd.f32 %v2127, %v2302
  %v2315 = vadd.f32 %v2129, %v2303
  %v2316 = vadd.f32 %v2256, %v2304
  %v2317 = vadd.f32 %v2258, %v2305
  %v2318 = vadd.f32 %v2002, %v2306
  %v2319 = vadd.f32 %v2004, %v2307
  %v2320 = vadd.f32 %v2131, %v2308
  %v2321 = vadd.f32 %v2133, %v2309
  %v2322 = vadd.f32 %v2260, %v2310
  %v2323 = vadd.f32 %v2262, %v2311
  %v2324 = vmul.f32 %v2312, 0.7978846
  %v2325 = vmul.f32 %v2313, 0.7978846
  %v2326 = vmul.f32 %v2314, 0.7978846
  %v2327 = vmul.f32 %v2315, 0.7978846
  %v2328 = vmul.f32 %v2316, 0.7978846
  %v2329 = vmul.f32 %v2317, 0.7978846
  %v2330 = vmul.f32 %v2318, 0.7978846
  %v2331 = vmul.f32 %v2319, 0.7978846
  %v2332 = vmul.f32 %v2320, 0.7978846
  %v2333 = vmul.f32 %v2321, 0.7978846
  %v2334 = vmul.f32 %v2322, 0.7978846
  %v2335 = vmul.f32 %v2323, 0.7978846
  %v2336 = vtanh.pop %v2324
  %v2337 = vtanh.pop %v2325
  %v2338 = vtanh.pop %v2326
  %v2339 = vtanh.pop %v2327
  %v2340 = vtanh.pop %v2328
  %v2341 = vtanh.pop %v2329
  %v2342 = vtanh.pop %v2330
  %v2343 = vtanh.pop %v2331
  %v2344 = vtanh.pop %v2332
  %v2345 = vtanh.pop %v2333
  %v2346 = vtanh.pop %v2334
  %v2347 = vtanh.pop %v2335
  %v2348 = vadd.f32 %v2336, 1.0
  %v2349 = vadd.f32 %v2337, 1.0
  %v2350 = vadd.f32 %v2338, 1.0
  %v2351 = vadd.f32 %v2339, 1.0
  %v2352 = vadd.f32 %v2340, 1.0
  %v2353 = vadd.f32 %v2341, 1.0
  %v2354 = vadd.f32 %v2342, 1.0
  %v2355 = vadd.f32 %v2343, 1.0
  %v2356 = vadd.f32 %v2344, 1.0
  %v2357 = vadd.f32 %v2345, 1.0
  %v2358 = vadd.f32 %v2346, 1.0
  %v2359 = vadd.f32 %v2347, 1.0
  %v2360 = vmul.f32 %v2264, %v2348
  %v2361 = vmul.f32 %v2265, %v2349
  %v2362 = vmul.f32 %v2266, %v2350
  %v2363 = vmul.f32 %v2267, %v2351
  %v2364 = vmul.f32 %v2268, %v2352
  %v2365 = vmul.f32 %v2269, %v2353
  %v2366 = vmul.f32 %v2270, %v2354
  %v2367 = vmul.f32 %v2271, %v2355
  %v2368 = vmul.f32 %v2272, %v2356
  %v2369 = vmul.f32 %v2273, %v2357
  %v2370 = vmul.f32 %v2274, %v2358
  %v2371 = vmul.f32 %v2275, %v2359
  %v2372 = vadd.f32 %v2360, %v2361
  %v2373 = vadd.f32 %v2372, %v2362
  %v2374 = vadd.f32 %v2373, %v2363
  %v2375 = vadd.f32 %v2374, %v2364
  %v2376 = vadd.f32 %v2375, %v2365
  %2377 = vadd.xlane.f32.xlu0 %v2376
  %v2378 = vpop.xlane.xlu0 %2377
  %v2379 = vadd.f32 %v2366, %v2367
  %v2380 = vadd.f32 %v2379, %v2368
  %v2381 = vadd.f32 %v2380, %v2369
  %v2382 = vadd.f32 %v2381, %v2370
  %v2383 = vadd.f32 %v2382, %v2371
  %2384 = vadd.xlane.f32.xlu0 %v2383
  %v2385 = vpop.xlane.xlu0 %2384
  %v2386 = vmul.f32 %v2360, %v2360
  %v2387 = vmul.f32 %v2361, %v2361
  %v2388 = vmul.f32 %v2362, %v2362
  %v2389 = vmul.f32 %v2363, %v2363
  %v2390 = vmul.f32 %v2364, %v2364
  %v2391 = vmul.f32 %v2365, %v2365
  %v2392 = vmul.f32 %v2366, %v2366
  %v2393 = vmul.f32 %v2367, %v2367
  %v2394 = vmul.f32 %v2368, %v2368
  %v2395 = vmul.f32 %v2369, %v2369
  %v2396 = vmul.f32 %v2370, %v2370
  %v2397 = vmul.f32 %v2371, %v2371
  %v2398 = vadd.f32 %v2386, %v2387
  %v2399 = vadd.f32 %v2398, %v2388
  %v2400 = vadd.f32 %v2399, %v2389
  %v2401 = vadd.f32 %v2400, %v2390
  %v2402 = vadd.f32 %v2401, %v2391
  %2403 = vadd.xlane.f32.xlu0 %v2402
  %v2404 = vpop.xlane.xlu0 %2403
  %v2405 = vadd.f32 %v2392, %v2393
  %v2406 = vadd.f32 %v2405, %v2394
  %v2407 = vadd.f32 %v2406, %v2395
  %v2408 = vadd.f32 %v2407, %v2396
  %v2409 = vadd.f32 %v2408, %v2397
  %2410 = vadd.xlane.f32.xlu0 %v2409
  %v2411 = vpop.xlane.xlu0 %2410
  %v2412 = vmul.f32 %v2378, 0.0013020834
  %v2413 = vmul.f32 %v2385, 0.0013020834
  %v2414 = vmul.f32 %v2404, 0.0013020834
  %v2415 = vmul.f32 %v2411, 0.0013020834
  %v2416 = vmul.f32 %v2412, %v2412
  %v2417 = vmul.f32 %v2413, %v2413
  %v2418 = vsub.f32 %v2414, %v2416
  %v2419 = vsub.f32 %v2415, %v2417
  %v2420 = vsub.f32 %v2360, %v2412
  %v2421 = vsub.f32 %v2361, %v2412
  %v2422 = vsub.f32 %v2362, %v2412
  %v2423 = vsub.f32 %v2363, %v2412
  %v2424 = vsub.f32 %v2364, %v2412
  %v2425 = vsub.f32 %v2365, %v2412
  %v2426 = vsub.f32 %v2366, %v2413
  %v2427 = vsub.f32 %v2367, %v2413
  %v2428 = vsub.f32 %v2368, %v2413
  %v2429 = vsub.f32 %v2369, %v2413
  %v2430 = vsub.f32 %v2370, %v2413
  %v2431 = vsub.f32 %v2371, %v2413
  %v2432 = vadd.f32 %v2418, 1e-05
  %v2433 = vadd.f32 %v2419, 1e-05
  %v2434 = vrsqrt.pop %v2432
  %v2435 = vrsqrt.pop %v2433
  %v2436 = vmul.f32 %v2420, %v2434
  %v2437 = vmul.f32 %v2421, %v2434
  %v2438 = vmul.f32 %v2422, %v2434
  %v2439 = vmul.f32 %v2423, %v2434
  %v2440 = vmul.f32 %v2424, %v2434
  %v2441 = vmul.f32 %v2425, %v2434
  %v2442 = vmul.f32 %v2426, %v2435
  %v2443 = vmul.f32 %v2427, %v2435
  %v2444 = vmul.f32 %v2428, %v2435
  %v2445 = vmul.f32 %v2429, %v2435
  %v2446 = vmul.f32 %v2430, %v2435
  %v2447 = vmul.f32 %v2431, %v2435
  %v2448 = vld [vmem:[%s4] sm:$0x3f]
  %v2450 = vlaneseq
  %v2451 = vshrl.u32 %v2450, 7
  %v2452 = vsub.s32 0, %v2451
  %v2453 = vrot.slane %v2448, %v2452
  %v2454 = vlaneseq
  %v2455 = vshrl.u32 %v2454, 7
  %v2456 = vsub.s32 1, %v2455
  %v2457 = vrot.slane %v2448, %v2456
  %v2458 = vlaneseq
  %v2459 = vshrl.u32 %v2458, 7
  %v2460 = vsub.s32 2, %v2459
  %v2461 = vrot.slane %v2448, %v2460
  %v2462 = vlaneseq
  %v2463 = vshrl.u32 %v2462, 7
  %v2464 = vsub.s32 3, %v2463
  %v2465 = vrot.slane %v2448, %v2464
  %v2466 = vlaneseq
  %v2467 = vshrl.u32 %v2466, 7
  %v2468 = vsub.s32 4, %v2467
  %v2469 = vrot.slane %v2448, %v2468
  %v2470 = vlaneseq
  %v2471 = vshrl.u32 %v2470, 7
  %v2472 = vsub.s32 5, %v2471
  %v2473 = vrot.slane %v2448, %v2472
  %v2480 = vmul.f32 %v2436, %v2453
  %v2481 = vmul.f32 %v2437, %v2457
  %v2482 = vmul.f32 %v2438, %v2461
  %v2483 = vmul.f32 %v2439, %v2465
  %v2484 = vmul.f32 %v2440, %v2469
  %v2485 = vmul.f32 %v2441, %v2473
  %v2486 = vmul.f32 %v2442, %v2453
  %v2487 = vmul.f32 %v2443, %v2457
  %v2488 = vmul.f32 %v2444, %v2461
  %v2489 = vmul.f32 %v2445, %v2465
  %v2490 = vmul.f32 %v2446, %v2469
  %v2491 = vmul.f32 %v2447, %v2473
  %v2492 = vld [vmem:[%s5] sm:$0x3f]
  %v2494 = vlaneseq
  %v2495 = vshrl.u32 %v2494, 7
  %v2496 = vsub.s32 0, %v2495
  %v2497 = vrot.slane %v2492, %v2496
  %v2498 = vlaneseq
  %v2499 = vshrl.u32 %v2498, 7
  %v2500 = vsub.s32 1, %v2499
  %v2501 = vrot.slane %v2492, %v2500
  %v2502 = vlaneseq
  %v2503 = vshrl.u32 %v2502, 7
  %v2504 = vsub.s32 2, %v2503
  %v2505 = vrot.slane %v2492, %v2504
  %v2506 = vlaneseq
  %v2507 = vshrl.u32 %v2506, 7
  %v2508 = vsub.s32 3, %v2507
  %v2509 = vrot.slane %v2492, %v2508
  %v2510 = vlaneseq
  %v2511 = vshrl.u32 %v2510, 7
  %v2512 = vsub.s32 4, %v2511
  %v2513 = vrot.slane %v2492, %v2512
  %v2514 = vlaneseq
  %v2515 = vshrl.u32 %v2514, 7
  %v2516 = vsub.s32 5, %v2515
  %v2517 = vrot.slane %v2492, %v2516
  %v2524 = vadd.f32 %v2480, %v2497
  %v2525 = vadd.f32 %v2481, %v2501
  %v2526 = vadd.f32 %v2482, %v2505
  %v2527 = vadd.f32 %v2483, %v2509
  %v2528 = vadd.f32 %v2484, %v2513
  %v2529 = vadd.f32 %v2485, %v2517
  %v2530 = vadd.f32 %v2486, %v2497
  %v2531 = vadd.f32 %v2487, %v2501
  %v2532 = vadd.f32 %v2488, %v2505
  %v2533 = vadd.f32 %v2489, %v2509
  %v2534 = vadd.f32 %v2490, %v2513
  %v2535 = vadd.f32 %v2491, %v2517
  %v2536 = vpack.c.bf16 %v2530, %v2524
  %v2537 = vpack.c.bf16 %v2531, %v2525
  %v2538 = vpack.c.bf16 %v2532, %v2526
  %v2539 = vpack.c.bf16 %v2533, %v2527
  %v2540 = vpack.c.bf16 %v2534, %v2528
  %v2541 = vpack.c.bf16 %v2535, %v2529
  %v2542 = vld [vmem:[%s6] sm:$0xff]
  %v2543 = vld [vmem:[%s6 + $0x8] sm:$0xff]
  %v2544 = vld [vmem:[%s6 + $0x10] sm:$0xff]
  %v2545 = vld [vmem:[%s6 + $0x18] sm:$0xff]
  %v2546 = vld [vmem:[%s6 + $0x20] sm:$0xff]
  %v2547 = vld [vmem:[%s6 + $0x28] sm:$0xff]
  %v2548 = vld [vmem:[%s6 + $0x30] sm:$0xff]
  %v2549 = vld [vmem:[%s6 + $0x38] sm:$0xff]
  %v2550 = vld [vmem:[%s6 + $0x40] sm:$0xff]
  %v2551 = vld [vmem:[%s6 + $0x48] sm:$0xff]
  %v2552 = vld [vmem:[%s6 + $0x50] sm:$0xff]
  %v2553 = vld [vmem:[%s6 + $0x58] sm:$0xff]
  %v2554 = vld [vmem:[%s6 + $0x60] sm:$0xff]
  %v2555 = vld [vmem:[%s6 + $0x68] sm:$0xff]
  %v2556 = vld [vmem:[%s6 + $0x70] sm:$0xff]
  %v2557 = vld [vmem:[%s6 + $0x78] sm:$0xff]
  %v2558 = vld [vmem:[%s6 + $0x80] sm:$0xff]
  %v2559 = vld [vmem:[%s6 + $0x88] sm:$0xff]
  %v2560 = vld [vmem:[%s6 + $0x90] sm:$0xff]
  %v2561 = vld [vmem:[%s6 + $0x98] sm:$0xff]
  %v2562 = vld [vmem:[%s6 + $0xa0] sm:$0xff]
  %v2563 = vld [vmem:[%s6 + $0xa8] sm:$0xff]
  %v2564 = vld [vmem:[%s6 + $0xb0] sm:$0xff]
  %v2565 = vld [vmem:[%s6 + $0xb8] sm:$0xff]
  %v2566 = vld [vmem:[%s6 + $0xc0] sm:$0xff]
  %v2567 = vld [vmem:[%s6 + $0xc8] sm:$0xff]
  %v2568 = vld [vmem:[%s6 + $0xd0] sm:$0xff]
  %v2569 = vld [vmem:[%s6 + $0xd8] sm:$0xff]
  %v2570 = vld [vmem:[%s6 + $0xe0] sm:$0xff]
  %v2571 = vld [vmem:[%s6 + $0xe8] sm:$0xff]
  %v2572 = vld [vmem:[%s6 + $0xf0] sm:$0xff]
  %v2573 = vld [vmem:[%s6 + $0xf8] sm:$0xff]
  %v2574 = vld [vmem:[%s6 + $0x100] sm:$0xff]
  %v2575 = vld [vmem:[%s6 + $0x108] sm:$0xff]
  %v2576 = vld [vmem:[%s6 + $0x110] sm:$0xff]
  %v2577 = vld [vmem:[%s6 + $0x118] sm:$0xff]
  %v2578 = vld [vmem:[%s6 + $0x120] sm:$0xff]
  %v2579 = vld [vmem:[%s6 + $0x128] sm:$0xff]
  %v2580 = vld [vmem:[%s6 + $0x130] sm:$0xff]
  %v2581 = vld [vmem:[%s6 + $0x138] sm:$0xff]
  %v2582 = vld [vmem:[%s6 + $0x140] sm:$0xff]
  %v2583 = vld [vmem:[%s6 + $0x148] sm:$0xff]
  %v2584 = vld [vmem:[%s6 + $0x150] sm:$0xff]
  %v2585 = vld [vmem:[%s6 + $0x158] sm:$0xff]
  %v2586 = vld [vmem:[%s6 + $0x160] sm:$0xff]
  %v2587 = vld [vmem:[%s6 + $0x168] sm:$0xff]
  %v2588 = vld [vmem:[%s6 + $0x170] sm:$0xff]
  %v2589 = vld [vmem:[%s6 + $0x178] sm:$0xff]
  %v2590 = vld [vmem:[%s6 + $0x180] sm:$0xff]
  %v2591 = vld [vmem:[%s6 + $0x188] sm:$0xff]
  %v2592 = vld [vmem:[%s6 + $0x190] sm:$0xff]
  %v2593 = vld [vmem:[%s6 + $0x198] sm:$0xff]
  %v2594 = vld [vmem:[%s6 + $0x1a0] sm:$0xff]
  %v2595 = vld [vmem:[%s6 + $0x1a8] sm:$0xff]
  %v2596 = vld [vmem:[%s6 + $0x1b0] sm:$0xff]
  %v2597 = vld [vmem:[%s6 + $0x1b8] sm:$0xff]
  %v2598 = vld [vmem:[%s6 + $0x1c0] sm:$0xff]
  %v2599 = vld [vmem:[%s6 + $0x1c8] sm:$0xff]
  %v2600 = vld [vmem:[%s6 + $0x1d0] sm:$0xff]
  %v2601 = vld [vmem:[%s6 + $0x1d8] sm:$0xff]
  %v2602 = vld [vmem:[%s6 + $0x1e0] sm:$0xff]
  %v2603 = vld [vmem:[%s6 + $0x1e8] sm:$0xff]
  %v2604 = vld [vmem:[%s6 + $0x1f0] sm:$0xff]
  %v2605 = vld [vmem:[%s6 + $0x1f8] sm:$0xff]
  %v2606 = vld [vmem:[%s6 + $0x200] sm:$0xff]
  %v2607 = vld [vmem:[%s6 + $0x208] sm:$0xff]
  %v2608 = vld [vmem:[%s6 + $0x210] sm:$0xff]
  %v2609 = vld [vmem:[%s6 + $0x218] sm:$0xff]
  %v2610 = vld [vmem:[%s6 + $0x220] sm:$0xff]
  %v2611 = vld [vmem:[%s6 + $0x228] sm:$0xff]
  %v2612 = vld [vmem:[%s6 + $0x230] sm:$0xff]
  %v2613 = vld [vmem:[%s6 + $0x238] sm:$0xff]
  %v2614 = vld [vmem:[%s6 + $0x240] sm:$0xff]
  %v2615 = vld [vmem:[%s6 + $0x248] sm:$0xff]
  %v2616 = vld [vmem:[%s6 + $0x250] sm:$0xff]
  %v2617 = vld [vmem:[%s6 + $0x258] sm:$0xff]
  %v2618 = vld [vmem:[%s6 + $0x260] sm:$0xff]
  %v2619 = vld [vmem:[%s6 + $0x268] sm:$0xff]
  %v2620 = vld [vmem:[%s6 + $0x270] sm:$0xff]
  %v2621 = vld [vmem:[%s6 + $0x278] sm:$0xff]
  %v2622 = vld [vmem:[%s6 + $0x280] sm:$0xff]
  %v2623 = vld [vmem:[%s6 + $0x288] sm:$0xff]
  %v2624 = vld [vmem:[%s6 + $0x290] sm:$0xff]
  %v2625 = vld [vmem:[%s6 + $0x298] sm:$0xff]
  %v2626 = vld [vmem:[%s6 + $0x2a0] sm:$0xff]
  %v2627 = vld [vmem:[%s6 + $0x2a8] sm:$0xff]
  %v2628 = vld [vmem:[%s6 + $0x2b0] sm:$0xff]
  %v2629 = vld [vmem:[%s6 + $0x2b8] sm:$0xff]
  %v2630 = vld [vmem:[%s6 + $0x2c0] sm:$0xff]
  %v2631 = vld [vmem:[%s6 + $0x2c8] sm:$0xff]
  %v2632 = vld [vmem:[%s6 + $0x2d0] sm:$0xff]
  %v2633 = vld [vmem:[%s6 + $0x2d8] sm:$0xff]
  %v2634 = vld [vmem:[%s6 + $0x2e0] sm:$0xff]
  %v2635 = vld [vmem:[%s6 + $0x2e8] sm:$0xff]
  %v2636 = vld [vmem:[%s6 + $0x2f0] sm:$0xff]
  %v2637 = vld [vmem:[%s6 + $0x2f8] sm:$0xff]
  %v2638 = vld [vmem:[%s6 + $0x300] sm:$0xff]
  %v2639 = vld [vmem:[%s6 + $0x308] sm:$0xff]
  %v2640 = vld [vmem:[%s6 + $0x310] sm:$0xff]
  %v2641 = vld [vmem:[%s6 + $0x318] sm:$0xff]
  %v2642 = vld [vmem:[%s6 + $0x320] sm:$0xff]
  %v2643 = vld [vmem:[%s6 + $0x328] sm:$0xff]
  %v2644 = vld [vmem:[%s6 + $0x330] sm:$0xff]
  %v2645 = vld [vmem:[%s6 + $0x338] sm:$0xff]
  %v2646 = vld [vmem:[%s6 + $0x340] sm:$0xff]
  %v2647 = vld [vmem:[%s6 + $0x348] sm:$0xff]
  %v2648 = vld [vmem:[%s6 + $0x350] sm:$0xff]
  %v2649 = vld [vmem:[%s6 + $0x358] sm:$0xff]
  %v2650 = vld [vmem:[%s6 + $0x360] sm:$0xff]
  %v2651 = vld [vmem:[%s6 + $0x368] sm:$0xff]
  %v2652 = vld [vmem:[%s6 + $0x370] sm:$0xff]
  %v2653 = vld [vmem:[%s6 + $0x378] sm:$0xff]
  %v2654 = vld [vmem:[%s6 + $0x380] sm:$0xff]
  %v2655 = vld [vmem:[%s6 + $0x388] sm:$0xff]
  %v2656 = vld [vmem:[%s6 + $0x390] sm:$0xff]
  %v2657 = vld [vmem:[%s6 + $0x398] sm:$0xff]
  %v2658 = vld [vmem:[%s6 + $0x3a0] sm:$0xff]
  %v2659 = vld [vmem:[%s6 + $0x3a8] sm:$0xff]
  %v2660 = vld [vmem:[%s6 + $0x3b0] sm:$0xff]
  %v2661 = vld [vmem:[%s6 + $0x3b8] sm:$0xff]
  %v2662 = vld [vmem:[%s6 + $0x3c0] sm:$0xff]
  %v2663 = vld [vmem:[%s6 + $0x3c8] sm:$0xff]
  %v2664 = vld [vmem:[%s6 + $0x3d0] sm:$0xff]
  %v2665 = vld [vmem:[%s6 + $0x3d8] sm:$0xff]
  %v2666 = vld [vmem:[%s6 + $0x3e0] sm:$0xff]
  %v2667 = vld [vmem:[%s6 + $0x3e8] sm:$0xff]
  %v2668 = vld [vmem:[%s6 + $0x3f0] sm:$0xff]
  %v2669 = vld [vmem:[%s6 + $0x3f8] sm:$0xff]
  %v2670 = vld [vmem:[%s6 + $0x400] sm:$0xff]
  %v2671 = vld [vmem:[%s6 + $0x408] sm:$0xff]
  %v2672 = vld [vmem:[%s6 + $0x410] sm:$0xff]
  %v2673 = vld [vmem:[%s6 + $0x418] sm:$0xff]
  %v2674 = vld [vmem:[%s6 + $0x420] sm:$0xff]
  %v2675 = vld [vmem:[%s6 + $0x428] sm:$0xff]
  %v2676 = vld [vmem:[%s6 + $0x430] sm:$0xff]
  %v2677 = vld [vmem:[%s6 + $0x438] sm:$0xff]
  %v2678 = vld [vmem:[%s6 + $0x440] sm:$0xff]
  %v2679 = vld [vmem:[%s6 + $0x448] sm:$0xff]
  %v2680 = vld [vmem:[%s6 + $0x450] sm:$0xff]
  %v2681 = vld [vmem:[%s6 + $0x458] sm:$0xff]
  %v2682 = vld [vmem:[%s6 + $0x460] sm:$0xff]
  %v2683 = vld [vmem:[%s6 + $0x468] sm:$0xff]
  %v2684 = vld [vmem:[%s6 + $0x470] sm:$0xff]
  %v2685 = vld [vmem:[%s6 + $0x478] sm:$0xff]
  %v2686 = vld [vmem:[%s6 + $0x480] sm:$0xff]
  %v2687 = vld [vmem:[%s6 + $0x488] sm:$0xff]
  %v2688 = vld [vmem:[%s6 + $0x490] sm:$0xff]
  %v2689 = vld [vmem:[%s6 + $0x498] sm:$0xff]
  %v2690 = vld [vmem:[%s6 + $0x4a0] sm:$0xff]
  %v2691 = vld [vmem:[%s6 + $0x4a8] sm:$0xff]
  %v2692 = vld [vmem:[%s6 + $0x4b0] sm:$0xff]
  %v2693 = vld [vmem:[%s6 + $0x4b8] sm:$0xff]
  %v2694 = vld [vmem:[%s6 + $0x4c0] sm:$0xff]
  %v2695 = vld [vmem:[%s6 + $0x4c8] sm:$0xff]
  %v2696 = vld [vmem:[%s6 + $0x4d0] sm:$0xff]
  %v2697 = vld [vmem:[%s6 + $0x4d8] sm:$0xff]
  %v2698 = vld [vmem:[%s6 + $0x4e0] sm:$0xff]
  %v2699 = vld [vmem:[%s6 + $0x4e8] sm:$0xff]
  %v2700 = vld [vmem:[%s6 + $0x4f0] sm:$0xff]
  %v2701 = vld [vmem:[%s6 + $0x4f8] sm:$0xff]
  %v2702 = vld [vmem:[%s6 + $0x500] sm:$0xff]
  %v2703 = vld [vmem:[%s6 + $0x508] sm:$0xff]
  %v2704 = vld [vmem:[%s6 + $0x510] sm:$0xff]
  %v2705 = vld [vmem:[%s6 + $0x518] sm:$0xff]
  %v2706 = vld [vmem:[%s6 + $0x520] sm:$0xff]
  %v2707 = vld [vmem:[%s6 + $0x528] sm:$0xff]
  %v2708 = vld [vmem:[%s6 + $0x530] sm:$0xff]
  %v2709 = vld [vmem:[%s6 + $0x538] sm:$0xff]
  %v2710 = vld [vmem:[%s6 + $0x540] sm:$0xff]
  %v2711 = vld [vmem:[%s6 + $0x548] sm:$0xff]
  %v2712 = vld [vmem:[%s6 + $0x550] sm:$0xff]
  %v2713 = vld [vmem:[%s6 + $0x558] sm:$0xff]
  %v2714 = vld [vmem:[%s6 + $0x560] sm:$0xff]
  %v2715 = vld [vmem:[%s6 + $0x568] sm:$0xff]
  %v2716 = vld [vmem:[%s6 + $0x570] sm:$0xff]
  %v2717 = vld [vmem:[%s6 + $0x578] sm:$0xff]
  %v2718 = vld [vmem:[%s6 + $0x580] sm:$0xff]
  %v2719 = vld [vmem:[%s6 + $0x588] sm:$0xff]
  %v2720 = vld [vmem:[%s6 + $0x590] sm:$0xff]
  %v2721 = vld [vmem:[%s6 + $0x598] sm:$0xff]
  %v2722 = vld [vmem:[%s6 + $0x5a0] sm:$0xff]
  %v2723 = vld [vmem:[%s6 + $0x5a8] sm:$0xff]
  %v2724 = vld [vmem:[%s6 + $0x5b0] sm:$0xff]
  %v2725 = vld [vmem:[%s6 + $0x5b8] sm:$0xff]
  %v2726 = vld [vmem:[%s6 + $0x5c0] sm:$0xff]
  %v2727 = vld [vmem:[%s6 + $0x5c8] sm:$0xff]
  %v2728 = vld [vmem:[%s6 + $0x5d0] sm:$0xff]
  %v2729 = vld [vmem:[%s6 + $0x5d8] sm:$0xff]
  %v2730 = vld [vmem:[%s6 + $0x5e0] sm:$0xff]
  %v2731 = vld [vmem:[%s6 + $0x5e8] sm:$0xff]
  %v2732 = vld [vmem:[%s6 + $0x5f0] sm:$0xff]
  %v2733 = vld [vmem:[%s6 + $0x5f8] sm:$0xff]
  %v2734 = vld [vmem:[%s7] sm:$0xf]
  %v2736 = vlaneseq
  %v2737 = vshrl.u32 %v2736, 7
  %v2738 = vsub.s32 0, %v2737
  %v2739 = vrot.slane %v2734, %v2738
  %v2740 = vlaneseq
  %v2741 = vshrl.u32 %v2740, 7
  %v2742 = vsub.s32 1, %v2741
  %v2743 = vrot.slane %v2734, %v2742
  %v2744 = vlaneseq
  %v2745 = vshrl.u32 %v2744, 7
  %v2746 = vsub.s32 2, %v2745
  %v2747 = vrot.slane %v2734, %v2746
  %v2748 = vlaneseq
  %v2749 = vshrl.u32 %v2748, 7
  %v2750 = vsub.s32 3, %v2749
  %v2751 = vrot.slane %v2734, %v2750
  %v2948 = vunpack.c.l.b16 %v2542
  %v2949 = vunpack.c.h.b16 %v2542
  %v2950 = vunpack.c.l.b16 %v2543
  %v2951 = vunpack.c.h.b16 %v2543
  %v2952 = vunpack.c.l.b16 %v2544
  %v2953 = vunpack.c.h.b16 %v2544
  %v2954 = vunpack.c.l.b16 %v2545
  %v2955 = vunpack.c.h.b16 %v2545
  %v2956 = vunpack.c.l.b16 %v2546
  %v2957 = vunpack.c.h.b16 %v2546
  %v2958 = vunpack.c.l.b16 %v2547
  %v2959 = vunpack.c.h.b16 %v2547
  %v2960 = vunpack.c.l.b16 %v2548
  %v2961 = vunpack.c.h.b16 %v2548
  %v2962 = vunpack.c.l.b16 %v2549
  %v2963 = vunpack.c.h.b16 %v2549
  %v2964 = vunpack.c.l.b16 %v2550
  %v2965 = vunpack.c.h.b16 %v2550
  %v2966 = vunpack.c.l.b16 %v2551
  %v2967 = vunpack.c.h.b16 %v2551
  %v2968 = vunpack.c.l.b16 %v2552
  %v2969 = vunpack.c.h.b16 %v2552
  %v2970 = vunpack.c.l.b16 %v2553
  %v2971 = vunpack.c.h.b16 %v2553
  %v2972 = vunpack.c.l.b16 %v2554
  %v2973 = vunpack.c.h.b16 %v2554
  %v2974 = vunpack.c.l.b16 %v2555
  %v2975 = vunpack.c.h.b16 %v2555
  %v2976 = vunpack.c.l.b16 %v2556
  %v2977 = vunpack.c.h.b16 %v2556
  %v2978 = vunpack.c.l.b16 %v2557
  %v2979 = vunpack.c.h.b16 %v2557
  %v2980 = vunpack.c.l.b16 %v2558
  %v2981 = vunpack.c.h.b16 %v2558
  %v2982 = vunpack.c.l.b16 %v2559
  %v2983 = vunpack.c.h.b16 %v2559
  %v2984 = vunpack.c.l.b16 %v2560
  %v2985 = vunpack.c.h.b16 %v2560
  %v2986 = vunpack.c.l.b16 %v2561
  %v2987 = vunpack.c.h.b16 %v2561
  %v2988 = vunpack.c.l.b16 %v2562
  %v2989 = vunpack.c.h.b16 %v2562
  %v2990 = vunpack.c.l.b16 %v2563
  %v2991 = vunpack.c.h.b16 %v2563
  %v2992 = vunpack.c.l.b16 %v2564
  %v2993 = vunpack.c.h.b16 %v2564
  %v2994 = vunpack.c.l.b16 %v2565
  %v2995 = vunpack.c.h.b16 %v2565
  %v2996 = vunpack.c.l.b16 %v2566
  %v2997 = vunpack.c.h.b16 %v2566
  %v2998 = vunpack.c.l.b16 %v2567
  %v2999 = vunpack.c.h.b16 %v2567
  %v3000 = vunpack.c.l.b16 %v2568
  %v3001 = vunpack.c.h.b16 %v2568
  %v3002 = vunpack.c.l.b16 %v2569
  %v3003 = vunpack.c.h.b16 %v2569
  %v3004 = vunpack.c.l.b16 %v2570
  %v3005 = vunpack.c.h.b16 %v2570
  %v3006 = vunpack.c.l.b16 %v2571
  %v3007 = vunpack.c.h.b16 %v2571
  %v3008 = vunpack.c.l.b16 %v2572
  %v3009 = vunpack.c.h.b16 %v2572
  %v3010 = vunpack.c.l.b16 %v2573
  %v3011 = vunpack.c.h.b16 %v2573
  %v3012 = vunpack.c.l.b16 %v2574
  %v3013 = vunpack.c.h.b16 %v2574
  %v3014 = vunpack.c.l.b16 %v2575
  %v3015 = vunpack.c.h.b16 %v2575
  %v3016 = vunpack.c.l.b16 %v2576
  %v3017 = vunpack.c.h.b16 %v2576
  %v3018 = vunpack.c.l.b16 %v2577
  %v3019 = vunpack.c.h.b16 %v2577
  %v3020 = vunpack.c.l.b16 %v2578
  %v3021 = vunpack.c.h.b16 %v2578
  %v3022 = vunpack.c.l.b16 %v2579
  %v3023 = vunpack.c.h.b16 %v2579
  %v3024 = vunpack.c.l.b16 %v2580
  %v3025 = vunpack.c.h.b16 %v2580
  %v3026 = vunpack.c.l.b16 %v2581
  %v3027 = vunpack.c.h.b16 %v2581
  %v3028 = vunpack.c.l.b16 %v2582
  %v3029 = vunpack.c.h.b16 %v2582
  %v3030 = vunpack.c.l.b16 %v2583
  %v3031 = vunpack.c.h.b16 %v2583
  %v3032 = vunpack.c.l.b16 %v2584
  %v3033 = vunpack.c.h.b16 %v2584
  %v3034 = vunpack.c.l.b16 %v2585
  %v3035 = vunpack.c.h.b16 %v2585
  %v3036 = vunpack.c.l.b16 %v2586
  %v3037 = vunpack.c.h.b16 %v2586
  %v3038 = vunpack.c.l.b16 %v2587
  %v3039 = vunpack.c.h.b16 %v2587
  %v3040 = vunpack.c.l.b16 %v2588
  %v3041 = vunpack.c.h.b16 %v2588
  %v3042 = vunpack.c.l.b16 %v2589
  %v3043 = vunpack.c.h.b16 %v2589
  %v3044 = vunpack.c.l.b16 %v2590
  %v3045 = vunpack.c.h.b16 %v2590
  %v3046 = vunpack.c.l.b16 %v2591
  %v3047 = vunpack.c.h.b16 %v2591
  %v3048 = vunpack.c.l.b16 %v2592
  %v3049 = vunpack.c.h.b16 %v2592
  %v3050 = vunpack.c.l.b16 %v2593
  %v3051 = vunpack.c.h.b16 %v2593
  %v3052 = vunpack.c.l.b16 %v2594
  %v3053 = vunpack.c.h.b16 %v2594
  %v3054 = vunpack.c.l.b16 %v2595
  %v3055 = vunpack.c.h.b16 %v2595
  %v3056 = vunpack.c.l.b16 %v2596
  %v3057 = vunpack.c.h.b16 %v2596
  %v3058 = vunpack.c.l.b16 %v2597
  %v3059 = vunpack.c.h.b16 %v2597
  %v3060 = vunpack.c.l.b16 %v2598
  %v3061 = vunpack.c.h.b16 %v2598
  %v3062 = vunpack.c.l.b16 %v2599
  %v3063 = vunpack.c.h.b16 %v2599
  %v3064 = vunpack.c.l.b16 %v2600
  %v3065 = vunpack.c.h.b16 %v2600
  %v3066 = vunpack.c.l.b16 %v2601
  %v3067 = vunpack.c.h.b16 %v2601
  %v3068 = vunpack.c.l.b16 %v2602
  %v3069 = vunpack.c.h.b16 %v2602
  %v3070 = vunpack.c.l.b16 %v2603
  %v3071 = vunpack.c.h.b16 %v2603
  %v3072 = vunpack.c.l.b16 %v2604
  %v3073 = vunpack.c.h.b16 %v2604
  %v3074 = vunpack.c.l.b16 %v2605
  %v3075 = vunpack.c.h.b16 %v2605
  %v3076 = vunpack.c.l.b16 %v2606
  %v3077 = vunpack.c.h.b16 %v2606
  %v3078 = vunpack.c.l.b16 %v2607
  %v3079 = vunpack.c.h.b16 %v2607
  %v3080 = vunpack.c.l.b16 %v2608
  %v3081 = vunpack.c.h.b16 %v2608
  %v3082 = vunpack.c.l.b16 %v2609
  %v3083 = vunpack.c.h.b16 %v2609
  %v3084 = vunpack.c.l.b16 %v2610
  %v3085 = vunpack.c.h.b16 %v2610
  %v3086 = vunpack.c.l.b16 %v2611
  %v3087 = vunpack.c.h.b16 %v2611
  %v3088 = vunpack.c.l.b16 %v2612
  %v3089 = vunpack.c.h.b16 %v2612
  %v3090 = vunpack.c.l.b16 %v2613
  %v3091 = vunpack.c.h.b16 %v2613
  %v3092 = vunpack.c.l.b16 %v2614
  %v3093 = vunpack.c.h.b16 %v2614
  %v3094 = vunpack.c.l.b16 %v2615
  %v3095 = vunpack.c.h.b16 %v2615
  %v3096 = vunpack.c.l.b16 %v2616
  %v3097 = vunpack.c.h.b16 %v2616
  %v3098 = vunpack.c.l.b16 %v2617
  %v3099 = vunpack.c.h.b16 %v2617
  %v3100 = vunpack.c.l.b16 %v2618
  %v3101 = vunpack.c.h.b16 %v2618
  %v3102 = vunpack.c.l.b16 %v2619
  %v3103 = vunpack.c.h.b16 %v2619
  %v3104 = vunpack.c.l.b16 %v2620
  %v3105 = vunpack.c.h.b16 %v2620
  %v3106 = vunpack.c.l.b16 %v2621
  %v3107 = vunpack.c.h.b16 %v2621
  %v3108 = vunpack.c.l.b16 %v2622
  %v3109 = vunpack.c.h.b16 %v2622
  %v3110 = vunpack.c.l.b16 %v2623
  %v3111 = vunpack.c.h.b16 %v2623
  %v3112 = vunpack.c.l.b16 %v2624
  %v3113 = vunpack.c.h.b16 %v2624
  %v3114 = vunpack.c.l.b16 %v2625
  %v3115 = vunpack.c.h.b16 %v2625
  %v3116 = vunpack.c.l.b16 %v2626
  %v3117 = vunpack.c.h.b16 %v2626
  %v3118 = vunpack.c.l.b16 %v2627
  %v3119 = vunpack.c.h.b16 %v2627
  %v3120 = vunpack.c.l.b16 %v2628
  %v3121 = vunpack.c.h.b16 %v2628
  %v3122 = vunpack.c.l.b16 %v2629
  %v3123 = vunpack.c.h.b16 %v2629
  %v3124 = vunpack.c.l.b16 %v2630
  %v3125 = vunpack.c.h.b16 %v2630
  %v3126 = vunpack.c.l.b16 %v2631
  %v3127 = vunpack.c.h.b16 %v2631
  %v3128 = vunpack.c.l.b16 %v2632
  %v3129 = vunpack.c.h.b16 %v2632
  %v3130 = vunpack.c.l.b16 %v2633
  %v3131 = vunpack.c.h.b16 %v2633
  %v3132 = vunpack.c.l.b16 %v2634
  %v3133 = vunpack.c.h.b16 %v2634
  %v3134 = vunpack.c.l.b16 %v2635
  %v3135 = vunpack.c.h.b16 %v2635
  %v3136 = vunpack.c.l.b16 %v2636
  %v3137 = vunpack.c.h.b16 %v2636
  %v3138 = vunpack.c.l.b16 %v2637
  %v3139 = vunpack.c.h.b16 %v2637
  %v3140 = vunpack.c.l.b16 %v2638
  %v3141 = vunpack.c.h.b16 %v2638
  %v3142 = vunpack.c.l.b16 %v2639
  %v3143 = vunpack.c.h.b16 %v2639
  %v3144 = vunpack.c.l.b16 %v2640
  %v3145 = vunpack.c.h.b16 %v2640
  %v3146 = vunpack.c.l.b16 %v2641
  %v3147 = vunpack.c.h.b16 %v2641
  %v3148 = vunpack.c.l.b16 %v2642
  %v3149 = vunpack.c.h.b16 %v2642
  %v3150 = vunpack.c.l.b16 %v2643
  %v3151 = vunpack.c.h.b16 %v2643
  %v3152 = vunpack.c.l.b16 %v2644
  %v3153 = vunpack.c.h.b16 %v2644
  %v3154 = vunpack.c.l.b16 %v2645
  %v3155 = vunpack.c.h.b16 %v2645
  %v3156 = vunpack.c.l.b16 %v2646
  %v3157 = vunpack.c.h.b16 %v2646
  %v3158 = vunpack.c.l.b16 %v2647
  %v3159 = vunpack.c.h.b16 %v2647
  %v3160 = vunpack.c.l.b16 %v2648
  %v3161 = vunpack.c.h.b16 %v2648
  %v3162 = vunpack.c.l.b16 %v2649
  %v3163 = vunpack.c.h.b16 %v2649
  %v3164 = vunpack.c.l.b16 %v2650
  %v3165 = vunpack.c.h.b16 %v2650
  %v3166 = vunpack.c.l.b16 %v2651
  %v3167 = vunpack.c.h.b16 %v2651
  %v3168 = vunpack.c.l.b16 %v2652
  %v3169 = vunpack.c.h.b16 %v2652
  %v3170 = vunpack.c.l.b16 %v2653
  %v3171 = vunpack.c.h.b16 %v2653
  %v3172 = vunpack.c.l.b16 %v2654
  %v3173 = vunpack.c.h.b16 %v2654
  %v3174 = vunpack.c.l.b16 %v2655
  %v3175 = vunpack.c.h.b16 %v2655
  %v3176 = vunpack.c.l.b16 %v2656
  %v3177 = vunpack.c.h.b16 %v2656
  %v3178 = vunpack.c.l.b16 %v2657
  %v3179 = vunpack.c.h.b16 %v2657
  %v3180 = vunpack.c.l.b16 %v2658
  %v3181 = vunpack.c.h.b16 %v2658
  %v3182 = vunpack.c.l.b16 %v2659
  %v3183 = vunpack.c.h.b16 %v2659
  %v3184 = vunpack.c.l.b16 %v2660
  %v3185 = vunpack.c.h.b16 %v2660
  %v3186 = vunpack.c.l.b16 %v2661
  %v3187 = vunpack.c.h.b16 %v2661
  %v3188 = vunpack.c.l.b16 %v2662
  %v3189 = vunpack.c.h.b16 %v2662
  %v3190 = vunpack.c.l.b16 %v2663
  %v3191 = vunpack.c.h.b16 %v2663
  %v3192 = vunpack.c.l.b16 %v2664
  %v3193 = vunpack.c.h.b16 %v2664
  %v3194 = vunpack.c.l.b16 %v2665
  %v3195 = vunpack.c.h.b16 %v2665
  %v3196 = vunpack.c.l.b16 %v2666
  %v3197 = vunpack.c.h.b16 %v2666
  %v3198 = vunpack.c.l.b16 %v2667
  %v3199 = vunpack.c.h.b16 %v2667
  %v3200 = vunpack.c.l.b16 %v2668
  %v3201 = vunpack.c.h.b16 %v2668
  %v3202 = vunpack.c.l.b16 %v2669
  %v3203 = vunpack.c.h.b16 %v2669
  %v3204 = vunpack.c.l.b16 %v2670
  %v3205 = vunpack.c.h.b16 %v2670
  %v3206 = vunpack.c.l.b16 %v2671
  %v3207 = vunpack.c.h.b16 %v2671
  %v3208 = vunpack.c.l.b16 %v2672
  %v3209 = vunpack.c.h.b16 %v2672
  %v3210 = vunpack.c.l.b16 %v2673
  %v3211 = vunpack.c.h.b16 %v2673
  %v3212 = vunpack.c.l.b16 %v2674
  %v3213 = vunpack.c.h.b16 %v2674
  %v3214 = vunpack.c.l.b16 %v2675
  %v3215 = vunpack.c.h.b16 %v2675
  %v3216 = vunpack.c.l.b16 %v2676
  %v3217 = vunpack.c.h.b16 %v2676
  %v3218 = vunpack.c.l.b16 %v2677
  %v3219 = vunpack.c.h.b16 %v2677
  %v3220 = vunpack.c.l.b16 %v2678
  %v3221 = vunpack.c.h.b16 %v2678
  %v3222 = vunpack.c.l.b16 %v2679
  %v3223 = vunpack.c.h.b16 %v2679
  %v3224 = vunpack.c.l.b16 %v2680
  %v3225 = vunpack.c.h.b16 %v2680
  %v3226 = vunpack.c.l.b16 %v2681
  %v3227 = vunpack.c.h.b16 %v2681
  %v3228 = vunpack.c.l.b16 %v2682
  %v3229 = vunpack.c.h.b16 %v2682
  %v3230 = vunpack.c.l.b16 %v2683
  %v3231 = vunpack.c.h.b16 %v2683
  %v3232 = vunpack.c.l.b16 %v2684
  %v3233 = vunpack.c.h.b16 %v2684
  %v3234 = vunpack.c.l.b16 %v2685
  %v3235 = vunpack.c.h.b16 %v2685
  %v3236 = vunpack.c.l.b16 %v2686
  %v3237 = vunpack.c.h.b16 %v2686
  %v3238 = vunpack.c.l.b16 %v2687
  %v3239 = vunpack.c.h.b16 %v2687
  %v3240 = vunpack.c.l.b16 %v2688
  %v3241 = vunpack.c.h.b16 %v2688
  %v3242 = vunpack.c.l.b16 %v2689
  %v3243 = vunpack.c.h.b16 %v2689
  %v3244 = vunpack.c.l.b16 %v2690
  %v3245 = vunpack.c.h.b16 %v2690
  %v3246 = vunpack.c.l.b16 %v2691
  %v3247 = vunpack.c.h.b16 %v2691
  %v3248 = vunpack.c.l.b16 %v2692
  %v3249 = vunpack.c.h.b16 %v2692
  %v3250 = vunpack.c.l.b16 %v2693
  %v3251 = vunpack.c.h.b16 %v2693
  %v3252 = vunpack.c.l.b16 %v2694
  %v3253 = vunpack.c.h.b16 %v2694
  %v3254 = vunpack.c.l.b16 %v2695
  %v3255 = vunpack.c.h.b16 %v2695
  %v3256 = vunpack.c.l.b16 %v2696
  %v3257 = vunpack.c.h.b16 %v2696
  %v3258 = vunpack.c.l.b16 %v2697
  %v3259 = vunpack.c.h.b16 %v2697
  %v3260 = vunpack.c.l.b16 %v2698
  %v3261 = vunpack.c.h.b16 %v2698
  %v3262 = vunpack.c.l.b16 %v2699
  %v3263 = vunpack.c.h.b16 %v2699
  %v3264 = vunpack.c.l.b16 %v2700
  %v3265 = vunpack.c.h.b16 %v2700
  %v3266 = vunpack.c.l.b16 %v2701
  %v3267 = vunpack.c.h.b16 %v2701
  %v3268 = vunpack.c.l.b16 %v2702
  %v3269 = vunpack.c.h.b16 %v2702
  %v3270 = vunpack.c.l.b16 %v2703
  %v3271 = vunpack.c.h.b16 %v2703
  %v3272 = vunpack.c.l.b16 %v2704
  %v3273 = vunpack.c.h.b16 %v2704
  %v3274 = vunpack.c.l.b16 %v2705
  %v3275 = vunpack.c.h.b16 %v2705
  %v3276 = vunpack.c.l.b16 %v2706
  %v3277 = vunpack.c.h.b16 %v2706
  %v3278 = vunpack.c.l.b16 %v2707
  %v3279 = vunpack.c.h.b16 %v2707
  %v3280 = vunpack.c.l.b16 %v2708
  %v3281 = vunpack.c.h.b16 %v2708
  %v3282 = vunpack.c.l.b16 %v2709
  %v3283 = vunpack.c.h.b16 %v2709
  %v3284 = vunpack.c.l.b16 %v2710
  %v3285 = vunpack.c.h.b16 %v2710
  %v3286 = vunpack.c.l.b16 %v2711
  %v3287 = vunpack.c.h.b16 %v2711
  %v3288 = vunpack.c.l.b16 %v2712
  %v3289 = vunpack.c.h.b16 %v2712
  %v3290 = vunpack.c.l.b16 %v2713
  %v3291 = vunpack.c.h.b16 %v2713
  %v3292 = vunpack.c.l.b16 %v2714
  %v3293 = vunpack.c.h.b16 %v2714
  %v3294 = vunpack.c.l.b16 %v2715
  %v3295 = vunpack.c.h.b16 %v2715
  %v3296 = vunpack.c.l.b16 %v2716
  %v3297 = vunpack.c.h.b16 %v2716
  %v3298 = vunpack.c.l.b16 %v2717
  %v3299 = vunpack.c.h.b16 %v2717
  %v3300 = vunpack.c.l.b16 %v2718
  %v3301 = vunpack.c.h.b16 %v2718
  %v3302 = vunpack.c.l.b16 %v2719
  %v3303 = vunpack.c.h.b16 %v2719
  %v3304 = vunpack.c.l.b16 %v2720
  %v3305 = vunpack.c.h.b16 %v2720
  %v3306 = vunpack.c.l.b16 %v2721
  %v3307 = vunpack.c.h.b16 %v2721
  %v3308 = vunpack.c.l.b16 %v2722
  %v3309 = vunpack.c.h.b16 %v2722
  %v3310 = vunpack.c.l.b16 %v2723
  %v3311 = vunpack.c.h.b16 %v2723
  %v3312 = vunpack.c.l.b16 %v2724
  %v3313 = vunpack.c.h.b16 %v2724
  %v3314 = vunpack.c.l.b16 %v2725
  %v3315 = vunpack.c.h.b16 %v2725
  %v3316 = vunpack.c.l.b16 %v2726
  %v3317 = vunpack.c.h.b16 %v2726
  %v3318 = vunpack.c.l.b16 %v2727
  %v3319 = vunpack.c.h.b16 %v2727
  %v3320 = vunpack.c.l.b16 %v2728
  %v3321 = vunpack.c.h.b16 %v2728
  %v3322 = vunpack.c.l.b16 %v2729
  %v3323 = vunpack.c.h.b16 %v2729
  %v3324 = vunpack.c.l.b16 %v2730
  %v3325 = vunpack.c.h.b16 %v2730
  %v3326 = vunpack.c.l.b16 %v2731
  %v3327 = vunpack.c.h.b16 %v2731
  %v3328 = vunpack.c.l.b16 %v2732
  %v3329 = vunpack.c.h.b16 %v2732
  %v3330 = vunpack.c.l.b16 %v2733
  %v3331 = vunpack.c.h.b16 %v2733
  %v3332 = vpack.c.b16 %v2952, %v2948
  %v3333 = vpack.c.b16 %v2953, %v2949
  %v3334 = vpack.c.b16 %v2954, %v2950
  %v3335 = vpack.c.b16 %v2955, %v2951
  %v3336 = vpack.c.b16 %v2960, %v2956
  %v3337 = vpack.c.b16 %v2961, %v2957
  %v3338 = vpack.c.b16 %v2962, %v2958
  %v3339 = vpack.c.b16 %v2963, %v2959
  %v3340 = vpack.c.b16 %v2968, %v2964
  %v3341 = vpack.c.b16 %v2969, %v2965
  %v3342 = vpack.c.b16 %v2970, %v2966
  %v3343 = vpack.c.b16 %v2971, %v2967
  %v3344 = vpack.c.b16 %v2976, %v2972
  %v3345 = vpack.c.b16 %v2977, %v2973
  %v3346 = vpack.c.b16 %v2978, %v2974
  %v3347 = vpack.c.b16 %v2979, %v2975
  %v3348 = vpack.c.b16 %v2984, %v2980
  %v3349 = vpack.c.b16 %v2985, %v2981
  %v3350 = vpack.c.b16 %v2986, %v2982
  %v3351 = vpack.c.b16 %v2987, %v2983
  %v3352 = vpack.c.b16 %v2992, %v2988
  %v3353 = vpack.c.b16 %v2993, %v2989
  %v3354 = vpack.c.b16 %v2994, %v2990
  %v3355 = vpack.c.b16 %v2995, %v2991
  %v3356 = vpack.c.b16 %v3000, %v2996
  %v3357 = vpack.c.b16 %v3001, %v2997
  %v3358 = vpack.c.b16 %v3002, %v2998
  %v3359 = vpack.c.b16 %v3003, %v2999
  %v3360 = vpack.c.b16 %v3008, %v3004
  %v3361 = vpack.c.b16 %v3009, %v3005
  %v3362 = vpack.c.b16 %v3010, %v3006
  %v3363 = vpack.c.b16 %v3011, %v3007
  %v3364 = vpack.c.b16 %v3016, %v3012
  %v3365 = vpack.c.b16 %v3017, %v3013
  %v3366 = vpack.c.b16 %v3018, %v3014
  %v3367 = vpack.c.b16 %v3019, %v3015
  %v3368 = vpack.c.b16 %v3024, %v3020
  %v3369 = vpack.c.b16 %v3025, %v3021
  %v3370 = vpack.c.b16 %v3026, %v3022
  %v3371 = vpack.c.b16 %v3027, %v3023
  %v3372 = vpack.c.b16 %v3032, %v3028
  %v3373 = vpack.c.b16 %v3033, %v3029
  %v3374 = vpack.c.b16 %v3034, %v3030
  %v3375 = vpack.c.b16 %v3035, %v3031
  %v3376 = vpack.c.b16 %v3040, %v3036
  %v3377 = vpack.c.b16 %v3041, %v3037
  %v3378 = vpack.c.b16 %v3042, %v3038
  %v3379 = vpack.c.b16 %v3043, %v3039
  %v3380 = vpack.c.b16 %v3048, %v3044
  %v3381 = vpack.c.b16 %v3049, %v3045
  %v3382 = vpack.c.b16 %v3050, %v3046
  %v3383 = vpack.c.b16 %v3051, %v3047
  %v3384 = vpack.c.b16 %v3056, %v3052
  %v3385 = vpack.c.b16 %v3057, %v3053
  %v3386 = vpack.c.b16 %v3058, %v3054
  %v3387 = vpack.c.b16 %v3059, %v3055
  %v3388 = vpack.c.b16 %v3064, %v3060
  %v3389 = vpack.c.b16 %v3065, %v3061
  %v3390 = vpack.c.b16 %v3066, %v3062
  %v3391 = vpack.c.b16 %v3067, %v3063
  %v3392 = vpack.c.b16 %v3072, %v3068
  %v3393 = vpack.c.b16 %v3073, %v3069
  %v3394 = vpack.c.b16 %v3074, %v3070
  %v3395 = vpack.c.b16 %v3075, %v3071
  %v3396 = vpack.c.b16 %v3080, %v3076
  %v3397 = vpack.c.b16 %v3081, %v3077
  %v3398 = vpack.c.b16 %v3082, %v3078
  %v3399 = vpack.c.b16 %v3083, %v3079
  %v3400 = vpack.c.b16 %v3088, %v3084
  %v3401 = vpack.c.b16 %v3089, %v3085
  %v3402 = vpack.c.b16 %v3090, %v3086
  %v3403 = vpack.c.b16 %v3091, %v3087
  %v3404 = vpack.c.b16 %v3096, %v3092
  %v3405 = vpack.c.b16 %v3097, %v3093
  %v3406 = vpack.c.b16 %v3098, %v3094
  %v3407 = vpack.c.b16 %v3099, %v3095
  %v3408 = vpack.c.b16 %v3104, %v3100
  %v3409 = vpack.c.b16 %v3105, %v3101
  %v3410 = vpack.c.b16 %v3106, %v3102
  %v3411 = vpack.c.b16 %v3107, %v3103
  %v3412 = vpack.c.b16 %v3112, %v3108
  %v3413 = vpack.c.b16 %v3113, %v3109
  %v3414 = vpack.c.b16 %v3114, %v3110
  %v3415 = vpack.c.b16 %v3115, %v3111
  %v3416 = vpack.c.b16 %v3120, %v3116
  %v3417 = vpack.c.b16 %v3121, %v3117
  %v3418 = vpack.c.b16 %v3122, %v3118
  %v3419 = vpack.c.b16 %v3123, %v3119
  %v3420 = vpack.c.b16 %v3128, %v3124
  %v3421 = vpack.c.b16 %v3129, %v3125
  %v3422 = vpack.c.b16 %v3130, %v3126
  %v3423 = vpack.c.b16 %v3131, %v3127
  %v3424 = vpack.c.b16 %v3136, %v3132
  %v3425 = vpack.c.b16 %v3137, %v3133
  %v3426 = vpack.c.b16 %v3138, %v3134
  %v3427 = vpack.c.b16 %v3139, %v3135
  %v3428 = vpack.c.b16 %v3144, %v3140
  %v3429 = vpack.c.b16 %v3145, %v3141
  %v3430 = vpack.c.b16 %v3146, %v3142
  %v3431 = vpack.c.b16 %v3147, %v3143
  %v3432 = vpack.c.b16 %v3152, %v3148
  %v3433 = vpack.c.b16 %v3153, %v3149
  %v3434 = vpack.c.b16 %v3154, %v3150
  %v3435 = vpack.c.b16 %v3155, %v3151
  %v3436 = vpack.c.b16 %v3160, %v3156
  %v3437 = vpack.c.b16 %v3161, %v3157
  %v3438 = vpack.c.b16 %v3162, %v3158
  %v3439 = vpack.c.b16 %v3163, %v3159
  %v3440 = vpack.c.b16 %v3168, %v3164
  %v3441 = vpack.c.b16 %v3169, %v3165
  %v3442 = vpack.c.b16 %v3170, %v3166
  %v3443 = vpack.c.b16 %v3171, %v3167
  %v3444 = vpack.c.b16 %v3176, %v3172
  %v3445 = vpack.c.b16 %v3177, %v3173
  %v3446 = vpack.c.b16 %v3178, %v3174
  %v3447 = vpack.c.b16 %v3179, %v3175
  %v3448 = vpack.c.b16 %v3184, %v3180
  %v3449 = vpack.c.b16 %v3185, %v3181
  %v3450 = vpack.c.b16 %v3186, %v3182
  %v3451 = vpack.c.b16 %v3187, %v3183
  %v3452 = vpack.c.b16 %v3192, %v3188
  %v3453 = vpack.c.b16 %v3193, %v3189
  %v3454 = vpack.c.b16 %v3194, %v3190
  %v3455 = vpack.c.b16 %v3195, %v3191
  %v3456 = vpack.c.b16 %v3200, %v3196
  %v3457 = vpack.c.b16 %v3201, %v3197
  %v3458 = vpack.c.b16 %v3202, %v3198
  %v3459 = vpack.c.b16 %v3203, %v3199
  %v3460 = vpack.c.b16 %v3208, %v3204
  %v3461 = vpack.c.b16 %v3209, %v3205
  %v3462 = vpack.c.b16 %v3210, %v3206
  %v3463 = vpack.c.b16 %v3211, %v3207
  %v3464 = vpack.c.b16 %v3216, %v3212
  %v3465 = vpack.c.b16 %v3217, %v3213
  %v3466 = vpack.c.b16 %v3218, %v3214
  %v3467 = vpack.c.b16 %v3219, %v3215
  %v3468 = vpack.c.b16 %v3224, %v3220
  %v3469 = vpack.c.b16 %v3225, %v3221
  %v3470 = vpack.c.b16 %v3226, %v3222
  %v3471 = vpack.c.b16 %v3227, %v3223
  %v3472 = vpack.c.b16 %v3232, %v3228
  %v3473 = vpack.c.b16 %v3233, %v3229
  %v3474 = vpack.c.b16 %v3234, %v3230
  %v3475 = vpack.c.b16 %v3235, %v3231
  %v3476 = vpack.c.b16 %v3240, %v3236
  %v3477 = vpack.c.b16 %v3241, %v3237
  %v3478 = vpack.c.b16 %v3242, %v3238
  %v3479 = vpack.c.b16 %v3243, %v3239
  %v3480 = vpack.c.b16 %v3248, %v3244
  %v3481 = vpack.c.b16 %v3249, %v3245
  %v3482 = vpack.c.b16 %v3250, %v3246
  %v3483 = vpack.c.b16 %v3251, %v3247
  %v3484 = vpack.c.b16 %v3256, %v3252
  %v3485 = vpack.c.b16 %v3257, %v3253
  %v3486 = vpack.c.b16 %v3258, %v3254
  %v3487 = vpack.c.b16 %v3259, %v3255
  %v3488 = vpack.c.b16 %v3264, %v3260
  %v3489 = vpack.c.b16 %v3265, %v3261
  %v3490 = vpack.c.b16 %v3266, %v3262
  %v3491 = vpack.c.b16 %v3267, %v3263
  %v3492 = vpack.c.b16 %v3272, %v3268
  %v3493 = vpack.c.b16 %v3273, %v3269
  %v3494 = vpack.c.b16 %v3274, %v3270
  %v3495 = vpack.c.b16 %v3275, %v3271
  %v3496 = vpack.c.b16 %v3280, %v3276
  %v3497 = vpack.c.b16 %v3281, %v3277
  %v3498 = vpack.c.b16 %v3282, %v3278
  %v3499 = vpack.c.b16 %v3283, %v3279
  %v3500 = vpack.c.b16 %v3288, %v3284
  %v3501 = vpack.c.b16 %v3289, %v3285
  %v3502 = vpack.c.b16 %v3290, %v3286
  %v3503 = vpack.c.b16 %v3291, %v3287
  %v3504 = vpack.c.b16 %v3296, %v3292
  %v3505 = vpack.c.b16 %v3297, %v3293
  %v3506 = vpack.c.b16 %v3298, %v3294
  %v3507 = vpack.c.b16 %v3299, %v3295
  %v3508 = vpack.c.b16 %v3304, %v3300
  %v3509 = vpack.c.b16 %v3305, %v3301
  %v3510 = vpack.c.b16 %v3306, %v3302
  %v3511 = vpack.c.b16 %v3307, %v3303
  %v3512 = vpack.c.b16 %v3312, %v3308
  %v3513 = vpack.c.b16 %v3313, %v3309
  %v3514 = vpack.c.b16 %v3314, %v3310
  %v3515 = vpack.c.b16 %v3315, %v3311
  %v3516 = vpack.c.b16 %v3320, %v3316
  %v3517 = vpack.c.b16 %v3321, %v3317
  %v3518 = vpack.c.b16 %v3322, %v3318
  %v3519 = vpack.c.b16 %v3323, %v3319
  %v3520 = vpack.c.b16 %v3328, %v3324
  %v3521 = vpack.c.b16 %v3329, %v3325
  %v3522 = vpack.c.b16 %v3330, %v3326
  %v3523 = vpack.c.b16 %v3331, %v3327
  %3716 = vmatprep.subr.bf16.mxu0 %v3361
  %3717 = vmatpush1.bf16.msra.mxu0 %v3360
  %3718 = vmatprep.subr.bf16.mxu0 %v3357
  %3719 = vmatpush1.bf16.msra.mxu0 %v3356
  %3720 = vmatprep.subr.bf16.mxu0 %v3353
  %3721 = vmatpush1.bf16.msra.mxu0 %v3352
  %3722 = vmatprep.subr.bf16.mxu0 %v3349
  %3723 = vmatpush1.bf16.msra.mxu0 %v3348
  %3724 = vmatprep.subr.bf16.mxu0 %v3345
  %3725 = vmatpush1.bf16.msra.mxu0 %v3344
  %3726 = vmatprep.subr.bf16.mxu0 %v3341
  %3727 = vmatpush1.bf16.msra.mxu0 %v3340
  %3728 = vmatprep.subr.bf16.mxu0 %v3337
  %3729 = vmatpush1.bf16.msra.mxu0 %v3336
  %3730 = vmatprep.subr.bf16.mxu0 %v3333
  %3731 = vmatpush1.bf16.msra.mxu0 %v3332
  %3732 = vmatprep.subr.bf16.mxu0 %v3393
  %3733 = vmatpush2.bf16.msra.mxu0 %v3392
  %3734 = vmatprep.subr.bf16.mxu0 %v3389
  %3735 = vmatpush2.bf16.msra.mxu0 %v3388
  %3736 = vmatprep.subr.bf16.mxu0 %v3385
  %3737 = vmatpush2.bf16.msra.mxu0 %v3384
  %3738 = vmatprep.subr.bf16.mxu0 %v3381
  %3739 = vmatpush2.bf16.msra.mxu0 %v3380
  %3740 = vmatprep.subr.bf16.mxu0 %v3377
  %3741 = vmatpush2.bf16.msra.mxu0 %v3376
  %3742 = vmatprep.subr.bf16.mxu0 %v3373
  %3743 = vmatpush2.bf16.msra.mxu0 %v3372
  %3744 = vmatprep.subr.bf16.mxu0 %v3369
  %3745 = vmatpush2.bf16.msra.mxu0 %v3368
  %3746 = vmatprep.subr.bf16.mxu0 %v3365
  %3747 = vmatpush2.bf16.msra.mxu0 %v3364
  %3748 = vmatprep.mubr.bf16.mxu0 %v2537
  %3749 = vmatmul.mubr.bf16.gmra.mxu0 %v2536
  %v3750 = vpop.f32.mrf.mxu0
  %v3751 = vadd.f32 %v2739, %v3750
  %v3752 = vpop.f32.mrf.mxu0
  %v3753 = vadd.f32 %v2743, %v3752
  %v3754 = vpop.f32.mrf.mxu0
  %v3755 = vadd.f32 %v2739, %v3754
  %v3756 = vpop.f32.mrf.mxu0
  %v3757 = vadd.f32 %v2743, %v3756
  %3758 = vdwg.mxu0
  %3759 = vmatprep.subr.bf16.mxu0 %v3425
  %3760 = vmatpush1.bf16.msra.mxu0 %v3424
  %3761 = vmatprep.subr.bf16.mxu0 %v3421
  %3762 = vmatpush1.bf16.msra.mxu0 %v3420
  %3763 = vmatprep.subr.bf16.mxu0 %v3417
  %3764 = vmatpush1.bf16.msra.mxu0 %v3416
  %3765 = vmatprep.subr.bf16.mxu0 %v3413
  %3766 = vmatpush1.bf16.msra.mxu0 %v3412
  %3767 = vmatprep.subr.bf16.mxu0 %v3409
  %3768 = vmatpush1.bf16.msra.mxu0 %v3408
  %3769 = vmatprep.subr.bf16.mxu0 %v3405
  %3770 = vmatpush1.bf16.msra.mxu0 %v3404
  %3771 = vmatprep.subr.bf16.mxu0 %v3401
  %3772 = vmatpush1.bf16.msra.mxu0 %v3400
  %3773 = vmatprep.subr.bf16.mxu0 %v3397
  %3774 = vmatpush1.bf16.msra.mxu0 %v3396
  %3775 = vmatprep.subr.bf16.mxu0 %v3457
  %3776 = vmatpush2.bf16.msra.mxu0 %v3456
  %3777 = vmatprep.subr.bf16.mxu0 %v3453
  %3778 = vmatpush2.bf16.msra.mxu0 %v3452
  %3779 = vmatprep.subr.bf16.mxu0 %v3449
  %3780 = vmatpush2.bf16.msra.mxu0 %v3448
  %3781 = vmatprep.subr.bf16.mxu0 %v3445
  %3782 = vmatpush2.bf16.msra.mxu0 %v3444
  %3783 = vmatprep.subr.bf16.mxu0 %v3441
  %3784 = vmatpush2.bf16.msra.mxu0 %v3440
  %3785 = vmatprep.subr.bf16.mxu0 %v3437
  %3786 = vmatpush2.bf16.msra.mxu0 %v3436
  %3787 = vmatprep.subr.bf16.mxu0 %v3433
  %3788 = vmatpush2.bf16.msra.mxu0 %v3432
  %3789 = vmatprep.subr.bf16.mxu0 %v3429
  %3790 = vmatpush2.bf16.msra.mxu0 %v3428
  %3791 = vmatprep.mubr.bf16.mxu0 %v2539
  %3792 = vmatmul.mubr.bf16.gmra.mxu0 %v2538
  %v3793 = vpop.f32.mrf.mxu0
  %v3794 = vadd.f32 %v3751, %v3793
  %v3795 = vpop.f32.mrf.mxu0
  %v3796 = vadd.f32 %v3753, %v3795
  %v3797 = vpop.f32.mrf.mxu0
  %v3798 = vadd.f32 %v3755, %v3797
  %v3799 = vpop.f32.mrf.mxu0
  %v3800 = vadd.f32 %v3757, %v3799
  %3801 = vdwg.mxu0
  %3802 = vmatprep.subr.bf16.mxu0 %v3489
  %3803 = vmatpush1.bf16.msra.mxu0 %v3488
  %3804 = vmatprep.subr.bf16.mxu0 %v3485
  %3805 = vmatpush1.bf16.msra.mxu0 %v3484
  %3806 = vmatprep.subr.bf16.mxu0 %v3481
  %3807 = vmatpush1.bf16.msra.mxu0 %v3480
  %3808 = vmatprep.subr.bf16.mxu0 %v3477
  %3809 = vmatpush1.bf16.msra.mxu0 %v3476
  %3810 = vmatprep.subr.bf16.mxu0 %v3473
  %3811 = vmatpush1.bf16.msra.mxu0 %v3472
  %3812 = vmatprep.subr.bf16.mxu0 %v3469
  %3813 = vmatpush1.bf16.msra.mxu0 %v3468
  %3814 = vmatprep.subr.bf16.mxu0 %v3465
  %3815 = vmatpush1.bf16.msra.mxu0 %v3464
  %3816 = vmatprep.subr.bf16.mxu0 %v3461
  %3817 = vmatpush1.bf16.msra.mxu0 %v3460
  %3818 = vmatprep.subr.bf16.mxu0 %v3521
  %3819 = vmatpush2.bf16.msra.mxu0 %v3520
  %3820 = vmatprep.subr.bf16.mxu0 %v3517
  %3821 = vmatpush2.bf16.msra.mxu0 %v3516
  %3822 = vmatprep.subr.bf16.mxu0 %v3513
  %3823 = vmatpush2.bf16.msra.mxu0 %v3512
  %3824 = vmatprep.subr.bf16.mxu0 %v3509
  %3825 = vmatpush2.bf16.msra.mxu0 %v3508
  %3826 = vmatprep.subr.bf16.mxu0 %v3505
  %3827 = vmatpush2.bf16.msra.mxu0 %v3504
  %3828 = vmatprep.subr.bf16.mxu0 %v3501
  %3829 = vmatpush2.bf16.msra.mxu0 %v3500
  %3830 = vmatprep.subr.bf16.mxu0 %v3497
  %3831 = vmatpush2.bf16.msra.mxu0 %v3496
  %3832 = vmatprep.subr.bf16.mxu0 %v3493
  %3833 = vmatpush2.bf16.msra.mxu0 %v3492
  %3834 = vmatprep.mubr.bf16.mxu0 %v2541
  %3835 = vmatmul.mubr.bf16.gmra.mxu0 %v2540
  %v3836 = vpop.f32.mrf.mxu0
  %v3837 = vadd.f32 %v3794, %v3836
  %v3838 = vpop.f32.mrf.mxu0
  %v3839 = vadd.f32 %v3796, %v3838
  %v3840 = vpop.f32.mrf.mxu0
  %v3841 = vadd.f32 %v3798, %v3840
  %v3842 = vpop.f32.mrf.mxu0
  %v3843 = vadd.f32 %v3800, %v3842
  %3844 = vdwg.mxu0
  %3845 = vmatprep.subr.bf16.mxu0 %v3363
  %3846 = vmatpush1.bf16.msra.mxu0 %v3362
  %3847 = vmatprep.subr.bf16.mxu0 %v3359
  %3848 = vmatpush1.bf16.msra.mxu0 %v3358
  %3849 = vmatprep.subr.bf16.mxu0 %v3355
  %3850 = vmatpush1.bf16.msra.mxu0 %v3354
  %3851 = vmatprep.subr.bf16.mxu0 %v3351
  %3852 = vmatpush1.bf16.msra.mxu0 %v3350
  %3853 = vmatprep.subr.bf16.mxu0 %v3347
  %3854 = vmatpush1.bf16.msra.mxu0 %v3346
  %3855 = vmatprep.subr.bf16.mxu0 %v3343
  %3856 = vmatpush1.bf16.msra.mxu0 %v3342
  %3857 = vmatprep.subr.bf16.mxu0 %v3339
  %3858 = vmatpush1.bf16.msra.mxu0 %v3338
  %3859 = vmatprep.subr.bf16.mxu0 %v3335
  %3860 = vmatpush1.bf16.msra.mxu0 %v3334
  %3861 = vmatprep.subr.bf16.mxu0 %v3395
  %3862 = vmatpush2.bf16.msra.mxu0 %v3394
  %3863 = vmatprep.subr.bf16.mxu0 %v3391
  %3864 = vmatpush2.bf16.msra.mxu0 %v3390
  %3865 = vmatprep.subr.bf16.mxu0 %v3387
  %3866 = vmatpush2.bf16.msra.mxu0 %v3386
  %3867 = vmatprep.subr.bf16.mxu0 %v3383
  %3868 = vmatpush2.bf16.msra.mxu0 %v3382
  %3869 = vmatprep.subr.bf16.mxu0 %v3379
  %3870 = vmatpush2.bf16.msra.mxu0 %v3378
  %3871 = vmatprep.subr.bf16.mxu0 %v3375
  %3872 = vmatpush2.bf16.msra.mxu0 %v3374
  %3873 = vmatprep.subr.bf16.mxu0 %v3371
  %3874 = vmatpush2.bf16.msra.mxu0 %v3370
  %3875 = vmatprep.subr.bf16.mxu0 %v3367
  %3876 = vmatpush2.bf16.msra.mxu0 %v3366
  %3877 = vmatprep.mubr.bf16.mxu0 %v2537
  %3878 = vmatmul.mubr.bf16.gmra.mxu0 %v2536
  %v3879 = vpop.f32.mrf.mxu0
  %v3880 = vadd.f32 %v2747, %v3879
  %v3881 = vpop.f32.mrf.mxu0
  %v3882 = vadd.f32 %v2751, %v3881
  %v3883 = vpop.f32.mrf.mxu0
  %v3884 = vadd.f32 %v2747, %v3883
  %v3885 = vpop.f32.mrf.mxu0
  %v3886 = vadd.f32 %v2751, %v3885
  %3887 = vdwg.mxu0
  %3888 = vmatprep.subr.bf16.mxu0 %v3427
  %3889 = vmatpush1.bf16.msra.mxu0 %v3426
  %3890 = vmatprep.subr.bf16.mxu0 %v3423
  %3891 = vmatpush1.bf16.msra.mxu0 %v3422
  %3892 = vmatprep.subr.bf16.mxu0 %v3419
  %3893 = vmatpush1.bf16.msra.mxu0 %v3418
  %3894 = vmatprep.subr.bf16.mxu0 %v3415
  %3895 = vmatpush1.bf16.msra.mxu0 %v3414
  %3896 = vmatprep.subr.bf16.mxu0 %v3411
  %3897 = vmatpush1.bf16.msra.mxu0 %v3410
  %3898 = vmatprep.subr.bf16.mxu0 %v3407
  %3899 = vmatpush1.bf16.msra.mxu0 %v3406
  %3900 = vmatprep.subr.bf16.mxu0 %v3403
  %3901 = vmatpush1.bf16.msra.mxu0 %v3402
  %3902 = vmatprep.subr.bf16.mxu0 %v3399
  %3903 = vmatpush1.bf16.msra.mxu0 %v3398
  %3904 = vmatprep.subr.bf16.mxu0 %v3459
  %3905 = vmatpush2.bf16.msra.mxu0 %v3458
  %3906 = vmatprep.subr.bf16.mxu0 %v3455
  %3907 = vmatpush2.bf16.msra.mxu0 %v3454
  %3908 = vmatprep.subr.bf16.mxu0 %v3451
  %3909 = vmatpush2.bf16.msra.mxu0 %v3450
  %3910 = vmatprep.subr.bf16.mxu0 %v3447
  %3911 = vmatpush2.bf16.msra.mxu0 %v3446
  %3912 = vmatprep.subr.bf16.mxu0 %v3443
  %3913 = vmatpush2.bf16.msra.mxu0 %v3442
  %3914 = vmatprep.subr.bf16.mxu0 %v3439
  %3915 = vmatpush2.bf16.msra.mxu0 %v3438
  %3916 = vmatprep.subr.bf16.mxu0 %v3435
  %3917 = vmatpush2.bf16.msra.mxu0 %v3434
  %3918 = vmatprep.subr.bf16.mxu0 %v3431
  %3919 = vmatpush2.bf16.msra.mxu0 %v3430
  %3920 = vmatprep.mubr.bf16.mxu0 %v2539
  %3921 = vmatmul.mubr.bf16.gmra.mxu0 %v2538
  %v3922 = vpop.f32.mrf.mxu0
  %v3923 = vadd.f32 %v3880, %v3922
  %v3924 = vpop.f32.mrf.mxu0
  %v3925 = vadd.f32 %v3882, %v3924
  %v3926 = vpop.f32.mrf.mxu0
  %v3927 = vadd.f32 %v3884, %v3926
  %v3928 = vpop.f32.mrf.mxu0
  %v3929 = vadd.f32 %v3886, %v3928
  %3930 = vdwg.mxu0
  %3931 = vmatprep.subr.bf16.mxu0 %v3491
  %3932 = vmatpush1.bf16.msra.mxu0 %v3490
  %3933 = vmatprep.subr.bf16.mxu0 %v3487
  %3934 = vmatpush1.bf16.msra.mxu0 %v3486
  %3935 = vmatprep.subr.bf16.mxu0 %v3483
  %3936 = vmatpush1.bf16.msra.mxu0 %v3482
  %3937 = vmatprep.subr.bf16.mxu0 %v3479
  %3938 = vmatpush1.bf16.msra.mxu0 %v3478
  %3939 = vmatprep.subr.bf16.mxu0 %v3475
  %3940 = vmatpush1.bf16.msra.mxu0 %v3474
  %3941 = vmatprep.subr.bf16.mxu0 %v3471
  %3942 = vmatpush1.bf16.msra.mxu0 %v3470
  %3943 = vmatprep.subr.bf16.mxu0 %v3467
  %3944 = vmatpush1.bf16.msra.mxu0 %v3466
  %3945 = vmatprep.subr.bf16.mxu0 %v3463
  %3946 = vmatpush1.bf16.msra.mxu0 %v3462
  %3947 = vmatprep.subr.bf16.mxu0 %v3523
  %3948 = vmatpush2.bf16.msra.mxu0 %v3522
  %3949 = vmatprep.subr.bf16.mxu0 %v3519
  %3950 = vmatpush2.bf16.msra.mxu0 %v3518
  %3951 = vmatprep.subr.bf16.mxu0 %v3515
  %3952 = vmatpush2.bf16.msra.mxu0 %v3514
  %3953 = vmatprep.subr.bf16.mxu0 %v3511
  %3954 = vmatpush2.bf16.msra.mxu0 %v3510
  %3955 = vmatprep.subr.bf16.mxu0 %v3507
  %3956 = vmatpush2.bf16.msra.mxu0 %v3506
  %3957 = vmatprep.subr.bf16.mxu0 %v3503
  %3958 = vmatpush2.bf16.msra.mxu0 %v3502
  %3959 = vmatprep.subr.bf16.mxu0 %v3499
  %3960 = vmatpush2.bf16.msra.mxu0 %v3498
  %3961 = vmatprep.subr.bf16.mxu0 %v3495
  %3962 = vmatpush2.bf16.msra.mxu0 %v3494
  %3963 = vmatprep.mubr.bf16.mxu0 %v2541
  %3964 = vmatmul.mubr.bf16.gmra.mxu0 %v2540
  %v3965 = vpop.f32.mrf.mxu0
  %v3966 = vadd.f32 %v3923, %v3965
  %v3967 = vpop.f32.mrf.mxu0
  %v3968 = vadd.f32 %v3925, %v3967
  %v3969 = vpop.f32.mrf.mxu0
  %v3970 = vadd.f32 %v3927, %v3969
  %v3971 = vpop.f32.mrf.mxu0
  %v3972 = vadd.f32 %v3929, %v3971
  %3973 = vdwg.mxu0
  %v3974 = vld [vmem:[%s73] sm:$0xff]
  %v3975 = vld [vmem:[%s73 + $0x8] sm:$0xff]
  %v3976 = vmax.f32 %v3837, %v3966
  %v3977 = vmax.f32 %v3839, %v3968
  %v3978 = vmax.f32 %v3976, %v3977
  %3979 = vmax.xlane.f32.xlu0 %v3978
  %v3980 = vpop.xlane.xlu0 %3979
  %v3981 = vmax.f32 %v3841, %v3970
  %v3982 = vmax.f32 %v3843, %v3972
  %v3983 = vmax.f32 %v3981, %v3982
  %3984 = vmax.xlane.f32.xlu0 %v3983
  %v3985 = vpop.xlane.xlu0 %3984
  %v3986 = vsub.f32 %v3837, %v3980
  %v3987 = vsub.f32 %v3839, %v3980
  %v3988 = vsub.f32 %v3966, %v3980
  %v3989 = vsub.f32 %v3968, %v3980
  %v3990 = vsub.f32 %v3841, %v3985
  %v3991 = vsub.f32 %v3843, %v3985
  %v3992 = vsub.f32 %v3970, %v3985
  %v3993 = vsub.f32 %v3972, %v3985
  %v3994 = vmul.f32 %v3986, 1.442695
  %v3995 = vpow.pop %v3994
  %v3996 = vmul.f32 %v3987, 1.442695
  %v3997 = vpow.pop %v3996
  %v3998 = vmul.f32 %v3988, 1.442695
  %v3999 = vpow.pop %v3998
  %v4000 = vmul.f32 %v3989, 1.442695
  %v4001 = vpow.pop %v4000
  %v4002 = vmul.f32 %v3990, 1.442695
  %v4003 = vpow.pop %v4002
  %v4004 = vmul.f32 %v3991, 1.442695
  %v4005 = vpow.pop %v4004
  %v4006 = vmul.f32 %v3992, 1.442695
  %v4007 = vpow.pop %v4006
  %v4008 = vmul.f32 %v3993, 1.442695
  %v4009 = vpow.pop %v4008
  %v4010 = vadd.f32 %v3995, %v3997
  %v4011 = vadd.f32 %v4010, %v3999
  %v4012 = vadd.f32 %v4011, %v4001
  %4013 = vadd.xlane.f32.xlu0 %v4012
  %v4014 = vpop.xlane.xlu0 %4013
  %v4015 = vadd.f32 %v4003, %v4005
  %v4016 = vadd.f32 %v4015, %v4007
  %v4017 = vadd.f32 %v4016, %v4009
  %4018 = vadd.xlane.f32.xlu0 %v4017
  %v4019 = vpop.xlane.xlu0 %4018
  %v4020 = vlog2.pop %v4014
  %v4021 = vmul.f32 %v4020, 0.6931472
  %v4022 = vlog2.pop %v4019
  %v4023 = vmul.f32 %v4022, 0.6931472
  %v4024 = vadd.f32 %v3980, %v4021
  %v4025 = vadd.f32 %v3985, %v4023
  %v4026 = vlaneseq
  %v4027 = vand.u32 %v4026, 127
  %v4028 = vadd.s32 %v4027, 128
  %v4029 = vadd.s32 %v4027, 256
  %v4030 = vadd.s32 %v4027, 384
  %4031 = vset.pattern.permute.xlu0 0
  %4032 = vperm.xlu0 %4031, %v3974
  %v4033 = vpop.permute.xlu0 %4032
  %4034 = vset.pattern.permute.xlu0 0
  %4035 = vperm.xlu0 %4034, %v3975
  %v4036 = vpop.permute.xlu0 %4035
  %vm4037 = vcmp.eq.s32.totalorder %v4027, %v4033
  %vm4038 = vcmp.eq.s32.totalorder %v4028, %v4033
  %vm4039 = vcmp.eq.s32.totalorder %v4029, %v4033
  %vm4040 = vcmp.eq.s32.totalorder %v4030, %v4033
  %vm4041 = vcmp.eq.s32.totalorder %v4027, %v4036
  %vm4042 = vcmp.eq.s32.totalorder %v4028, %v4036
  %vm4043 = vcmp.eq.s32.totalorder %v4029, %v4036
  %vm4044 = vcmp.eq.s32.totalorder %v4030, %v4036
  %v4045 = vsel %vm4037, %v3837, 0.0
  %v4046 = vsel %vm4038, %v3839, 0.0
  %v4047 = vsel %vm4039, %v3966, 0.0
  %v4048 = vsel %vm4040, %v3968, 0.0
  %v4049 = vsel %vm4041, %v3841, 0.0
  %v4050 = vsel %vm4042, %v3843, 0.0
  %v4051 = vsel %vm4043, %v3970, 0.0
  %v4052 = vsel %vm4044, %v3972, 0.0
  %v4053 = vadd.f32 %v4045, %v4046
  %v4054 = vadd.f32 %v4053, %v4047
  %v4055 = vadd.f32 %v4054, %v4048
  %4056 = vadd.xlane.f32.xlu0 %v4055
  %v4057 = vpop.xlane.xlu0 %4056
  %v4058 = vadd.f32 %v4049, %v4050
  %v4059 = vadd.f32 %v4058, %v4051
  %v4060 = vadd.f32 %v4059, %v4052
  %4061 = vadd.xlane.f32.xlu0 %v4060
  %v4062 = vpop.xlane.xlu0 %4061
  %vm4063 = vcmp.ne.s32.totalorder %v3974, 4294967196
  %vm4064 = vcmp.ne.s32.totalorder %v3975, 4294967196
  %v4065 = vsub.f32 %v4024, %v4057
  %v4066 = vsub.f32 %v4025, %v4062
  %v4067 = vsel %vm4063, %v4065, 0.0
  %v4068 = vsel %vm4064, %v4066, 0.0
  %v4069 = vld [vmem:[%s8] sm:$0x1]
  %vm4070 = vcmask 7168
  %v4071 = vsel %vm4070, %v4067, 0.0
  %v4072 = vsel %vm4070, %v4068, 0.0
  %v4073 = vadd.f32 %v4071, %v4072
  %4074 = vadd.xlane.f32.xlu0 %v4073
  %v4075 = vpop.xlane.xlu0 %4074
  %v4076 = vrot.slane %v4075, 4
  %v4077 = vadd.f32 %v4075, %v4076
  %v4078 = vrot.slane %v4077, 2
  %v4079 = vadd.f32 %v4077, %v4078
  %v4080 = vrot.slane %v4079, 1
  %v4081 = vadd.f32 %v4079, %v4080
  %s4082 = vtos %v4081
  %v4083 = vstv %s4082
  %v4084 = vadd.f32 %v4069, %v4083
  %4085 = vst [vmem:[%s8] sm:$0x1] %v4084
  // Predicated region
  $region38: #{forward.3} parent=0 // pred_check
    _
  $region39: #{forward.3} parent=0 // pred_check_branch
    %4087 = sbr.rel (0) target = $region41
  $region40: #{forward.3} parent=0 // pred_region
    _
  $region41: #{forward.3} parent=0 // pred_fallthru
    _
  // Predicated region
  $region42: #{forward.3} parent=0 // pred_check
    _
  $region43: #{forward.3} parent=0 // pred_check_branch
    %4089 = sbr.rel (0) target = $region45
  $region44: #{forward.3} parent=0 // pred_region
    _
  $region45: #{forward.3} parent=0 // pred_fallthru
    _

// kernel: forward.5
$region0: #{forward.5}
  #allocation0 [shape = 'u32[]', space=smem, size = 0x4, offset = 0x4, fixed_abs, tag = 'smem constant byte address 0x4 - core index']
  #allocation1 [shape = 'u32[144,128]{1,0:T(1,128)}', space=vmem, size = 0x12000, scoped, tag = 'internal scratch']
  %s0 = inlined_call_operand.vmem [shape: bf16[128,768], index: 0, kind: input, shape index: {}]
  %s1 = inlined_call_operand.hbm [shape: bf16[768,768], index: 1, kind: input, shape index: {}]
  %s2 = inlined_call_operand.hbm [shape: f32[1,768], index: 2, kind: input, shape index: {}]
  %s3 = inlined_call_operand.hbm [shape: bf16[768,768], index: 3, kind: input, shape index: {}]
  %s4 = inlined_call_operand.hbm [shape: f32[1,768], index: 4, kind: input, shape index: {}]
  %s5 = inlined_call_operand.hbm [shape: f32[1,1], index: 5, kind: output, shape index: {}]
  %s6 = sld [smem:[#allocation0]]
  $region46: #{forward.5} parent=0
    _
  %s8 = ssub.s32 1, %s6
  %s9 = scalar_select 0, %s8, %s6
  $region1: #{forward.5} parent=0
    #allocation2 [shape = 'u8[1179648]{0}', space=vmem, size = 0x120000, scoped, tag = 'input window, operand 1, single buffered']
    #allocation3 [shape = 's32[1]{0}', space=sflag, size = 0x4, scoped, tag = 'scoped memory for forward.5']
    #allocation4 [shape = 's32[1]{0}', space=sflag, size = 0x4, scoped, tag = 'scoped memory for forward.5']
    #allocation5 [shape = 'u8[3072]{0}', space=vmem, size = 0xc00, scoped, tag = 'input window, operand 2, single buffered']
    #allocation6 [shape = 's32[1]{0}', space=sflag, size = 0x4, scoped, tag = 'scoped memory for forward.5']
    #allocation7 [shape = 'u8[1179648]{0}', space=vmem, size = 0x120000, scoped, tag = 'input window, operand 3, single buffered']
    #allocation8 [shape = 'u8[3072]{0}', space=vmem, size = 0xc00, scoped, tag = 'input window, operand 4, single buffered']
    #allocation9 [shape = 's32[1]{0}', space=sflag, size = 0x4, scoped, tag = 'scoped memory for forward.5']
    #allocation10 [shape = 'u8[512]{0}', space=vmem, size = 0x400, scoped, tag = 'output window, operand 0, single buffered']
    %10 = vsyncpa [#allocation3], 0
    %11 = vsyncpa [#allocation6], 0
    %12 = vsyncpa [#allocation9], 0
    %13 = vsyncpa [#allocation4], 0
    // Predicated region
    $region2: #{forward.5} parent=1 // pred_check
      _
    $region3: #{forward.5} parent=1 // pred_check_branch
      %15 = sbr.rel (0) target = $region5
    $region4: #{forward.5} parent=1 // pred_region
      _
    $region5: #{forward.5} parent=1 // pred_fallthru
      _
    // Predicated region
    $region6: #{forward.5} parent=1 // pred_check
      _
    $region7: #{forward.5} parent=1 // pred_check_branch
      %17 = sbr.rel (0) target = $region9
    $region8: #{forward.5} parent=1 // pred_region
      %s19 = ssub.s32 36864, 36864
      %20 = vsyncadd [#allocation3], %s19
      %s21 = sshll.u32 [#allocation2], 4
      %s22 = int_to_ptr.vmem [resolvable:$true] %s21
      %27 = dma.hbm_to_vmem [thread:$0]  %s1, 36864, %s22, [#allocation3], 384, 384, 24
    $region9: #{forward.5} parent=1 // pred_fallthru
      _
    // Predicated region
    $region10: #{forward.5} parent=1 // pred_check
      _
    $region11: #{forward.5} parent=1 // pred_check_branch
      %29 = sbr.rel (0) target = $region13
    $region12: #{forward.5} parent=1 // pred_region
      %s31 = ssub.s32 96, 96
      %32 = vsyncadd [#allocation6], %s31
      %s34 = sshll.u32 [#allocation5], 4
      %s35 = int_to_ptr.vmem [resolvable:$true] %s34
      %37 = dma.hbm_to_vmem [thread:$0]  %s2, 96, %s35, [#allocation6]
    $region13: #{forward.5} parent=1 // pred_fallthru
      _
    // Predicated region
    $region14: #{forward.5} parent=1 // pred_check
      _
    $region15: #{forward.5} parent=1 // pred_check_branch
      %39 = sbr.rel (0) target = $region17
    $region16: #{forward.5} parent=1 // pred_region
      %s41 = ssub.s32 36864, 36864
      %42 = vsyncadd [#allocation6], %s41
      %s43 = sshll.u32 [#allocation7], 4
      %s44 = int_to_ptr.vmem [resolvable:$true] %s43
      %49 = dma.hbm_to_vmem [thread:$0]  %s3, 36864, %s44, [#allocation6], 384, 384, 24
    $region17: #{forward.5} parent=1 // pred_fallthru
      _
    // Predicated region
    $region18: #{forward.5} parent=1 // pred_check
      _
    $region19: #{forward.5} parent=1 // pred_check_branch
      %51 = sbr.rel (0) target = $region21
    $region20: #{forward.5} parent=1 // pred_region
      %s53 = ssub.s32 96, 96
      %54 = vsyncadd [#allocation9], %s53
      %s56 = sshll.u32 [#allocation8], 4
      %s57 = int_to_ptr.vmem [resolvable:$true] %s56
      %59 = dma.hbm_to_vmem [thread:$0]  %s4, 96, %s57, [#allocation9]
    $region21: #{forward.5} parent=1 // pred_fallthru
      _
    // Predicated region
    $region22: #{forward.5} parent=1 // pred_check
      _
    $region23: #{forward.5} parent=1 // pred_check_branch
      %61 = sbr.rel (0) target = $region25
    $region24: #{forward.5} parent=1 // pred_region
      %62 = dma.done [#allocation3], 36864
    $region25: #{forward.5} parent=1 // pred_fallthru
      _
    // Predicated region
    $region26: #{forward.5} parent=1 // pred_check
      _
    $region27: #{forward.5} parent=1 // pred_check_branch
      %64 = sbr.rel (0) target = $region29
    $region28: #{forward.5} parent=1 // pred_region
      %65 = dma.done [#allocation6], 96
    $region29: #{forward.5} parent=1 // pred_fallthru
      _
    // Predicated region
    $region30: #{forward.5} parent=1 // pred_check
      _
    $region31: #{forward.5} parent=1 // pred_check_branch
      %67 = sbr.rel (0) target = $region33
    $region32: #{forward.5} parent=1 // pred_region
      %68 = dma.done [#allocation6], 36864
    $region33: #{forward.5} parent=1 // pred_fallthru
      _
    // Predicated region
    $region34: #{forward.5} parent=1 // pred_check
      _
    $region35: #{forward.5} parent=1 // pred_check_branch
      %70 = sbr.rel (0) target = $region37
    $region36: #{forward.5} parent=1 // pred_region
      %71 = dma.done [#allocation9], 96
    $region37: #{forward.5} parent=1 // pred_fallthru
      _
    %v73 = vld [vmem:[%s0] sm:$0xff]
    %v74 = vld [vmem:[%s0 + $0x8] sm:$0xff]
    %v75 = vld [vmem:[%s0 + $0x10] sm:$0xff]
    %v76 = vld [vmem:[%s0 + $0x18] sm:$0xff]
    %v77 = vld [vmem:[%s0 + $0x20] sm:$0xff]
    %v78 = vld [vmem:[%s0 + $0x28] sm:$0xff]
    %v79 = vld [vmem:[%s0 + $0x30] sm:$0xff]
    %v80 = vld [vmem:[%s0 + $0x38] sm:$0xff]
    %v81 = vld [vmem:[%s0 + $0x40] sm:$0xff]
    %v82 = vld [vmem:[%s0 + $0x48] sm:$0xff]
    %v83 = vld [vmem:[%s0 + $0x50] sm:$0xff]
    %v84 = vld [vmem:[%s0 + $0x58] sm:$0xff]
    %v85 = vld [vmem:[%s0 + $0x60] sm:$0xff]
    %v86 = vld [vmem:[%s0 + $0x68] sm:$0xff]
    %v87 = vld [vmem:[%s0 + $0x70] sm:$0xff]
    %v88 = vld [vmem:[%s0 + $0x78] sm:$0xff]
    %v89 = vld [vmem:[%s0 + $0x80] sm:$0xff]
    %v90 = vld [vmem:[%s0 + $0x88] sm:$0xff]
    %v91 = vld [vmem:[%s0 + $0x90] sm:$0xff]
    %v92 = vld [vmem:[%s0 + $0x98] sm:$0xff]
    %v93 = vld [vmem:[%s0 + $0xa0] sm:$0xff]
    %v94 = vld [vmem:[%s0 + $0xa8] sm:$0xff]
    %v95 = vld [vmem:[%s0 + $0xb0] sm:$0xff]
    %v96 = vld [vmem:[%s0 + $0xb8] sm:$0xff]
    %v97 = vld [vmem:[%s0 + $0xc0] sm:$0xff]
    %v98 = vld [vmem:[%s0 + $0xc8] sm:$0xff]
    %v99 = vld [vmem:[%s0 + $0xd0] sm:$0xff]
    %v100 = vld [vmem:[%s0 + $0xd8] sm:$0xff]
    %v101 = vld [vmem:[%s0 + $0xe0] sm:$0xff]
    %v102 = vld [vmem:[%s0 + $0xe8] sm:$0xff]
    %v103 = vld [vmem:[%s0 + $0xf0] sm:$0xff]
    %v104 = vld [vmem:[%s0 + $0xf8] sm:$0xff]
    %v105 = vld [vmem:[%s0 + $0x100] sm:$0xff]
    %v106 = vld [vmem:[%s0 + $0x108] sm:$0xff]
    %v107 = vld [vmem:[%s0 + $0x110] sm:$0xff]
    %v108 = vld [vmem:[%s0 + $0x118] sm:$0xff]
    %v109 = vld [vmem:[%s0 + $0x120] sm:$0xff]
    %v110 = vld [vmem:[%s0 + $0x128] sm:$0xff]
    %v111 = vld [vmem:[%s0 + $0x130] sm:$0xff]
    %v112 = vld [vmem:[%s0 + $0x138] sm:$0xff]
    %v113 = vld [vmem:[%s0 + $0x140] sm:$0xff]
    %v114 = vld [vmem:[%s0 + $0x148] sm:$0xff]
    %v115 = vld [vmem:[%s0 + $0x150] sm:$0xff]
    %v116 = vld [vmem:[%s0 + $0x158] sm:$0xff]
    %v117 = vld [vmem:[%s0 + $0x160] sm:$0xff]
    %v118 = vld [vmem:[%s0 + $0x168] sm:$0xff]
    %v119 = vld [vmem:[%s0 + $0x170] sm:$0xff]
    %v120 = vld [vmem:[%s0 + $0x178] sm:$0xff]
    %v121 = vld [vmem:[#allocation2] sm:$0xff]
    %v122 = vld [vmem:[#allocation2 + $0x8] sm:$0xff]
    %v123 = vld [vmem:[#allocation2 + $0x10] sm:$0xff]
    %v124 = vld [vmem:[#allocation2 + $0x18] sm:$0xff]
    %v125 = vld [vmem:[#allocation2 + $0x20] sm:$0xff]
    %v126 = vld [vmem:[#allocation2 + $0x28] sm:$0xff]
    %v127 = vld [vmem:[#allocation2 + $0x30] sm:$0xff]
    %v128 = vld [vmem:[#allocation2 + $0x38] sm:$0xff]
    %v129 = vld [vmem:[#allocation2 + $0x40] sm:$0xff]
    %v130 = vld [vmem:[#allocation2 + $0x48] sm:$0xff]
    %v131 = vld [vmem:[#allocation2 + $0x50] sm:$0xff]
    %v132 = vld [vmem:[#allocation2 + $0x58] sm:$0xff]
    %v133 = vld [vmem:[#allocation2 + $0x60] sm:$0xff]
    %v134 = vld [vmem:[#allocation2 + $0x68] sm:$0xff]
    %v135 = vld [vmem:[#allocation2 + $0x70] sm:$0xff]
    %v136 = vld [vmem:[#allocation2 + $0x78] sm:$0xff]
    %v137 = vld [vmem:[#allocation2 + $0x80] sm:$0xff]
    %v138 = vld [vmem:[#allocation2 + $0x88] sm:$0xff]
    %v139 = vld [vmem:[#allocation2 + $0x90] sm:$0xff]
    %v140 = vld [vmem:[#allocation2 + $0x98] sm:$0xff]
    %v141 = vld [vmem:[#allocation2 + $0xa0] sm:$0xff]
    %v142 = vld [vmem:[#allocation2 + $0xa8] sm:$0xff]
    %v143 = vld [vmem:[#allocation2 + $0xb0] sm:$0xff]
    %v144 = vld [vmem:[#allocation2 + $0xb8] sm:$0xff]
    %v145 = vld [vmem:[#allocation2 + $0xc0] sm:$0xff]
    %v146 = vld [vmem:[#allocation2 + $0xc8] sm:$0xff]
    %v147 = vld [vmem:[#allocation2 + $0xd0] sm:$0xff]
    %v148 = vld [vmem:[#allocation2 + $0xd8] sm:$0xff]
    %v149 = vld [vmem:[#allocation2 + $0xe0] sm:$0xff]
    %v150 = vld [vmem:[#allocation2 + $0xe8] sm:$0xff]
    %v151 = vld [vmem:[#allocation2 + $0xf0] sm:$0xff]
    %v152 = vld [vmem:[#allocation2 + $0xf8] sm:$0xff]
    %v153 = vld [vmem:[#allocation2 + $0x100] sm:$0xff]
    %v154 = vld [vmem:[#allocation2 + $0x108] sm:$0xff]
    %v155 = vld [vmem:[#allocation2 + $0x110] sm:$0xff]
    %v156 = vld [vmem:[#allocation2 + $0x118] sm:$0xff]
    %v157 = vld [vmem:[#allocation2 + $0x120] sm:$0xff]
    %v158 = vld [vmem:[#allocation2 + $0x128] sm:$0xff]
    %v159 = vld [vmem:[#allocation2 + $0x130] sm:$0xff]
    %v160 = vld [vmem:[#allocation2 + $0x138] sm:$0xff]
    %v161 = vld [vmem:[#allocation2 + $0x140] sm:$0xff]
    %v162 = vld [vmem:[#allocation2 + $0x148] sm:$0xff]
    %v163 = vld [vmem:[#allocation2 + $0x150] sm:$0xff]
    %v164 = vld [vmem:[#allocation2 + $0x158] sm:$0xff]
    %v165 = vld [vmem:[#allocation2 + $0x160] sm:$0xff]
    %v166 = vld [vmem:[#allocation2 + $0x168] sm:$0xff]
    %v167 = vld [vmem:[#allocation2 + $0x170] sm:$0xff]
    %v168 = vld [vmem:[#allocation2 + $0x178] sm:$0xff]
    %v169 = vld [vmem:[#allocation2 + $0x180] sm:$0xff]
    %v170 = vld [vmem:[#allocation2 + $0x188] sm:$0xff]
    %v171 = vld [vmem:[#allocation2 + $0x190] sm:$0xff]
    %v172 = vld [vmem:[#allocation2 + $0x198] sm:$0xff]
    %v173 = vld [vmem:[#allocation2 + $0x1a0] sm:$0xff]
    %v174 = vld [vmem:[#allocation2 + $0x1a8] sm:$0xff]
    %v175 = vld [vmem:[#allocation2 + $0x1b0] sm:$0xff]
    %v176 = vld [vmem:[#allocation2 + $0x1b8] sm:$0xff]
    %v177 = vld [vmem:[#allocation2 + $0x1c0] sm:$0xff]
    %v178 = vld [vmem:[#allocation2 + $0x1c8] sm:$0xff]
    %v179 = vld [vmem:[#allocation2 + $0x1d0] sm:$0xff]
    %v180 = vld [vmem:[#allocation2 + $0x1d8] sm:$0xff]
    %v181 = vld [vmem:[#allocation2 + $0x1e0] sm:$0xff]
    %v182 = vld [vmem:[#allocation2 + $0x1e8] sm:$0xff]
    %v183 = vld [vmem:[#allocation2 + $0x1f0] sm:$0xff]
    %v184 = vld [vmem:[#allocation2 + $0x1f8] sm:$0xff]
    %v185 = vld [vmem:[#allocation2 + $0x200] sm:$0xff]
    %v186 = vld [vmem:[#allocation2 + $0x208] sm:$0xff]
    %v187 = vld [vmem:[#allocation2 + $0x210] sm:$0xff]
    %v188 = vld [vmem:[#allocation2 + $0x218] sm:$0xff]
    %v189 = vld [vmem:[#allocation2 + $0x220] sm:$0xff]
    %v190 = vld [vmem:[#allocation2 + $0x228] sm:$0xff]
    %v191 = vld [vmem:[#allocation2 + $0x230] sm:$0xff]
    %v192 = vld [vmem:[#allocation2 + $0x238] sm:$0xff]
    %v193 = vld [vmem:[#allocation2 + $0x240] sm:$0xff]
    %v194 = vld [vmem:[#allocation2 + $0x248] sm:$0xff]
    %v195 = vld [vmem:[#allocation2 + $0x250] sm:$0xff]
    %v196 = vld [vmem:[#allocation2 + $0x258] sm:$0xff]
    %v197 = vld [vmem:[#allocation2 + $0x260] sm:$0xff]
    %v198 = vld [vmem:[#allocation2 + $0x268] sm:$0xff]
    %v199 = vld [vmem:[#allocation2 + $0x270] sm:$0xff]
    %v200 = vld [vmem:[#allocation2 + $0x278] sm:$0xff]
    %v201 = vld [vmem:[#allocation2 + $0x280] sm:$0xff]
    %v202 = vld [vmem:[#allocation2 + $0x288] sm:$0xff]
    %v203 = vld [vmem:[#allocation2 + $0x290] sm:$0xff]
    %v204 = vld [vmem:[#allocation2 + $0x298] sm:$0xff]
    %v205 = vld [vmem:[#allocation2 + $0x2a0] sm:$0xff]
    %v206 = vld [vmem:[#allocation2 + $0x2a8] sm:$0xff]
    %v207 = vld [vmem:[#allocation2 + $0x2b0] sm:$0xff]
    %v208 = vld [vmem:[#allocation2 + $0x2b8] sm:$0xff]
    %v209 = vld [vmem:[#allocation2 + $0x2c0] sm:$0xff]
    %v210 = vld [vmem:[#allocation2 + $0x2c8] sm:$0xff]
    %v211 = vld [vmem:[#allocation2 + $0x2d0] sm:$0xff]
    %v212 = vld [vmem:[#allocation2 + $0x2d8] sm:$0xff]
    %v213 = vld [vmem:[#allocation2 + $0x2e0] sm:$0xff]
    %v214 = vld [vmem:[#allocation2 + $0x2e8] sm:$0xff]
    %v215 = vld [vmem:[#allocation2 + $0x2f0] sm:$0xff]
    %v216 = vld [vmem:[#allocation2 + $0x2f8] sm:$0xff]
    %v217 = vld [vmem:[#allocation2 + $0x300] sm:$0xff]
    %v218 = vld [vmem:[#allocation2 + $0x308] sm:$0xff]
    %v219 = vld [vmem:[#allocation2 + $0x310] sm:$0xff]
    %v220 = vld [vmem:[#allocation2 + $0x318] sm:$0xff]
    %v221 = vld [vmem:[#allocation2 + $0x320] sm:$0xff]
    %v222 = vld [vmem:[#allocation2 + $0x328] sm:$0xff]
    %v223 = vld [vmem:[#allocation2 + $0x330] sm:$0xff]
    %v224 = vld [vmem:[#allocation2 + $0x338] sm:$0xff]
    %v225 = vld [vmem:[#allocation2 + $0x340] sm:$0xff]
    %v226 = vld [vmem:[#allocation2 + $0x348] sm:$0xff]
    %v227 = vld [vmem:[#allocation2 + $0x350] sm:$0xff]
    %v228 = vld [vmem:[#allocation2 + $0x358] sm:$0xff]
    %v229 = vld [vmem:[#allocation2 + $0x360] sm:$0xff]
    %v230 = vld [vmem:[#allocation2 + $0x368] sm:$0xff]
    %v231 = vld [vmem:[#allocation2 + $0x370] sm:$0xff]
    %v232 = vld [vmem:[#allocation2 + $0x378] sm:$0xff]
    %v233 = vld [vmem:[#allocation2 + $0x380] sm:$0xff]
    %v234 = vld [vmem:[#allocation2 + $0x388] sm:$0xff]
    %v235 = vld [vmem:[#allocation2 + $0x390] sm:$0xff]
    %v236 = vld [vmem:[#allocation2 + $0x398] sm:$0xff]
    %v237 = vld [vmem:[#allocation2 + $0x3a0] sm:$0xff]
    %v238 = vld [vmem:[#allocation2 + $0x3a8] sm:$0xff]
    %v239 = vld [vmem:[#allocation2 + $0x3b0] sm:$0xff]
    %v240 = vld [vmem:[#allocation2 + $0x3b8] sm:$0xff]
    %v241 = vld [vmem:[#allocation2 + $0x3c0] sm:$0xff]
    %v242 = vld [vmem:[#allocation2 + $0x3c8] sm:$0xff]
    %v243 = vld [vmem:[#allocation2 + $0x3d0] sm:$0xff]
    %v244 = vld [vmem:[#allocation2 + $0x3d8] sm:$0xff]
    %v245 = vld [vmem:[#allocation2 + $0x3e0] sm:$0xff]
    %v246 = vld [vmem:[#allocation2 + $0x3e8] sm:$0xff]
    %v247 = vld [vmem:[#allocation2 + $0x3f0] sm:$0xff]
    %v248 = vld [vmem:[#allocation2 + $0x3f8] sm:$0xff]
    %v249 = vld [vmem:[#allocation2 + $0x400] sm:$0xff]
    %v250 = vld [vmem:[#allocation2 + $0x408] sm:$0xff]
    %v251 = vld [vmem:[#allocation2 + $0x410] sm:$0xff]
    %v252 = vld [vmem:[#allocation2 + $0x418] sm:$0xff]
    %v253 = vld [vmem:[#allocation2 + $0x420] sm:$0xff]
    %v254 = vld [vmem:[#allocation2 + $0x428] sm:$0xff]
    %v255 = vld [vmem:[#allocation2 + $0x430] sm:$0xff]
    %v256 = vld [vmem:[#allocation2 + $0x438] sm:$0xff]
    %v257 = vld [vmem:[#allocation2 + $0x440] sm:$0xff]
    %v258 = vld [vmem:[#allocation2 + $0x448] sm:$0xff]
    %v259 = vld [vmem:[#allocation2 + $0x450] sm:$0xff]
    %v260 = vld [vmem:[#allocation2 + $0x458] sm:$0xff]
    %v261 = vld [vmem:[#allocation2 + $0x460] sm:$0xff]
    %v262 = vld [vmem:[#allocation2 + $0x468] sm:$0xff]
    %v263 = vld [vmem:[#allocation2 + $0x470] sm:$0xff]
    %v264 = vld [vmem:[#allocation2 + $0x478] sm:$0xff]
    %v265 = vld [vmem:[#allocation2 + $0x480] sm:$0xff]
    %v266 = vld [vmem:[#allocation2 + $0x488] sm:$0xff]
    %v267 = vld [vmem:[#allocation2 + $0x490] sm:$0xff]
    %v268 = vld [vmem:[#allocation2 + $0x498] sm:$0xff]
    %v269 = vld [vmem:[#allocation2 + $0x4a0] sm:$0xff]
    %v270 = vld [vmem:[#allocation2 + $0x4a8] sm:$0xff]
    %v271 = vld [vmem:[#allocation2 + $0x4b0] sm:$0xff]
    %v272 = vld [vmem:[#allocation2 + $0x4b8] sm:$0xff]
    %v273 = vld [vmem:[#allocation2 + $0x4c0] sm:$0xff]
    %v274 = vld [vmem:[#allocation2 + $0x4c8] sm:$0xff]
    %v275 = vld [vmem:[#allocation2 + $0x4d0] sm:$0xff]
    %v276 = vld [vmem:[#allocation2 + $0x4d8] sm:$0xff]
    %v277 = vld [vmem:[#allocation2 + $0x4e0] sm:$0xff]
    %v278 = vld [vmem:[#allocation2 + $0x4e8] sm:$0xff]
    %v279 = vld [vmem:[#allocation2 + $0x4f0] sm:$0xff]
    %v280 = vld [vmem:[#allocation2 + $0x4f8] sm:$0xff]
    %v281 = vld [vmem:[#allocation2 + $0x500] sm:$0xff]
    %v282 = vld [vmem:[#allocation2 + $0x508] sm:$0xff]
    %v283 = vld [vmem:[#allocation2 + $0x510] sm:$0xff]
    %v284 = vld [vmem:[#allocation2 + $0x518] sm:$0xff]
    %v285 = vld [vmem:[#allocation2 + $0x520] sm:$0xff]
    %v286 = vld [vmem:[#allocation2 + $0x528] sm:$0xff]
    %v287 = vld [vmem:[#allocation2 + $0x530] sm:$0xff]
    %v288 = vld [vmem:[#allocation2 + $0x538] sm:$0xff]
    %v289 = vld [vmem:[#allocation2 + $0x540] sm:$0xff]
    %v290 = vld [vmem:[#allocation2 + $0x548] sm:$0xff]
    %v291 = vld [vmem:[#allocation2 + $0x550] sm:$0xff]
    %v292 = vld [vmem:[#allocation2 + $0x558] sm:$0xff]
    %v293 = vld [vmem:[#allocation2 + $0x560] sm:$0xff]
    %v294 = vld [vmem:[#allocation2 + $0x568] sm:$0xff]
    %v295 = vld [vmem:[#allocation2 + $0x570] sm:$0xff]
    %v296 = vld [vmem:[#allocation2 + $0x578] sm:$0xff]
    %v297 = vld [vmem:[#allocation2 + $0x580] sm:$0xff]
    %v298 = vld [vmem:[#allocation2 + $0x588] sm:$0xff]
    %v299 = vld [vmem:[#allocation2 + $0x590] sm:$0xff]
    %v300 = vld [vmem:[#allocation2 + $0x598] sm:$0xff]
    %v301 = vld [vmem:[#allocation2 + $0x5a0] sm:$0xff]
    %v302 = vld [vmem:[#allocation2 + $0x5a8] sm:$0xff]
    %v303 = vld [vmem:[#allocation2 + $0x5b0] sm:$0xff]
    %v304 = vld [vmem:[#allocation2 + $0x5b8] sm:$0xff]
    %v305 = vld [vmem:[#allocation2 + $0x5c0] sm:$0xff]
    %v306 = vld [vmem:[#allocation2 + $0x5c8] sm:$0xff]
    %v307 = vld [vmem:[#allocation2 + $0x5d0] sm:$0xff]
    %v308 = vld [vmem:[#allocation2 + $0x5d8] sm:$0xff]
    %v309 = vld [vmem:[#allocation2 + $0x5e0] sm:$0xff]
    %v310 = vld [vmem:[#allocation2 + $0x5e8] sm:$0xff]
    %v311 = vld [vmem:[#allocation2 + $0x5f0] sm:$0xff]
    %v312 = vld [vmem:[#allocation2 + $0x5f8] sm:$0xff]
    %v313 = vld [vmem:[#allocation2 + $0x600] sm:$0xff]
    %v314 = vld [vmem:[#allocation2 + $0x608] sm:$0xff]
    %v315 = vld [vmem:[#allocation2 + $0x610] sm:$0xff]
    %v316 = vld [vmem:[#allocation2 + $0x618] sm:$0xff]
    %v317 = vld [vmem:[#allocation2 + $0x620] sm:$0xff]
    %v318 = vld [vmem:[#allocation2 + $0x628] sm:$0xff]
    %v319 = vld [vmem:[#allocation2 + $0x630] sm:$0xff]
    %v320 = vld [vmem:[#allocation2 + $0x638] sm:$0xff]
    %v321 = vld [vmem:[#allocation2 + $0x640] sm:$0xff]
    %v322 = vld [vmem:[#allocation2 + $0x648] sm:$0xff]
    %v323 = vld [vmem:[#allocation2 + $0x650] sm:$0xff]
    %v324 = vld [vmem:[#allocation2 + $0x658] sm:$0xff]
    %v325 = vld [vmem:[#allocation2 + $0x660] sm:$0xff]
    %v326 = vld [vmem:[#allocation2 + $0x668] sm:$0xff]
    %v327 = vld [vmem:[#allocation2 + $0x670] sm:$0xff]
    %v328 = vld [vmem:[#allocation2 + $0x678] sm:$0xff]
    %v329 = vld [vmem:[#allocation2 + $0x680] sm:$0xff]
    %v330 = vld [vmem:[#allocation2 + $0x688] sm:$0xff]
    %v331 = vld [vmem:[#allocation2 + $0x690] sm:$0xff]
    %v332 = vld [vmem:[#allocation2 + $0x698] sm:$0xff]
    %v333 = vld [vmem:[#allocation2 + $0x6a0] sm:$0xff]
    %v334 = vld [vmem:[#allocation2 + $0x6a8] sm:$0xff]
    %v335 = vld [vmem:[#allocation2 + $0x6b0] sm:$0xff]
    %v336 = vld [vmem:[#allocation2 + $0x6b8] sm:$0xff]
    %v337 = vld [vmem:[#allocation2 + $0x6c0] sm:$0xff]
    %v338 = vld [vmem:[#allocation2 + $0x6c8] sm:$0xff]
    %v339 = vld [vmem:[#allocation2 + $0x6d0] sm:$0xff]
    %v340 = vld [vmem:[#allocation2 + $0x6d8] sm:$0xff]
    %v341 = vld [vmem:[#allocation2 + $0x6e0] sm:$0xff]
    %v342 = vld [vmem:[#allocation2 + $0x6e8] sm:$0xff]
    %v343 = vld [vmem:[#allocation2 + $0x6f0] sm:$0xff]
    %v344 = vld [vmem:[#allocation2 + $0x6f8] sm:$0xff]
    %v345 = vld [vmem:[#allocation2 + $0x700] sm:$0xff]
    %v346 = vld [vmem:[#allocation2 + $0x708] sm:$0xff]
    %v347 = vld [vmem:[#allocation2 + $0x710] sm:$0xff]
    %v348 = vld [vmem:[#allocation2 + $0x718] sm:$0xff]
    %v349 = vld [vmem:[#allocation2 + $0x720] sm:$0xff]
    %v350 = vld [vmem:[#allocation2 + $0x728] sm:$0xff]
    %v351 = vld [vmem:[#allocation2 + $0x730] sm:$0xff]
    %v352 = vld [vmem:[#allocation2 + $0x738] sm:$0xff]
    %v353 = vld [vmem:[#allocation2 + $0x740] sm:$0xff]
    %v354 = vld [vmem:[#allocation2 + $0x748] sm:$0xff]
    %v355 = vld [vmem:[#allocation2 + $0x750] sm:$0xff]
    %v356 = vld [vmem:[#allocation2 + $0x758] sm:$0xff]
    %v357 = vld [vmem:[#allocation2 + $0x760] sm:$0xff]
    %v358 = vld [vmem:[#allocation2 + $0x768] sm:$0xff]
    %v359 = vld [vmem:[#allocation2 + $0x770] sm:$0xff]
    %v360 = vld [vmem:[#allocation2 + $0x778] sm:$0xff]
    %v361 = vld [vmem:[#allocation2 + $0x780] sm:$0xff]
    %v362 = vld [vmem:[#allocation2 + $0x788] sm:$0xff]
    %v363 = vld [vmem:[#allocation2 + $0x790] sm:$0xff]
    %v364 = vld [vmem:[#allocation2 + $0x798] sm:$0xff]
    %v365 = vld [vmem:[#allocation2 + $0x7a0] sm:$0xff]
    %v366 = vld [vmem:[#allocation2 + $0x7a8] sm:$0xff]
    %v367 = vld [vmem:[#allocation2 + $0x7b0] sm:$0xff]
    %v368 = vld [vmem:[#allocation2 + $0x7b8] sm:$0xff]
    %v369 = vld [vmem:[#allocation2 + $0x7c0] sm:$0xff]
    %v370 = vld [vmem:[#allocation2 + $0x7c8] sm:$0xff]
    %v371 = vld [vmem:[#allocation2 + $0x7d0] sm:$0xff]
    %v372 = vld [vmem:[#allocation2 + $0x7d8] sm:$0xff]
    %v373 = vld [vmem:[#allocation2 + $0x7e0] sm:$0xff]
    %v374 = vld [vmem:[#allocation2 + $0x7e8] sm:$0xff]
    %v375 = vld [vmem:[#allocation2 + $0x7f0] sm:$0xff]
    %v376 = vld [vmem:[#allocation2 + $0x7f8] sm:$0xff]
    %v377 = vld [vmem:[#allocation2 + $0x800] sm:$0xff]
    %v378 = vld [vmem:[#allocation2 + $0x808] sm:$0xff]
    %v379 = vld [vmem:[#allocation2 + $0x810] sm:$0xff]
    %v380 = vld [vmem:[#allocation2 + $0x818] sm:$0xff]
    %v381 = vld [vmem:[#allocation2 + $0x820] sm:$0xff]
    %v382 = vld [vmem:[#allocation2 + $0x828] sm:$0xff]
    %v383 = vld [vmem:[#allocation2 + $0x830] sm:$0xff]
    %v384 = vld [vmem:[#allocation2 + $0x838] sm:$0xff]
    %v385 = vld [vmem:[#allocation2 + $0x840] sm:$0xff]
    %v386 = vld [vmem:[#allocation2 + $0x848] sm:$0xff]
    %v387 = vld [vmem:[#allocation2 + $0x850] sm:$0xff]
    %v388 = vld [vmem:[#allocation2 + $0x858] sm:$0xff]
    %v389 = vld [vmem:[#allocation2 + $0x860] sm:$0xff]
    %v390 = vld [vmem:[#allocation2 + $0x868] sm:$0xff]
    %v391 = vld [vmem:[#allocation2 + $0x870] sm:$0xff]
    %v392 = vld [vmem:[#allocation2 + $0x878] sm:$0xff]
    %v393 = vld [vmem:[#allocation2 + $0x880] sm:$0xff]
    %v394 = vld [vmem:[#allocation2 + $0x888] sm:$0xff]
    %v395 = vld [vmem:[#allocation2 + $0x890] sm:$0xff]
    %v396 = vld [vmem:[#allocation2 + $0x898] sm:$0xff]
    %v397 = vld [vmem:[#allocation2 + $0x8a0] sm:$0xff]
    %v398 = vld [vmem:[#allocation2 + $0x8a8] sm:$0xff]
    %v399 = vld [vmem:[#allocation2 + $0x8b0] sm:$0xff]
    %v400 = vld [vmem:[#allocation2 + $0x8b8] sm:$0xff]
    %v401 = vld [vmem:[#allocation2 + $0x8c0] sm:$0xff]
    %v402 = vld [vmem:[#allocation2 + $0x8c8] sm:$0xff]
    %v403 = vld [vmem:[#allocation2 + $0x8d0] sm:$0xff]
    %v404 = vld [vmem:[#allocation2 + $0x8d8] sm:$0xff]
    %v405 = vld [vmem:[#allocation2 + $0x8e0] sm:$0xff]
    %v406 = vld [vmem:[#allocation2 + $0x8e8] sm:$0xff]
    %v407 = vld [vmem:[#allocation2 + $0x8f0] sm:$0xff]
    %v408 = vld [vmem:[#allocation2 + $0x8f8] sm:$0xff]
    %v409 = vld [vmem:[#allocation5] sm:$0x3f]
    %v411 = vlaneseq
    %v412 = vshrl.u32 %v411, 7
    %v413 = vsub.s32 0, %v412
    %v414 = vrot.slane %v409, %v413
    %v415 = vlaneseq
    %v416 = vshrl.u32 %v415, 7
    %v417 = vsub.s32 1, %v416
    %v418 = vrot.slane %v409, %v417
    %v419 = vlaneseq
    %v420 = vshrl.u32 %v419, 7
    %v421 = vsub.s32 2, %v420
    %v422 = vrot.slane %v409, %v421
    %v423 = vlaneseq
    %v424 = vshrl.u32 %v423, 7
    %v425 = vsub.s32 3, %v424
    %v426 = vrot.slane %v409, %v425
    %v427 = vlaneseq
    %v428 = vshrl.u32 %v427, 7
    %v429 = vsub.s32 4, %v428
    %v430 = vrot.slane %v409, %v429
    %v431 = vlaneseq
    %v432 = vshrl.u32 %v431, 7
    %v433 = vsub.s32 5, %v432
    %v434 = vrot.slane %v409, %v433
    %v489 = vunpack.c.l.b16 %v73
    %v490 = vunpack.c.h.b16 %v73
    %v491 = vunpack.c.l.b16 %v74
    %v492 = vunpack.c.h.b16 %v74
    %v493 = vunpack.c.l.b16 %v75
    %v494 = vunpack.c.h.b16 %v75
    %v495 = vunpack.c.l.b16 %v76
    %v496 = vunpack.c.h.b16 %v76
    %v497 = vunpack.c.l.b16 %v77
    %v498 = vunpack.c.h.b16 %v77
    %v499 = vunpack.c.l.b16 %v78
    %v500 = vunpack.c.h.b16 %v78
    %v501 = vunpack.c.l.b16 %v79
    %v502 = vunpack.c.h.b16 %v79
    %v503 = vunpack.c.l.b16 %v80
    %v504 = vunpack.c.h.b16 %v80
    %v505 = vunpack.c.l.b16 %v81
    %v506 = vunpack.c.h.b16 %v81
    %v507 = vunpack.c.l.b16 %v82
    %v508 = vunpack.c.h.b16 %v82
    %v509 = vunpack.c.l.b16 %v83
    %v510 = vunpack.c.h.b16 %v83
    %v511 = vunpack.c.l.b16 %v84
    %v512 = vunpack.c.h.b16 %v84
    %v513 = vunpack.c.l.b16 %v85
    %v514 = vunpack.c.h.b16 %v85
    %v515 = vunpack.c.l.b16 %v86
    %v516 = vunpack.c.h.b16 %v86
    %v517 = vunpack.c.l.b16 %v87
    %v518 = vunpack.c.h.b16 %v87
    %v519 = vunpack.c.l.b16 %v88
    %v520 = vunpack.c.h.b16 %v88
    %v521 = vunpack.c.l.b16 %v89
    %v522 = vunpack.c.h.b16 %v89
    %v523 = vunpack.c.l.b16 %v90
    %v524 = vunpack.c.h.b16 %v90
    %v525 = vunpack.c.l.b16 %v91
    %v526 = vunpack.c.h.b16 %v91
    %v527 = vunpack.c.l.b16 %v92
    %v528 = vunpack.c.h.b16 %v92
    %v529 = vunpack.c.l.b16 %v93
    %v530 = vunpack.c.h.b16 %v93
    %v531 = vunpack.c.l.b16 %v94
    %v532 = vunpack.c.h.b16 %v94
    %v533 = vunpack.c.l.b16 %v95
    %v534 = vunpack.c.h.b16 %v95
    %v535 = vunpack.c.l.b16 %v96
    %v536 = vunpack.c.h.b16 %v96
    %v537 = vunpack.c.l.b16 %v97
    %v538 = vunpack.c.h.b16 %v97
    %v539 = vunpack.c.l.b16 %v98
    %v540 = vunpack.c.h.b16 %v98
    %v541 = vunpack.c.l.b16 %v99
    %v542 = vunpack.c.h.b16 %v99
    %v543 = vunpack.c.l.b16 %v100
    %v544 = vunpack.c.h.b16 %v100
    %v545 = vunpack.c.l.b16 %v101
    %v546 = vunpack.c.h.b16 %v101
    %v547 = vunpack.c.l.b16 %v102
    %v548 = vunpack.c.h.b16 %v102
    %v549 = vunpack.c.l.b16 %v103
    %v550 = vunpack.c.h.b16 %v103
    %v551 = vunpack.c.l.b16 %v104
    %v552 = vunpack.c.h.b16 %v104
    %v553 = vunpack.c.l.b16 %v105
    %v554 = vunpack.c.h.b16 %v105
    %v555 = vunpack.c.l.b16 %v106
    %v556 = vunpack.c.h.b16 %v106
    %v557 = vunpack.c.l.b16 %v107
    %v558 = vunpack.c.h.b16 %v107
    %v559 = vunpack.c.l.b16 %v108
    %v560 = vunpack.c.h.b16 %v108
    %v561 = vunpack.c.l.b16 %v109
    %v562 = vunpack.c.h.b16 %v109
    %v563 = vunpack.c.l.b16 %v110
    %v564 = vunpack.c.h.b16 %v110
    %v565 = vunpack.c.l.b16 %v111
    %v566 = vunpack.c.h.b16 %v111
    %v567 = vunpack.c.l.b16 %v112
    %v568 = vunpack.c.h.b16 %v112
    %v569 = vunpack.c.l.b16 %v113
    %v570 = vunpack.c.h.b16 %v113
    %v571 = vunpack.c.l.b16 %v114
    %v572 = vunpack.c.h.b16 %v114
    %v573 = vunpack.c.l.b16 %v115
    %v574 = vunpack.c.h.b16 %v115
    %v575 = vunpack.c.l.b16 %v116
    %v576 = vunpack.c.h.b16 %v116
    %v577 = vunpack.c.l.b16 %v117
    %v578 = vunpack.c.h.b16 %v117
    %v579 = vunpack.c.l.b16 %v118
    %v580 = vunpack.c.h.b16 %v118
    %v581 = vunpack.c.l.b16 %v119
    %v582 = vunpack.c.h.b16 %v119
    %v583 = vunpack.c.l.b16 %v120
    %v584 = vunpack.c.h.b16 %v120
    %v585 = vpack.c.b16 %v495, %v489
    %v586 = vpack.c.b16 %v496, %v490
    %v587 = vpack.c.b16 %v497, %v491
    %v588 = vpack.c.b16 %v498, %v492
    %v589 = vpack.c.b16 %v499, %v493
    %v590 = vpack.c.b16 %v500, %v494
    %v591 = vpack.c.b16 %v507, %v501
    %v592 = vpack.c.b16 %v508, %v502
    %v593 = vpack.c.b16 %v509, %v503
    %v594 = vpack.c.b16 %v510, %v504
    %v595 = vpack.c.b16 %v511, %v505
    %v596 = vpack.c.b16 %v512, %v506
    %v597 = vpack.c.b16 %v519, %v513
    %v598 = vpack.c.b16 %v520, %v514
    %v599 = vpack.c.b16 %v521, %v515
    %v600 = vpack.c.b16 %v522, %v516
    %v601 = vpack.c.b16 %v523, %v517
    %v602 = vpack.c.b16 %v524, %v518
    %v603 = vpack.c.b16 %v531, %v525
    %v604 = vpack.c.b16 %v532, %v526
    %v605 = vpack.c.b16 %v533, %v527
    %v606 = vpack.c.b16 %v534, %v528
    %v607 = vpack.c.b16 %v535, %v529
    %v608 = vpack.c.b16 %v536, %v530
    %v609 = vpack.c.b16 %v543, %v537
    %v610 = vpack.c.b16 %v544, %v538
    %v611 = vpack.c.b16 %v545, %v539
    %v612 = vpack.c.b16 %v546, %v540
    %v613 = vpack.c.b16 %v547, %v541
    %v614 = vpack.c.b16 %v548, %v542
    %v615 = vpack.c.b16 %v555, %v549
    %v616 = vpack.c.b16 %v556, %v550
    %v617 = vpack.c.b16 %v557, %v551
    %v618 = vpack.c.b16 %v558, %v552
    %v619 = vpack.c.b16 %v559, %v553
    %v620 = vpack.c.b16 %v560, %v554
    %v621 = vpack.c.b16 %v567, %v561
    %v622 = vpack.c.b16 %v568, %v562
    %v623 = vpack.c.b16 %v569, %v563
    %v624 = vpack.c.b16 %v570, %v564
    %v625 = vpack.c.b16 %v571, %v565
    %v626 = vpack.c.b16 %v572, %v566
    %v627 = vpack.c.b16 %v579, %v573
    %v628 = vpack.c.b16 %v580, %v574
    %v629 = vpack.c.b16 %v581, %v575
    %v630 = vpack.c.b16 %v582, %v576
    %v631 = vpack.c.b16 %v583, %v577
    %v632 = vpack.c.b16 %v584, %v578
    %v969 = vunpack.c.l.b16 %v121
    %v970 = vunpack.c.h.b16 %v121
    %v971 = vunpack.c.l.b16 %v122
    %v972 = vunpack.c.h.b16 %v122
    %v973 = vunpack.c.l.b16 %v123
    %v974 = vunpack.c.h.b16 %v123
    %v975 = vunpack.c.l.b16 %v124
    %v976 = vunpack.c.h.b16 %v124
    %v977 = vunpack.c.l.b16 %v125
    %v978 = vunpack.c.h.b16 %v125
    %v979 = vunpack.c.l.b16 %v126
    %v980 = vunpack.c.h.b16 %v126
    %v981 = vunpack.c.l.b16 %v127
    %v982 = vunpack.c.h.b16 %v127
    %v983 = vunpack.c.l.b16 %v128
    %v984 = vunpack.c.h.b16 %v128
    %v985 = vunpack.c.l.b16 %v129
    %v986 = vunpack.c.h.b16 %v129
    %v987 = vunpack.c.l.b16 %v130
    %v988 = vunpack.c.h.b16 %v130
    %v989 = vunpack.c.l.b16 %v131
    %v990 = vunpack.c.h.b16 %v131
    %v991 = vunpack.c.l.b16 %v132
    %v992 = vunpack.c.h.b16 %v132
    %v993 = vunpack.c.l.b16 %v133
    %v994 = vunpack.c.h.b16 %v133
    %v995 = vunpack.c.l.b16 %v134
    %v996 = vunpack.c.h.b16 %v134
    %v997 = vunpack.c.l.b16 %v135
    %v998 = vunpack.c.h.b16 %v135
    %v999 = vunpack.c.l.b16 %v136
    %v1000 = vunpack.c.h.b16 %v136
    %v1001 = vunpack.c.l.b16 %v137
    %v1002 = vunpack.c.h.b16 %v137
    %v1003 = vunpack.c.l.b16 %v138
    %v1004 = vunpack.c.h.b16 %v138
    %v1005 = vunpack.c.l.b16 %v139
    %v1006 = vunpack.c.h.b16 %v139
    %v1007 = vunpack.c.l.b16 %v140
    %v1008 = vunpack.c.h.b16 %v140
    %v1009 = vunpack.c.l.b16 %v141
    %v1010 = vunpack.c.h.b16 %v141
    %v1011 = vunpack.c.l.b16 %v142
    %v1012 = vunpack.c.h.b16 %v142
    %v1013 = vunpack.c.l.b16 %v143
    %v1014 = vunpack.c.h.b16 %v143
    %v1015 = vunpack.c.l.b16 %v144
    %v1016 = vunpack.c.h.b16 %v144
    %v1017 = vunpack.c.l.b16 %v145
    %v1018 = vunpack.c.h.b16 %v145
    %v1019 = vunpack.c.l.b16 %v146
    %v1020 = vunpack.c.h.b16 %v146
    %v1021 = vunpack.c.l.b16 %v147
    %v1022 = vunpack.c.h.b16 %v147
    %v1023 = vunpack.c.l.b16 %v148
    %v1024 = vunpack.c.h.b16 %v148
    %v1025 = vunpack.c.l.b16 %v149
    %v1026 = vunpack.c.h.b16 %v149
    %v1027 = vunpack.c.l.b16 %v150
    %v1028 = vunpack.c.h.b16 %v150
    %v1029 = vunpack.c.l.b16 %v151
    %v1030 = vunpack.c.h.b16 %v151
    %v1031 = vunpack.c.l.b16 %v152
    %v1032 = vunpack.c.h.b16 %v152
    %v1033 = vunpack.c.l.b16 %v153
    %v1034 = vunpack.c.h.b16 %v153
    %v1035 = vunpack.c.l.b16 %v154
    %v1036 = vunpack.c.h.b16 %v154
    %v1037 = vunpack.c.l.b16 %v155
    %v1038 = vunpack.c.h.b16 %v155
    %v1039 = vunpack.c.l.b16 %v156
    %v1040 = vunpack.c.h.b16 %v156
    %v1041 = vunpack.c.l.b16 %v157
    %v1042 = vunpack.c.h.b16 %v157
    %v1043 = vunpack.c.l.b16 %v158
    %v1044 = vunpack.c.h.b16 %v158
    %v1045 = vunpack.c.l.b16 %v159
    %v1046 = vunpack.c.h.b16 %v159
    %v1047 = vunpack.c.l.b16 %v160
    %v1048 = vunpack.c.h.b16 %v160
    %v1049 = vunpack.c.l.b16 %v161
    %v1050 = vunpack.c.h.b16 %v161
    %v1051 = vunpack.c.l.b16 %v162
    %v1052 = vunpack.c.h.b16 %v162
    %v1053 = vunpack.c.l.b16 %v163
    %v1054 = vunpack.c.h.b16 %v163
    %v1055 = vunpack.c.l.b16 %v164
    %v1056 = vunpack.c.h.b16 %v164
    %v1057 = vunpack.c.l.b16 %v165
    %v1058 = vunpack.c.h.b16 %v165
    %v1059 = vunpack.c.l.b16 %v166
    %v1060 = vunpack.c.h.b16 %v166
    %v1061 = vunpack.c.l.b16 %v167
    %v1062 = vunpack.c.h.b16 %v167
    %v1063 = vunpack.c.l.b16 %v168
    %v1064 = vunpack.c.h.b16 %v168
    %v1065 = vunpack.c.l.b16 %v169
    %v1066 = vunpack.c.h.b16 %v169
    %v1067 = vunpack.c.l.b16 %v170
    %v1068 = vunpack.c.h.b16 %v170
    %v1069 = vunpack.c.l.b16 %v171
    %v1070 = vunpack.c.h.b16 %v171
    %v1071 = vunpack.c.l.b16 %v172
    %v1072 = vunpack.c.h.b16 %v172
    %v1073 = vunpack.c.l.b16 %v173
    %v1074 = vunpack.c.h.b16 %v173
    %v1075 = vunpack.c.l.b16 %v174
    %v1076 = vunpack.c.h.b16 %v174
    %v1077 = vunpack.c.l.b16 %v175
    %v1078 = vunpack.c.h.b16 %v175
    %v1079 = vunpack.c.l.b16 %v176
    %v1080 = vunpack.c.h.b16 %v176
    %v1081 = vunpack.c.l.b16 %v177
    %v1082 = vunpack.c.h.b16 %v177
    %v1083 = vunpack.c.l.b16 %v178
    %v1084 = vunpack.c.h.b16 %v178
    %v1085 = vunpack.c.l.b16 %v179
    %v1086 = vunpack.c.h.b16 %v179
    %v1087 = vunpack.c.l.b16 %v180
    %v1088 = vunpack.c.h.b16 %v180
    %v1089 = vunpack.c.l.b16 %v181
    %v1090 = vunpack.c.h.b16 %v181
    %v1091 = vunpack.c.l.b16 %v182
    %v1092 = vunpack.c.h.b16 %v182
    %v1093 = vunpack.c.l.b16 %v183
    %v1094 = vunpack.c.h.b16 %v183
    %v1095 = vunpack.c.l.b16 %v184
    %v1096 = vunpack.c.h.b16 %v184
    %v1097 = vunpack.c.l.b16 %v185
    %v1098 = vunpack.c.h.b16 %v185
    %v1099 = vunpack.c.l.b16 %v186
    %v1100 = vunpack.c.h.b16 %v186
    %v1101 = vunpack.c.l.b16 %v187
    %v1102 = vunpack.c.h.b16 %v187
    %v1103 = vunpack.c.l.b16 %v188
    %v1104 = vunpack.c.h.b16 %v188
    %v1105 = vunpack.c.l.b16 %v189
    %v1106 = vunpack.c.h.b16 %v189
    %v1107 = vunpack.c.l.b16 %v190
    %v1108 = vunpack.c.h.b16 %v190
    %v1109 = vunpack.c.l.b16 %v191
    %v1110 = vunpack.c.h.b16 %v191
    %v1111 = vunpack.c.l.b16 %v192
    %v1112 = vunpack.c.h.b16 %v192
    %v1113 = vunpack.c.l.b16 %v193
    %v1114 = vunpack.c.h.b16 %v193
    %v1115 = vunpack.c.l.b16 %v194
    %v1116 = vunpack.c.h.b16 %v194
    %v1117 = vunpack.c.l.b16 %v195
    %v1118 = vunpack.c.h.b16 %v195
    %v1119 = vunpack.c.l.b16 %v196
    %v1120 = vunpack.c.h.b16 %v196
    %v1121 = vunpack.c.l.b16 %v197
    %v1122 = vunpack.c.h.b16 %v197
    %v1123 = vunpack.c.l.b16 %v198
    %v1124 = vunpack.c.h.b16 %v198
    %v1125 = vunpack.c.l.b16 %v199
    %v1126 = vunpack.c.h.b16 %v199
    %v1127 = vunpack.c.l.b16 %v200
    %v1128 = vunpack.c.h.b16 %v200
    %v1129 = vunpack.c.l.b16 %v201
    %v1130 = vunpack.c.h.b16 %v201
    %v1131 = vunpack.c.l.b16 %v202
    %v1132 = vunpack.c.h.b16 %v202
    %v1133 = vunpack.c.l.b16 %v203
    %v1134 = vunpack.c.h.b16 %v203
    %v1135 = vunpack.c.l.b16 %v204
    %v1136 = vunpack.c.h.b16 %v204
    %v1137 = vunpack.c.l.b16 %v205
    %v1138 = vunpack.c.h.b16 %v205
    %v1139 = vunpack.c.l.b16 %v206
    %v1140 = vunpack.c.h.b16 %v206
    %v1141 = vunpack.c.l.b16 %v207
    %v1142 = vunpack.c.h.b16 %v207
    %v1143 = vunpack.c.l.b16 %v208
    %v1144 = vunpack.c.h.b16 %v208
    %v1145 = vunpack.c.l.b16 %v209
    %v1146 = vunpack.c.h.b16 %v209
    %v1147 = vunpack.c.l.b16 %v210
    %v1148 = vunpack.c.h.b16 %v210
    %v1149 = vunpack.c.l.b16 %v211
    %v1150 = vunpack.c.h.b16 %v211
    %v1151 = vunpack.c.l.b16 %v212
    %v1152 = vunpack.c.h.b16 %v212
    %v1153 = vunpack.c.l.b16 %v213
    %v1154 = vunpack.c.h.b16 %v213
    %v1155 = vunpack.c.l.b16 %v214
    %v1156 = vunpack.c.h.b16 %v214
    %v1157 = vunpack.c.l.b16 %v215
    %v1158 = vunpack.c.h.b16 %v215
    %v1159 = vunpack.c.l.b16 %v216
    %v1160 = vunpack.c.h.b16 %v216
    %v1161 = vunpack.c.l.b16 %v217
    %v1162 = vunpack.c.h.b16 %v217
    %v1163 = vunpack.c.l.b16 %v218
    %v1164 = vunpack.c.h.b16 %v218
    %v1165 = vunpack.c.l.b16 %v219
    %v1166 = vunpack.c.h.b16 %v219
    %v1167 = vunpack.c.l.b16 %v220
    %v1168 = vunpack.c.h.b16 %v220
    %v1169 = vunpack.c.l.b16 %v221
    %v1170 = vunpack.c.h.b16 %v221
    %v1171 = vunpack.c.l.b16 %v222
    %v1172 = vunpack.c.h.b16 %v222
    %v1173 = vunpack.c.l.b16 %v223
    %v1174 = vunpack.c.h.b16 %v223
    %v1175 = vunpack.c.l.b16 %v224
    %v1176 = vunpack.c.h.b16 %v224
    %v1177 = vunpack.c.l.b16 %v225
    %v1178 = vunpack.c.h.b16 %v225
    %v1179 = vunpack.c.l.b16 %v226
    %v1180 = vunpack.c.h.b16 %v226
    %v1181 = vunpack.c.l.b16 %v227
    %v1182 = vunpack.c.h.b16 %v227
    %v1183 = vunpack.c.l.b16 %v228
    %v1184 = vunpack.c.h.b16 %v228
    %v1185 = vunpack.c.l.b16 %v229
    %v1186 = vunpack.c.h.b16 %v229
    %v1187 = vunpack.c.l.b16 %v230
    %v1188 = vunpack.c.h.b16 %v230
    %v1189 = vunpack.c.l.b16 %v231
    %v1190 = vunpack.c.h.b16 %v231
    %v1191 = vunpack.c.l.b16 %v232
    %v1192 = vunpack.c.h.b16 %v232
    %v1193 = vunpack.c.l.b16 %v233
    %v1194 = vunpack.c.h.b16 %v233
    %v1195 = vunpack.c.l.b16 %v234
    %v1196 = vunpack.c.h.b16 %v234
    %v1197 = vunpack.c.l.b16 %v235
    %v1198 = vunpack.c.h.b16 %v235
    %v1199 = vunpack.c.l.b16 %v236
    %v1200 = vunpack.c.h.b16 %v236
    %v1201 = vunpack.c.l.b16 %v237
    %v1202 = vunpack.c.h.b16 %v237
    %v1203 = vunpack.c.l.b16 %v238
    %v1204 = vunpack.c.h.b16 %v238
    %v1205 = vunpack.c.l.b16 %v239
    %v1206 = vunpack.c.h.b16 %v239
    %v1207 = vunpack.c.l.b16 %v240
    %v1208 = vunpack.c.h.b16 %v240
    %v1209 = vunpack.c.l.b16 %v241
    %v1210 = vunpack.c.h.b16 %v241
    %v1211 = vunpack.c.l.b16 %v242
    %v1212 = vunpack.c.h.b16 %v242
    %v1213 = vunpack.c.l.b16 %v243
    %v1214 = vunpack.c.h.b16 %v243
    %v1215 = vunpack.c.l.b16 %v244
    %v1216 = vunpack.c.h.b16 %v244
    %v1217 = vunpack.c.l.b16 %v245
    %v1218 = vunpack.c.h.b16 %v245
    %v1219 = vunpack.c.l.b16 %v246
    %v1220 = vunpack.c.h.b16 %v246
    %v1221 = vunpack.c.l.b16 %v247
    %v1222 = vunpack.c.h.b16 %v247
    %v1223 = vunpack.c.l.b16 %v248
    %v1224 = vunpack.c.h.b16 %v248
    %v1225 = vunpack.c.l.b16 %v249
    %v1226 = vunpack.c.h.b16 %v249
    %v1227 = vunpack.c.l.b16 %v250
    %v1228 = vunpack.c.h.b16 %v250
    %v1229 = vunpack.c.l.b16 %v251
    %v1230 = vunpack.c.h.b16 %v251
    %v1231 = vunpack.c.l.b16 %v252
    %v1232 = vunpack.c.h.b16 %v252
    %v1233 = vunpack.c.l.b16 %v253
    %v1234 = vunpack.c.h.b16 %v253
    %v1235 = vunpack.c.l.b16 %v254
    %v1236 = vunpack.c.h.b16 %v254
    %v1237 = vunpack.c.l.b16 %v255
    %v1238 = vunpack.c.h.b16 %v255
    %v1239 = vunpack.c.l.b16 %v256
    %v1240 = vunpack.c.h.b16 %v256
    %v1241 = vunpack.c.l.b16 %v257
    %v1242 = vunpack.c.h.b16 %v257
    %v1243 = vunpack.c.l.b16 %v258
    %v1244 = vunpack.c.h.b16 %v258
    %v1245 = vunpack.c.l.b16 %v259
    %v1246 = vunpack.c.h.b16 %v259
    %v1247 = vunpack.c.l.b16 %v260
    %v1248 = vunpack.c.h.b16 %v260
    %v1249 = vunpack.c.l.b16 %v261
    %v1250 = vunpack.c.h.b16 %v261
    %v1251 = vunpack.c.l.b16 %v262
    %v1252 = vunpack.c.h.b16 %v262
    %v1253 = vunpack.c.l.b16 %v263
    %v1254 = vunpack.c.h.b16 %v263
    %v1255 = vunpack.c.l.b16 %v264
    %v1256 = vunpack.c.h.b16 %v264
    %v1257 = vunpack.c.l.b16 %v265
    %v1258 = vunpack.c.h.b16 %v265
    %v1259 = vunpack.c.l.b16 %v266
    %v1260 = vunpack.c.h.b16 %v266
    %v1261 = vunpack.c.l.b16 %v267
    %v1262 = vunpack.c.h.b16 %v267
    %v1263 = vunpack.c.l.b16 %v268
    %v1264 = vunpack.c.h.b16 %v268
    %v1265 = vunpack.c.l.b16 %v269
    %v1266 = vunpack.c.h.b16 %v269
    %v1267 = vunpack.c.l.b16 %v270
    %v1268 = vunpack.c.h.b16 %v270
    %v1269 = vunpack.c.l.b16 %v271
    %v1270 = vunpack.c.h.b16 %v271
    %v1271 = vunpack.c.l.b16 %v272
    %v1272 = vunpack.c.h.b16 %v272
    %v1273 = vunpack.c.l.b16 %v273
    %v1274 = vunpack.c.h.b16 %v273
    %v1275 = vunpack.c.l.b16 %v274
    %v1276 = vunpack.c.h.b16 %v274
    %v1277 = vunpack.c.l.b16 %v275
    %v1278 = vunpack.c.h.b16 %v275
    %v1279 = vunpack.c.l.b16 %v276
    %v1280 = vunpack.c.h.b16 %v276
    %v1281 = vunpack.c.l.b16 %v277
    %v1282 = vunpack.c.h.b16 %v277
    %v1283 = vunpack.c.l.b16 %v278
    %v1284 = vunpack.c.h.b16 %v278
    %v1285 = vunpack.c.l.b16 %v279
    %v1286 = vunpack.c.h.b16 %v279
    %v1287 = vunpack.c.l.b16 %v280
    %v1288 = vunpack.c.h.b16 %v280
    %v1289 = vunpack.c.l.b16 %v281
    %v1290 = vunpack.c.h.b16 %v281
    %v1291 = vunpack.c.l.b16 %v282
    %v1292 = vunpack.c.h.b16 %v282
    %v1293 = vunpack.c.l.b16 %v283
    %v1294 = vunpack.c.h.b16 %v283
    %v1295 = vunpack.c.l.b16 %v284
    %v1296 = vunpack.c.h.b16 %v284
    %v1297 = vunpack.c.l.b16 %v285
    %v1298 = vunpack.c.h.b16 %v285
    %v1299 = vunpack.c.l.b16 %v286
    %v1300 = vunpack.c.h.b16 %v286
    %v1301 = vunpack.c.l.b16 %v287
    %v1302 = vunpack.c.h.b16 %v287
    %v1303 = vunpack.c.l.b16 %v288
    %v1304 = vunpack.c.h.b16 %v288
    %v1305 = vunpack.c.l.b16 %v289
    %v1306 = vunpack.c.h.b16 %v289
    %v1307 = vunpack.c.l.b16 %v290
    %v1308 = vunpack.c.h.b16 %v290
    %v1309 = vunpack.c.l.b16 %v291
    %v1310 = vunpack.c.h.b16 %v291
    %v1311 = vunpack.c.l.b16 %v292
    %v1312 = vunpack.c.h.b16 %v292
    %v1313 = vunpack.c.l.b16 %v293
    %v1314 = vunpack.c.h.b16 %v293
    %v1315 = vunpack.c.l.b16 %v294
    %v1316 = vunpack.c.h.b16 %v294
    %v1317 = vunpack.c.l.b16 %v295
    %v1318 = vunpack.c.h.b16 %v295
    %v1319 = vunpack.c.l.b16 %v296
    %v1320 = vunpack.c.h.b16 %v296
    %v1321 = vunpack.c.l.b16 %v297
    %v1322 = vunpack.c.h.b16 %v297
    %v1323 = vunpack.c.l.b16 %v298
    %v1324 = vunpack.c.h.b16 %v298
    %v1325 = vunpack.c.l.b16 %v299
    %v1326 = vunpack.c.h.b16 %v299
    %v1327 = vunpack.c.l.b16 %v300
    %v1328 = vunpack.c.h.b16 %v300
    %v1329 = vunpack.c.l.b16 %v301
    %v1330 = vunpack.c.h.b16 %v301
    %v1331 = vunpack.c.l.b16 %v302
    %v1332 = vunpack.c.h.b16 %v302
    %v1333 = vunpack.c.l.b16 %v303
    %v1334 = vunpack.c.h.b16 %v303
    %v1335 = vunpack.c.l.b16 %v304
    %v1336 = vunpack.c.h.b16 %v304
    %v1337 = vunpack.c.l.b16 %v305
    %v1338 = vunpack.c.h.b16 %v305
    %v1339 = vunpack.c.l.b16 %v306
    %v1340 = vunpack.c.h.b16 %v306
    %v1341 = vunpack.c.l.b16 %v307
    %v1342 = vunpack.c.h.b16 %v307
    %v1343 = vunpack.c.l.b16 %v308
    %v1344 = vunpack.c.h.b16 %v308
    %v1345 = vunpack.c.l.b16 %v309
    %v1346 = vunpack.c.h.b16 %v309
    %v1347 = vunpack.c.l.b16 %v310
    %v1348 = vunpack.c.h.b16 %v310
    %v1349 = vunpack.c.l.b16 %v311
    %v1350 = vunpack.c.h.b16 %v311
    %v1351 = vunpack.c.l.b16 %v312
    %v1352 = vunpack.c.h.b16 %v312
    %v1353 = vunpack.c.l.b16 %v313
    %v1354 = vunpack.c.h.b16 %v313
    %v1355 = vunpack.c.l.b16 %v314
    %v1356 = vunpack.c.h.b16 %v314
    %v1357 = vunpack.c.l.b16 %v315
    %v1358 = vunpack.c.h.b16 %v315
    %v1359 = vunpack.c.l.b16 %v316
    %v1360 = vunpack.c.h.b16 %v316
    %v1361 = vunpack.c.l.b16 %v317
    %v1362 = vunpack.c.h.b16 %v317
    %v1363 = vunpack.c.l.b16 %v318
    %v1364 = vunpack.c.h.b16 %v318
    %v1365 = vunpack.c.l.b16 %v319
    %v1366 = vunpack.c.h.b16 %v319
    %v1367 = vunpack.c.l.b16 %v320
    %v1368 = vunpack.c.h.b16 %v320
    %v1369 = vunpack.c.l.b16 %v321
    %v1370 = vunpack.c.h.b16 %v321
    %v1371 = vunpack.c.l.b16 %v322
    %v1372 = vunpack.c.h.b16 %v322
    %v1373 = vunpack.c.l.b16 %v323
    %v1374 = vunpack.c.h.b16 %v323
    %v1375 = vunpack.c.l.b16 %v324
    %v1376 = vunpack.c.h.b16 %v324
    %v1377 = vunpack.c.l.b16 %v325
    %v1378 = vunpack.c.h.b16 %v325
    %v1379 = vunpack.c.l.b16 %v326
    %v1380 = vunpack.c.h.b16 %v326
    %v1381 = vunpack.c.l.b16 %v327
    %v1382 = vunpack.c.h.b16 %v327
    %v1383 = vunpack.c.l.b16 %v328
    %v1384 = vunpack.c.h.b16 %v328
    %v1385 = vunpack.c.l.b16 %v329
    %v1386 = vunpack.c.h.b16 %v329
    %v1387 = vunpack.c.l.b16 %v330
    %v1388 = vunpack.c.h.b16 %v330
    %v1389 = vunpack.c.l.b16 %v331
    %v1390 = vunpack.c.h.b16 %v331
    %v1391 = vunpack.c.l.b16 %v332
    %v1392 = vunpack.c.h.b16 %v332
    %v1393 = vunpack.c.l.b16 %v333
    %v1394 = vunpack.c.h.b16 %v333
    %v1395 = vunpack.c.l.b16 %v334
    %v1396 = vunpack.c.h.b16 %v334
    %v1397 = vunpack.c.l.b16 %v335
    %v1398 = vunpack.c.h.b16 %v335
    %v1399 = vunpack.c.l.b16 %v336
    %v1400 = vunpack.c.h.b16 %v336
    %v1401 = vunpack.c.l.b16 %v337
    %v1402 = vunpack.c.h.b16 %v337
    %v1403 = vunpack.c.l.b16 %v338
    %v1404 = vunpack.c.h.b16 %v338
    %v1405 = vunpack.c.l.b16 %v339
    %v1406 = vunpack.c.h.b16 %v339
    %v1407 = vunpack.c.l.b16 %v340
    %v1408 = vunpack.c.h.b16 %v340
    %v1409 = vunpack.c.l.b16 %v341
    %v1410 = vunpack.c.h.b16 %v341
    %v1411 = vunpack.c.l.b16 %v342
    %v1412 = vunpack.c.h.b16 %v342
    %v1413 = vunpack.c.l.b16 %v343
    %v1414 = vunpack.c.h.b16 %v343
    %v1415 = vunpack.c.l.b16 %v344
    %v1416 = vunpack.c.h.b16 %v344
    %v1417 = vunpack.c.l.b16 %v345
    %v1418 = vunpack.c.h.b16 %v345
    %v1419 = vunpack.c.l.b16 %v346
    %v1420 = vunpack.c.h.b16 %v346
    %v1421 = vunpack.c.l.b16 %v347
    %v1422 = vunpack.c.h.b16 %v347
    %v1423 = vunpack.c.l.b16 %v348
    %v1424 = vunpack.c.h.b16 %v348
    %v1425 = vunpack.c.l.b16 %v349
    %v1426 = vunpack.c.h.b16 %v349
    %v1427 = vunpack.c.l.b16 %v350
    %v1428 = vunpack.c.h.b16 %v350
    %v1429 = vunpack.c.l.b16 %v351
    %v1430 = vunpack.c.h.b16 %v351
    %v1431 = vunpack.c.l.b16 %v352
    %v1432 = vunpack.c.h.b16 %v352
    %v1433 = vunpack.c.l.b16 %v353
    %v1434 = vunpack.c.h.b16 %v353
    %v1435 = vunpack.c.l.b16 %v354
    %v1436 = vunpack.c.h.b16 %v354
    %v1437 = vunpack.c.l.b16 %v355
    %v1438 = vunpack.c.h.b16 %v355
    %v1439 = vunpack.c.l.b16 %v356
    %v1440 = vunpack.c.h.b16 %v356
    %v1441 = vunpack.c.l.b16 %v357
    %v1442 = vunpack.c.h.b16 %v357
    %v1443 = vunpack.c.l.b16 %v358
    %v1444 = vunpack.c.h.b16 %v358
    %v1445 = vunpack.c.l.b16 %v359
    %v1446 = vunpack.c.h.b16 %v359
    %v1447 = vunpack.c.l.b16 %v360
    %v1448 = vunpack.c.h.b16 %v360
    %v1449 = vunpack.c.l.b16 %v361
    %v1450 = vunpack.c.h.b16 %v361
    %v1451 = vunpack.c.l.b16 %v362
    %v1452 = vunpack.c.h.b16 %v362
    %v1453 = vunpack.c.l.b16 %v363
    %v1454 = vunpack.c.h.b16 %v363
    %v1455 = vunpack.c.l.b16 %v364
    %v1456 = vunpack.c.h.b16 %v364
    %v1457 = vunpack.c.l.b16 %v365
    %v1458 = vunpack.c.h.b16 %v365
    %v1459 = vunpack.c.l.b16 %v366
    %v1460 = vunpack.c.h.b16 %v366
    %v1461 = vunpack.c.l.b16 %v367
    %v1462 = vunpack.c.h.b16 %v367
    %v1463 = vunpack.c.l.b16 %v368
    %v1464 = vunpack.c.h.b16 %v368
    %v1465 = vunpack.c.l.b16 %v369
    %v1466 = vunpack.c.h.b16 %v369
    %v1467 = vunpack.c.l.b16 %v370
    %v1468 = vunpack.c.h.b16 %v370
    %v1469 = vunpack.c.l.b16 %v371
    %v1470 = vunpack.c.h.b16 %v371
    %v1471 = vunpack.c.l.b16 %v372
    %v1472 = vunpack.c.h.b16 %v372
    %v1473 = vunpack.c.l.b16 %v373
    %v1474 = vunpack.c.h.b16 %v373
    %v1475 = vunpack.c.l.b16 %v374
    %v1476 = vunpack.c.h.b16 %v374
    %v1477 = vunpack.c.l.b16 %v375
    %v1478 = vunpack.c.h.b16 %v375
    %v1479 = vunpack.c.l.b16 %v376
    %v1480 = vunpack.c.h.b16 %v376
    %v1481 = vunpack.c.l.b16 %v377
    %v1482 = vunpack.c.h.b16 %v377
    %v1483 = vunpack.c.l.b16 %v378
    %v1484 = vunpack.c.h.b16 %v378
    %v1485 = vunpack.c.l.b16 %v379
    %v1486 = vunpack.c.h.b16 %v379
    %v1487 = vunpack.c.l.b16 %v380
    %v1488 = vunpack.c.h.b16 %v380
    %v1489 = vunpack.c.l.b16 %v381
    %v1490 = vunpack.c.h.b16 %v381
    %v1491 = vunpack.c.l.b16 %v382
    %v1492 = vunpack.c.h.b16 %v382
    %v1493 = vunpack.c.l.b16 %v383
    %v1494 = vunpack.c.h.b16 %v383
    %v1495 = vunpack.c.l.b16 %v384
    %v1496 = vunpack.c.h.b16 %v384
    %v1497 = vunpack.c.l.b16 %v385
    %v1498 = vunpack.c.h.b16 %v385
    %v1499 = vunpack.c.l.b16 %v386
    %v1500 = vunpack.c.h.b16 %v386
    %v1501 = vunpack.c.l.b16 %v387
    %v1502 = vunpack.c.h.b16 %v387
    %v1503 = vunpack.c.l.b16 %v388
    %v1504 = vunpack.c.h.b16 %v388
    %v1505 = vunpack.c.l.b16 %v389
    %v1506 = vunpack.c.h.b16 %v389
    %v1507 = vunpack.c.l.b16 %v390
    %v1508 = vunpack.c.h.b16 %v390
    %v1509 = vunpack.c.l.b16 %v391
    %v1510 = vunpack.c.h.b16 %v391
    %v1511 = vunpack.c.l.b16 %v392
    %v1512 = vunpack.c.h.b16 %v392
    %v1513 = vunpack.c.l.b16 %v393
    %v1514 = vunpack.c.h.b16 %v393
    %v1515 = vunpack.c.l.b16 %v394
    %v1516 = vunpack.c.h.b16 %v394
    %v1517 = vunpack.c.l.b16 %v395
    %v1518 = vunpack.c.h.b16 %v395
    %v1519 = vunpack.c.l.b16 %v396
    %v1520 = vunpack.c.h.b16 %v396
    %v1521 = vunpack.c.l.b16 %v397
    %v1522 = vunpack.c.h.b16 %v397
    %v1523 = vunpack.c.l.b16 %v398
    %v1524 = vunpack.c.h.b16 %v398
    %v1525 = vunpack.c.l.b16 %v399
    %v1526 = vunpack.c.h.b16 %v399
    %v1527 = vunpack.c.l.b16 %v400
    %v1528 = vunpack.c.h.b16 %v400
    %v1529 = vunpack.c.l.b16 %v401
    %v1530 = vunpack.c.h.b16 %v401
    %v1531 = vunpack.c.l.b16 %v402
    %v1532 = vunpack.c.h.b16 %v402
    %v1533 = vunpack.c.l.b16 %v403
    %v1534 = vunpack.c.h.b16 %v403
    %v1535 = vunpack.c.l.b16 %v404
    %v1536 = vunpack.c.h.b16 %v404
    %v1537 = vunpack.c.l.b16 %v405
    %v1538 = vunpack.c.h.b16 %v405
    %v1539 = vunpack.c.l.b16 %v406
    %v1540 = vunpack.c.h.b16 %v406
    %v1541 = vunpack.c.l.b16 %v407
    %v1542 = vunpack.c.h.b16 %v407
    %v1543 = vunpack.c.l.b16 %v408
    %v1544 = vunpack.c.h.b16 %v408
    %v1545 = vpack.c.b16 %v975, %v969
    %v1546 = vpack.c.b16 %v976, %v970
    %v1547 = vpack.c.b16 %v977, %v971
    %v1548 = vpack.c.b16 %v978, %v972
    %v1549 = vpack.c.b16 %v979, %v973
    %v1550 = vpack.c.b16 %v980, %v974
    %v1551 = vpack.c.b16 %v987, %v981
    %v1552 = vpack.c.b16 %v988, %v982
    %v1553 = vpack.c.b16 %v989, %v983
    %v1554 = vpack.c.b16 %v990, %v984
    %v1555 = vpack.c.b16 %v991, %v985
    %v1556 = vpack.c.b16 %v992, %v986
    %v1557 = vpack.c.b16 %v999, %v993
    %v1558 = vpack.c.b16 %v1000, %v994
    %v1559 = vpack.c.b16 %v1001, %v995
    %v1560 = vpack.c.b16 %v1002, %v996
    %v1561 = vpack.c.b16 %v1003, %v997
    %v1562 = vpack.c.b16 %v1004, %v998
    %v1563 = vpack.c.b16 %v1011, %v1005
    %v1564 = vpack.c.b16 %v1012, %v1006
    %v1565 = vpack.c.b16 %v1013, %v1007
    %v1566 = vpack.c.b16 %v1014, %v1008
    %v1567 = vpack.c.b16 %v1015, %v1009
    %v1568 = vpack.c.b16 %v1016, %v1010
    %v1569 = vpack.c.b16 %v1023, %v1017
    %v1570 = vpack.c.b16 %v1024, %v1018
    %v1571 = vpack.c.b16 %v1025, %v1019
    %v1572 = vpack.c.b16 %v1026, %v1020
    %v1573 = vpack.c.b16 %v1027, %v1021
    %v1574 = vpack.c.b16 %v1028, %v1022
    %v1575 = vpack.c.b16 %v1035, %v1029
    %v1576 = vpack.c.b16 %v1036, %v1030
    %v1577 = vpack.c.b16 %v1037, %v1031
    %v1578 = vpack.c.b16 %v1038, %v1032
    %v1579 = vpack.c.b16 %v1039, %v1033
    %v1580 = vpack.c.b16 %v1040, %v1034
    %v1581 = vpack.c.b16 %v1047, %v1041
    %v1582 = vpack.c.b16 %v1048, %v1042
    %v1583 = vpack.c.b16 %v1049, %v1043
    %v1584 = vpack.c.b16 %v1050, %v1044
    %v1585 = vpack.c.b16 %v1051, %v1045
    %v1586 = vpack.c.b16 %v1052, %v1046
    %v1587 = vpack.c.b16 %v1059, %v1053
    %v1588 = vpack.c.b16 %v1060, %v1054
    %v1589 = vpack.c.b16 %v1061, %v1055
    %v1590 = vpack.c.b16 %v1062, %v1056
    %v1591 = vpack.c.b16 %v1063, %v1057
    %v1592 = vpack.c.b16 %v1064, %v1058
    %v1593 = vpack.c.b16 %v1071, %v1065
    %v1594 = vpack.c.b16 %v1072, %v1066
    %v1595 = vpack.c.b16 %v1073, %v1067
    %v1596 = vpack.c.b16 %v1074, %v1068
    %v1597 = vpack.c.b16 %v1075, %v1069
    %v1598 = vpack.c.b16 %v1076, %v1070
    %v1599 = vpack.c.b16 %v1083, %v1077
    %v1600 = vpack.c.b16 %v1084, %v1078
    %v1601 = vpack.c.b16 %v1085, %v1079
    %v1602 = vpack.c.b16 %v1086, %v1080
    %v1603 = vpack.c.b16 %v1087, %v1081
    %v1604 = vpack.c.b16 %v1088, %v1082
    %v1605 = vpack.c.b16 %v1095, %v1089
    %v1606 = vpack.c.b16 %v1096, %v1090
    %v1607 = vpack.c.b16 %v1097, %v1091
    %v1608 = vpack.c.b16 %v1098, %v1092
    %v1609 = vpack.c.b16 %v1099, %v1093
    %v1610 = vpack.c.b16 %v1100, %v1094
    %v1611 = vpack.c.b16 %v1107, %v1101
    %v1612 = vpack.c.b16 %v1108, %v1102
    %v1613 = vpack.c.b16 %v1109, %v1103
    %v1614 = vpack.c.b16 %v1110, %v1104
    %v1615 = vpack.c.b16 %v1111, %v1105
    %v1616 = vpack.c.b16 %v1112, %v1106
    %v1617 = vpack.c.b16 %v1119, %v1113
    %v1618 = vpack.c.b16 %v1120, %v1114
    %v1619 = vpack.c.b16 %v1121, %v1115
    %v1620 = vpack.c.b16 %v1122, %v1116
    %v1621 = vpack.c.b16 %v1123, %v1117
    %v1622 = vpack.c.b16 %v1124, %v1118
    %v1623 = vpack.c.b16 %v1131, %v1125
    %v1624 = vpack.c.b16 %v1132, %v1126
    %v1625 = vpack.c.b16 %v1133, %v1127
    %v1626 = vpack.c.b16 %v1134, %v1128
    %v1627 = vpack.c.b16 %v1135, %v1129
    %v1628 = vpack.c.b16 %v1136, %v1130
    %v1629 = vpack.c.b16 %v1143, %v1137
    %v1630 = vpack.c.b16 %v1144, %v1138
    %v1631 = vpack.c.b16 %v1145, %v1139
    %v1632 = vpack.c.b16 %v1146, %v1140
    %v1633 = vpack.c.b16 %v1147, %v1141
    %v1634 = vpack.c.b16 %v1148, %v1142
    %v1635 = vpack.c.b16 %v1155, %v1149
    %v1636 = vpack.c.b16 %v1156, %v1150
    %v1637 = vpack.c.b16 %v1157, %v1151
    %v1638 = vpack.c.b16 %v1158, %v1152
    %v1639 = vpack.c.b16 %v1159, %v1153
    %v1640 = vpack.c.b16 %v1160, %v1154
    %v1641 = vpack.c.b16 %v1167, %v1161
    %v1642 = vpack.c.b16 %v1168, %v1162
    %v1643 = vpack.c.b16 %v1169, %v1163
    %v1644 = vpack.c.b16 %v1170, %v1164
    %v1645 = vpack.c.b16 %v1171, %v1165
    %v1646 = vpack.c.b16 %v1172, %v1166
    %v1647 = vpack.c.b16 %v1179, %v1173
    %v1648 = vpack.c.b16 %v1180, %v1174
    %v1649 = vpack.c.b16 %v1181, %v1175
    %v1650 = vpack.c.b16 %v1182, %v1176
    %v1651 = vpack.c.b16 %v1183, %v1177
    %v1652 = vpack.c.b16 %v1184, %v1178
    %v1653 = vpack.c.b16 %v1191, %v1185
    %v1654 = vpack.c.b16 %v1192, %v1186
    %v1655 = vpack.c.b16 %v1193, %v1187
    %v1656 = vpack.c.b16 %v1194, %v1188
    %v1657 = vpack.c.b16 %v1195, %v1189
    %v1658 = vpack.c.b16 %v1196, %v1190
    %v1659 = vpack.c.b16 %v1203, %v1197
    %v1660 = vpack.c.b16 %v1204, %v1198
    %v1661 = vpack.c.b16 %v1205, %v1199
    %v1662 = vpack.c.b16 %v1206, %v1200
    %v1663 = vpack.c.b16 %v1207, %v1201
    %v1664 = vpack.c.b16 %v1208, %v1202
    %v1665 = vpack.c.b16 %v1215, %v1209
    %v1666 = vpack.c.b16 %v1216, %v1210
    %v1667 = vpack.c.b16 %v1217, %v1211
    %v1668 = vpack.c.b16 %v1218, %v1212
    %v1669 = vpack.c.b16 %v1219, %v1213
    %v1670 = vpack.c.b16 %v1220, %v1214
    %v1671 = vpack.c.b16 %v1227, %v1221
    %v1672 = vpack.c.b16 %v1228, %v1222
    %v1673 = vpack.c.b16 %v1229, %v1223
    %v1674 = vpack.c.b16 %v1230, %v1224
    %v1675 = vpack.c.b16 %v1231, %v1225
    %v1676 = vpack.c.b16 %v1232, %v1226
    %v1677 = vpack.c.b16 %v1239, %v1233
    %v1678 = vpack.c.b16 %v1240, %v1234
    %v1679 = vpack.c.b16 %v1241, %v1235
    %v1680 = vpack.c.b16 %v1242, %v1236
    %v1681 = vpack.c.b16 %v1243, %v1237
    %v1682 = vpack.c.b16 %v1244, %v1238
    %v1683 = vpack.c.b16 %v1251, %v1245
    %v1684 = vpack.c.b16 %v1252, %v1246
    %v1685 = vpack.c.b16 %v1253, %v1247
    %v1686 = vpack.c.b16 %v1254, %v1248
    %v1687 = vpack.c.b16 %v1255, %v1249
    %v1688 = vpack.c.b16 %v1256, %v1250
    %v1689 = vpack.c.b16 %v1263, %v1257
    %v1690 = vpack.c.b16 %v1264, %v1258
    %v1691 = vpack.c.b16 %v1265, %v1259
    %v1692 = vpack.c.b16 %v1266, %v1260
    %v1693 = vpack.c.b16 %v1267, %v1261
    %v1694 = vpack.c.b16 %v1268, %v1262
    %v1695 = vpack.c.b16 %v1275, %v1269
    %v1696 = vpack.c.b16 %v1276, %v1270
    %v1697 = vpack.c.b16 %v1277, %v1271
    %v1698 = vpack.c.b16 %v1278, %v1272
    %v1699 = vpack.c.b16 %v1279, %v1273
    %v1700 = vpack.c.b16 %v1280, %v1274
    %v1701 = vpack.c.b16 %v1287, %v1281
    %v1702 = vpack.c.b16 %v1288, %v1282
    %v1703 = vpack.c.b16 %v1289, %v1283
    %v1704 = vpack.c.b16 %v1290, %v1284
    %v1705 = vpack.c.b16 %v1291, %v1285
    %v1706 = vpack.c.b16 %v1292, %v1286
    %v1707 = vpack.c.b16 %v1299, %v1293
    %v1708 = vpack.c.b16 %v1300, %v1294
    %v1709 = vpack.c.b16 %v1301, %v1295
    %v1710 = vpack.c.b16 %v1302, %v1296
    %v1711 = vpack.c.b16 %v1303, %v1297
    %v1712 = vpack.c.b16 %v1304, %v1298
    %v1713 = vpack.c.b16 %v1311, %v1305
    %v1714 = vpack.c.b16 %v1312, %v1306
    %v1715 = vpack.c.b16 %v1313, %v1307
    %v1716 = vpack.c.b16 %v1314, %v1308
    %v1717 = vpack.c.b16 %v1315, %v1309
    %v1718 = vpack.c.b16 %v1316, %v1310
    %v1719 = vpack.c.b16 %v1323, %v1317
    %v1720 = vpack.c.b16 %v1324, %v1318
    %v1721 = vpack.c.b16 %v1325, %v1319
    %v1722 = vpack.c.b16 %v1326, %v1320
    %v1723 = vpack.c.b16 %v1327, %v1321
    %v1724 = vpack.c.b16 %v1328, %v1322
    %v1725 = vpack.c.b16 %v1335, %v1329
    %v1726 = vpack.c.b16 %v1336, %v1330
    %v1727 = vpack.c.b16 %v1337, %v1331
    %v1728 = vpack.c.b16 %v1338, %v1332
    %v1729 = vpack.c.b16 %v1339, %v1333
    %v1730 = vpack.c.b16 %v1340, %v1334
    %v1731 = vpack.c.b16 %v1347, %v1341
    %v1732 = vpack.c.b16 %v1348, %v1342
    %v1733 = vpack.c.b16 %v1349, %v1343
    %v1734 = vpack.c.b16 %v1350, %v1344
    %v1735 = vpack.c.b16 %v1351, %v1345
    %v1736 = vpack.c.b16 %v1352, %v1346
    %v1737 = vpack.c.b16 %v1359, %v1353
    %v1738 = vpack.c.b16 %v1360, %v1354
    %v1739 = vpack.c.b16 %v1361, %v1355
    %v1740 = vpack.c.b16 %v1362, %v1356
    %v1741 = vpack.c.b16 %v1363, %v1357
    %v1742 = vpack.c.b16 %v1364, %v1358
    %v1743 = vpack.c.b16 %v1371, %v1365
    %v1744 = vpack.c.b16 %v1372, %v1366
    %v1745 = vpack.c.b16 %v1373, %v1367
    %v1746 = vpack.c.b16 %v1374, %v1368
    %v1747 = vpack.c.b16 %v1375, %v1369
    %v1748 = vpack.c.b16 %v1376, %v1370
    %v1749 = vpack.c.b16 %v1383, %v1377
    %v1750 = vpack.c.b16 %v1384, %v1378
    %v1751 = vpack.c.b16 %v1385, %v1379
    %v1752 = vpack.c.b16 %v1386, %v1380
    %v1753 = vpack.c.b16 %v1387, %v1381
    %v1754 = vpack.c.b16 %v1388, %v1382
    %v1755 = vpack.c.b16 %v1395, %v1389
    %v1756 = vpack.c.b16 %v1396, %v1390
    %v1757 = vpack.c.b16 %v1397, %v1391
    %v1758 = vpack.c.b16 %v1398, %v1392
    %v1759 = vpack.c.b16 %v1399, %v1393
    %v1760 = vpack.c.b16 %v1400, %v1394
    %v1761 = vpack.c.b16 %v1407, %v1401
    %v1762 = vpack.c.b16 %v1408, %v1402
    %v1763 = vpack.c.b16 %v1409, %v1403
    %v1764 = vpack.c.b16 %v1410, %v1404
    %v1765 = vpack.c.b16 %v1411, %v1405
    %v1766 = vpack.c.b16 %v1412, %v1406
    %v1767 = vpack.c.b16 %v1419, %v1413
    %v1768 = vpack.c.b16 %v1420, %v1414
    %v1769 = vpack.c.b16 %v1421, %v1415
    %v1770 = vpack.c.b16 %v1422, %v1416
    %v1771 = vpack.c.b16 %v1423, %v1417
    %v1772 = vpack.c.b16 %v1424, %v1418
    %v1773 = vpack.c.b16 %v1431, %v1425
    %v1774 = vpack.c.b16 %v1432, %v1426
    %v1775 = vpack.c.b16 %v1433, %v1427
    %v1776 = vpack.c.b16 %v1434, %v1428
    %v1777 = vpack.c.b16 %v1435, %v1429
    %v1778 = vpack.c.b16 %v1436, %v1430
    %v1779 = vpack.c.b16 %v1443, %v1437
    %v1780 = vpack.c.b16 %v1444, %v1438
    %v1781 = vpack.c.b16 %v1445, %v1439
    %v1782 = vpack.c.b16 %v1446, %v1440
    %v1783 = vpack.c.b16 %v1447, %v1441
    %v1784 = vpack.c.b16 %v1448, %v1442
    %v1785 = vpack.c.b16 %v1455, %v1449
    %v1786 = vpack.c.b16 %v1456, %v1450
    %v1787 = vpack.c.b16 %v1457, %v1451
    %v1788 = vpack.c.b16 %v1458, %v1452
    %v1789 = vpack.c.b16 %v1459, %v1453
    %v1790 = vpack.c.b16 %v1460, %v1454
    %v1791 = vpack.c.b16 %v1467, %v1461
    %v1792 = vpack.c.b16 %v1468, %v1462
    %v1793 = vpack.c.b16 %v1469, %v1463
    %v1794 = vpack.c.b16 %v1470, %v1464
    %v1795 = vpack.c.b16 %v1471, %v1465
    %v1796 = vpack.c.b16 %v1472, %v1466
    %v1797 = vpack.c.b16 %v1479, %v1473
    %v1798 = vpack.c.b16 %v1480, %v1474
    %v1799 = vpack.c.b16 %v1481, %v1475
    %v1800 = vpack.c.b16 %v1482, %v1476
    %v1801 = vpack.c.b16 %v1483, %v1477
    %v1802 = vpack.c.b16 %v1484, %v1478
    %v1803 = vpack.c.b16 %v1491, %v1485
    %v1804 = vpack.c.b16 %v1492, %v1486
    %v1805 = vpack.c.b16 %v1493, %v1487
    %v1806 = vpack.c.b16 %v1494, %v1488
    %v1807 = vpack.c.b16 %v1495, %v1489
    %v1808 = vpack.c.b16 %v1496, %v1490
    %v1809 = vpack.c.b16 %v1503, %v1497
    %v1810 = vpack.c.b16 %v1504, %v1498
    %v1811 = vpack.c.b16 %v1505, %v1499
    %v1812 = vpack.c.b16 %v1506, %v1500
    %v1813 = vpack.c.b16 %v1507, %v1501
    %v1814 = vpack.c.b16 %v1508, %v1502
    %v1815 = vpack.c.b16 %v1515, %v1509
    %v1816 = vpack.c.b16 %v1516, %v1510
    %v1817 = vpack.c.b16 %v1517, %v1511
    %v1818 = vpack.c.b16 %v1518, %v1512
    %v1819 = vpack.c.b16 %v1519, %v1513
    %v1820 = vpack.c.b16 %v1520, %v1514
    %v1821 = vpack.c.b16 %v1527, %v1521
    %v1822 = vpack.c.b16 %v1528, %v1522
    %v1823 = vpack.c.b16 %v1529, %v1523
    %v1824 = vpack.c.b16 %v1530, %v1524
    %v1825 = vpack.c.b16 %v1531, %v1525
    %v1826 = vpack.c.b16 %v1532, %v1526
    %v1827 = vpack.c.b16 %v1539, %v1533
    %v1828 = vpack.c.b16 %v1540, %v1534
    %v1829 = vpack.c.b16 %v1541, %v1535
    %v1830 = vpack.c.b16 %v1542, %v1536
    %v1831 = vpack.c.b16 %v1543, %v1537
    %v1832 = vpack.c.b16 %v1544, %v1538
    %2121 = vmatprep.subr.bf16.mxu0 %v1588
    %2122 = vmatpush1.bf16.msra.mxu0 %v1587
    %2123 = vmatprep.subr.bf16.mxu0 %v1582
    %2124 = vmatpush1.bf16.msra.mxu0 %v1581
    %2125 = vmatprep.subr.bf16.mxu0 %v1576
    %2126 = vmatpush1.bf16.msra.mxu0 %v1575
    %2127 = vmatprep.subr.bf16.mxu0 %v1570
    %2128 = vmatpush1.bf16.msra.mxu0 %v1569
    %2129 = vmatprep.subr.bf16.mxu0 %v1564
    %2130 = vmatpush1.bf16.msra.mxu0 %v1563
    %2131 = vmatprep.subr.bf16.mxu0 %v1558
    %2132 = vmatpush1.bf16.msra.mxu0 %v1557
    %2133 = vmatprep.subr.bf16.mxu0 %v1552
    %2134 = vmatpush1.bf16.msra.mxu0 %v1551
    %2135 = vmatprep.subr.bf16.mxu0 %v1546
    %2136 = vmatpush1.bf16.msra.mxu0 %v1545
    %2137 = vmatprep.subr.bf16.mxu0 %v1636
    %2138 = vmatpush2.bf16.msra.mxu0 %v1635
    %2139 = vmatprep.subr.bf16.mxu0 %v1630
    %2140 = vmatpush2.bf16.msra.mxu0 %v1629
    %2141 = vmatprep.subr.bf16.mxu0 %v1624
    %2142 = vmatpush2.bf16.msra.mxu0 %v1623
    %2143 = vmatprep.subr.bf16.mxu0 %v1618
    %2144 = vmatpush2.bf16.msra.mxu0 %v1617
    %2145 = vmatprep.subr.bf16.mxu0 %v1612
    %2146 = vmatpush2.bf16.msra.mxu0 %v1611
    %2147 = vmatprep.subr.bf16.mxu0 %v1606
    %2148 = vmatpush2.bf16.msra.mxu0 %v1605
    %2149 = vmatprep.subr.bf16.mxu0 %v1600
    %2150 = vmatpush2.bf16.msra.mxu0 %v1599
    %2151 = vmatprep.subr.bf16.mxu0 %v1594
    %2152 = vmatpush2.bf16.msra.mxu0 %v1593
    %2153 = vmatprep.mubr.bf16.mxu0 %v586
    %2154 = vmatmul.mubr.bf16.gmra.mxu0 %v585
    %v2155 = vpop.f32.mrf.mxu0
    %v2156 = vadd.f32 %v414, %v2155
    %v2157 = vpop.f32.mrf.mxu0
    %v2158 = vadd.f32 %v418, %v2157
    %v2159 = vpop.f32.mrf.mxu0
    %v2160 = vadd.f32 %v414, %v2159
    %v2161 = vpop.f32.mrf.mxu0
    %v2162 = vadd.f32 %v418, %v2161
    %2163 = vmatprep.mubr.bf16.mxu0 %v592
    %2164 = vmatmul.mubr.bf16.gmra.mxu0 %v591
    %v2165 = vpop.f32.mrf.mxu0
    %v2166 = vadd.f32 %v414, %v2165
    %v2167 = vpop.f32.mrf.mxu0
    %v2168 = vadd.f32 %v418, %v2167
    %v2169 = vpop.f32.mrf.mxu0
    %v2170 = vadd.f32 %v414, %v2169
    %v2171 = vpop.f32.mrf.mxu0
    %v2172 = vadd.f32 %v418, %v2171
    %2173 = vmatprep.mubr.bf16.mxu0 %v598
    %2174 = vmatmul.mubr.bf16.gmra.mxu0 %v597
    %v2175 = vpop.f32.mrf.mxu0
    %v2176 = vadd.f32 %v414, %v2175
    %v2177 = vpop.f32.mrf.mxu0
    %v2178 = vadd.f32 %v418, %v2177
    %v2179 = vpop.f32.mrf.mxu0
    %v2180 = vadd.f32 %v414, %v2179
    %v2181 = vpop.f32.mrf.mxu0
    %v2182 = vadd.f32 %v418, %v2181
    %2183 = vmatprep.mubr.bf16.mxu0 %v604
    %2184 = vmatmul.mubr.bf16.gmra.mxu0 %v603
    %v2185 = vpop.f32.mrf.mxu0
    %v2186 = vadd.f32 %v414, %v2185
    %v2187 = vpop.f32.mrf.mxu0
    %v2188 = vadd.f32 %v418, %v2187
    %v2189 = vpop.f32.mrf.mxu0
    %v2190 = vadd.f32 %v414, %v2189
    %v2191 = vpop.f32.mrf.mxu0
    %v2192 = vadd.f32 %v418, %v2191
    %2193 = vmatprep.mubr.bf16.mxu0 %v610
    %2194 = vmatmul.mubr.bf16.gmra.mxu0 %v609
    %v2195 = vpop.f32.mrf.mxu0
    %v2196 = vadd.f32 %v414, %v2195
    %v2197 = vpop.f32.mrf.mxu0
    %v2198 = vadd.f32 %v418, %v2197
    %v2199 = vpop.f32.mrf.mxu0
    %v2200 = vadd.f32 %v414, %v2199
    %v2201 = vpop.f32.mrf.mxu0
    %v2202 = vadd.f32 %v418, %v2201
    %2203 = vmatprep.mubr.bf16.mxu0 %v616
    %2204 = vmatmul.mubr.bf16.gmra.mxu0 %v615
    %v2205 = vpop.f32.mrf.mxu0
    %v2206 = vadd.f32 %v414, %v2205
    %v2207 = vpop.f32.mrf.mxu0
    %v2208 = vadd.f32 %v418, %v2207
    %v2209 = vpop.f32.mrf.mxu0
    %v2210 = vadd.f32 %v414, %v2209
    %v2211 = vpop.f32.mrf.mxu0
    %v2212 = vadd.f32 %v418, %v2211
    %2213 = vmatprep.mubr.bf16.mxu0 %v622
    %2214 = vmatmul.mubr.bf16.gmra.mxu0 %v621
    %v2215 = vpop.f32.mrf.mxu0
    %v2216 = vadd.f32 %v414, %v2215
    %v2217 = vpop.f32.mrf.mxu0
    %v2218 = vadd.f32 %v418, %v2217
    %v2219 = vpop.f32.mrf.mxu0
    %v2220 = vadd.f32 %v414, %v2219
    %v2221 = vpop.f32.mrf.mxu0
    %v2222 = vadd.f32 %v418, %v2221
    %2223 = vmatprep.mubr.bf16.mxu0 %v628
    %2224 = vmatmul.mubr.bf16.gmra.mxu0 %v627
    %v2225 = vpop.f32.mrf.mxu0
    %v2226 = vadd.f32 %v414, %v2225
    %v2227 = vpop.f32.mrf.mxu0
    %v2228 = vadd.f32 %v418, %v2227
    %v2229 = vpop.f32.mrf.mxu0
    %v2230 = vadd.f32 %v414, %v2229
    %v2231 = vpop.f32.mrf.mxu0
    %v2232 = vadd.f32 %v418, %v2231
    %2233 = vdwg.mxu0
    %2234 = vmatprep.subr.bf16.mxu0 %v1684
    %2235 = vmatpush1.bf16.msra.mxu0 %v1683
    %2236 = vmatprep.subr.bf16.mxu0 %v1678
    %2237 = vmatpush1.bf16.msra.mxu0 %v1677
    %2238 = vmatprep.subr.bf16.mxu0 %v1672
    %2239 = vmatpush1.bf16.msra.mxu0 %v1671
    %2240 = vmatprep.subr.bf16.mxu0 %v1666
    %2241 = vmatpush1.bf16.msra.mxu0 %v1665
    %2242 = vmatprep.subr.bf16.mxu0 %v1660
    %2243 = vmatpush1.bf16.msra.mxu0 %v1659
    %2244 = vmatprep.subr.bf16.mxu0 %v1654
    %2245 = vmatpush1.bf16.msra.mxu0 %v1653
    %2246 = vmatprep.subr.bf16.mxu0 %v1648
    %2247 = vmatpush1.bf16.msra.mxu0 %v1647
    %2248 = vmatprep.subr.bf16.mxu0 %v1642
    %2249 = vmatpush1.bf16.msra.mxu0 %v1641
    %2250 = vmatprep.subr.bf16.mxu0 %v1732
    %2251 = vmatpush2.bf16.msra.mxu0 %v1731
    %2252 = vmatprep.subr.bf16.mxu0 %v1726
    %2253 = vmatpush2.bf16.msra.mxu0 %v1725
    %2254 = vmatprep.subr.bf16.mxu0 %v1720
    %2255 = vmatpush2.bf16.msra.mxu0 %v1719
    %2256 = vmatprep.subr.bf16.mxu0 %v1714
    %2257 = vmatpush2.bf16.msra.mxu0 %v1713
    %2258 = vmatprep.subr.bf16.mxu0 %v1708
    %2259 = vmatpush2.bf16.msra.mxu0 %v1707
    %2260 = vmatprep.subr.bf16.mxu0 %v1702
    %2261 = vmatpush2.bf16.msra.mxu0 %v1701
    %2262 = vmatprep.subr.bf16.mxu0 %v1696
    %2263 = vmatpush2.bf16.msra.mxu0 %v1695
    %2264 = vmatprep.subr.bf16.mxu0 %v1690
    %2265 = vmatpush2.bf16.msra.mxu0 %v1689
    %2266 = vmatprep.mubr.bf16.mxu0 %v588
    %2267 = vmatmul.mubr.bf16.gmra.mxu0 %v587
    %v2268 = vpop.f32.mrf.mxu0
    %v2269 = vadd.f32 %v2156, %v2268
    %v2270 = vpop.f32.mrf.mxu0
    %v2271 = vadd.f32 %v2158, %v2270
    %v2272 = vpop.f32.mrf.mxu0
    %v2273 = vadd.f32 %v2160, %v2272
    %v2274 = vpop.f32.mrf.mxu0
    %v2275 = vadd.f32 %v2162, %v2274
    %2276 = vmatprep.mubr.bf16.mxu0 %v594
    %2277 = vmatmul.mubr.bf16.gmra.mxu0 %v593
    %v2278 = vpop.f32.mrf.mxu0
    %v2279 = vadd.f32 %v2166, %v2278
    %v2280 = vpop.f32.mrf.mxu0
    %v2281 = vadd.f32 %v2168, %v2280
    %v2282 = vpop.f32.mrf.mxu0
    %v2283 = vadd.f32 %v2170, %v2282
    %v2284 = vpop.f32.mrf.mxu0
    %v2285 = vadd.f32 %v2172, %v2284
    %2286 = vmatprep.mubr.bf16.mxu0 %v600
    %2287 = vmatmul.mubr.bf16.gmra.mxu0 %v599
    %v2288 = vpop.f32.mrf.mxu0
    %v2289 = vadd.f32 %v2176, %v2288
    %v2290 = vpop.f32.mrf.mxu0
    %v2291 = vadd.f32 %v2178, %v2290
    %v2292 = vpop.f32.mrf.mxu0
    %v2293 = vadd.f32 %v2180, %v2292
    %v2294 = vpop.f32.mrf.mxu0
    %v2295 = vadd.f32 %v2182, %v2294
    %2296 = vmatprep.mubr.bf16.mxu0 %v606
    %2297 = vmatmul.mubr.bf16.gmra.mxu0 %v605
    %v2298 = vpop.f32.mrf.mxu0
    %v2299 = vadd.f32 %v2186, %v2298
    %v2300 = vpop.f32.mrf.mxu0
    %v2301 = vadd.f32 %v2188, %v2300
    %v2302 = vpop.f32.mrf.mxu0
    %v2303 = vadd.f32 %v2190, %v2302
    %v2304 = vpop.f32.mrf.mxu0
    %v2305 = vadd.f32 %v2192, %v2304
    %2306 = vmatprep.mubr.bf16.mxu0 %v612
    %2307 = vmatmul.mubr.bf16.gmra.mxu0 %v611
    %v2308 = vpop.f32.mrf.mxu0
    %v2309 = vadd.f32 %v2196, %v2308
    %v2310 = vpop.f32.mrf.mxu0
    %v2311 = vadd.f32 %v2198, %v2310
    %v2312 = vpop.f32.mrf.mxu0
    %v2313 = vadd.f32 %v2200, %v2312
    %v2314 = vpop.f32.mrf.mxu0
    %v2315 = vadd.f32 %v2202, %v2314
    %2316 = vmatprep.mubr.bf16.mxu0 %v618
    %2317 = vmatmul.mubr.bf16.gmra.mxu0 %v617
    %v2318 = vpop.f32.mrf.mxu0
    %v2319 = vadd.f32 %v2206, %v2318
    %v2320 = vpop.f32.mrf.mxu0
    %v2321 = vadd.f32 %v2208, %v2320
    %v2322 = vpop.f32.mrf.mxu0
    %v2323 = vadd.f32 %v2210, %v2322
    %v2324 = vpop.f32.mrf.mxu0
    %v2325 = vadd.f32 %v2212, %v2324
    %2326 = vmatprep.mubr.bf16.mxu0 %v624
    %2327 = vmatmul.mubr.bf16.gmra.mxu0 %v623
    %v2328 = vpop.f32.mrf.mxu0
    %v2329 = vadd.f32 %v2216, %v2328
    %v2330 = vpop.f32.mrf.mxu0
    %v2331 = vadd.f32 %v2218, %v2330
    %v2332 = vpop.f32.mrf.mxu0
    %v2333 = vadd.f32 %v2220, %v2332
    %v2334 = vpop.f32.mrf.mxu0
    %v2335 = vadd.f32 %v2222, %v2334
    %2336 = vmatprep.mubr.bf16.mxu0 %v630
    %2337 = vmatmul.mubr.bf16.gmra.mxu0 %v629
    %v2338 = vpop.f32.mrf.mxu0
    %v2339 = vadd.f32 %v2226, %v2338
    %v2340 = vpop.f32.mrf.mxu0
    %v2341 = vadd.f32 %v2228, %v2340
    %v2342 = vpop.f32.mrf.mxu0
    %v2343 = vadd.f32 %v2230, %v2342
    %v2344 = vpop.f32.mrf.mxu0
    %v2345 = vadd.f32 %v2232, %v2344
    %2346 = vdwg.mxu0
    %2347 = vmatprep.subr.bf16.mxu0 %v1780
    %2348 = vmatpush1.bf16.msra.mxu0 %v1779
    %2349 = vmatprep.subr.bf16.mxu0 %v1774
    %2350 = vmatpush1.bf16.msra.mxu0 %v1773
    %2351 = vmatprep.subr.bf16.mxu0 %v1768
    %2352 = vmatpush1.bf16.msra.mxu0 %v1767
    %2353 = vmatprep.subr.bf16.mxu0 %v1762
    %2354 = vmatpush1.bf16.msra.mxu0 %v1761
    %2355 = vmatprep.subr.bf16.mxu0 %v1756
    %2356 = vmatpush1.bf16.msra.mxu0 %v1755
    %2357 = vmatprep.subr.bf16.mxu0 %v1750
    %2358 = vmatpush1.bf16.msra.mxu0 %v1749
    %2359 = vmatprep.subr.bf16.mxu0 %v1744
    %2360 = vmatpush1.bf16.msra.mxu0 %v1743
    %2361 = vmatprep.subr.bf16.mxu0 %v1738
    %2362 = vmatpush1.bf16.msra.mxu0 %v1737
    %2363 = vmatprep.subr.bf16.mxu0 %v1828
    %2364 = vmatpush2.bf16.msra.mxu0 %v1827
    %2365 = vmatprep.subr.bf16.mxu0 %v1822
    %2366 = vmatpush2.bf16.msra.mxu0 %v1821
    %2367 = vmatprep.subr.bf16.mxu0 %v1816
    %2368 = vmatpush2.bf16.msra.mxu0 %v1815
    %2369 = vmatprep.subr.bf16.mxu0 %v1810
    %2370 = vmatpush2.bf16.msra.mxu0 %v1809
    %2371 = vmatprep.subr.bf16.mxu0 %v1804
    %2372 = vmatpush2.bf16.msra.mxu0 %v1803
    %2373 = vmatprep.subr.bf16.mxu0 %v1798
    %2374 = vmatpush2.bf16.msra.mxu0 %v1797
    %2375 = vmatprep.subr.bf16.mxu0 %v1792
    %2376 = vmatpush2.bf16.msra.mxu0 %v1791
    %2377 = vmatprep.subr.bf16.mxu0 %v1786
    %2378 = vmatpush2.bf16.msra.mxu0 %v1785
    %2379 = vmatprep.mubr.bf16.mxu0 %v590
    %2380 = vmatmul.mubr.bf16.gmra.mxu0 %v589
    %v2381 = vpop.f32.mrf.mxu0
    %v2382 = vadd.f32 %v2269, %v2381
    %v2383 = vpop.f32.mrf.mxu0
    %v2384 = vadd.f32 %v2271, %v2383
    %v2385 = vpop.f32.mrf.mxu0
    %v2386 = vadd.f32 %v2273, %v2385
    %v2387 = vpop.f32.mrf.mxu0
    %v2388 = vadd.f32 %v2275, %v2387
    %2389 = vmatprep.mubr.bf16.mxu0 %v596
    %2390 = vmatmul.mubr.bf16.gmra.mxu0 %v595
    %v2391 = vpop.f32.mrf.mxu0
    %v2392 = vadd.f32 %v2279, %v2391
    %v2393 = vpop.f32.mrf.mxu0
    %v2394 = vadd.f32 %v2281, %v2393
    %v2395 = vpop.f32.mrf.mxu0
    %v2396 = vadd.f32 %v2283, %v2395
    %v2397 = vpop.f32.mrf.mxu0
    %v2398 = vadd.f32 %v2285, %v2397
    %2399 = vmatprep.mubr.bf16.mxu0 %v602
    %2400 = vmatmul.mubr.bf16.gmra.mxu0 %v601
    %v2401 = vpop.f32.mrf.mxu0
    %v2402 = vadd.f32 %v2289, %v2401
    %v2403 = vpop.f32.mrf.mxu0
    %v2404 = vadd.f32 %v2291, %v2403
    %v2405 = vpop.f32.mrf.mxu0
    %v2406 = vadd.f32 %v2293, %v2405
    %v2407 = vpop.f32.mrf.mxu0
    %v2408 = vadd.f32 %v2295, %v2407
    %2409 = vmatprep.mubr.bf16.mxu0 %v608
    %2410 = vmatmul.mubr.bf16.gmra.mxu0 %v607
    %v2411 = vpop.f32.mrf.mxu0
    %v2412 = vadd.f32 %v2299, %v2411
    %v2413 = vpop.f32.mrf.mxu0
    %v2414 = vadd.f32 %v2301, %v2413
    %v2415 = vpop.f32.mrf.mxu0
    %v2416 = vadd.f32 %v2303, %v2415
    %v2417 = vpop.f32.mrf.mxu0
    %v2418 = vadd.f32 %v2305, %v2417
    %2419 = vmatprep.mubr.bf16.mxu0 %v614
    %2420 = vmatmul.mubr.bf16.gmra.mxu0 %v613
    %v2421 = vpop.f32.mrf.mxu0
    %v2422 = vadd.f32 %v2309, %v2421
    %v2423 = vpop.f32.mrf.mxu0
    %v2424 = vadd.f32 %v2311, %v2423
    %v2425 = vpop.f32.mrf.mxu0
    %v2426 = vadd.f32 %v2313, %v2425
    %v2427 = vpop.f32.mrf.mxu0
    %v2428 = vadd.f32 %v2315, %v2427
    %2429 = vmatprep.mubr.bf16.mxu0 %v620
    %2430 = vmatmul.mubr.bf16.gmra.mxu0 %v619
    %v2431 = vpop.f32.mrf.mxu0
    %v2432 = vadd.f32 %v2319, %v2431
    %v2433 = vpop.f32.mrf.mxu0
    %v2434 = vadd.f32 %v2321, %v2433
    %v2435 = vpop.f32.mrf.mxu0
    %v2436 = vadd.f32 %v2323, %v2435
    %v2437 = vpop.f32.mrf.mxu0
    %v2438 = vadd.f32 %v2325, %v2437
    %2439 = vmatprep.mubr.bf16.mxu0 %v626
    %2440 = vmatmul.mubr.bf16.gmra.mxu0 %v625
    %v2441 = vpop.f32.mrf.mxu0
    %v2442 = vadd.f32 %v2329, %v2441
    %v2443 = vpop.f32.mrf.mxu0
    %v2444 = vadd.f32 %v2331, %v2443
    %v2445 = vpop.f32.mrf.mxu0
    %v2446 = vadd.f32 %v2333, %v2445
    %v2447 = vpop.f32.mrf.mxu0
    %v2448 = vadd.f32 %v2335, %v2447
    %2449 = vmatprep.mubr.bf16.mxu0 %v632
    %2450 = vmatmul.mubr.bf16.gmra.mxu0 %v631
    %v2451 = vpop.f32.mrf.mxu0
    %v2452 = vadd.f32 %v2339, %v2451
    %v2453 = vpop.f32.mrf.mxu0
    %v2454 = vadd.f32 %v2341, %v2453
    %v2455 = vpop.f32.mrf.mxu0
    %v2456 = vadd.f32 %v2343, %v2455
    %v2457 = vpop.f32.mrf.mxu0
    %v2458 = vadd.f32 %v2345, %v2457
    %2459 = vdwg.mxu0
    %2460 = vmatprep.subr.bf16.mxu0 %v1590
    %2461 = vmatpush1.bf16.msra.mxu0 %v1589
    %2462 = vmatprep.subr.bf16.mxu0 %v1584
    %2463 = vmatpush1.bf16.msra.mxu0 %v1583
    %2464 = vmatprep.subr.bf16.mxu0 %v1578
    %2465 = vmatpush1.bf16.msra.mxu0 %v1577
    %2466 = vmatprep.subr.bf16.mxu0 %v1572
    %2467 = vmatpush1.bf16.msra.mxu0 %v1571
    %2468 = vmatprep.subr.bf16.mxu0 %v1566
    %2469 = vmatpush1.bf16.msra.mxu0 %v1565
    %2470 = vmatprep.subr.bf16.mxu0 %v1560
    %2471 = vmatpush1.bf16.msra.mxu0 %v1559
    %2472 = vmatprep.subr.bf16.mxu0 %v1554
    %2473 = vmatpush1.bf16.msra.mxu0 %v1553
    %2474 = vmatprep.subr.bf16.mxu0 %v1548
    %2475 = vmatpush1.bf16.msra.mxu0 %v1547
    %2476 = vmatprep.subr.bf16.mxu0 %v1638
    %2477 = vmatpush2.bf16.msra.mxu0 %v1637
    %2478 = vmatprep.subr.bf16.mxu0 %v1632
    %2479 = vmatpush2.bf16.msra.mxu0 %v1631
    %2480 = vmatprep.subr.bf16.mxu0 %v1626
    %2481 = vmatpush2.bf16.msra.mxu0 %v1625
    %2482 = vmatprep.subr.bf16.mxu0 %v1620
    %2483 = vmatpush2.bf16.msra.mxu0 %v1619
    %2484 = vmatprep.subr.bf16.mxu0 %v1614
    %2485 = vmatpush2.bf16.msra.mxu0 %v1613
    %2486 = vmatprep.subr.bf16.mxu0 %v1608
    %2487 = vmatpush2.bf16.msra.mxu0 %v1607
    %2488 = vmatprep.subr.bf16.mxu0 %v1602
    %2489 = vmatpush2.bf16.msra.mxu0 %v1601
    %2490 = vmatprep.subr.bf16.mxu0 %v1596
    %2491 = vmatpush2.bf16.msra.mxu0 %v1595
    %2492 = vmatprep.mubr.bf16.mxu0 %v586
    %2493 = vmatmul.mubr.bf16.gmra.mxu0 %v585
    %v2494 = vpop.f32.mrf.mxu0
    %v2495 = vadd.f32 %v422, %v2494
    %v2496 = vpop.f32.mrf.mxu0
    %v2497 = vadd.f32 %v426, %v2496
    %v2498 = vpop.f32.mrf.mxu0
    %v2499 = vadd.f32 %v422, %v2498
    %v2500 = vpop.f32.mrf.mxu0
    %v2501 = vadd.f32 %v426, %v2500
    %2502 = vmatprep.mubr.bf16.mxu0 %v592
    %2503 = vmatmul.mubr.bf16.gmra.mxu0 %v591
    %v2504 = vpop.f32.mrf.mxu0
    %v2505 = vadd.f32 %v422, %v2504
    %v2506 = vpop.f32.mrf.mxu0
    %v2507 = vadd.f32 %v426, %v2506
    %v2508 = vpop.f32.mrf.mxu0
    %v2509 = vadd.f32 %v422, %v2508
    %v2510 = vpop.f32.mrf.mxu0
    %v2511 = vadd.f32 %v426, %v2510
    %2512 = vmatprep.mubr.bf16.mxu0 %v598
    %2513 = vmatmul.mubr.bf16.gmra.mxu0 %v597
    %v2514 = vpop.f32.mrf.mxu0
    %v2515 = vadd.f32 %v422, %v2514
    %v2516 = vpop.f32.mrf.mxu0
    %v2517 = vadd.f32 %v426, %v2516
    %v2518 = vpop.f32.mrf.mxu0
    %v2519 = vadd.f32 %v422, %v2518
    %v2520 = vpop.f32.mrf.mxu0
    %v2521 = vadd.f32 %v426, %v2520
    %2522 = vmatprep.mubr.bf16.mxu0 %v604
    %2523 = vmatmul.mubr.bf16.gmra.mxu0 %v603
    %v2524 = vpop.f32.mrf.mxu0
    %v2525 = vadd.f32 %v422, %v2524
    %v2526 = vpop.f32.mrf.mxu0
    %v2527 = vadd.f32 %v426, %v2526
    %v2528 = vpop.f32.mrf.mxu0
    %v2529 = vadd.f32 %v422, %v2528
    %v2530 = vpop.f32.mrf.mxu0
    %v2531 = vadd.f32 %v426, %v2530
    %2532 = vmatprep.mubr.bf16.mxu0 %v610
    %2533 = vmatmul.mubr.bf16.gmra.mxu0 %v609
    %v2534 = vpop.f32.mrf.mxu0
    %v2535 = vadd.f32 %v422, %v2534
    %v2536 = vpop.f32.mrf.mxu0
    %v2537 = vadd.f32 %v426, %v2536
    %v2538 = vpop.f32.mrf.mxu0
    %v2539 = vadd.f32 %v422, %v2538
    %v2540 = vpop.f32.mrf.mxu0
    %v2541 = vadd.f32 %v426, %v2540
    %2542 = vmatprep.mubr.bf16.mxu0 %v616
    %2543 = vmatmul.mubr.bf16.gmra.mxu0 %v615
    %v2544 = vpop.f32.mrf.mxu0
    %v2545 = vadd.f32 %v422, %v2544
    %v2546 = vpop.f32.mrf.mxu0
    %v2547 = vadd.f32 %v426, %v2546
    %v2548 = vpop.f32.mrf.mxu0
    %v2549 = vadd.f32 %v422, %v2548
    %v2550 = vpop.f32.mrf.mxu0
    %v2551 = vadd.f32 %v426, %v2550
    %2552 = vmatprep.mubr.bf16.mxu0 %v622
    %2553 = vmatmul.mubr.bf16.gmra.mxu0 %v621
    %v2554 = vpop.f32.mrf.mxu0
    %v2555 = vadd.f32 %v422, %v2554
    %v2556 = vpop.f32.mrf.mxu0
    %v2557 = vadd.f32 %v426, %v2556
    %v2558 = vpop.f32.mrf.mxu0
    %v2559 = vadd.f32 %v422, %v2558
    %v2560 = vpop.f32.mrf.mxu0
    %v2561 = vadd.f32 %v426, %v2560
    %2562 = vmatprep.mubr.bf16.mxu0 %v628
    %2563 = vmatmul.mubr.bf16.gmra.mxu0 %v627
    %v2564 = vpop.f32.mrf.mxu0
    %v2565 = vadd.f32 %v422, %v2564
    %v2566 = vpop.f32.mrf.mxu0
    %v2567 = vadd.f32 %v426, %v2566
    %v2568 = vpop.f32.mrf.mxu0
    %v2569 = vadd.f32 %v422, %v2568
    %v2570 = vpop.f32.mrf.mxu0
    %v2571 = vadd.f32 %v426, %v2570
    %2572 = vdwg.mxu0
    %2573 = vmatprep.subr.bf16.mxu0 %v1686
    %2574 = vmatpush1.bf16.msra.mxu0 %v1685
    %2575 = vmatprep.subr.bf16.mxu0 %v1680
    %2576 = vmatpush1.bf16.msra.mxu0 %v1679
    %2577 = vmatprep.subr.bf16.mxu0 %v1674
    %2578 = vmatpush1.bf16.msra.mxu0 %v1673
    %2579 = vmatprep.subr.bf16.mxu0 %v1668
    %2580 = vmatpush1.bf16.msra.mxu0 %v1667
    %2581 = vmatprep.subr.bf16.mxu0 %v1662
    %2582 = vmatpush1.bf16.msra.mxu0 %v1661
    %2583 = vmatprep.subr.bf16.mxu0 %v1656
    %2584 = vmatpush1.bf16.msra.mxu0 %v1655
    %2585 = vmatprep.subr.bf16.mxu0 %v1650
    %2586 = vmatpush1.bf16.msra.mxu0 %v1649
    %2587 = vmatprep.subr.bf16.mxu0 %v1644
    %2588 = vmatpush1.bf16.msra.mxu0 %v1643
    %2589 = vmatprep.subr.bf16.mxu0 %v1734
    %2590 = vmatpush2.bf16.msra.mxu0 %v1733
    %2591 = vmatprep.subr.bf16.mxu0 %v1728
    %2592 = vmatpush2.bf16.msra.mxu0 %v1727
    %2593 = vmatprep.subr.bf16.mxu0 %v1722
    %2594 = vmatpush2.bf16.msra.mxu0 %v1721
    %2595 = vmatprep.subr.bf16.mxu0 %v1716
    %2596 = vmatpush2.bf16.msra.mxu0 %v1715
    %2597 = vmatprep.subr.bf16.mxu0 %v1710
    %2598 = vmatpush2.bf16.msra.mxu0 %v1709
    %2599 = vmatprep.subr.bf16.mxu0 %v1704
    %2600 = vmatpush2.bf16.msra.mxu0 %v1703
    %2601 = vmatprep.subr.bf16.mxu0 %v1698
    %2602 = vmatpush2.bf16.msra.mxu0 %v1697
    %2603 = vmatprep.subr.bf16.mxu0 %v1692
    %2604 = vmatpush2.bf16.msra.mxu0 %v1691
    %2605 = vmatprep.mubr.bf16.mxu0 %v588
    %2606 = vmatmul.mubr.bf16.gmra.mxu0 %v587
    %v2607 = vpop.f32.mrf.mxu0
    %v2608 = vadd.f32 %v2495, %v2607
    %v2609 = vpop.f32.mrf.mxu0
    %v2610 = vadd.f32 %v2497, %v2609
    %v2611 = vpop.f32.mrf.mxu0
    %v2612 = vadd.f32 %v2499, %v2611
    %v2613 = vpop.f32.mrf.mxu0
    %v2614 = vadd.f32 %v2501, %v2613
    %2615 = vmatprep.mubr.bf16.mxu0 %v594
    %2616 = vmatmul.mubr.bf16.gmra.mxu0 %v593
    %v2617 = vpop.f32.mrf.mxu0
    %v2618 = vadd.f32 %v2505, %v2617
    %v2619 = vpop.f32.mrf.mxu0
    %v2620 = vadd.f32 %v2507, %v2619
    %v2621 = vpop.f32.mrf.mxu0
    %v2622 = vadd.f32 %v2509, %v2621
    %v2623 = vpop.f32.mrf.mxu0
    %v2624 = vadd.f32 %v2511, %v2623
    %2625 = vmatprep.mubr.bf16.mxu0 %v600
    %2626 = vmatmul.mubr.bf16.gmra.mxu0 %v599
    %v2627 = vpop.f32.mrf.mxu0
    %v2628 = vadd.f32 %v2515, %v2627
    %v2629 = vpop.f32.mrf.mxu0
    %v2630 = vadd.f32 %v2517, %v2629
    %v2631 = vpop.f32.mrf.mxu0
    %v2632 = vadd.f32 %v2519, %v2631
    %v2633 = vpop.f32.mrf.mxu0
    %v2634 = vadd.f32 %v2521, %v2633
    %2635 = vmatprep.mubr.bf16.mxu0 %v606
    %2636 = vmatmul.mubr.bf16.gmra.mxu0 %v605
    %v2637 = vpop.f32.mrf.mxu0
    %v2638 = vadd.f32 %v2525, %v2637
    %v2639 = vpop.f32.mrf.mxu0
    %v2640 = vadd.f32 %v2527, %v2639
    %v2641 = vpop.f32.mrf.mxu0
    %v2642 = vadd.f32 %v2529, %v2641
    %v2643 = vpop.f32.mrf.mxu0
    %v2644 = vadd.f32 %v2531, %v2643
    %2645 = vmatprep.mubr.bf16.mxu0 %v612
    %2646 = vmatmul.mubr.bf16.gmra.mxu0 %v611
    %v2647 = vpop.f32.mrf.mxu0
    %v2648 = vadd.f32 %v2535, %v2647
    %v2649 = vpop.f32.mrf.mxu0
    %v2650 = vadd.f32 %v2537, %v2649
    %v2651 = vpop.f32.mrf.mxu0
    %v2652 = vadd.f32 %v2539, %v2651
    %v2653 = vpop.f32.mrf.mxu0
    %v2654 = vadd.f32 %v2541, %v2653
    %2655 = vmatprep.mubr.bf16.mxu0 %v618
    %2656 = vmatmul.mubr.bf16.gmra.mxu0 %v617
    %v2657 = vpop.f32.mrf.mxu0
    %v2658 = vadd.f32 %v2545, %v2657
    %v2659 = vpop.f32.mrf.mxu0
    %v2660 = vadd.f32 %v2547, %v2659
    %v2661 = vpop.f32.mrf.mxu0
    %v2662 = vadd.f32 %v2549, %v2661
    %v2663 = vpop.f32.mrf.mxu0
    %v2664 = vadd.f32 %v2551, %v2663
    %2665 = vmatprep.mubr.bf16.mxu0 %v624
    %2666 = vmatmul.mubr.bf16.gmra.mxu0 %v623
    %v2667 = vpop.f32.mrf.mxu0
    %v2668 = vadd.f32 %v2555, %v2667
    %v2669 = vpop.f32.mrf.mxu0
    %v2670 = vadd.f32 %v2557, %v2669
    %v2671 = vpop.f32.mrf.mxu0
    %v2672 = vadd.f32 %v2559, %v2671
    %v2673 = vpop.f32.mrf.mxu0
    %v2674 = vadd.f32 %v2561, %v2673
    %2675 = vmatprep.mubr.bf16.mxu0 %v630
    %2676 = vmatmul.mubr.bf16.gmra.mxu0 %v629
    %v2677 = vpop.f32.mrf.mxu0
    %v2678 = vadd.f32 %v2565, %v2677
    %v2679 = vpop.f32.mrf.mxu0
    %v2680 = vadd.f32 %v2567, %v2679
    %v2681 = vpop.f32.mrf.mxu0
    %v2682 = vadd.f32 %v2569, %v2681
    %v2683 = vpop.f32.mrf.mxu0
    %v2684 = vadd.f32 %v2571, %v2683
    %2685 = vdwg.mxu0
    %2686 = vmatprep.subr.bf16.mxu0 %v1782
    %2687 = vmatpush1.bf16.msra.mxu0 %v1781
    %2688 = vmatprep.subr.bf16.mxu0 %v1776
    %2689 = vmatpush1.bf16.msra.mxu0 %v1775
    %2690 = vmatprep.subr.bf16.mxu0 %v1770
    %2691 = vmatpush1.bf16.msra.mxu0 %v1769
    %2692 = vmatprep.subr.bf16.mxu0 %v1764
    %2693 = vmatpush1.bf16.msra.mxu0 %v1763
    %2694 = vmatprep.subr.bf16.mxu0 %v1758
    %2695 = vmatpush1.bf16.msra.mxu0 %v1757
    %2696 = vmatprep.subr.bf16.mxu0 %v1752
    %2697 = vmatpush1.bf16.msra.mxu0 %v1751
    %2698 = vmatprep.subr.bf16.mxu0 %v1746
    %2699 = vmatpush1.bf16.msra.mxu0 %v1745
    %2700 = vmatprep.subr.bf16.mxu0 %v1740
    %2701 = vmatpush1.bf16.msra.mxu0 %v1739
    %2702 = vmatprep.subr.bf16.mxu0 %v1830
    %2703 = vmatpush2.bf16.msra.mxu0 %v1829
    %2704 = vmatprep.subr.bf16.mxu0 %v1824
    %2705 = vmatpush2.bf16.msra.mxu0 %v1823
    %2706 = vmatprep.subr.bf16.mxu0 %v1818
    %2707 = vmatpush2.bf16.msra.mxu0 %v1817
    %2708 = vmatprep.subr.bf16.mxu0 %v1812
    %2709 = vmatpush2.bf16.msra.mxu0 %v1811
    %2710 = vmatprep.subr.bf16.mxu0 %v1806
    %2711 = vmatpush2.bf16.msra.mxu0 %v1805
    %2712 = vmatprep.subr.bf16.mxu0 %v1800
    %2713 = vmatpush2.bf16.msra.mxu0 %v1799
    %2714 = vmatprep.subr.bf16.mxu0 %v1794
    %2715 = vmatpush2.bf16.msra.mxu0 %v1793
    %2716 = vmatprep.subr.bf16.mxu0 %v1788
    %2717 = vmatpush2.bf16.msra.mxu0 %v1787
    %2718 = vmatprep.mubr.bf16.mxu0 %v590
    %2719 = vmatmul.mubr.bf16.gmra.mxu0 %v589
    %v2720 = vpop.f32.mrf.mxu0
    %v2721 = vadd.f32 %v2608, %v2720
    %v2722 = vpop.f32.mrf.mxu0
    %v2723 = vadd.f32 %v2610, %v2722
    %v2724 = vpop.f32.mrf.mxu0
    %v2725 = vadd.f32 %v2612, %v2724
    %v2726 = vpop.f32.mrf.mxu0
    %v2727 = vadd.f32 %v2614, %v2726
    %2728 = vmatprep.mubr.bf16.mxu0 %v596
    %2729 = vmatmul.mubr.bf16.gmra.mxu0 %v595
    %v2730 = vpop.f32.mrf.mxu0
    %v2731 = vadd.f32 %v2618, %v2730
    %v2732 = vpop.f32.mrf.mxu0
    %v2733 = vadd.f32 %v2620, %v2732
    %v2734 = vpop.f32.mrf.mxu0
    %v2735 = vadd.f32 %v2622, %v2734
    %v2736 = vpop.f32.mrf.mxu0
    %v2737 = vadd.f32 %v2624, %v2736
    %2738 = vmatprep.mubr.bf16.mxu0 %v602
    %2739 = vmatmul.mubr.bf16.gmra.mxu0 %v601
    %v2740 = vpop.f32.mrf.mxu0
    %v2741 = vadd.f32 %v2628, %v2740
    %v2742 = vpop.f32.mrf.mxu0
    %v2743 = vadd.f32 %v2630, %v2742
    %v2744 = vpop.f32.mrf.mxu0
    %v2745 = vadd.f32 %v2632, %v2744
    %v2746 = vpop.f32.mrf.mxu0
    %v2747 = vadd.f32 %v2634, %v2746
    %2748 = vmatprep.mubr.bf16.mxu0 %v608
    %2749 = vmatmul.mubr.bf16.gmra.mxu0 %v607
    %v2750 = vpop.f32.mrf.mxu0
    %v2751 = vadd.f32 %v2638, %v2750
    %v2752 = vpop.f32.mrf.mxu0
    %v2753 = vadd.f32 %v2640, %v2752
    %v2754 = vpop.f32.mrf.mxu0
    %v2755 = vadd.f32 %v2642, %v2754
    %v2756 = vpop.f32.mrf.mxu0
    %v2757 = vadd.f32 %v2644, %v2756
    %2758 = vmatprep.mubr.bf16.mxu0 %v614
    %2759 = vmatmul.mubr.bf16.gmra.mxu0 %v613
    %v2760 = vpop.f32.mrf.mxu0
    %v2761 = vadd.f32 %v2648, %v2760
    %v2762 = vpop.f32.mrf.mxu0
    %v2763 = vadd.f32 %v2650, %v2762
    %v2764 = vpop.f32.mrf.mxu0
    %v2765 = vadd.f32 %v2652, %v2764
    %v2766 = vpop.f32.mrf.mxu0
    %v2767 = vadd.f32 %v2654, %v2766
    %2768 = vmatprep.mubr.bf16.mxu0 %v620
    %2769 = vmatmul.mubr.bf16.gmra.mxu0 %v619
    %v2770 = vpop.f32.mrf.mxu0
    %v2771 = vadd.f32 %v2658, %v2770
    %v2772 = vpop.f32.mrf.mxu0
    %v2773 = vadd.f32 %v2660, %v2772
    %v2774 = vpop.f32.mrf.mxu0
    %v2775 = vadd.f32 %v2662, %v2774
    %v2776 = vpop.f32.mrf.mxu0
    %v2777 = vadd.f32 %v2664, %v2776
    %2778 = vmatprep.mubr.bf16.mxu0 %v626
    %2779 = vmatmul.mubr.bf16.gmra.mxu0 %v625
    %v2780 = vpop.f32.mrf.mxu0
    %v2781 = vadd.f32 %v2668, %v2780
    %v2782 = vpop.f32.mrf.mxu0
    %v2783 = vadd.f32 %v2670, %v2782
    %v2784 = vpop.f32.mrf.mxu0
    %v2785 = vadd.f32 %v2672, %v2784
    %v2786 = vpop.f32.mrf.mxu0
    %v2787 = vadd.f32 %v2674, %v2786
    %2788 = vmatprep.mubr.bf16.mxu0 %v632
    %2789 = vmatmul.mubr.bf16.gmra.mxu0 %v631
    %v2790 = vpop.f32.mrf.mxu0
    %v2791 = vadd.f32 %v2678, %v2790
    %v2792 = vpop.f32.mrf.mxu0
    %v2793 = vadd.f32 %v2680, %v2792
    %v2794 = vpop.f32.mrf.mxu0
    %v2795 = vadd.f32 %v2682, %v2794
    %v2796 = vpop.f32.mrf.mxu0
    %v2797 = vadd.f32 %v2684, %v2796
    %2798 = vdwg.mxu0
    %2799 = vmatprep.subr.bf16.mxu0 %v1592
    %2800 = vmatpush1.bf16.msra.mxu0 %v1591
    %2801 = vmatprep.subr.bf16.mxu0 %v1586
    %2802 = vmatpush1.bf16.msra.mxu0 %v1585
    %2803 = vmatprep.subr.bf16.mxu0 %v1580
    %2804 = vmatpush1.bf16.msra.mxu0 %v1579
    %2805 = vmatprep.subr.bf16.mxu0 %v1574
    %2806 = vmatpush1.bf16.msra.mxu0 %v1573
    %2807 = vmatprep.subr.bf16.mxu0 %v1568
    %2808 = vmatpush1.bf16.msra.mxu0 %v1567
    %2809 = vmatprep.subr.bf16.mxu0 %v1562
    %2810 = vmatpush1.bf16.msra.mxu0 %v1561
    %2811 = vmatprep.subr.bf16.mxu0 %v1556
    %2812 = vmatpush1.bf16.msra.mxu0 %v1555
    %2813 = vmatprep.subr.bf16.mxu0 %v1550
    %2814 = vmatpush1.bf16.msra.mxu0 %v1549
    %2815 = vmatprep.subr.bf16.mxu0 %v1640
    %2816 = vmatpush2.bf16.msra.mxu0 %v1639
    %2817 = vmatprep.subr.bf16.mxu0 %v1634
    %2818 = vmatpush2.bf16.msra.mxu0 %v1633
    %2819 = vmatprep.subr.bf16.mxu0 %v1628
    %2820 = vmatpush2.bf16.msra.mxu0 %v1627
    %2821 = vmatprep.subr.bf16.mxu0 %v1622
    %2822 = vmatpush2.bf16.msra.mxu0 %v1621
    %2823 = vmatprep.subr.bf16.mxu0 %v1616
    %2824 = vmatpush2.bf16.msra.mxu0 %v1615
    %2825 = vmatprep.subr.bf16.mxu0 %v1610
    %2826 = vmatpush2.bf16.msra.mxu0 %v1609
    %2827 = vmatprep.subr.bf16.mxu0 %v1604
    %2828 = vmatpush2.bf16.msra.mxu0 %v1603
    %2829 = vmatprep.subr.bf16.mxu0 %v1598
    %2830 = vmatpush2.bf16.msra.mxu0 %v1597
    %2831 = vmatprep.mubr.bf16.mxu0 %v586
    %2832 = vmatmul.mubr.bf16.gmra.mxu0 %v585
    %v2833 = vpop.f32.mrf.mxu0
    %v2834 = vadd.f32 %v430, %v2833
    %v2835 = vpop.f32.mrf.mxu0
    %v2836 = vadd.f32 %v434, %v2835
    %v2837 = vpop.f32.mrf.mxu0
    %v2838 = vadd.f32 %v430, %v2837
    %v2839 = vpop.f32.mrf.mxu0
    %v2840 = vadd.f32 %v434, %v2839
    %2841 = vmatprep.mubr.bf16.mxu0 %v592
    %2842 = vmatmul.mubr.bf16.gmra.mxu0 %v591
    %v2843 = vpop.f32.mrf.mxu0
    %v2844 = vadd.f32 %v430, %v2843
    %v2845 = vpop.f32.mrf.mxu0
    %v2846 = vadd.f32 %v434, %v2845
    %v2847 = vpop.f32.mrf.mxu0
    %v2848 = vadd.f32 %v430, %v2847
    %v2849 = vpop.f32.mrf.mxu0
    %v2850 = vadd.f32 %v434, %v2849
    %2851 = vmatprep.mubr.bf16.mxu0 %v598
    %2852 = vmatmul.mubr.bf16.gmra.mxu0 %v597
    %v2853 = vpop.f32.mrf.mxu0
    %v2854 = vadd.f32 %v430, %v2853
    %v2855 = vpop.f32.mrf.mxu0
    %v2856 = vadd.f32 %v434, %v2855
    %v2857 = vpop.f32.mrf.mxu0
    %v2858 = vadd.f32 %v430, %v2857
    %v2859 = vpop.f32.mrf.mxu0
    %v2860 = vadd.f32 %v434, %v2859
    %2861 = vmatprep.mubr.bf16.mxu0 %v604
    %2862 = vmatmul.mubr.bf16.gmra.mxu0 %v603
    %v2863 = vpop.f32.mrf.mxu0
    %v2864 = vadd.f32 %v430, %v2863
    %v2865 = vpop.f32.mrf.mxu0
    %v2866 = vadd.f32 %v434, %v2865
    %v2867 = vpop.f32.mrf.mxu0
    %v2868 = vadd.f32 %v430, %v2867
    %v2869 = vpop.f32.mrf.mxu0
    %v2870 = vadd.f32 %v434, %v2869
    %2871 = vmatprep.mubr.bf16.mxu0 %v610
    %2872 = vmatmul.mubr.bf16.gmra.mxu0 %v609
    %v2873 = vpop.f32.mrf.mxu0
    %v2874 = vadd.f32 %v430, %v2873
    %v2875 = vpop.f32.mrf.mxu0
    %v2876 = vadd.f32 %v434, %v2875
    %v2877 = vpop.f32.mrf.mxu0
    %v2878 = vadd.f32 %v430, %v2877
    %v2879 = vpop.f32.mrf.mxu0
    %v2880 = vadd.f32 %v434, %v2879
    %2881 = vmatprep.mubr.bf16.mxu0 %v616
    %2882 = vmatmul.mubr.bf16.gmra.mxu0 %v615
    %v2883 = vpop.f32.mrf.mxu0
    %v2884 = vadd.f32 %v430, %v2883
    %v2885 = vpop.f32.mrf.mxu0
    %v2886 = vadd.f32 %v434, %v2885
    %v2887 = vpop.f32.mrf.mxu0
    %v2888 = vadd.f32 %v430, %v2887
    %v2889 = vpop.f32.mrf.mxu0
    %v2890 = vadd.f32 %v434, %v2889
    %2891 = vmatprep.mubr.bf16.mxu0 %v622
    %2892 = vmatmul.mubr.bf16.gmra.mxu0 %v621
    %v2893 = vpop.f32.mrf.mxu0
    %v2894 = vadd.f32 %v430, %v2893
    %v2895 = vpop.f32.mrf.mxu0
    %v2896 = vadd.f32 %v434, %v2895
    %v2897 = vpop.f32.mrf.mxu0
    %v2898 = vadd.f32 %v430, %v2897
    %v2899 = vpop.f32.mrf.mxu0
    %v2900 = vadd.f32 %v434, %v2899
    %2901 = vmatprep.mubr.bf16.mxu0 %v628
    %2902 = vmatmul.mubr.bf16.gmra.mxu0 %v627
    %v2903 = vpop.f32.mrf.mxu0
    %v2904 = vadd.f32 %v430, %v2903
    %v2905 = vpop.f32.mrf.mxu0
    %v2906 = vadd.f32 %v434, %v2905
    %v2907 = vpop.f32.mrf.mxu0
    %v2908 = vadd.f32 %v430, %v2907
    %v2909 = vpop.f32.mrf.mxu0
    %v2910 = vadd.f32 %v434, %v2909
    %2911 = vdwg.mxu0
    %2912 = vmatprep.subr.bf16.mxu0 %v1688
    %2913 = vmatpush1.bf16.msra.mxu0 %v1687
    %2914 = vmatprep.subr.bf16.mxu0 %v1682
    %2915 = vmatpush1.bf16.msra.mxu0 %v1681
    %2916 = vmatprep.subr.bf16.mxu0 %v1676
    %2917 = vmatpush1.bf16.msra.mxu0 %v1675
    %2918 = vmatprep.subr.bf16.mxu0 %v1670
    %2919 = vmatpush1.bf16.msra.mxu0 %v1669
    %2920 = vmatprep.subr.bf16.mxu0 %v1664
    %2921 = vmatpush1.bf16.msra.mxu0 %v1663
    %2922 = vmatprep.subr.bf16.mxu0 %v1658
    %2923 = vmatpush1.bf16.msra.mxu0 %v1657
    %2924 = vmatprep.subr.bf16.mxu0 %v1652
    %2925 = vmatpush1.bf16.msra.mxu0 %v1651
    %2926 = vmatprep.subr.bf16.mxu0 %v1646
    %2927 = vmatpush1.bf16.msra.mxu0 %v1645
    %2928 = vmatprep.subr.bf16.mxu0 %v1736
    %2929 = vmatpush2.bf16.msra.mxu0 %v1735
    %2930 = vmatprep.subr.bf16.mxu0 %v1730
    %2931 = vmatpush2.bf16.msra.mxu0 %v1729
    %2932 = vmatprep.subr.bf16.mxu0 %v1724
    %2933 = vmatpush2.bf16.msra.mxu0 %v1723
    %2934 = vmatprep.subr.bf16.mxu0 %v1718
    %2935 = vmatpush2.bf16.msra.mxu0 %v1717
    %2936 = vmatprep.subr.bf16.mxu0 %v1712
    %2937 = vmatpush2.bf16.msra.mxu0 %v1711
    %2938 = vmatprep.subr.bf16.mxu0 %v1706
    %2939 = vmatpush2.bf16.msra.mxu0 %v1705
    %2940 = vmatprep.subr.bf16.mxu0 %v1700
    %2941 = vmatpush2.bf16.msra.mxu0 %v1699
    %2942 = vmatprep.subr.bf16.mxu0 %v1694
    %2943 = vmatpush2.bf16.msra.mxu0 %v1693
    %2944 = vmatprep.mubr.bf16.mxu0 %v588
    %2945 = vmatmul.mubr.bf16.gmra.mxu0 %v587
    %v2946 = vpop.f32.mrf.mxu0
    %v2947 = vadd.f32 %v2834, %v2946
    %v2948 = vpop.f32.mrf.mxu0
    %v2949 = vadd.f32 %v2836, %v2948
    %v2950 = vpop.f32.mrf.mxu0
    %v2951 = vadd.f32 %v2838, %v2950
    %v2952 = vpop.f32.mrf.mxu0
    %v2953 = vadd.f32 %v2840, %v2952
    %2954 = vmatprep.mubr.bf16.mxu0 %v594
    %2955 = vmatmul.mubr.bf16.gmra.mxu0 %v593
    %v2956 = vpop.f32.mrf.mxu0
    %v2957 = vadd.f32 %v2844, %v2956
    %v2958 = vpop.f32.mrf.mxu0
    %v2959 = vadd.f32 %v2846, %v2958
    %v2960 = vpop.f32.mrf.mxu0
    %v2961 = vadd.f32 %v2848, %v2960
    %v2962 = vpop.f32.mrf.mxu0
    %v2963 = vadd.f32 %v2850, %v2962
    %2964 = vmatprep.mubr.bf16.mxu0 %v600
    %2965 = vmatmul.mubr.bf16.gmra.mxu0 %v599
    %v2966 = vpop.f32.mrf.mxu0
    %v2967 = vadd.f32 %v2854, %v2966
    %v2968 = vpop.f32.mrf.mxu0
    %v2969 = vadd.f32 %v2856, %v2968
    %v2970 = vpop.f32.mrf.mxu0
    %v2971 = vadd.f32 %v2858, %v2970
    %v2972 = vpop.f32.mrf.mxu0
    %v2973 = vadd.f32 %v2860, %v2972
    %2974 = vmatprep.mubr.bf16.mxu0 %v606
    %2975 = vmatmul.mubr.bf16.gmra.mxu0 %v605
    %v2976 = vpop.f32.mrf.mxu0
    %v2977 = vadd.f32 %v2864, %v2976
    %v2978 = vpop.f32.mrf.mxu0
    %v2979 = vadd.f32 %v2866, %v2978
    %v2980 = vpop.f32.mrf.mxu0
    %v2981 = vadd.f32 %v2868, %v2980
    %v2982 = vpop.f32.mrf.mxu0
    %v2983 = vadd.f32 %v2870, %v2982
    %2984 = vmatprep.mubr.bf16.mxu0 %v612
    %2985 = vmatmul.mubr.bf16.gmra.mxu0 %v611
    %v2986 = vpop.f32.mrf.mxu0
    %v2987 = vadd.f32 %v2874, %v2986
    %v2988 = vpop.f32.mrf.mxu0
    %v2989 = vadd.f32 %v2876, %v2988
    %v2990 = vpop.f32.mrf.mxu0
    %v2991 = vadd.f32 %v2878, %v2990
    %v2992 = vpop.f32.mrf.mxu0
    %v2993 = vadd.f32 %v2880, %v2992
    %2994 = vmatprep.mubr.bf16.mxu0 %v618
    %2995 = vmatmul.mubr.bf16.gmra.mxu0 %v617
    %v2996 = vpop.f32.mrf.mxu0
    %v2997 = vadd.f32 %v2884, %v2996
    %v2998 = vpop.f32.mrf.mxu0
    %v2999 = vadd.f32 %v2886, %v2998
    %v3000 = vpop.f32.mrf.mxu0
    %v3001 = vadd.f32 %v2888, %v3000
    %v3002 = vpop.f32.mrf.mxu0
    %v3003 = vadd.f32 %v2890, %v3002
    %3004 = vmatprep.mubr.bf16.mxu0 %v624
    %3005 = vmatmul.mubr.bf16.gmra.mxu0 %v623
    %v3006 = vpop.f32.mrf.mxu0
    %v3007 = vadd.f32 %v2894, %v3006
    %v3008 = vpop.f32.mrf.mxu0
    %v3009 = vadd.f32 %v2896, %v3008
    %v3010 = vpop.f32.mrf.mxu0
    %v3011 = vadd.f32 %v2898, %v3010
    %v3012 = vpop.f32.mrf.mxu0
    %v3013 = vadd.f32 %v2900, %v3012
    %3014 = vmatprep.mubr.bf16.mxu0 %v630
    %3015 = vmatmul.mubr.bf16.gmra.mxu0 %v629
    %v3016 = vpop.f32.mrf.mxu0
    %v3017 = vadd.f32 %v2904, %v3016
    %v3018 = vpop.f32.mrf.mxu0
    %v3019 = vadd.f32 %v2906, %v3018
    %v3020 = vpop.f32.mrf.mxu0
    %v3021 = vadd.f32 %v2908, %v3020
    %v3022 = vpop.f32.mrf.mxu0
    %v3023 = vadd.f32 %v2910, %v3022
    %3024 = vdwg.mxu0
    %3025 = vmatprep.subr.bf16.mxu0 %v1784
    %3026 = vmatpush1.bf16.msra.mxu0 %v1783
    %3027 = vmatprep.subr.bf16.mxu0 %v1778
    %3028 = vmatpush1.bf16.msra.mxu0 %v1777
    %3029 = vmatprep.subr.bf16.mxu0 %v1772
    %3030 = vmatpush1.bf16.msra.mxu0 %v1771
    %3031 = vmatprep.subr.bf16.mxu0 %v1766
    %3032 = vmatpush1.bf16.msra.mxu0 %v1765
    %3033 = vmatprep.subr.bf16.mxu0 %v1760
    %3034 = vmatpush1.bf16.msra.mxu0 %v1759
    %3035 = vmatprep.subr.bf16.mxu0 %v1754
    %3036 = vmatpush1.bf16.msra.mxu0 %v1753
    %3037 = vmatprep.subr.bf16.mxu0 %v1748
    %3038 = vmatpush1.bf16.msra.mxu0 %v1747
    %3039 = vmatprep.subr.bf16.mxu0 %v1742
    %3040 = vmatpush1.bf16.msra.mxu0 %v1741
    %3041 = vmatprep.subr.bf16.mxu0 %v1832
    %3042 = vmatpush2.bf16.msra.mxu0 %v1831
    %3043 = vmatprep.subr.bf16.mxu0 %v1826
    %3044 = vmatpush2.bf16.msra.mxu0 %v1825
    %3045 = vmatprep.subr.bf16.mxu0 %v1820
    %3046 = vmatpush2.bf16.msra.mxu0 %v1819
    %3047 = vmatprep.subr.bf16.mxu0 %v1814
    %3048 = vmatpush2.bf16.msra.mxu0 %v1813
    %3049 = vmatprep.subr.bf16.mxu0 %v1808
    %3050 = vmatpush2.bf16.msra.mxu0 %v1807
    %3051 = vmatprep.subr.bf16.mxu0 %v1802
    %3052 = vmatpush2.bf16.msra.mxu0 %v1801
    %3053 = vmatprep.subr.bf16.mxu0 %v1796
    %3054 = vmatpush2.bf16.msra.mxu0 %v1795
    %3055 = vmatprep.subr.bf16.mxu0 %v1790
    %3056 = vmatpush2.bf16.msra.mxu0 %v1789
    %3057 = vmatprep.mubr.bf16.mxu0 %v590
    %3058 = vmatmul.mubr.bf16.gmra.mxu0 %v589
    %v3059 = vpop.f32.mrf.mxu0
    %v3060 = vadd.f32 %v2947, %v3059
    %v3061 = vpop.f32.mrf.mxu0
    %v3062 = vadd.f32 %v2949, %v3061
    %v3063 = vpop.f32.mrf.mxu0
    %v3064 = vadd.f32 %v2951, %v3063
    %v3065 = vpop.f32.mrf.mxu0
    %v3066 = vadd.f32 %v2953, %v3065
    %3067 = vmatprep.mubr.bf16.mxu0 %v596
    %3068 = vmatmul.mubr.bf16.gmra.mxu0 %v595
    %v3069 = vpop.f32.mrf.mxu0
    %v3070 = vadd.f32 %v2957, %v3069
    %v3071 = vpop.f32.mrf.mxu0
    %v3072 = vadd.f32 %v2959, %v3071
    %v3073 = vpop.f32.mrf.mxu0
    %v3074 = vadd.f32 %v2961, %v3073
    %v3075 = vpop.f32.mrf.mxu0
    %v3076 = vadd.f32 %v2963, %v3075
    %3077 = vmatprep.mubr.bf16.mxu0 %v602
    %3078 = vmatmul.mubr.bf16.gmra.mxu0 %v601
    %v3079 = vpop.f32.mrf.mxu0
    %v3080 = vadd.f32 %v2967, %v3079
    %v3081 = vpop.f32.mrf.mxu0
    %v3082 = vadd.f32 %v2969, %v3081
    %v3083 = vpop.f32.mrf.mxu0
    %v3084 = vadd.f32 %v2971, %v3083
    %v3085 = vpop.f32.mrf.mxu0
    %v3086 = vadd.f32 %v2973, %v3085
    %3087 = vmatprep.mubr.bf16.mxu0 %v608
    %3088 = vmatmul.mubr.bf16.gmra.mxu0 %v607
    %v3089 = vpop.f32.mrf.mxu0
    %v3090 = vadd.f32 %v2977, %v3089
    %v3091 = vpop.f32.mrf.mxu0
    %v3092 = vadd.f32 %v2979, %v3091
    %v3093 = vpop.f32.mrf.mxu0
    %v3094 = vadd.f32 %v2981, %v3093
    %v3095 = vpop.f32.mrf.mxu0
    %v3096 = vadd.f32 %v2983, %v3095
    %3097 = vmatprep.mubr.bf16.mxu0 %v614
    %3098 = vmatmul.mubr.bf16.gmra.mxu0 %v613
    %v3099 = vpop.f32.mrf.mxu0
    %v3100 = vadd.f32 %v2987, %v3099
    %v3101 = vpop.f32.mrf.mxu0
    %v3102 = vadd.f32 %v2989, %v3101
    %v3103 = vpop.f32.mrf.mxu0
    %v3104 = vadd.f32 %v2991, %v3103
    %v3105 = vpop.f32.mrf.mxu0
    %v3106 = vadd.f32 %v2993, %v3105
    %3107 = vmatprep.mubr.bf16.mxu0 %v620
    %3108 = vmatmul.mubr.bf16.gmra.mxu0 %v619
    %v3109 = vpop.f32.mrf.mxu0
    %v3110 = vadd.f32 %v2997, %v3109
    %v3111 = vpop.f32.mrf.mxu0
    %v3112 = vadd.f32 %v2999, %v3111
    %v3113 = vpop.f32.mrf.mxu0
    %v3114 = vadd.f32 %v3001, %v3113
    %v3115 = vpop.f32.mrf.mxu0
    %v3116 = vadd.f32 %v3003, %v3115
    %3117 = vmatprep.mubr.bf16.mxu0 %v626
    %3118 = vmatmul.mubr.bf16.gmra.mxu0 %v625
    %v3119 = vpop.f32.mrf.mxu0
    %v3120 = vadd.f32 %v3007, %v3119
    %v3121 = vpop.f32.mrf.mxu0
    %v3122 = vadd.f32 %v3009, %v3121
    %v3123 = vpop.f32.mrf.mxu0
    %v3124 = vadd.f32 %v3011, %v3123
    %v3125 = vpop.f32.mrf.mxu0
    %v3126 = vadd.f32 %v3013, %v3125
    %3127 = vmatprep.mubr.bf16.mxu0 %v632
    %3128 = vmatmul.mubr.bf16.gmra.mxu0 %v631
    %v3129 = vpop.f32.mrf.mxu0
    %v3130 = vadd.f32 %v3017, %v3129
    %v3131 = vpop.f32.mrf.mxu0
    %v3132 = vadd.f32 %v3019, %v3131
    %v3133 = vpop.f32.mrf.mxu0
    %v3134 = vadd.f32 %v3021, %v3133
    %v3135 = vpop.f32.mrf.mxu0
    %v3136 = vadd.f32 %v3023, %v3135
    %3137 = vdwg.mxu0
    %v3138 = vmax.f32 %v2382, 0.0
    %v3139 = vmax.f32 %v2384, 0.0
    %v3140 = vmax.f32 %v2721, 0.0
    %v3141 = vmax.f32 %v2723, 0.0
    %v3142 = vmax.f32 %v3060, 0.0
    %v3143 = vmax.f32 %v3062, 0.0
    %v3144 = vmax.f32 %v2386, 0.0
    %v3145 = vmax.f32 %v2388, 0.0
    %v3146 = vmax.f32 %v2725, 0.0
    %v3147 = vmax.f32 %v2727, 0.0
    %v3148 = vmax.f32 %v3064, 0.0
    %v3149 = vmax.f32 %v3066, 0.0
    %v3150 = vmax.f32 %v2392, 0.0
    %v3151 = vmax.f32 %v2394, 0.0
    %v3152 = vmax.f32 %v2731, 0.0
    %v3153 = vmax.f32 %v2733, 0.0
    %v3154 = vmax.f32 %v3070, 0.0
    %v3155 = vmax.f32 %v3072, 0.0
    %v3156 = vmax.f32 %v2396, 0.0
    %v3157 = vmax.f32 %v2398, 0.0
    %v3158 = vmax.f32 %v2735, 0.0
    %v3159 = vmax.f32 %v2737, 0.0
    %v3160 = vmax.f32 %v3074, 0.0
    %v3161 = vmax.f32 %v3076, 0.0
    %v3162 = vmax.f32 %v2402, 0.0
    %v3163 = vmax.f32 %v2404, 0.0
    %v3164 = vmax.f32 %v2741, 0.0
    %v3165 = vmax.f32 %v2743, 0.0
    %v3166 = vmax.f32 %v3080, 0.0
    %v3167 = vmax.f32 %v3082, 0.0
    %v3168 = vmax.f32 %v2406, 0.0
    %v3169 = vmax.f32 %v2408, 0.0
    %v3170 = vmax.f32 %v2745, 0.0
    %v3171 = vmax.f32 %v2747, 0.0
    %v3172 = vmax.f32 %v3084, 0.0
    %v3173 = vmax.f32 %v3086, 0.0
    %v3174 = vmax.f32 %v2412, 0.0
    %v3175 = vmax.f32 %v2414, 0.0
    %v3176 = vmax.f32 %v2751, 0.0
    %v3177 = vmax.f32 %v2753, 0.0
    %v3178 = vmax.f32 %v3090, 0.0
    %v3179 = vmax.f32 %v3092, 0.0
    %v3180 = vmax.f32 %v2416, 0.0
    %v3181 = vmax.f32 %v2418, 0.0
    %v3182 = vmax.f32 %v2755, 0.0
    %v3183 = vmax.f32 %v2757, 0.0
    %v3184 = vmax.f32 %v3094, 0.0
    %v3185 = vmax.f32 %v3096, 0.0
    %v3186 = vmax.f32 %v2422, 0.0
    %v3187 = vmax.f32 %v2424, 0.0
    %v3188 = vmax.f32 %v2761, 0.0
    %v3189 = vmax.f32 %v2763, 0.0
    %v3190 = vmax.f32 %v3100, 0.0
    %v3191 = vmax.f32 %v3102, 0.0
    %v3192 = vmax.f32 %v2426, 0.0
    %v3193 = vmax.f32 %v2428, 0.0
    %v3194 = vmax.f32 %v2765, 0.0
    %v3195 = vmax.f32 %v2767, 0.0
    %v3196 = vmax.f32 %v3104, 0.0
    %v3197 = vmax.f32 %v3106, 0.0
    %v3198 = vmax.f32 %v2432, 0.0
    %v3199 = vmax.f32 %v2434, 0.0
    %v3200 = vmax.f32 %v2771, 0.0
    %v3201 = vmax.f32 %v2773, 0.0
    %v3202 = vmax.f32 %v3110, 0.0
    %v3203 = vmax.f32 %v3112, 0.0
    %v3204 = vmax.f32 %v2436, 0.0
    %v3205 = vmax.f32 %v2438, 0.0
    %v3206 = vmax.f32 %v2775, 0.0
    %v3207 = vmax.f32 %v2777, 0.0
    %v3208 = vmax.f32 %v3114, 0.0
    %v3209 = vmax.f32 %v3116, 0.0
    %v3210 = vmax.f32 %v2442, 0.0
    %v3211 = vmax.f32 %v2444, 0.0
    %v3212 = vmax.f32 %v2781, 0.0
    %v3213 = vmax.f32 %v2783, 0.0
    %v3214 = vmax.f32 %v3120, 0.0
    %v3215 = vmax.f32 %v3122, 0.0
    %v3216 = vmax.f32 %v2446, 0.0
    %v3217 = vmax.f32 %v2448, 0.0
    %v3218 = vmax.f32 %v2785, 0.0
    %v3219 = vmax.f32 %v2787, 0.0
    %v3220 = vmax.f32 %v3124, 0.0
    %v3221 = vmax.f32 %v3126, 0.0
    %v3222 = vmax.f32 %v2452, 0.0
    %v3223 = vmax.f32 %v2454, 0.0
    %v3224 = vmax.f32 %v2791, 0.0
    %v3225 = vmax.f32 %v2793, 0.0
    %v3226 = vmax.f32 %v3130, 0.0
    %v3227 = vmax.f32 %v3132, 0.0
    %v3228 = vmax.f32 %v2456, 0.0
    %v3229 = vmax.f32 %v2458, 0.0
    %v3230 = vmax.f32 %v2795, 0.0
    %v3231 = vmax.f32 %v2797, 0.0
    %v3232 = vmax.f32 %v3134, 0.0
    %v3233 = vmax.f32 %v3136, 0.0
    %v3234 = vpack.c.bf16 %v3144, %v3138
    %v3235 = vpack.c.bf16 %v3145, %v3139
    %v3236 = vpack.c.bf16 %v3146, %v3140
    %v3237 = vpack.c.bf16 %v3147, %v3141
    %v3238 = vpack.c.bf16 %v3148, %v3142
    %v3239 = vpack.c.bf16 %v3149, %v3143
    %v3240 = vpack.c.bf16 %v3156, %v3150
    %v3241 = vpack.c.bf16 %v3157, %v3151
    %v3242 = vpack.c.bf16 %v3158, %v3152
    %v3243 = vpack.c.bf16 %v3159, %v3153
    %v3244 = vpack.c.bf16 %v3160, %v3154
    %v3245 = vpack.c.bf16 %v3161, %v3155
    %v3246 = vpack.c.bf16 %v3168, %v3162
    %v3247 = vpack.c.bf16 %v3169, %v3163
    %v3248 = vpack.c.bf16 %v3170, %v3164
    %v3249 = vpack.c.bf16 %v3171, %v3165
    %v3250 = vpack.c.bf16 %v3172, %v3166
    %v3251 = vpack.c.bf16 %v3173, %v3167
    %v3252 = vpack.c.bf16 %v3180, %v3174
    %v3253 = vpack.c.bf16 %v3181, %v3175
    %v3254 = vpack.c.bf16 %v3182, %v3176
    %v3255 = vpack.c.bf16 %v3183, %v3177
    %v3256 = vpack.c.bf16 %v3184, %v3178
    %v3257 = vpack.c.bf16 %v3185, %v3179
    %v3258 = vpack.c.bf16 %v3192, %v3186
    %v3259 = vpack.c.bf16 %v3193, %v3187
    %v3260 = vpack.c.bf16 %v3194, %v3188
    %v3261 = vpack.c.bf16 %v3195, %v3189
    %v3262 = vpack.c.bf16 %v3196, %v3190
    %v3263 = vpack.c.bf16 %v3197, %v3191
    %v3264 = vpack.c.bf16 %v3204, %v3198
    %v3265 = vpack.c.bf16 %v3205, %v3199
    %v3266 = vpack.c.bf16 %v3206, %v3200
    %v3267 = vpack.c.bf16 %v3207, %v3201
    %v3268 = vpack.c.bf16 %v3208, %v3202
    %v3269 = vpack.c.bf16 %v3209, %v3203
    %v3270 = vpack.c.bf16 %v3216, %v3210
    %v3271 = vpack.c.bf16 %v3217, %v3211
    %v3272 = vpack.c.bf16 %v3218, %v3212
    %v3273 = vpack.c.bf16 %v3219, %v3213
    %v3274 = vpack.c.bf16 %v3220, %v3214
    %v3275 = vpack.c.bf16 %v3221, %v3215
    %v3276 = vpack.c.bf16 %v3228, %v3222
    %v3277 = vpack.c.bf16 %v3229, %v3223
    %v3278 = vpack.c.bf16 %v3230, %v3224
    %v3279 = vpack.c.bf16 %v3231, %v3225
    %v3280 = vpack.c.bf16 %v3232, %v3226
    %v3281 = vpack.c.bf16 %v3233, %v3227
    %v3282 = vld [vmem:[#allocation7] sm:$0xff]
    %v3283 = vld [vmem:[#allocation7 + $0x8] sm:$0xff]
    %v3284 = vld [vmem:[#allocation7 + $0x10] sm:$0xff]
    %v3285 = vld [vmem:[#allocation7 + $0x18] sm:$0xff]
    %v3286 = vld [vmem:[#allocation7 + $0x20] sm:$0xff]
    %v3287 = vld [vmem:[#allocation7 + $0x28] sm:$0xff]
    %v3288 = vld [vmem:[#allocation7 + $0x30] sm:$0xff]
    %v3289 = vld [vmem:[#allocation7 + $0x38] sm:$0xff]
    %v3290 = vld [vmem:[#allocation7 + $0x40] sm:$0xff]
    %v3291 = vld [vmem:[#allocation7 + $0x48] sm:$0xff]
    %v3292 = vld [vmem:[#allocation7 + $0x50] sm:$0xff]
    %v3293 = vld [vmem:[#allocation7 + $0x58] sm:$0xff]
    %v3294 = vld [vmem:[#allocation7 + $0x60] sm:$0xff]
    %v3295 = vld [vmem:[#allocation7 + $0x68] sm:$0xff]
    %v3296 = vld [vmem:[#allocation7 + $0x70] sm:$0xff]
    %v3297 = vld [vmem:[#allocation7 + $0x78] sm:$0xff]
    %v3298 = vld [vmem:[#allocation7 + $0x80] sm:$0xff]
    %v3299 = vld [vmem:[#allocation7 + $0x88] sm:$0xff]
    %v3300 = vld [vmem:[#allocation7 + $0x90] sm:$0xff]
    %v3301 = vld [vmem:[#allocation7 + $0x98] sm:$0xff]
    %v3302 = vld [vmem:[#allocation7 + $0xa0] sm:$0xff]
    %v3303 = vld [vmem:[#allocation7 + $0xa8] sm:$0xff]
    %v3304 = vld [vmem:[#allocation7 + $0xb0] sm:$0xff]
    %v3305 = vld [vmem:[#allocation7 + $0xb8] sm:$0xff]
    %v3306 = vld [vmem:[#allocation7 + $0xc0] sm:$0xff]
    %v3307 = vld [vmem:[#allocation7 + $0xc8] sm:$0xff]
    %v3308 = vld [vmem:[#allocation7 + $0xd0] sm:$0xff]
    %v3309 = vld [vmem:[#allocation7 + $0xd8] sm:$0xff]
    %v3310 = vld [vmem:[#allocation7 + $0xe0] sm:$0xff]
    %v3311 = vld [vmem:[#allocation7 + $0xe8] sm:$0xff]
    %v3312 = vld [vmem:[#allocation7 + $0xf0] sm:$0xff]
    %v3313 = vld [vmem:[#allocation7 + $0xf8] sm:$0xff]
    %v3314 = vld [vmem:[#allocation7 + $0x100] sm:$0xff]
    %v3315 = vld [vmem:[#allocation7 + $0x108] sm:$0xff]
    %v3316 = vld [vmem:[#allocation7 + $0x110] sm:$0xff]
    %v3317 = vld [vmem:[#allocation7 + $0x118] sm:$0xff]
    %v3318 = vld [vmem:[#allocation7 + $0x120] sm:$0xff]
    %v3319 = vld [vmem:[#allocation7 + $0x128] sm:$0xff]
    %v3320 = vld [vmem:[#allocation7 + $0x130] sm:$0xff]
    %v3321 = vld [vmem:[#allocation7 + $0x138] sm:$0xff]
    %v3322 = vld [vmem:[#allocation7 + $0x140] sm:$0xff]
    %v3323 = vld [vmem:[#allocation7 + $0x148] sm:$0xff]
    %v3324 = vld [vmem:[#allocation7 + $0x150] sm:$0xff]
    %v3325 = vld [vmem:[#allocation7 + $0x158] sm:$0xff]
    %v3326 = vld [vmem:[#allocation7 + $0x160] sm:$0xff]
    %v3327 = vld [vmem:[#allocation7 + $0x168] sm:$0xff]
    %v3328 = vld [vmem:[#allocation7 + $0x170] sm:$0xff]
    %v3329 = vld [vmem:[#allocation7 + $0x178] sm:$0xff]
    %v3330 = vld [vmem:[#allocation7 + $0x180] sm:$0xff]
    %v3331 = vld [vmem:[#allocation7 + $0x188] sm:$0xff]
    %v3332 = vld [vmem:[#allocation7 + $0x190] sm:$0xff]
    %v3333 = vld [vmem:[#allocation7 + $0x198] sm:$0xff]
    %v3334 = vld [vmem:[#allocation7 + $0x1a0] sm:$0xff]
    %v3335 = vld [vmem:[#allocation7 + $0x1a8] sm:$0xff]
    %v3336 = vld [vmem:[#allocation7 + $0x1b0] sm:$0xff]
    %v3337 = vld [vmem:[#allocation7 + $0x1b8] sm:$0xff]
    %v3338 = vld [vmem:[#allocation7 + $0x1c0] sm:$0xff]
    %v3339 = vld [vmem:[#allocation7 + $0x1c8] sm:$0xff]
    %v3340 = vld [vmem:[#allocation7 + $0x1d0] sm:$0xff]
    %v3341 = vld [vmem:[#allocation7 + $0x1d8] sm:$0xff]
    %v3342 = vld [vmem:[#allocation7 + $0x1e0] sm:$0xff]
    %v3343 = vld [vmem:[#allocation7 + $0x1e8] sm:$0xff]
    %v3344 = vld [vmem:[#allocation7 + $0x1f0] sm:$0xff]
    %v3345 = vld [vmem:[#allocation7 + $0x1f8] sm:$0xff]
    %v3346 = vld [vmem:[#allocation7 + $0x200] sm:$0xff]
    %v3347 = vld [vmem:[#allocation7 + $0x208] sm:$0xff]
    %v3348 = vld [vmem:[#allocation7 + $0x210] sm:$0xff]
    %v3349 = vld [vmem:[#allocation7 + $0x218] sm:$0xff]
    %v3350 = vld [vmem:[#allocation7 + $0x220] sm:$0xff]
    %v3351 = vld [vmem:[#allocation7 + $0x228] sm:$0xff]
    %v3352 = vld [vmem:[#allocation7 + $0x230] sm:$0xff]
    %v3353 = vld [vmem:[#allocation7 + $0x238] sm:$0xff]
    %v3354 = vld [vmem:[#allocation7 + $0x240] sm:$0xff]
    %v3355 = vld [vmem:[#allocation7 + $0x248] sm:$0xff]
    %v3356 = vld [vmem:[#allocation7 + $0x250] sm:$0xff]
    %v3357 = vld [vmem:[#allocation7 + $0x258] sm:$0xff]
    %v3358 = vld [vmem:[#allocation7 + $0x260] sm:$0xff]
    %v3359 = vld [vmem:[#allocation7 + $0x268] sm:$0xff]
    %v3360 = vld [vmem:[#allocation7 + $0x270] sm:$0xff]
    %v3361 = vld [vmem:[#allocation7 + $0x278] sm:$0xff]
    %v3362 = vld [vmem:[#allocation7 + $0x280] sm:$0xff]
    %v3363 = vld [vmem:[#allocation7 + $0x288] sm:$0xff]
    %v3364 = vld [vmem:[#allocation7 + $0x290] sm:$0xff]
    %v3365 = vld [vmem:[#allocation7 + $0x298] sm:$0xff]
    %v3366 = vld [vmem:[#allocation7 + $0x2a0] sm:$0xff]
    %v3367 = vld [vmem:[#allocation7 + $0x2a8] sm:$0xff]
    %v3368 = vld [vmem:[#allocation7 + $0x2b0] sm:$0xff]
    %v3369 = vld [vmem:[#allocation7 + $0x2b8] sm:$0xff]
    %v3370 = vld [vmem:[#allocation7 + $0x2c0] sm:$0xff]
    %v3371 = vld [vmem:[#allocation7 + $0x2c8] sm:$0xff]
    %v3372 = vld [vmem:[#allocation7 + $0x2d0] sm:$0xff]
    %v3373 = vld [vmem:[#allocation7 + $0x2d8] sm:$0xff]
    %v3374 = vld [vmem:[#allocation7 + $0x2e0] sm:$0xff]
    %v3375 = vld [vmem:[#allocation7 + $0x2e8] sm:$0xff]
    %v3376 = vld [vmem:[#allocation7 + $0x2f0] sm:$0xff]
    %v3377 = vld [vmem:[#allocation7 + $0x2f8] sm:$0xff]
    %v3378 = vld [vmem:[#allocation7 + $0x300] sm:$0xff]
    %v3379 = vld [vmem:[#allocation7 + $0x308] sm:$0xff]
    %v3380 = vld [vmem:[#allocation7 + $0x310] sm:$0xff]
    %v3381 = vld [vmem:[#allocation7 + $0x318] sm:$0xff]
    %v3382 = vld [vmem:[#allocation7 + $0x320] sm:$0xff]
    %v3383 = vld [vmem:[#allocation7 + $0x328] sm:$0xff]
    %v3384 = vld [vmem:[#allocation7 + $0x330] sm:$0xff]
    %v3385 = vld [vmem:[#allocation7 + $0x338] sm:$0xff]
    %v3386 = vld [vmem:[#allocation7 + $0x340] sm:$0xff]
    %v3387 = vld [vmem:[#allocation7 + $0x348] sm:$0xff]
    %v3388 = vld [vmem:[#allocation7 + $0x350] sm:$0xff]
    %v3389 = vld [vmem:[#allocation7 + $0x358] sm:$0xff]
    %v3390 = vld [vmem:[#allocation7 + $0x360] sm:$0xff]
    %v3391 = vld [vmem:[#allocation7 + $0x368] sm:$0xff]
    %v3392 = vld [vmem:[#allocation7 + $0x370] sm:$0xff]
    %v3393 = vld [vmem:[#allocation7 + $0x378] sm:$0xff]
    %v3394 = vld [vmem:[#allocation7 + $0x380] sm:$0xff]
    %v3395 = vld [vmem:[#allocation7 + $0x388] sm:$0xff]
    %v3396 = vld [vmem:[#allocation7 + $0x390] sm:$0xff]
    %v3397 = vld [vmem:[#allocation7 + $0x398] sm:$0xff]
    %v3398 = vld [vmem:[#allocation7 + $0x3a0] sm:$0xff]
    %v3399 = vld [vmem:[#allocation7 + $0x3a8] sm:$0xff]
    %v3400 = vld [vmem:[#allocation7 + $0x3b0] sm:$0xff]
    %v3401 = vld [vmem:[#allocation7 + $0x3b8] sm:$0xff]
    %v3402 = vld [vmem:[#allocation7 + $0x3c0] sm:$0xff]
    %v3403 = vld [vmem:[#allocation7 + $0x3c8] sm:$0xff]
    %v3404 = vld [vmem:[#allocation7 + $0x3d0] sm:$0xff]
    %v3405 = vld [vmem:[#allocation7 + $0x3d8] sm:$0xff]
    %v3406 = vld [vmem:[#allocation7 + $0x3e0] sm:$0xff]
    %v3407 = vld [vmem:[#allocation7 + $0x3e8] sm:$0xff]
    %v3408 = vld [vmem:[#allocation7 + $0x3f0] sm:$0xff]
    %v3409 = vld [vmem:[#allocation7 + $0x3f8] sm:$0xff]
    %v3410 = vld [vmem:[#allocation7 + $0x400] sm:$0xff]
    %v3411 = vld [vmem:[#allocation7 + $0x408] sm:$0xff]
    %v3412 = vld [vmem:[#allocation7 + $0x410] sm:$0xff]
    %v3413 = vld [vmem:[#allocation7 + $0x418] sm:$0xff]
    %v3414 = vld [vmem:[#allocation7 + $0x420] sm:$0xff]
    %v3415 = vld [vmem:[#allocation7 + $0x428] sm:$0xff]
    %v3416 = vld [vmem:[#allocation7 + $0x430] sm:$0xff]
    %v3417 = vld [vmem:[#allocation7 + $0x438] sm:$0xff]
    %v3418 = vld [vmem:[#allocation7 + $0x440] sm:$0xff]
    %v3419 = vld [vmem:[#allocation7 + $0x448] sm:$0xff]
    %v3420 = vld [vmem:[#allocation7 + $0x450] sm:$0xff]
    %v3421 = vld [vmem:[#allocation7 + $0x458] sm:$0xff]
    %v3422 = vld [vmem:[#allocation7 + $0x460] sm:$0xff]
    %v3423 = vld [vmem:[#allocation7 + $0x468] sm:$0xff]
    %v3424 = vld [vmem:[#allocation7 + $0x470] sm:$0xff]
    %v3425 = vld [vmem:[#allocation7 + $0x478] sm:$0xff]
    %v3426 = vld [vmem:[#allocation7 + $0x480] sm:$0xff]
    %v3427 = vld [vmem:[#allocation7 + $0x488] sm:$0xff]
    %v3428 = vld [vmem:[#allocation7 + $0x490] sm:$0xff]
    %v3429 = vld [vmem:[#allocation7 + $0x498] sm:$0xff]
    %v3430 = vld [vmem:[#allocation7 + $0x4a0] sm:$0xff]
    %v3431 = vld [vmem:[#allocation7 + $0x4a8] sm:$0xff]
    %v3432 = vld [vmem:[#allocation7 + $0x4b0] sm:$0xff]
    %v3433 = vld [vmem:[#allocation7 + $0x4b8] sm:$0xff]
    %v3434 = vld [vmem:[#allocation7 + $0x4c0] sm:$0xff]
    %v3435 = vld [vmem:[#allocation7 + $0x4c8] sm:$0xff]
    %v3436 = vld [vmem:[#allocation7 + $0x4d0] sm:$0xff]
    %v3437 = vld [vmem:[#allocation7 + $0x4d8] sm:$0xff]
    %v3438 = vld [vmem:[#allocation7 + $0x4e0] sm:$0xff]
    %v3439 = vld [vmem:[#allocation7 + $0x4e8] sm:$0xff]
    %v3440 = vld [vmem:[#allocation7 + $0x4f0] sm:$0xff]
    %v3441 = vld [vmem:[#allocation7 + $0x4f8] sm:$0xff]
    %v3442 = vld [vmem:[#allocation7 + $0x500] sm:$0xff]
    %v3443 = vld [vmem:[#allocation7 + $0x508] sm:$0xff]
    %v3444 = vld [vmem:[#allocation7 + $0x510] sm:$0xff]
    %v3445 = vld [vmem:[#allocation7 + $0x518] sm:$0xff]
    %v3446 = vld [vmem:[#allocation7 + $0x520] sm:$0xff]
    %v3447 = vld [vmem:[#allocation7 + $0x528] sm:$0xff]
    %v3448 = vld [vmem:[#allocation7 + $0x530] sm:$0xff]
    %v3449 = vld [vmem:[#allocation7 + $0x538] sm:$0xff]
    %v3450 = vld [vmem:[#allocation7 + $0x540] sm:$0xff]
    %v3451 = vld [vmem:[#allocation7 + $0x548] sm:$0xff]
    %v3452 = vld [vmem:[#allocation7 + $0x550] sm:$0xff]
    %v3453 = vld [vmem:[#allocation7 + $0x558] sm:$0xff]
    %v3454 = vld [vmem:[#allocation7 + $0x560] sm:$0xff]
    %v3455 = vld [vmem:[#allocation7 + $0x568] sm:$0xff]
    %v3456 = vld [vmem:[#allocation7 + $0x570] sm:$0xff]
    %v3457 = vld [vmem:[#allocation7 + $0x578] sm:$0xff]
    %v3458 = vld [vmem:[#allocation7 + $0x580] sm:$0xff]
    %v3459 = vld [vmem:[#allocation7 + $0x588] sm:$0xff]
    %v3460 = vld [vmem:[#allocation7 + $0x590] sm:$0xff]
    %v3461 = vld [vmem:[#allocation7 + $0x598] sm:$0xff]
    %v3462 = vld [vmem:[#allocation7 + $0x5a0] sm:$0xff]
    %v3463 = vld [vmem:[#allocation7 + $0x5a8] sm:$0xff]
    %v3464 = vld [vmem:[#allocation7 + $0x5b0] sm:$0xff]
    %v3465 = vld [vmem:[#allocation7 + $0x5b8] sm:$0xff]
    %v3466 = vld [vmem:[#allocation7 + $0x5c0] sm:$0xff]
    %v3467 = vld [vmem:[#allocation7 + $0x5c8] sm:$0xff]
    %v3468 = vld [vmem:[#allocation7 + $0x5d0] sm:$0xff]
    %v3469 = vld [vmem:[#allocation7 + $0x5d8] sm:$0xff]
    %v3470 = vld [vmem:[#allocation7 + $0x5e0] sm:$0xff]
    %v3471 = vld [vmem:[#allocation7 + $0x5e8] sm:$0xff]
    %v3472 = vld [vmem:[#allocation7 + $0x5f0] sm:$0xff]
    %v3473 = vld [vmem:[#allocation7 + $0x5f8] sm:$0xff]
    %v3474 = vld [vmem:[#allocation7 + $0x600] sm:$0xff]
    %v3475 = vld [vmem:[#allocation7 + $0x608] sm:$0xff]
    %v3476 = vld [vmem:[#allocation7 + $0x610] sm:$0xff]
    %v3477 = vld [vmem:[#allocation7 + $0x618] sm:$0xff]
    %v3478 = vld [vmem:[#allocation7 + $0x620] sm:$0xff]
    %v3479 = vld [vmem:[#allocation7 + $0x628] sm:$0xff]
    %v3480 = vld [vmem:[#allocation7 + $0x630] sm:$0xff]
    %v3481 = vld [vmem:[#allocation7 + $0x638] sm:$0xff]
    %v3482 = vld [vmem:[#allocation7 + $0x640] sm:$0xff]
    %v3483 = vld [vmem:[#allocation7 + $0x648] sm:$0xff]
    %v3484 = vld [vmem:[#allocation7 + $0x650] sm:$0xff]
    %v3485 = vld [vmem:[#allocation7 + $0x658] sm:$0xff]
    %v3486 = vld [vmem:[#allocation7 + $0x660] sm:$0xff]
    %v3487 = vld [vmem:[#allocation7 + $0x668] sm:$0xff]
    %v3488 = vld [vmem:[#allocation7 + $0x670] sm:$0xff]
    %v3489 = vld [vmem:[#allocation7 + $0x678] sm:$0xff]
    %v3490 = vld [vmem:[#allocation7 + $0x680] sm:$0xff]
    %v3491 = vld [vmem:[#allocation7 + $0x688] sm:$0xff]
    %v3492 = vld [vmem:[#allocation7 + $0x690] sm:$0xff]
    %v3493 = vld [vmem:[#allocation7 + $0x698] sm:$0xff]
    %v3494 = vld [vmem:[#allocation7 + $0x6a0] sm:$0xff]
    %v3495 = vld [vmem:[#allocation7 + $0x6a8] sm:$0xff]
    %v3496 = vld [vmem:[#allocation7 + $0x6b0] sm:$0xff]
    %v3497 = vld [vmem:[#allocation7 + $0x6b8] sm:$0xff]
    %v3498 = vld [vmem:[#allocation7 + $0x6c0] sm:$0xff]
    %v3499 = vld [vmem:[#allocation7 + $0x6c8] sm:$0xff]
    %v3500 = vld [vmem:[#allocation7 + $0x6d0] sm:$0xff]
    %v3501 = vld [vmem:[#allocation7 + $0x6d8] sm:$0xff]
    %v3502 = vld [vmem:[#allocation7 + $0x6e0] sm:$0xff]
    %v3503 = vld [vmem:[#allocation7 + $0x6e8] sm:$0xff]
    %v3504 = vld [vmem:[#allocation7 + $0x6f0] sm:$0xff]
    %v3505 = vld [vmem:[#allocation7 + $0x6f8] sm:$0xff]
    %v3506 = vld [vmem:[#allocation7 + $0x700] sm:$0xff]
    %v3507 = vld [vmem:[#allocation7 + $0x708] sm:$0xff]
    %v3508 = vld [vmem:[#allocation7 + $0x710] sm:$0xff]
    %v3509 = vld [vmem:[#allocation7 + $0x718] sm:$0xff]
    %v3510 = vld [vmem:[#allocation7 + $0x720] sm:$0xff]
    %v3511 = vld [vmem:[#allocation7 + $0x728] sm:$0xff]
    %v3512 = vld [vmem:[#allocation7 + $0x730] sm:$0xff]
    %v3513 = vld [vmem:[#allocation7 + $0x738] sm:$0xff]
    %v3514 = vld [vmem:[#allocation7 + $0x740] sm:$0xff]
    %v3515 = vld [vmem:[#allocation7 + $0x748] sm:$0xff]
    %v3516 = vld [vmem:[#allocation7 + $0x750] sm:$0xff]
    %v3517 = vld [vmem:[#allocation7 + $0x758] sm:$0xff]
    %v3518 = vld [vmem:[#allocation7 + $0x760] sm:$0xff]
    %v3519 = vld [vmem:[#allocation7 + $0x768] sm:$0xff]
    %v3520 = vld [vmem:[#allocation7 + $0x770] sm:$0xff]
    %v3521 = vld [vmem:[#allocation7 + $0x778] sm:$0xff]
    %v3522 = vld [vmem:[#allocation7 + $0x780] sm:$0xff]
    %v3523 = vld [vmem:[#allocation7 + $0x788] sm:$0xff]
    %v3524 = vld [vmem:[#allocation7 + $0x790] sm:$0xff]
    %v3525 = vld [vmem:[#allocation7 + $0x798] sm:$0xff]
    %v3526 = vld [vmem:[#allocation7 + $0x7a0] sm:$0xff]
    %v3527 = vld [vmem:[#allocation7 + $0x7a8] sm:$0xff]
    %v3528 = vld [vmem:[#allocation7 + $0x7b0] sm:$0xff]
    %v3529 = vld [vmem:[#allocation7 + $0x7b8] sm:$0xff]
    %v3530 = vld [vmem:[#allocation7 + $0x7c0] sm:$0xff]
    %v3531 = vld [vmem:[#allocation7 + $0x7c8] sm:$0xff]
    %v3532 = vld [vmem:[#allocation7 + $0x7d0] sm:$0xff]
    %v3533 = vld [vmem:[#allocation7 + $0x7d8] sm:$0xff]
    %v3534 = vld [vmem:[#allocation7 + $0x7e0] sm:$0xff]
    %v3535 = vld [vmem:[#allocation7 + $0x7e8] sm:$0xff]
    %v3536 = vld [vmem:[#allocation7 + $0x7f0] sm:$0xff]
    %v3537 = vld [vmem:[#allocation7 + $0x7f8] sm:$0xff]
    %v3538 = vld [vmem:[#allocation7 + $0x800] sm:$0xff]
    %v3539 = vld [vmem:[#allocation7 + $0x808] sm:$0xff]
    %v3540 = vld [vmem:[#allocation7 + $0x810] sm:$0xff]
    %v3541 = vld [vmem:[#allocation7 + $0x818] sm:$0xff]
    %v3542 = vld [vmem:[#allocation7 + $0x820] sm:$0xff]
    %v3543 = vld [vmem:[#allocation7 + $0x828] sm:$0xff]
    %v3544 = vld [vmem:[#allocation7 + $0x830] sm:$0xff]
    %v3545 = vld [vmem:[#allocation7 + $0x838] sm:$0xff]
    %v3546 = vld [vmem:[#allocation7 + $0x840] sm:$0xff]
    %v3547 = vld [vmem:[#allocation7 + $0x848] sm:$0xff]
    %v3548 = vld [vmem:[#allocation7 + $0x850] sm:$0xff]
    %v3549 = vld [vmem:[#allocation7 + $0x858] sm:$0xff]
    %v3550 = vld [vmem:[#allocation7 + $0x860] sm:$0xff]
    %v3551 = vld [vmem:[#allocation7 + $0x868] sm:$0xff]
    %v3552 = vld [vmem:[#allocation7 + $0x870] sm:$0xff]
    %v3553 = vld [vmem:[#allocation7 + $0x878] sm:$0xff]
    %v3554 = vld [vmem:[#allocation7 + $0x880] sm:$0xff]
    %v3555 = vld [vmem:[#allocation7 + $0x888] sm:$0xff]
    %v3556 = vld [vmem:[#allocation7 + $0x890] sm:$0xff]
    %v3557 = vld [vmem:[#allocation7 + $0x898] sm:$0xff]
    %v3558 = vld [vmem:[#allocation7 + $0x8a0] sm:$0xff]
    %v3559 = vld [vmem:[#allocation7 + $0x8a8] sm:$0xff]
    %v3560 = vld [vmem:[#allocation7 + $0x8b0] sm:$0xff]
    %v3561 = vld [vmem:[#allocation7 + $0x8b8] sm:$0xff]
    %v3562 = vld [vmem:[#allocation7 + $0x8c0] sm:$0xff]
    %v3563 = vld [vmem:[#allocation7 + $0x8c8] sm:$0xff]
    %v3564 = vld [vmem:[#allocation7 + $0x8d0] sm:$0xff]
    %v3565 = vld [vmem:[#allocation7 + $0x8d8] sm:$0xff]
    %v3566 = vld [vmem:[#allocation7 + $0x8e0] sm:$0xff]
    %v3567 = vld [vmem:[#allocation7 + $0x8e8] sm:$0xff]
    %v3568 = vld [vmem:[#allocation7 + $0x8f0] sm:$0xff]
    %v3569 = vld [vmem:[#allocation7 + $0x8f8] sm:$0xff]
    %v3570 = vld [vmem:[#allocation8] sm:$0x3f]
    %v3572 = vlaneseq
    %v3573 = vshrl.u32 %v3572, 7
    %v3574 = vsub.s32 0, %v3573
    %v3575 = vrot.slane %v3570, %v3574
    %v3576 = vlaneseq
    %v3577 = vshrl.u32 %v3576, 7
    %v3578 = vsub.s32 1, %v3577
    %v3579 = vrot.slane %v3570, %v3578
    %v3580 = vlaneseq
    %v3581 = vshrl.u32 %v3580, 7
    %v3582 = vsub.s32 2, %v3581
    %v3583 = vrot.slane %v3570, %v3582
    %v3584 = vlaneseq
    %v3585 = vshrl.u32 %v3584, 7
    %v3586 = vsub.s32 3, %v3585
    %v3587 = vrot.slane %v3570, %v3586
    %v3588 = vlaneseq
    %v3589 = vshrl.u32 %v3588, 7
    %v3590 = vsub.s32 4, %v3589
    %v3591 = vrot.slane %v3570, %v3590
    %v3592 = vlaneseq
    %v3593 = vshrl.u32 %v3592, 7
    %v3594 = vsub.s32 5, %v3593
    %v3595 = vrot.slane %v3570, %v3594
    %v3890 = vunpack.c.l.b16 %v3282
    %v3891 = vunpack.c.h.b16 %v3282
    %v3892 = vunpack.c.l.b16 %v3283
    %v3893 = vunpack.c.h.b16 %v3283
    %v3894 = vunpack.c.l.b16 %v3284
    %v3895 = vunpack.c.h.b16 %v3284
    %v3896 = vunpack.c.l.b16 %v3285
    %v3897 = vunpack.c.h.b16 %v3285
    %v3898 = vunpack.c.l.b16 %v3286
    %v3899 = vunpack.c.h.b16 %v3286
    %v3900 = vunpack.c.l.b16 %v3287
    %v3901 = vunpack.c.h.b16 %v3287
    %v3902 = vunpack.c.l.b16 %v3288
    %v3903 = vunpack.c.h.b16 %v3288
    %v3904 = vunpack.c.l.b16 %v3289
    %v3905 = vunpack.c.h.b16 %v3289
    %v3906 = vunpack.c.l.b16 %v3290
    %v3907 = vunpack.c.h.b16 %v3290
    %v3908 = vunpack.c.l.b16 %v3291
    %v3909 = vunpack.c.h.b16 %v3291
    %v3910 = vunpack.c.l.b16 %v3292
    %v3911 = vunpack.c.h.b16 %v3292
    %v3912 = vunpack.c.l.b16 %v3293
    %v3913 = vunpack.c.h.b16 %v3293
    %v3914 = vunpack.c.l.b16 %v3294
    %v3915 = vunpack.c.h.b16 %v3294
    %v3916 = vunpack.c.l.b16 %v3295
    %v3917 = vunpack.c.h.b16 %v3295
    %v3918 = vunpack.c.l.b16 %v3296
    %v3919 = vunpack.c.h.b16 %v3296
    %v3920 = vunpack.c.l.b16 %v3297
    %v3921 = vunpack.c.h.b16 %v3297
    %v3922 = vunpack.c.l.b16 %v3298
    %v3923 = vunpack.c.h.b16 %v3298
    %v3924 = vunpack.c.l.b16 %v3299
    %v3925 = vunpack.c.h.b16 %v3299
    %v3926 = vunpack.c.l.b16 %v3300
    %v3927 = vunpack.c.h.b16 %v3300
    %v3928 = vunpack.c.l.b16 %v3301
    %v3929 = vunpack.c.h.b16 %v3301
    %v3930 = vunpack.c.l.b16 %v3302
    %v3931 = vunpack.c.h.b16 %v3302
    %v3932 = vunpack.c.l.b16 %v3303
    %v3933 = vunpack.c.h.b16 %v3303
    %v3934 = vunpack.c.l.b16 %v3304
    %v3935 = vunpack.c.h.b16 %v3304
    %v3936 = vunpack.c.l.b16 %v3305
    %v3937 = vunpack.c.h.b16 %v3305
    %v3938 = vunpack.c.l.b16 %v3306
    %v3939 = vunpack.c.h.b16 %v3306
    %v3940 = vunpack.c.l.b16 %v3307
    %v3941 = vunpack.c.h.b16 %v3307
    %v3942 = vunpack.c.l.b16 %v3308
    %v3943 = vunpack.c.h.b16 %v3308
    %v3944 = vunpack.c.l.b16 %v3309
    %v3945 = vunpack.c.h.b16 %v3309
    %v3946 = vunpack.c.l.b16 %v3310
    %v3947 = vunpack.c.h.b16 %v3310
    %v3948 = vunpack.c.l.b16 %v3311
    %v3949 = vunpack.c.h.b16 %v3311
    %v3950 = vunpack.c.l.b16 %v3312
    %v3951 = vunpack.c.h.b16 %v3312
    %v3952 = vunpack.c.l.b16 %v3313
    %v3953 = vunpack.c.h.b16 %v3313
    %v3954 = vunpack.c.l.b16 %v3314
    %v3955 = vunpack.c.h.b16 %v3314
    %v3956 = vunpack.c.l.b16 %v3315
    %v3957 = vunpack.c.h.b16 %v3315
    %v3958 = vunpack.c.l.b16 %v3316
    %v3959 = vunpack.c.h.b16 %v3316
    %v3960 = vunpack.c.l.b16 %v3317
    %v3961 = vunpack.c.h.b16 %v3317
    %v3962 = vunpack.c.l.b16 %v3318
    %v3963 = vunpack.c.h.b16 %v3318
    %v3964 = vunpack.c.l.b16 %v3319
    %v3965 = vunpack.c.h.b16 %v3319
    %v3966 = vunpack.c.l.b16 %v3320
    %v3967 = vunpack.c.h.b16 %v3320
    %v3968 = vunpack.c.l.b16 %v3321
    %v3969 = vunpack.c.h.b16 %v3321
    %v3970 = vunpack.c.l.b16 %v3322
    %v3971 = vunpack.c.h.b16 %v3322
    %v3972 = vunpack.c.l.b16 %v3323
    %v3973 = vunpack.c.h.b16 %v3323
    %v3974 = vunpack.c.l.b16 %v3324
    %v3975 = vunpack.c.h.b16 %v3324
    %v3976 = vunpack.c.l.b16 %v3325
    %v3977 = vunpack.c.h.b16 %v3325
    %v3978 = vunpack.c.l.b16 %v3326
    %v3979 = vunpack.c.h.b16 %v3326
    %v3980 = vunpack.c.l.b16 %v3327
    %v3981 = vunpack.c.h.b16 %v3327
    %v3982 = vunpack.c.l.b16 %v3328
    %v3983 = vunpack.c.h.b16 %v3328
    %v3984 = vunpack.c.l.b16 %v3329
    %v3985 = vunpack.c.h.b16 %v3329
    %v3986 = vunpack.c.l.b16 %v3330
    %v3987 = vunpack.c.h.b16 %v3330
    %v3988 = vunpack.c.l.b16 %v3331
    %v3989 = vunpack.c.h.b16 %v3331
    %v3990 = vunpack.c.l.b16 %v3332
    %v3991 = vunpack.c.h.b16 %v3332
    %v3992 = vunpack.c.l.b16 %v3333
    %v3993 = vunpack.c.h.b16 %v3333
    %v3994 = vunpack.c.l.b16 %v3334
    %v3995 = vunpack.c.h.b16 %v3334
    %v3996 = vunpack.c.l.b16 %v3335
    %v3997 = vunpack.c.h.b16 %v3335
    %v3998 = vunpack.c.l.b16 %v3336
    %v3999 = vunpack.c.h.b16 %v3336
    %v4000 = vunpack.c.l.b16 %v3337
    %v4001 = vunpack.c.h.b16 %v3337
    %v4002 = vunpack.c.l.b16 %v3338
    %v4003 = vunpack.c.h.b16 %v3338
    %v4004 = vunpack.c.l.b16 %v3339
    %v4005 = vunpack.c.h.b16 %v3339
    %v4006 = vunpack.c.l.b16 %v3340
    %v4007 = vunpack.c.h.b16 %v3340
    %v4008 = vunpack.c.l.b16 %v3341
    %v4009 = vunpack.c.h.b16 %v3341
    %v4010 = vunpack.c.l.b16 %v3342
    %v4011 = vunpack.c.h.b16 %v3342
    %v4012 = vunpack.c.l.b16 %v3343
    %v4013 = vunpack.c.h.b16 %v3343
    %v4014 = vunpack.c.l.b16 %v3344
    %v4015 = vunpack.c.h.b16 %v3344
    %v4016 = vunpack.c.l.b16 %v3345
    %v4017 = vunpack.c.h.b16 %v3345
    %v4018 = vunpack.c.l.b16 %v3346
    %v4019 = vunpack.c.h.b16 %v3346
    %v4020 = vunpack.c.l.b16 %v3347
    %v4021 = vunpack.c.h.b16 %v3347
    %v4022 = vunpack.c.l.b16 %v3348
    %v4023 = vunpack.c.h.b16 %v3348
    %v4024 = vunpack.c.l.b16 %v3349
    %v4025 = vunpack.c.h.b16 %v3349
    %v4026 = vunpack.c.l.b16 %v3350
    %v4027 = vunpack.c.h.b16 %v3350
    %v4028 = vunpack.c.l.b16 %v3351
    %v4029 = vunpack.c.h.b16 %v3351
    %v4030 = vunpack.c.l.b16 %v3352
    %v4031 = vunpack.c.h.b16 %v3352
    %v4032 = vunpack.c.l.b16 %v3353
    %v4033 = vunpack.c.h.b16 %v3353
    %v4034 = vunpack.c.l.b16 %v3354
    %v4035 = vunpack.c.h.b16 %v3354
    %v4036 = vunpack.c.l.b16 %v3355
    %v4037 = vunpack.c.h.b16 %v3355
    %v4038 = vunpack.c.l.b16 %v3356
    %v4039 = vunpack.c.h.b16 %v3356
    %v4040 = vunpack.c.l.b16 %v3357
    %v4041 = vunpack.c.h.b16 %v3357
    %v4042 = vunpack.c.l.b16 %v3358
    %v4043 = vunpack.c.h.b16 %v3358
    %v4044 = vunpack.c.l.b16 %v3359
    %v4045 = vunpack.c.h.b16 %v3359
    %v4046 = vunpack.c.l.b16 %v3360
    %v4047 = vunpack.c.h.b16 %v3360
    %v4048 = vunpack.c.l.b16 %v3361
    %v4049 = vunpack.c.h.b16 %v3361
    %v4050 = vunpack.c.l.b16 %v3362
    %v4051 = vunpack.c.h.b16 %v3362
    %v4052 = vunpack.c.l.b16 %v3363
    %v4053 = vunpack.c.h.b16 %v3363
    %v4054 = vunpack.c.l.b16 %v3364
    %v4055 = vunpack.c.h.b16 %v3364
    %v4056 = vunpack.c.l.b16 %v3365
    %v4057 = vunpack.c.h.b16 %v3365
    %v4058 = vunpack.c.l.b16 %v3366
    %v4059 = vunpack.c.h.b16 %v3366
    %v4060 = vunpack.c.l.b16 %v3367
    %v4061 = vunpack.c.h.b16 %v3367
    %v4062 = vunpack.c.l.b16 %v3368
    %v4063 = vunpack.c.h.b16 %v3368
    %v4064 = vunpack.c.l.b16 %v3369
    %v4065 = vunpack.c.h.b16 %v3369
    %v4066 = vunpack.c.l.b16 %v3370
    %v4067 = vunpack.c.h.b16 %v3370
    %v4068 = vunpack.c.l.b16 %v3371
    %v4069 = vunpack.c.h.b16 %v3371
    %v4070 = vunpack.c.l.b16 %v3372
    %v4071 = vunpack.c.h.b16 %v3372
    %v4072 = vunpack.c.l.b16 %v3373
    %v4073 = vunpack.c.h.b16 %v3373
    %v4074 = vunpack.c.l.b16 %v3374
    %v4075 = vunpack.c.h.b16 %v3374
    %v4076 = vunpack.c.l.b16 %v3375
    %v4077 = vunpack.c.h.b16 %v3375
    %v4078 = vunpack.c.l.b16 %v3376
    %v4079 = vunpack.c.h.b16 %v3376
    %v4080 = vunpack.c.l.b16 %v3377
    %v4081 = vunpack.c.h.b16 %v3377
    %v4082 = vunpack.c.l.b16 %v3378
    %v4083 = vunpack.c.h.b16 %v3378
    %v4084 = vunpack.c.l.b16 %v3379
    %v4085 = vunpack.c.h.b16 %v3379
    %v4086 = vunpack.c.l.b16 %v3380
    %v4087 = vunpack.c.h.b16 %v3380
    %v4088 = vunpack.c.l.b16 %v3381
    %v4089 = vunpack.c.h.b16 %v3381
    %v4090 = vunpack.c.l.b16 %v3382
    %v4091 = vunpack.c.h.b16 %v3382
    %v4092 = vunpack.c.l.b16 %v3383
    %v4093 = vunpack.c.h.b16 %v3383
    %v4094 = vunpack.c.l.b16 %v3384
    %v4095 = vunpack.c.h.b16 %v3384
    %v4096 = vunpack.c.l.b16 %v3385
    %v4097 = vunpack.c.h.b16 %v3385
    %v4098 = vunpack.c.l.b16 %v3386
    %v4099 = vunpack.c.h.b16 %v3386
    %v4100 = vunpack.c.l.b16 %v3387
    %v4101 = vunpack.c.h.b16 %v3387
    %v4102 = vunpack.c.l.b16 %v3388
    %v4103 = vunpack.c.h.b16 %v3388
    %v4104 = vunpack.c.l.b16 %v3389
    %v4105 = vunpack.c.h.b16 %v3389
    %v4106 = vunpack.c.l.b16 %v3390
    %v4107 = vunpack.c.h.b16 %v3390
    %v4108 = vunpack.c.l.b16 %v3391
    %v4109 = vunpack.c.h.b16 %v3391
    %v4110 = vunpack.c.l.b16 %v3392
    %v4111 = vunpack.c.h.b16 %v3392
    %v4112 = vunpack.c.l.b16 %v3393
    %v4113 = vunpack.c.h.b16 %v3393
    %v4114 = vunpack.c.l.b16 %v3394
    %v4115 = vunpack.c.h.b16 %v3394
    %v4116 = vunpack.c.l.b16 %v3395
    %v4117 = vunpack.c.h.b16 %v3395
    %v4118 = vunpack.c.l.b16 %v3396
    %v4119 = vunpack.c.h.b16 %v3396
    %v4120 = vunpack.c.l.b16 %v3397
    %v4121 = vunpack.c.h.b16 %v3397
    %v4122 = vunpack.c.l.b16 %v3398
    %v4123 = vunpack.c.h.b16 %v3398
    %v4124 = vunpack.c.l.b16 %v3399
    %v4125 = vunpack.c.h.b16 %v3399
    %v4126 = vunpack.c.l.b16 %v3400
    %v4127 = vunpack.c.h.b16 %v3400
    %v4128 = vunpack.c.l.b16 %v3401
    %v4129 = vunpack.c.h.b16 %v3401
    %v4130 = vunpack.c.l.b16 %v3402
    %v4131 = vunpack.c.h.b16 %v3402
    %v4132 = vunpack.c.l.b16 %v3403
    %v4133 = vunpack.c.h.b16 %v3403
    %v4134 = vunpack.c.l.b16 %v3404
    %v4135 = vunpack.c.h.b16 %v3404
    %v4136 = vunpack.c.l.b16 %v3405
    %v4137 = vunpack.c.h.b16 %v3405
    %v4138 = vunpack.c.l.b16 %v3406
    %v4139 = vunpack.c.h.b16 %v3406
    %v4140 = vunpack.c.l.b16 %v3407
    %v4141 = vunpack.c.h.b16 %v3407
    %v4142 = vunpack.c.l.b16 %v3408
    %v4143 = vunpack.c.h.b16 %v3408
    %v4144 = vunpack.c.l.b16 %v3409
    %v4145 = vunpack.c.h.b16 %v3409
    %v4146 = vunpack.c.l.b16 %v3410
    %v4147 = vunpack.c.h.b16 %v3410
    %v4148 = vunpack.c.l.b16 %v3411
    %v4149 = vunpack.c.h.b16 %v3411
    %v4150 = vunpack.c.l.b16 %v3412
    %v4151 = vunpack.c.h.b16 %v3412
    %v4152 = vunpack.c.l.b16 %v3413
    %v4153 = vunpack.c.h.b16 %v3413
    %v4154 = vunpack.c.l.b16 %v3414
    %v4155 = vunpack.c.h.b16 %v3414
    %v4156 = vunpack.c.l.b16 %v3415
    %v4157 = vunpack.c.h.b16 %v3415
    %v4158 = vunpack.c.l.b16 %v3416
    %v4159 = vunpack.c.h.b16 %v3416
    %v4160 = vunpack.c.l.b16 %v3417
    %v4161 = vunpack.c.h.b16 %v3417
    %v4162 = vunpack.c.l.b16 %v3418
    %v4163 = vunpack.c.h.b16 %v3418
    %v4164 = vunpack.c.l.b16 %v3419
    %v4165 = vunpack.c.h.b16 %v3419
    %v4166 = vunpack.c.l.b16 %v3420
    %v4167 = vunpack.c.h.b16 %v3420
    %v4168 = vunpack.c.l.b16 %v3421
    %v4169 = vunpack.c.h.b16 %v3421
    %v4170 = vunpack.c.l.b16 %v3422
    %v4171 = vunpack.c.h.b16 %v3422
    %v4172 = vunpack.c.l.b16 %v3423
    %v4173 = vunpack.c.h.b16 %v3423
    %v4174 = vunpack.c.l.b16 %v3424
    %v4175 = vunpack.c.h.b16 %v3424
    %v4176 = vunpack.c.l.b16 %v3425
    %v4177 = vunpack.c.h.b16 %v3425
    %v4178 = vunpack.c.l.b16 %v3426
    %v4179 = vunpack.c.h.b16 %v3426
    %v4180 = vunpack.c.l.b16 %v3427
    %v4181 = vunpack.c.h.b16 %v3427
    %v4182 = vunpack.c.l.b16 %v3428
    %v4183 = vunpack.c.h.b16 %v3428
    %v4184 = vunpack.c.l.b16 %v3429
    %v4185 = vunpack.c.h.b16 %v3429
    %v4186 = vunpack.c.l.b16 %v3430
    %v4187 = vunpack.c.h.b16 %v3430
    %v4188 = vunpack.c.l.b16 %v3431
    %v4189 = vunpack.c.h.b16 %v3431
    %v4190 = vunpack.c.l.b16 %v3432
    %v4191 = vunpack.c.h.b16 %v3432
    %v4192 = vunpack.c.l.b16 %v3433
    %v4193 = vunpack.c.h.b16 %v3433
    %v4194 = vunpack.c.l.b16 %v3434
    %v4195 = vunpack.c.h.b16 %v3434
    %v4196 = vunpack.c.l.b16 %v3435
    %v4197 = vunpack.c.h.b16 %v3435
    %v4198 = vunpack.c.l.b16 %v3436
    %v4199 = vunpack.c.h.b16 %v3436
    %v4200 = vunpack.c.l.b16 %v3437
    %v4201 = vunpack.c.h.b16 %v3437
    %v4202 = vunpack.c.l.b16 %v3438
    %v4203 = vunpack.c.h.b16 %v3438
    %v4204 = vunpack.c.l.b16 %v3439
    %v4205 = vunpack.c.h.b16 %v3439
    %v4206 = vunpack.c.l.b16 %v3440
    %v4207 = vunpack.c.h.b16 %v3440
    %v4208 = vunpack.c.l.b16 %v3441
    %v4209 = vunpack.c.h.b16 %v3441
    %v4210 = vunpack.c.l.b16 %v3442
    %v4211 = vunpack.c.h.b16 %v3442
    %v4212 = vunpack.c.l.b16 %v3443
    %v4213 = vunpack.c.h.b16 %v3443
    %v4214 = vunpack.c.l.b16 %v3444
    %v4215 = vunpack.c.h.b16 %v3444
    %v4216 = vunpack.c.l.b16 %v3445
    %v4217 = vunpack.c.h.b16 %v3445
    %v4218 = vunpack.c.l.b16 %v3446
    %v4219 = vunpack.c.h.b16 %v3446
    %v4220 = vunpack.c.l.b16 %v3447
    %v4221 = vunpack.c.h.b16 %v3447
    %v4222 = vunpack.c.l.b16 %v3448
    %v4223 = vunpack.c.h.b16 %v3448
    %v4224 = vunpack.c.l.b16 %v3449
    %v4225 = vunpack.c.h.b16 %v3449
    %v4226 = vunpack.c.l.b16 %v3450
    %v4227 = vunpack.c.h.b16 %v3450
    %v4228 = vunpack.c.l.b16 %v3451
    %v4229 = vunpack.c.h.b16 %v3451
    %v4230 = vunpack.c.l.b16 %v3452
    %v4231 = vunpack.c.h.b16 %v3452
    %v4232 = vunpack.c.l.b16 %v3453
    %v4233 = vunpack.c.h.b16 %v3453
    %v4234 = vunpack.c.l.b16 %v3454
    %v4235 = vunpack.c.h.b16 %v3454
    %v4236 = vunpack.c.l.b16 %v3455
    %v4237 = vunpack.c.h.b16 %v3455
    %v4238 = vunpack.c.l.b16 %v3456
    %v4239 = vunpack.c.h.b16 %v3456
    %v4240 = vunpack.c.l.b16 %v3457
    %v4241 = vunpack.c.h.b16 %v3457
    %v4242 = vunpack.c.l.b16 %v3458
    %v4243 = vunpack.c.h.b16 %v3458
    %v4244 = vunpack.c.l.b16 %v3459
    %v4245 = vunpack.c.h.b16 %v3459
    %v4246 = vunpack.c.l.b16 %v3460
    %v4247 = vunpack.c.h.b16 %v3460
    %v4248 = vunpack.c.l.b16 %v3461
    %v4249 = vunpack.c.h.b16 %v3461
    %v4250 = vunpack.c.l.b16 %v3462
    %v4251 = vunpack.c.h.b16 %v3462
    %v4252 = vunpack.c.l.b16 %v3463
    %v4253 = vunpack.c.h.b16 %v3463
    %v4254 = vunpack.c.l.b16 %v3464
    %v4255 = vunpack.c.h.b16 %v3464
    %v4256 = vunpack.c.l.b16 %v3465
    %v4257 = vunpack.c.h.b16 %v3465
    %v4258 = vunpack.c.l.b16 %v3466
    %v4259 = vunpack.c.h.b16 %v3466
    %v4260 = vunpack.c.l.b16 %v3467
    %v4261 = vunpack.c.h.b16 %v3467
    %v4262 = vunpack.c.l.b16 %v3468
    %v4263 = vunpack.c.h.b16 %v3468
    %v4264 = vunpack.c.l.b16 %v3469
    %v4265 = vunpack.c.h.b16 %v3469
    %v4266 = vunpack.c.l.b16 %v3470
    %v4267 = vunpack.c.h.b16 %v3470
    %v4268 = vunpack.c.l.b16 %v3471
    %v4269 = vunpack.c.h.b16 %v3471
    %v4270 = vunpack.c.l.b16 %v3472
    %v4271 = vunpack.c.h.b16 %v3472
    %v4272 = vunpack.c.l.b16 %v3473
    %v4273 = vunpack.c.h.b16 %v3473
    %v4274 = vunpack.c.l.b16 %v3474
    %v4275 = vunpack.c.h.b16 %v3474
    %v4276 = vunpack.c.l.b16 %v3475
    %v4277 = vunpack.c.h.b16 %v3475
    %v4278 = vunpack.c.l.b16 %v3476
    %v4279 = vunpack.c.h.b16 %v3476
    %v4280 = vunpack.c.l.b16 %v3477
    %v4281 = vunpack.c.h.b16 %v3477
    %v4282 = vunpack.c.l.b16 %v3478
    %v4283 = vunpack.c.h.b16 %v3478
    %v4284 = vunpack.c.l.b16 %v3479
    %v4285 = vunpack.c.h.b16 %v3479
    %v4286 = vunpack.c.l.b16 %v3480
    %v4287 = vunpack.c.h.b16 %v3480
    %v4288 = vunpack.c.l.b16 %v3481
    %v4289 = vunpack.c.h.b16 %v3481
    %v4290 = vunpack.c.l.b16 %v3482
    %v4291 = vunpack.c.h.b16 %v3482
    %v4292 = vunpack.c.l.b16 %v3483
    %v4293 = vunpack.c.h.b16 %v3483
    %v4294 = vunpack.c.l.b16 %v3484
    %v4295 = vunpack.c.h.b16 %v3484
    %v4296 = vunpack.c.l.b16 %v3485
    %v4297 = vunpack.c.h.b16 %v3485
    %v4298 = vunpack.c.l.b16 %v3486
    %v4299 = vunpack.c.h.b16 %v3486
    %v4300 = vunpack.c.l.b16 %v3487
    %v4301 = vunpack.c.h.b16 %v3487
    %v4302 = vunpack.c.l.b16 %v3488
    %v4303 = vunpack.c.h.b16 %v3488
    %v4304 = vunpack.c.l.b16 %v3489
    %v4305 = vunpack.c.h.b16 %v3489
    %v4306 = vunpack.c.l.b16 %v3490
    %v4307 = vunpack.c.h.b16 %v3490
    %v4308 = vunpack.c.l.b16 %v3491
    %v4309 = vunpack.c.h.b16 %v3491
    %v4310 = vunpack.c.l.b16 %v3492
    %v4311 = vunpack.c.h.b16 %v3492
    %v4312 = vunpack.c.l.b16 %v3493
    %v4313 = vunpack.c.h.b16 %v3493
    %v4314 = vunpack.c.l.b16 %v3494
    %v4315 = vunpack.c.h.b16 %v3494
    %v4316 = vunpack.c.l.b16 %v3495
    %v4317 = vunpack.c.h.b16 %v3495
    %v4318 = vunpack.c.l.b16 %v3496
    %v4319 = vunpack.c.h.b16 %v3496
    %v4320 = vunpack.c.l.b16 %v3497
    %v4321 = vunpack.c.h.b16 %v3497
    %v4322 = vunpack.c.l.b16 %v3498
    %v4323 = vunpack.c.h.b16 %v3498
    %v4324 = vunpack.c.l.b16 %v3499
    %v4325 = vunpack.c.h.b16 %v3499
    %v4326 = vunpack.c.l.b16 %v3500
    %v4327 = vunpack.c.h.b16 %v3500
    %v4328 = vunpack.c.l.b16 %v3501
    %v4329 = vunpack.c.h.b16 %v3501
    %v4330 = vunpack.c.l.b16 %v3502
    %v4331 = vunpack.c.h.b16 %v3502
    %v4332 = vunpack.c.l.b16 %v3503
    %v4333 = vunpack.c.h.b16 %v3503
    %v4334 = vunpack.c.l.b16 %v3504
    %v4335 = vunpack.c.h.b16 %v3504
    %v4336 = vunpack.c.l.b16 %v3505
    %v4337 = vunpack.c.h.b16 %v3505
    %v4338 = vunpack.c.l.b16 %v3506
    %v4339 = vunpack.c.h.b16 %v3506
    %v4340 = vunpack.c.l.b16 %v3507
    %v4341 = vunpack.c.h.b16 %v3507
    %v4342 = vunpack.c.l.b16 %v3508
    %v4343 = vunpack.c.h.b16 %v3508
    %v4344 = vunpack.c.l.b16 %v3509
    %v4345 = vunpack.c.h.b16 %v3509
    %v4346 = vunpack.c.l.b16 %v3510
    %v4347 = vunpack.c.h.b16 %v3510
    %v4348 = vunpack.c.l.b16 %v3511
    %v4349 = vunpack.c.h.b16 %v3511
    %v4350 = vunpack.c.l.b16 %v3512
    %v4351 = vunpack.c.h.b16 %v3512
    %v4352 = vunpack.c.l.b16 %v3513
    %v4353 = vunpack.c.h.b16 %v3513
    %v4354 = vunpack.c.l.b16 %v3514
    %v4355 = vunpack.c.h.b16 %v3514
    %v4356 = vunpack.c.l.b16 %v3515
    %v4357 = vunpack.c.h.b16 %v3515
    %v4358 = vunpack.c.l.b16 %v3516
    %v4359 = vunpack.c.h.b16 %v3516
    %v4360 = vunpack.c.l.b16 %v3517
    %v4361 = vunpack.c.h.b16 %v3517
    %v4362 = vunpack.c.l.b16 %v3518
    %v4363 = vunpack.c.h.b16 %v3518
    %v4364 = vunpack.c.l.b16 %v3519
    %v4365 = vunpack.c.h.b16 %v3519
    %v4366 = vunpack.c.l.b16 %v3520
    %v4367 = vunpack.c.h.b16 %v3520
    %v4368 = vunpack.c.l.b16 %v3521
    %v4369 = vunpack.c.h.b16 %v3521
    %v4370 = vunpack.c.l.b16 %v3522
    %v4371 = vunpack.c.h.b16 %v3522
    %v4372 = vunpack.c.l.b16 %v3523
    %v4373 = vunpack.c.h.b16 %v3523
    %v4374 = vunpack.c.l.b16 %v3524
    %v4375 = vunpack.c.h.b16 %v3524
    %v4376 = vunpack.c.l.b16 %v3525
    %v4377 = vunpack.c.h.b16 %v3525
    %v4378 = vunpack.c.l.b16 %v3526
    %v4379 = vunpack.c.h.b16 %v3526
    %v4380 = vunpack.c.l.b16 %v3527
    %v4381 = vunpack.c.h.b16 %v3527
    %v4382 = vunpack.c.l.b16 %v3528
    %v4383 = vunpack.c.h.b16 %v3528
    %v4384 = vunpack.c.l.b16 %v3529
    %v4385 = vunpack.c.h.b16 %v3529
    %v4386 = vunpack.c.l.b16 %v3530
    %v4387 = vunpack.c.h.b16 %v3530
    %v4388 = vunpack.c.l.b16 %v3531
    %v4389 = vunpack.c.h.b16 %v3531
    %v4390 = vunpack.c.l.b16 %v3532
    %v4391 = vunpack.c.h.b16 %v3532
    %v4392 = vunpack.c.l.b16 %v3533
    %v4393 = vunpack.c.h.b16 %v3533
    %v4394 = vunpack.c.l.b16 %v3534
    %v4395 = vunpack.c.h.b16 %v3534
    %v4396 = vunpack.c.l.b16 %v3535
    %v4397 = vunpack.c.h.b16 %v3535
    %v4398 = vunpack.c.l.b16 %v3536
    %v4399 = vunpack.c.h.b16 %v3536
    %v4400 = vunpack.c.l.b16 %v3537
    %v4401 = vunpack.c.h.b16 %v3537
    %v4402 = vunpack.c.l.b16 %v3538
    %v4403 = vunpack.c.h.b16 %v3538
    %v4404 = vunpack.c.l.b16 %v3539
    %v4405 = vunpack.c.h.b16 %v3539
    %v4406 = vunpack.c.l.b16 %v3540
    %v4407 = vunpack.c.h.b16 %v3540
    %v4408 = vunpack.c.l.b16 %v3541
    %v4409 = vunpack.c.h.b16 %v3541
    %v4410 = vunpack.c.l.b16 %v3542
    %v4411 = vunpack.c.h.b16 %v3542
    %v4412 = vunpack.c.l.b16 %v3543
    %v4413 = vunpack.c.h.b16 %v3543
    %v4414 = vunpack.c.l.b16 %v3544
    %v4415 = vunpack.c.h.b16 %v3544
    %v4416 = vunpack.c.l.b16 %v3545
    %v4417 = vunpack.c.h.b16 %v3545
    %v4418 = vunpack.c.l.b16 %v3546
    %v4419 = vunpack.c.h.b16 %v3546
    %v4420 = vunpack.c.l.b16 %v3547
    %v4421 = vunpack.c.h.b16 %v3547
    %v4422 = vunpack.c.l.b16 %v3548
    %v4423 = vunpack.c.h.b16 %v3548
    %v4424 = vunpack.c.l.b16 %v3549
    %v4425 = vunpack.c.h.b16 %v3549
    %v4426 = vunpack.c.l.b16 %v3550
    %v4427 = vunpack.c.h.b16 %v3550
    %v4428 = vunpack.c.l.b16 %v3551
    %v4429 = vunpack.c.h.b16 %v3551
    %v4430 = vunpack.c.l.b16 %v3552
    %v4431 = vunpack.c.h.b16 %v3552
    %v4432 = vunpack.c.l.b16 %v3553
    %v4433 = vunpack.c.h.b16 %v3553
    %v4434 = vunpack.c.l.b16 %v3554
    %v4435 = vunpack.c.h.b16 %v3554
    %v4436 = vunpack.c.l.b16 %v3555
    %v4437 = vunpack.c.h.b16 %v3555
    %v4438 = vunpack.c.l.b16 %v3556
    %v4439 = vunpack.c.h.b16 %v3556
    %v4440 = vunpack.c.l.b16 %v3557
    %v4441 = vunpack.c.h.b16 %v3557
    %v4442 = vunpack.c.l.b16 %v3558
    %v4443 = vunpack.c.h.b16 %v3558
    %v4444 = vunpack.c.l.b16 %v3559
    %v4445 = vunpack.c.h.b16 %v3559
    %v4446 = vunpack.c.l.b16 %v3560
    %v4447 = vunpack.c.h.b16 %v3560
    %v4448 = vunpack.c.l.b16 %v3561
    %v4449 = vunpack.c.h.b16 %v3561
    %v4450 = vunpack.c.l.b16 %v3562
    %v4451 = vunpack.c.h.b16 %v3562
    %v4452 = vunpack.c.l.b16 %v3563
    %v4453 = vunpack.c.h.b16 %v3563
    %v4454 = vunpack.c.l.b16 %v3564
    %v4455 = vunpack.c.h.b16 %v3564
    %v4456 = vunpack.c.l.b16 %v3565
    %v4457 = vunpack.c.h.b16 %v3565
    %v4458 = vunpack.c.l.b16 %v3566
    %v4459 = vunpack.c.h.b16 %v3566
    %v4460 = vunpack.c.l.b16 %v3567
    %v4461 = vunpack.c.h.b16 %v3567
    %v4462 = vunpack.c.l.b16 %v3568
    %v4463 = vunpack.c.h.b16 %v3568
    %v4464 = vunpack.c.l.b16 %v3569
    %v4465 = vunpack.c.h.b16 %v3569
    %v4466 = vpack.c.b16 %v3896, %v3890
    %v4467 = vpack.c.b16 %v3897, %v3891
    %v4468 = vpack.c.b16 %v3898, %v3892
    %v4469 = vpack.c.b16 %v3899, %v3893
    %v4470 = vpack.c.b16 %v3900, %v3894
    %v4471 = vpack.c.b16 %v3901, %v3895
    %v4472 = vpack.c.b16 %v3908, %v3902
    %v4473 = vpack.c.b16 %v3909, %v3903
    %v4474 = vpack.c.b16 %v3910, %v3904
    %v4475 = vpack.c.b16 %v3911, %v3905
    %v4476 = vpack.c.b16 %v3912, %v3906
    %v4477 = vpack.c.b16 %v3913, %v3907
    %v4478 = vpack.c.b16 %v3920, %v3914
    %v4479 = vpack.c.b16 %v3921, %v3915
    %v4480 = vpack.c.b16 %v3922, %v3916
    %v4481 = vpack.c.b16 %v3923, %v3917
    %v4482 = vpack.c.b16 %v3924, %v3918
    %v4483 = vpack.c.b16 %v3925, %v3919
    %v4484 = vpack.c.b16 %v3932, %v3926
    %v4485 = vpack.c.b16 %v3933, %v3927
    %v4486 = vpack.c.b16 %v3934, %v3928
    %v4487 = vpack.c.b16 %v3935, %v3929
    %v4488 = vpack.c.b16 %v3936, %v3930
    %v4489 = vpack.c.b16 %v3937, %v3931
    %v4490 = vpack.c.b16 %v3944, %v3938
    %v4491 = vpack.c.b16 %v3945, %v3939
    %v4492 = vpack.c.b16 %v3946, %v3940
    %v4493 = vpack.c.b16 %v3947, %v3941
    %v4494 = vpack.c.b16 %v3948, %v3942
    %v4495 = vpack.c.b16 %v3949, %v3943
    %v4496 = vpack.c.b16 %v3956, %v3950
    %v4497 = vpack.c.b16 %v3957, %v3951
    %v4498 = vpack.c.b16 %v3958, %v3952
    %v4499 = vpack.c.b16 %v3959, %v3953
    %v4500 = vpack.c.b16 %v3960, %v3954
    %v4501 = vpack.c.b16 %v3961, %v3955
    %v4502 = vpack.c.b16 %v3968, %v3962
    %v4503 = vpack.c.b16 %v3969, %v3963
    %v4504 = vpack.c.b16 %v3970, %v3964
    %v4505 = vpack.c.b16 %v3971, %v3965
    %v4506 = vpack.c.b16 %v3972, %v3966
    %v4507 = vpack.c.b16 %v3973, %v3967
    %v4508 = vpack.c.b16 %v3980, %v3974
    %v4509 = vpack.c.b16 %v3981, %v3975
    %v4510 = vpack.c.b16 %v3982, %v3976
    %v4511 = vpack.c.b16 %v3983, %v3977
    %v4512 = vpack.c.b16 %v3984, %v3978
    %v4513 = vpack.c.b16 %v3985, %v3979
    %v4514 = vpack.c.b16 %v3992, %v3986
    %v4515 = vpack.c.b16 %v3993, %v3987
    %v4516 = vpack.c.b16 %v3994, %v3988
    %v4517 = vpack.c.b16 %v3995, %v3989
    %v4518 = vpack.c.b16 %v3996, %v3990
    %v4519 = vpack.c.b16 %v3997, %v3991
    %v4520 = vpack.c.b16 %v4004, %v3998
    %v4521 = vpack.c.b16 %v4005, %v3999
    %v4522 = vpack.c.b16 %v4006, %v4000
    %v4523 = vpack.c.b16 %v4007, %v4001
    %v4524 = vpack.c.b16 %v4008, %v4002
    %v4525 = vpack.c.b16 %v4009, %v4003
    %v4526 = vpack.c.b16 %v4016, %v4010
    %v4527 = vpack.c.b16 %v4017, %v4011
    %v4528 = vpack.c.b16 %v4018, %v4012
    %v4529 = vpack.c.b16 %v4019, %v4013
    %v4530 = vpack.c.b16 %v4020, %v4014
    %v4531 = vpack.c.b16 %v4021, %v4015
    %v4532 = vpack.c.b16 %v4028, %v4022
    %v4533 = vpack.c.b16 %v4029, %v4023
    %v4534 = vpack.c.b16 %v4030, %v4024
    %v4535 = vpack.c.b16 %v4031, %v4025
    %v4536 = vpack.c.b16 %v4032, %v4026
    %v4537 = vpack.c.b16 %v4033, %v4027
    %v4538 = vpack.c.b16 %v4040, %v4034
    %v4539 = vpack.c.b16 %v4041, %v4035
    %v4540 = vpack.c.b16 %v4042, %v4036
    %v4541 = vpack.c.b16 %v4043, %v4037
    %v4542 = vpack.c.b16 %v4044, %v4038
    %v4543 = vpack.c.b16 %v4045, %v4039
    %v4544 = vpack.c.b16 %v4052, %v4046
    %v4545 = vpack.c.b16 %v4053, %v4047
    %v4546 = vpack.c.b16 %v4054, %v4048
    %v4547 = vpack.c.b16 %v4055, %v4049
    %v4548 = vpack.c.b16 %v4056, %v4050
    %v4549 = vpack.c.b16 %v4057, %v4051
    %v4550 = vpack.c.b16 %v4064, %v4058
    %v4551 = vpack.c.b16 %v4065, %v4059
    %v4552 = vpack.c.b16 %v4066, %v4060
    %v4553 = vpack.c.b16 %v4067, %v4061
    %v4554 = vpack.c.b16 %v4068, %v4062
    %v4555 = vpack.c.b16 %v4069, %v4063
    %v4556 = vpack.c.b16 %v4076, %v4070
    %v4557 = vpack.c.b16 %v4077, %v4071
    %v4558 = vpack.c.b16 %v4078, %v4072
    %v4559 = vpack.c.b16 %v4079, %v4073
    %v4560 = vpack.c.b16 %v4080, %v4074
    %v4561 = vpack.c.b16 %v4081, %v4075
    %v4562 = vpack.c.b16 %v4088, %v4082
    %v4563 = vpack.c.b16 %v4089, %v4083
    %v4564 = vpack.c.b16 %v4090, %v4084
    %v4565 = vpack.c.b16 %v4091, %v4085
    %v4566 = vpack.c.b16 %v4092, %v4086
    %v4567 = vpack.c.b16 %v4093, %v4087
    %v4568 = vpack.c.b16 %v4100, %v4094
    %v4569 = vpack.c.b16 %v4101, %v4095
    %v4570 = vpack.c.b16 %v4102, %v4096
    %v4571 = vpack.c.b16 %v4103, %v4097
    %v4572 = vpack.c.b16 %v4104, %v4098
    %v4573 = vpack.c.b16 %v4105, %v4099
    %v4574 = vpack.c.b16 %v4112, %v4106
    %v4575 = vpack.c.b16 %v4113, %v4107
    %v4576 = vpack.c.b16 %v4114, %v4108
    %v4577 = vpack.c.b16 %v4115, %v4109
    %v4578 = vpack.c.b16 %v4116, %v4110
    %v4579 = vpack.c.b16 %v4117, %v4111
    %v4580 = vpack.c.b16 %v4124, %v4118
    %v4581 = vpack.c.b16 %v4125, %v4119
    %v4582 = vpack.c.b16 %v4126, %v4120
    %v4583 = vpack.c.b16 %v4127, %v4121
    %v4584 = vpack.c.b16 %v4128, %v4122
    %v4585 = vpack.c.b16 %v4129, %v4123
    %v4586 = vpack.c.b16 %v4136, %v4130
    %v4587 = vpack.c.b16 %v4137, %v4131
    %v4588 = vpack.c.b16 %v4138, %v4132
    %v4589 = vpack.c.b16 %v4139, %v4133
    %v4590 = vpack.c.b16 %v4140, %v4134
    %v4591 = vpack.c.b16 %v4141, %v4135
    %v4592 = vpack.c.b16 %v4148, %v4142
    %v4593 = vpack.c.b16 %v4149, %v4143
    %v4594 = vpack.c.b16 %v4150, %v4144
    %v4595 = vpack.c.b16 %v4151, %v4145
    %v4596 = vpack.c.b16 %v4152, %v4146
    %v4597 = vpack.c.b16 %v4153, %v4147
    %v4598 = vpack.c.b16 %v4160, %v4154
    %v4599 = vpack.c.b16 %v4161, %v4155
    %v4600 = vpack.c.b16 %v4162, %v4156
    %v4601 = vpack.c.b16 %v4163, %v4157
    %v4602 = vpack.c.b16 %v4164, %v4158
    %v4603 = vpack.c.b16 %v4165, %v4159
    %v4604 = vpack.c.b16 %v4172, %v4166
    %v4605 = vpack.c.b16 %v4173, %v4167
    %v4606 = vpack.c.b16 %v4174, %v4168
    %v4607 = vpack.c.b16 %v4175, %v4169
    %v4608 = vpack.c.b16 %v4176, %v4170
    %v4609 = vpack.c.b16 %v4177, %v4171
    %v4610 = vpack.c.b16 %v4184, %v4178
    %v4611 = vpack.c.b16 %v4185, %v4179
    %v4612 = vpack.c.b16 %v4186, %v4180
    %v4613 = vpack.c.b16 %v4187, %v4181
    %v4614 = vpack.c.b16 %v4188, %v4182
    %v4615 = vpack.c.b16 %v4189, %v4183
    %v4616 = vpack.c.b16 %v4196, %v4190
    %v4617 = vpack.c.b16 %v4197, %v4191
    %v4618 = vpack.c.b16 %v4198, %v4192
    %v4619 = vpack.c.b16 %v4199, %v4193
    %v4620 = vpack.c.b16 %v4200, %v4194
    %v4621 = vpack.c.b16 %v4201, %v4195
    %v4622 = vpack.c.b16 %v4208, %v4202
    %v4623 = vpack.c.b16 %v4209, %v4203
    %v4624 = vpack.c.b16 %v4210, %v4204
    %v4625 = vpack.c.b16 %v4211, %v4205
    %v4626 = vpack.c.b16 %v4212, %v4206
    %v4627 = vpack.c.b16 %v4213, %v4207
    %v4628 = vpack.c.b16 %v4220, %v4214
    %v4629 = vpack.c.b16 %v4221, %v4215
    %v4630 = vpack.c.b16 %v4222, %v4216
    %v4631 = vpack.c.b16 %v4223, %v4217
    %v4632 = vpack.c.b16 %v4224, %v4218
    %v4633 = vpack.c.b16 %v4225, %v4219
    %v4634 = vpack.c.b16 %v4232, %v4226
    %v4635 = vpack.c.b16 %v4233, %v4227
    %v4636 = vpack.c.b16 %v4234, %v4228
    %v4637 = vpack.c.b16 %v4235, %v4229
    %v4638 = vpack.c.b16 %v4236, %v4230
    %v4639 = vpack.c.b16 %v4237, %v4231
    %v4640 = vpack.c.b16 %v4244, %v4238
    %v4641 = vpack.c.b16 %v4245, %v4239
    %v4642 = vpack.c.b16 %v4246, %v4240
    %v4643 = vpack.c.b16 %v4247, %v4241
    %v4644 = vpack.c.b16 %v4248, %v4242
    %v4645 = vpack.c.b16 %v4249, %v4243
    %v4646 = vpack.c.b16 %v4256, %v4250
    %v4647 = vpack.c.b16 %v4257, %v4251
    %v4648 = vpack.c.b16 %v4258, %v4252
    %v4649 = vpack.c.b16 %v4259, %v4253
    %v4650 = vpack.c.b16 %v4260, %v4254
    %v4651 = vpack.c.b16 %v4261, %v4255
    %v4652 = vpack.c.b16 %v4268, %v4262
    %v4653 = vpack.c.b16 %v4269, %v4263
    %v4654 = vpack.c.b16 %v4270, %v4264
    %v4655 = vpack.c.b16 %v4271, %v4265
    %v4656 = vpack.c.b16 %v4272, %v4266
    %v4657 = vpack.c.b16 %v4273, %v4267
    %v4658 = vpack.c.b16 %v4280, %v4274
    %v4659 = vpack.c.b16 %v4281, %v4275
    %v4660 = vpack.c.b16 %v4282, %v4276
    %v4661 = vpack.c.b16 %v4283, %v4277
    %v4662 = vpack.c.b16 %v4284, %v4278
    %v4663 = vpack.c.b16 %v4285, %v4279
    %v4664 = vpack.c.b16 %v4292, %v4286
    %v4665 = vpack.c.b16 %v4293, %v4287
    %v4666 = vpack.c.b16 %v4294, %v4288
    %v4667 = vpack.c.b16 %v4295, %v4289
    %v4668 = vpack.c.b16 %v4296, %v4290
    %v4669 = vpack.c.b16 %v4297, %v4291
    %v4670 = vpack.c.b16 %v4304, %v4298
    %v4671 = vpack.c.b16 %v4305, %v4299
    %v4672 = vpack.c.b16 %v4306, %v4300
    %v4673 = vpack.c.b16 %v4307, %v4301
    %v4674 = vpack.c.b16 %v4308, %v4302
    %v4675 = vpack.c.b16 %v4309, %v4303
    %v4676 = vpack.c.b16 %v4316, %v4310
    %v4677 = vpack.c.b16 %v4317, %v4311
    %v4678 = vpack.c.b16 %v4318, %v4312
    %v4679 = vpack.c.b16 %v4319, %v4313
    %v4680 = vpack.c.b16 %v4320, %v4314
    %v4681 = vpack.c.b16 %v4321, %v4315
    %v4682 = vpack.c.b16 %v4328, %v4322
    %v4683 = vpack.c.b16 %v4329, %v4323
    %v4684 = vpack.c.b16 %v4330, %v4324
    %v4685 = vpack.c.b16 %v4331, %v4325
    %v4686 = vpack.c.b16 %v4332, %v4326
    %v4687 = vpack.c.b16 %v4333, %v4327
    %v4688 = vpack.c.b16 %v4340, %v4334
    %v4689 = vpack.c.b16 %v4341, %v4335
    %v4690 = vpack.c.b16 %v4342, %v4336
    %v4691 = vpack.c.b16 %v4343, %v4337
    %v4692 = vpack.c.b16 %v4344, %v4338
    %v4693 = vpack.c.b16 %v4345, %v4339
    %v4694 = vpack.c.b16 %v4352, %v4346
    %v4695 = vpack.c.b16 %v4353, %v4347
    %v4696 = vpack.c.b16 %v4354, %v4348
    %v4697 = vpack.c.b16 %v4355, %v4349
    %v4698 = vpack.c.b16 %v4356, %v4350
    %v4699 = vpack.c.b16 %v4357, %v4351
    %v4700 = vpack.c.b16 %v4364, %v4358
    %v4701 = vpack.c.b16 %v4365, %v4359
    %v4702 = vpack.c.b16 %v4366, %v4360
    %v4703 = vpack.c.b16 %v4367, %v4361
    %v4704 = vpack.c.b16 %v4368, %v4362
    %v4705 = vpack.c.b16 %v4369, %v4363
    %v4706 = vpack.c.b16 %v4376, %v4370
    %v4707 = vpack.c.b16 %v4377, %v4371
    %v4708 = vpack.c.b16 %v4378, %v4372
    %v4709 = vpack.c.b16 %v4379, %v4373
    %v4710 = vpack.c.b16 %v4380, %v4374
    %v4711 = vpack.c.b16 %v4381, %v4375
    %v4712 = vpack.c.b16 %v4388, %v4382
    %v4713 = vpack.c.b16 %v4389, %v4383
    %v4714 = vpack.c.b16 %v4390, %v4384
    %v4715 = vpack.c.b16 %v4391, %v4385
    %v4716 = vpack.c.b16 %v4392, %v4386
    %v4717 = vpack.c.b16 %v4393, %v4387
    %v4718 = vpack.c.b16 %v4400, %v4394
    %v4719 = vpack.c.b16 %v4401, %v4395
    %v4720 = vpack.c.b16 %v4402, %v4396
    %v4721 = vpack.c.b16 %v4403, %v4397
    %v4722 = vpack.c.b16 %v4404, %v4398
    %v4723 = vpack.c.b16 %v4405, %v4399
    %v4724 = vpack.c.b16 %v4412, %v4406
    %v4725 = vpack.c.b16 %v4413, %v4407
    %v4726 = vpack.c.b16 %v4414, %v4408
    %v4727 = vpack.c.b16 %v4415, %v4409
    %v4728 = vpack.c.b16 %v4416, %v4410
    %v4729 = vpack.c.b16 %v4417, %v4411
    %v4730 = vpack.c.b16 %v4424, %v4418
    %v4731 = vpack.c.b16 %v4425, %v4419
    %v4732 = vpack.c.b16 %v4426, %v4420
    %v4733 = vpack.c.b16 %v4427, %v4421
    %v4734 = vpack.c.b16 %v4428, %v4422
    %v4735 = vpack.c.b16 %v4429, %v4423
    %v4736 = vpack.c.b16 %v4436, %v4430
    %v4737 = vpack.c.b16 %v4437, %v4431
    %v4738 = vpack.c.b16 %v4438, %v4432
    %v4739 = vpack.c.b16 %v4439, %v4433
    %v4740 = vpack.c.b16 %v4440, %v4434
    %v4741 = vpack.c.b16 %v4441, %v4435
    %v4742 = vpack.c.b16 %v4448, %v4442
    %v4743 = vpack.c.b16 %v4449, %v4443
    %v4744 = vpack.c.b16 %v4450, %v4444
    %v4745 = vpack.c.b16 %v4451, %v4445
    %v4746 = vpack.c.b16 %v4452, %v4446
    %v4747 = vpack.c.b16 %v4453, %v4447
    %v4748 = vpack.c.b16 %v4460, %v4454
    %v4749 = vpack.c.b16 %v4461, %v4455
    %v4750 = vpack.c.b16 %v4462, %v4456
    %v4751 = vpack.c.b16 %v4463, %v4457
    %v4752 = vpack.c.b16 %v4464, %v4458
    %v4753 = vpack.c.b16 %v4465, %v4459
    %5042 = vmatprep.subr.bf16.mxu0 %v4509
    %5043 = vmatpush1.bf16.msra.mxu0 %v4508
    %5044 = vmatprep.subr.bf16.mxu0 %v4503
    %5045 = vmatpush1.bf16.msra.mxu0 %v4502
    %5046 = vmatprep.subr.bf16.mxu0 %v4497
    %5047 = vmatpush1.bf16.msra.mxu0 %v4496
    %5048 = vmatprep.subr.bf16.mxu0 %v4491
    %5049 = vmatpush1.bf16.msra.mxu0 %v4490
    %5050 = vmatprep.subr.bf16.mxu0 %v4485
    %5051 = vmatpush1.bf16.msra.mxu0 %v4484
    %5052 = vmatprep.subr.bf16.mxu0 %v4479
    %5053 = vmatpush1.bf16.msra.mxu0 %v4478
    %5054 = vmatprep.subr.bf16.mxu0 %v4473
    %5055 = vmatpush1.bf16.msra.mxu0 %v4472
    %5056 = vmatprep.subr.bf16.mxu0 %v4467
    %5057 = vmatpush1.bf16.msra.mxu0 %v4466
    %5058 = vmatprep.subr.bf16.mxu0 %v4557
    %5059 = vmatpush2.bf16.msra.mxu0 %v4556
    %5060 = vmatprep.subr.bf16.mxu0 %v4551
    %5061 = vmatpush2.bf16.msra.mxu0 %v4550
    %5062 = vmatprep.subr.bf16.mxu0 %v4545
    %5063 = vmatpush2.bf16.msra.mxu0 %v4544
    %5064 = vmatprep.subr.bf16.mxu0 %v4539
    %5065 = vmatpush2.bf16.msra.mxu0 %v4538
    %5066 = vmatprep.subr.bf16.mxu0 %v4533
    %5067 = vmatpush2.bf16.msra.mxu0 %v4532
    %5068 = vmatprep.subr.bf16.mxu0 %v4527
    %5069 = vmatpush2.bf16.msra.mxu0 %v4526
    %5070 = vmatprep.subr.bf16.mxu0 %v4521
    %5071 = vmatpush2.bf16.msra.mxu0 %v4520
    %5072 = vmatprep.subr.bf16.mxu0 %v4515
    %5073 = vmatpush2.bf16.msra.mxu0 %v4514
    %5074 = vmatprep.mubr.bf16.mxu0 %v3235
    %5075 = vmatmul.mubr.bf16.gmra.mxu0 %v3234
    %v5076 = vpop.f32.mrf.mxu0
    %v5077 = vadd.f32 %v3575, %v5076
    %v5078 = vpop.f32.mrf.mxu0
    %v5079 = vadd.f32 %v3579, %v5078
    %v5080 = vpop.f32.mrf.mxu0
    %v5081 = vadd.f32 %v3575, %v5080
    %v5082 = vpop.f32.mrf.mxu0
    %v5083 = vadd.f32 %v3579, %v5082
    %5084 = vmatprep.mubr.bf16.mxu0 %v3241
    %5085 = vmatmul.mubr.bf16.gmra.mxu0 %v3240
    %v5086 = vpop.f32.mrf.mxu0
    %v5087 = vadd.f32 %v3575, %v5086
    %v5088 = vpop.f32.mrf.mxu0
    %v5089 = vadd.f32 %v3579, %v5088
    %v5090 = vpop.f32.mrf.mxu0
    %v5091 = vadd.f32 %v3575, %v5090
    %v5092 = vpop.f32.mrf.mxu0
    %v5093 = vadd.f32 %v3579, %v5092
    %5094 = vmatprep.mubr.bf16.mxu0 %v3247
    %5095 = vmatmul.mubr.bf16.gmra.mxu0 %v3246
    %v5096 = vpop.f32.mrf.mxu0
    %v5097 = vadd.f32 %v3575, %v5096
    %v5098 = vpop.f32.mrf.mxu0
    %v5099 = vadd.f32 %v3579, %v5098
    %v5100 = vpop.f32.mrf.mxu0
    %v5101 = vadd.f32 %v3575, %v5100
    %v5102 = vpop.f32.mrf.mxu0
    %v5103 = vadd.f32 %v3579, %v5102
    %5104 = vmatprep.mubr.bf16.mxu0 %v3253
    %5105 = vmatmul.mubr.bf16.gmra.mxu0 %v3252
    %v5106 = vpop.f32.mrf.mxu0
    %v5107 = vadd.f32 %v3575, %v5106
    %v5108 = vpop.f32.mrf.mxu0
    %v5109 = vadd.f32 %v3579, %v5108
    %v5110 = vpop.f32.mrf.mxu0
    %v5111 = vadd.f32 %v3575, %v5110
    %v5112 = vpop.f32.mrf.mxu0
    %v5113 = vadd.f32 %v3579, %v5112
    %5114 = vmatprep.mubr.bf16.mxu0 %v3259
    %5115 = vmatmul.mubr.bf16.gmra.mxu0 %v3258
    %v5116 = vpop.f32.mrf.mxu0
    %v5117 = vadd.f32 %v3575, %v5116
    %v5118 = vpop.f32.mrf.mxu0
    %v5119 = vadd.f32 %v3579, %v5118
    %v5120 = vpop.f32.mrf.mxu0
    %v5121 = vadd.f32 %v3575, %v5120
    %v5122 = vpop.f32.mrf.mxu0
    %v5123 = vadd.f32 %v3579, %v5122
    %5124 = vmatprep.mubr.bf16.mxu0 %v3265
    %5125 = vmatmul.mubr.bf16.gmra.mxu0 %v3264
    %v5126 = vpop.f32.mrf.mxu0
    %v5127 = vadd.f32 %v3575, %v5126
    %v5128 = vpop.f32.mrf.mxu0
    %v5129 = vadd.f32 %v3579, %v5128
    %v5130 = vpop.f32.mrf.mxu0
    %v5131 = vadd.f32 %v3575, %v5130
    %v5132 = vpop.f32.mrf.mxu0
    %v5133 = vadd.f32 %v3579, %v5132
    %5134 = vmatprep.mubr.bf16.mxu0 %v3271
    %5135 = vmatmul.mubr.bf16.gmra.mxu0 %v3270
    %v5136 = vpop.f32.mrf.mxu0
    %v5137 = vadd.f32 %v3575, %v5136
    %v5138 = vpop.f32.mrf.mxu0
    %v5139 = vadd.f32 %v3579, %v5138
    %v5140 = vpop.f32.mrf.mxu0
    %v5141 = vadd.f32 %v3575, %v5140
    %v5142 = vpop.f32.mrf.mxu0
    %v5143 = vadd.f32 %v3579, %v5142
    %5144 = vmatprep.mubr.bf16.mxu0 %v3277
    %5145 = vmatmul.mubr.bf16.gmra.mxu0 %v3276
    %v5146 = vpop.f32.mrf.mxu0
    %v5147 = vadd.f32 %v3575, %v5146
    %v5148 = vpop.f32.mrf.mxu0
    %v5149 = vadd.f32 %v3579, %v5148
    %v5150 = vpop.f32.mrf.mxu0
    %v5151 = vadd.f32 %v3575, %v5150
    %v5152 = vpop.f32.mrf.mxu0
    %v5153 = vadd.f32 %v3579, %v5152
    %5154 = vdwg.mxu0
    %5155 = vmatprep.subr.bf16.mxu0 %v4605
    %5156 = vmatpush1.bf16.msra.mxu0 %v4604
    %5157 = vmatprep.subr.bf16.mxu0 %v4599
    %5158 = vmatpush1.bf16.msra.mxu0 %v4598
    %5159 = vmatprep.subr.bf16.mxu0 %v4593
    %5160 = vmatpush1.bf16.msra.mxu0 %v4592
    %5161 = vmatprep.subr.bf16.mxu0 %v4587
    %5162 = vmatpush1.bf16.msra.mxu0 %v4586
    %5163 = vmatprep.subr.bf16.mxu0 %v4581
    %5164 = vmatpush1.bf16.msra.mxu0 %v4580
    %5165 = vmatprep.subr.bf16.mxu0 %v4575
    %5166 = vmatpush1.bf16.msra.mxu0 %v4574
    %5167 = vmatprep.subr.bf16.mxu0 %v4569
    %5168 = vmatpush1.bf16.msra.mxu0 %v4568
    %5169 = vmatprep.subr.bf16.mxu0 %v4563
    %5170 = vmatpush1.bf16.msra.mxu0 %v4562
    %5171 = vmatprep.subr.bf16.mxu0 %v4653
    %5172 = vmatpush2.bf16.msra.mxu0 %v4652
    %5173 = vmatprep.subr.bf16.mxu0 %v4647
    %5174 = vmatpush2.bf16.msra.mxu0 %v4646
    %5175 = vmatprep.subr.bf16.mxu0 %v4641
    %5176 = vmatpush2.bf16.msra.mxu0 %v4640
    %5177 = vmatprep.subr.bf16.mxu0 %v4635
    %5178 = vmatpush2.bf16.msra.mxu0 %v4634
    %5179 = vmatprep.subr.bf16.mxu0 %v4629
    %5180 = vmatpush2.bf16.msra.mxu0 %v4628
    %5181 = vmatprep.subr.bf16.mxu0 %v4623
    %5182 = vmatpush2.bf16.msra.mxu0 %v4622
    %5183 = vmatprep.subr.bf16.mxu0 %v4617
    %5184 = vmatpush2.bf16.msra.mxu0 %v4616
    %5185 = vmatprep.subr.bf16.mxu0 %v4611
    %5186 = vmatpush2.bf16.msra.mxu0 %v4610
    %5187 = vmatprep.mubr.bf16.mxu0 %v3237
    %5188 = vmatmul.mubr.bf16.gmra.mxu0 %v3236
    %v5189 = vpop.f32.mrf.mxu0
    %v5190 = vadd.f32 %v5077, %v5189
    %v5191 = vpop.f32.mrf.mxu0
    %v5192 = vadd.f32 %v5079, %v5191
    %v5193 = vpop.f32.mrf.mxu0
    %v5194 = vadd.f32 %v5081, %v5193
    %v5195 = vpop.f32.mrf.mxu0
    %v5196 = vadd.f32 %v5083, %v5195
    %5197 = vmatprep.mubr.bf16.mxu0 %v3243
    %5198 = vmatmul.mubr.bf16.gmra.mxu0 %v3242
    %v5199 = vpop.f32.mrf.mxu0
    %v5200 = vadd.f32 %v5087, %v5199
    %v5201 = vpop.f32.mrf.mxu0
    %v5202 = vadd.f32 %v5089, %v5201
    %v5203 = vpop.f32.mrf.mxu0
    %v5204 = vadd.f32 %v5091, %v5203
    %v5205 = vpop.f32.mrf.mxu0
    %v5206 = vadd.f32 %v5093, %v5205
    %5207 = vmatprep.mubr.bf16.mxu0 %v3249
    %5208 = vmatmul.mubr.bf16.gmra.mxu0 %v3248
    %v5209 = vpop.f32.mrf.mxu0
    %v5210 = vadd.f32 %v5097, %v5209
    %v5211 = vpop.f32.mrf.mxu0
    %v5212 = vadd.f32 %v5099, %v5211
    %v5213 = vpop.f32.mrf.mxu0
    %v5214 = vadd.f32 %v5101, %v5213
    %v5215 = vpop.f32.mrf.mxu0
    %v5216 = vadd.f32 %v5103, %v5215
    %5217 = vmatprep.mubr.bf16.mxu0 %v3255
    %5218 = vmatmul.mubr.bf16.gmra.mxu0 %v3254
    %v5219 = vpop.f32.mrf.mxu0
    %v5220 = vadd.f32 %v5107, %v5219
    %v5221 = vpop.f32.mrf.mxu0
    %v5222 = vadd.f32 %v5109, %v5221
    %v5223 = vpop.f32.mrf.mxu0
    %v5224 = vadd.f32 %v5111, %v5223
    %v5225 = vpop.f32.mrf.mxu0
    %v5226 = vadd.f32 %v5113, %v5225
    %5227 = vmatprep.mubr.bf16.mxu0 %v3261
    %5228 = vmatmul.mubr.bf16.gmra.mxu0 %v3260
    %v5229 = vpop.f32.mrf.mxu0
    %v5230 = vadd.f32 %v5117, %v5229
    %v5231 = vpop.f32.mrf.mxu0
    %v5232 = vadd.f32 %v5119, %v5231
    %v5233 = vpop.f32.mrf.mxu0
    %v5234 = vadd.f32 %v5121, %v5233
    %v5235 = vpop.f32.mrf.mxu0
    %v5236 = vadd.f32 %v5123, %v5235
    %5237 = vmatprep.mubr.bf16.mxu0 %v3267
    %5238 = vmatmul.mubr.bf16.gmra.mxu0 %v3266
    %v5239 = vpop.f32.mrf.mxu0
    %v5240 = vadd.f32 %v5127, %v5239
    %v5241 = vpop.f32.mrf.mxu0
    %v5242 = vadd.f32 %v5129, %v5241
    %v5243 = vpop.f32.mrf.mxu0
    %v5244 = vadd.f32 %v5131, %v5243
    %v5245 = vpop.f32.mrf.mxu0
    %v5246 = vadd.f32 %v5133, %v5245
    %5247 = vmatprep.mubr.bf16.mxu0 %v3273
    %5248 = vmatmul.mubr.bf16.gmra.mxu0 %v3272
    %v5249 = vpop.f32.mrf.mxu0
    %v5250 = vadd.f32 %v5137, %v5249
    %v5251 = vpop.f32.mrf.mxu0
    %v5252 = vadd.f32 %v5139, %v5251
    %v5253 = vpop.f32.mrf.mxu0
    %v5254 = vadd.f32 %v5141, %v5253
    %v5255 = vpop.f32.mrf.mxu0
    %v5256 = vadd.f32 %v5143, %v5255
    %5257 = vmatprep.mubr.bf16.mxu0 %v3279
    %5258 = vmatmul.mubr.bf16.gmra.mxu0 %v3278
    %v5259 = vpop.f32.mrf.mxu0
    %v5260 = vadd.f32 %v5147, %v5259
    %v5261 = vpop.f32.mrf.mxu0
    %v5262 = vadd.f32 %v5149, %v5261
    %v5263 = vpop.f32.mrf.mxu0
    %v5264 = vadd.f32 %v5151, %v5263
    %v5265 = vpop.f32.mrf.mxu0
    %v5266 = vadd.f32 %v5153, %v5265
    %5267 = vdwg.mxu0
    %5268 = vmatprep.subr.bf16.mxu0 %v4701
    %5269 = vmatpush1.bf16.msra.mxu0 %v4700
    %5270 = vmatprep.subr.bf16.mxu0 %v4695
    %5271 = vmatpush1.bf16.msra.mxu0 %v4694
    %5272 = vmatprep.subr.bf16.mxu0 %v4689
    %5273 = vmatpush1.bf16.msra.mxu0 %v4688
    %5274 = vmatprep.subr.bf16.mxu0 %v4683
    %5275 = vmatpush1.bf16.msra.mxu0 %v4682
    %5276 = vmatprep.subr.bf16.mxu0 %v4677
    %5277 = vmatpush1.bf16.msra.mxu0 %v4676
    %5278 = vmatprep.subr.bf16.mxu0 %v4671
    %5279 = vmatpush1.bf16.msra.mxu0 %v4670
    %5280 = vmatprep.subr.bf16.mxu0 %v4665
    %5281 = vmatpush1.bf16.msra.mxu0 %v4664
    %5282 = vmatprep.subr.bf16.mxu0 %v4659
    %5283 = vmatpush1.bf16.msra.mxu0 %v4658
    %5284 = vmatprep.subr.bf16.mxu0 %v4749
    %5285 = vmatpush2.bf16.msra.mxu0 %v4748
    %5286 = vmatprep.subr.bf16.mxu0 %v4743
    %5287 = vmatpush2.bf16.msra.mxu0 %v4742
    %5288 = vmatprep.subr.bf16.mxu0 %v4737
    %5289 = vmatpush2.bf16.msra.mxu0 %v4736
    %5290 = vmatprep.subr.bf16.mxu0 %v4731
    %5291 = vmatpush2.bf16.msra.mxu0 %v4730
    %5292 = vmatprep.subr.bf16.mxu0 %v4725
    %5293 = vmatpush2.bf16.msra.mxu0 %v4724
    %5294 = vmatprep.subr.bf16.mxu0 %v4719
    %5295 = vmatpush2.bf16.msra.mxu0 %v4718
    %5296 = vmatprep.subr.bf16.mxu0 %v4713
    %5297 = vmatpush2.bf16.msra.mxu0 %v4712
    %5298 = vmatprep.subr.bf16.mxu0 %v4707
    %5299 = vmatpush2.bf16.msra.mxu0 %v4706
    %5300 = vmatprep.mubr.bf16.mxu0 %v3239
    %5301 = vmatmul.mubr.bf16.gmra.mxu0 %v3238
    %v5302 = vpop.f32.mrf.mxu0
    %v5303 = vadd.f32 %v5190, %v5302
    %v5304 = vpop.f32.mrf.mxu0
    %v5305 = vadd.f32 %v5192, %v5304
    %v5306 = vpop.f32.mrf.mxu0
    %v5307 = vadd.f32 %v5194, %v5306
    %v5308 = vpop.f32.mrf.mxu0
    %v5309 = vadd.f32 %v5196, %v5308
    %5310 = vmatprep.mubr.bf16.mxu0 %v3245
    %5311 = vmatmul.mubr.bf16.gmra.mxu0 %v3244
    %v5312 = vpop.f32.mrf.mxu0
    %v5313 = vadd.f32 %v5200, %v5312
    %v5314 = vpop.f32.mrf.mxu0
    %v5315 = vadd.f32 %v5202, %v5314
    %v5316 = vpop.f32.mrf.mxu0
    %v5317 = vadd.f32 %v5204, %v5316
    %v5318 = vpop.f32.mrf.mxu0
    %v5319 = vadd.f32 %v5206, %v5318
    %5320 = vmatprep.mubr.bf16.mxu0 %v3251
    %5321 = vmatmul.mubr.bf16.gmra.mxu0 %v3250
    %v5322 = vpop.f32.mrf.mxu0
    %v5323 = vadd.f32 %v5210, %v5322
    %v5324 = vpop.f32.mrf.mxu0
    %v5325 = vadd.f32 %v5212, %v5324
    %v5326 = vpop.f32.mrf.mxu0
    %v5327 = vadd.f32 %v5214, %v5326
    %v5328 = vpop.f32.mrf.mxu0
    %v5329 = vadd.f32 %v5216, %v5328
    %5330 = vmatprep.mubr.bf16.mxu0 %v3257
    %5331 = vmatmul.mubr.bf16.gmra.mxu0 %v3256
    %v5332 = vpop.f32.mrf.mxu0
    %v5333 = vadd.f32 %v5220, %v5332
    %v5334 = vpop.f32.mrf.mxu0
    %v5335 = vadd.f32 %v5222, %v5334
    %v5336 = vpop.f32.mrf.mxu0
    %v5337 = vadd.f32 %v5224, %v5336
    %v5338 = vpop.f32.mrf.mxu0
    %v5339 = vadd.f32 %v5226, %v5338
    %5340 = vmatprep.mubr.bf16.mxu0 %v3263
    %5341 = vmatmul.mubr.bf16.gmra.mxu0 %v3262
    %v5342 = vpop.f32.mrf.mxu0
    %v5343 = vadd.f32 %v5230, %v5342
    %v5344 = vpop.f32.mrf.mxu0
    %v5345 = vadd.f32 %v5232, %v5344
    %v5346 = vpop.f32.mrf.mxu0
    %v5347 = vadd.f32 %v5234, %v5346
    %v5348 = vpop.f32.mrf.mxu0
    %v5349 = vadd.f32 %v5236, %v5348
    %5350 = vmatprep.mubr.bf16.mxu0 %v3269
    %5351 = vmatmul.mubr.bf16.gmra.mxu0 %v3268
    %v5352 = vpop.f32.mrf.mxu0
    %v5353 = vadd.f32 %v5240, %v5352
    %v5354 = vpop.f32.mrf.mxu0
    %v5355 = vadd.f32 %v5242, %v5354
    %v5356 = vpop.f32.mrf.mxu0
    %v5357 = vadd.f32 %v5244, %v5356
    %v5358 = vpop.f32.mrf.mxu0
    %v5359 = vadd.f32 %v5246, %v5358
    %5360 = vmatprep.mubr.bf16.mxu0 %v3275
    %5361 = vmatmul.mubr.bf16.gmra.mxu0 %v3274
    %v5362 = vpop.f32.mrf.mxu0
    %v5363 = vadd.f32 %v5250, %v5362
    %v5364 = vpop.f32.mrf.mxu0
    %v5365 = vadd.f32 %v5252, %v5364
    %v5366 = vpop.f32.mrf.mxu0
    %v5367 = vadd.f32 %v5254, %v5366
    %v5368 = vpop.f32.mrf.mxu0
    %v5369 = vadd.f32 %v5256, %v5368
    %5370 = vmatprep.mubr.bf16.mxu0 %v3281
    %5371 = vmatmul.mubr.bf16.gmra.mxu0 %v3280
    %v5372 = vpop.f32.mrf.mxu0
    %v5373 = vadd.f32 %v5260, %v5372
    %v5374 = vpop.f32.mrf.mxu0
    %v5375 = vadd.f32 %v5262, %v5374
    %v5376 = vpop.f32.mrf.mxu0
    %v5377 = vadd.f32 %v5264, %v5376
    %v5378 = vpop.f32.mrf.mxu0
    %v5379 = vadd.f32 %v5266, %v5378
    %5380 = vdwg.mxu0
    %5381 = vmatprep.subr.bf16.mxu0 %v4511
    %5382 = vmatpush1.bf16.msra.mxu0 %v4510
    %5383 = vmatprep.subr.bf16.mxu0 %v4505
    %5384 = vmatpush1.bf16.msra.mxu0 %v4504
    %5385 = vmatprep.subr.bf16.mxu0 %v4499
    %5386 = vmatpush1.bf16.msra.mxu0 %v4498
    %5387 = vmatprep.subr.bf16.mxu0 %v4493
    %5388 = vmatpush1.bf16.msra.mxu0 %v4492
    %5389 = vmatprep.subr.bf16.mxu0 %v4487
    %5390 = vmatpush1.bf16.msra.mxu0 %v4486
    %5391 = vmatprep.subr.bf16.mxu0 %v4481
    %5392 = vmatpush1.bf16.msra.mxu0 %v4480
    %5393 = vmatprep.subr.bf16.mxu0 %v4475
    %5394 = vmatpush1.bf16.msra.mxu0 %v4474
    %5395 = vmatprep.subr.bf16.mxu0 %v4469
    %5396 = vmatpush1.bf16.msra.mxu0 %v4468
    %5397 = vmatprep.subr.bf16.mxu0 %v4559
    %5398 = vmatpush2.bf16.msra.mxu0 %v4558
    %5399 = vmatprep.subr.bf16.mxu0 %v4553
    %5400 = vmatpush2.bf16.msra.mxu0 %v4552
    %5401 = vmatprep.subr.bf16.mxu0 %v4547
    %5402 = vmatpush2.bf16.msra.mxu0 %v4546
    %5403 = vmatprep.subr.bf16.mxu0 %v4541
    %5404 = vmatpush2.bf16.msra.mxu0 %v4540
    %5405 = vmatprep.subr.bf16.mxu0 %v4535
    %5406 = vmatpush2.bf16.msra.mxu0 %v4534
    %5407 = vmatprep.subr.bf16.mxu0 %v4529
    %5408 = vmatpush2.bf16.msra.mxu0 %v4528
    %5409 = vmatprep.subr.bf16.mxu0 %v4523
    %5410 = vmatpush2.bf16.msra.mxu0 %v4522
    %5411 = vmatprep.subr.bf16.mxu0 %v4517
    %5412 = vmatpush2.bf16.msra.mxu0 %v4516
    %5413 = vmatprep.mubr.bf16.mxu0 %v3235
    %5414 = vmatmul.mubr.bf16.gmra.mxu0 %v3234
    %v5415 = vpop.f32.mrf.mxu0
    %v5416 = vadd.f32 %v3583, %v5415
    %v5417 = vpop.f32.mrf.mxu0
    %v5418 = vadd.f32 %v3587, %v5417
    %v5419 = vpop.f32.mrf.mxu0
    %v5420 = vadd.f32 %v3583, %v5419
    %v5421 = vpop.f32.mrf.mxu0
    %v5422 = vadd.f32 %v3587, %v5421
    %5423 = vmatprep.mubr.bf16.mxu0 %v3241
    %5424 = vmatmul.mubr.bf16.gmra.mxu0 %v3240
    %v5425 = vpop.f32.mrf.mxu0
    %v5426 = vadd.f32 %v3583, %v5425
    %v5427 = vpop.f32.mrf.mxu0
    %v5428 = vadd.f32 %v3587, %v5427
    %v5429 = vpop.f32.mrf.mxu0
    %v5430 = vadd.f32 %v3583, %v5429
    %v5431 = vpop.f32.mrf.mxu0
    %v5432 = vadd.f32 %v3587, %v5431
    %5433 = vmatprep.mubr.bf16.mxu0 %v3247
    %5434 = vmatmul.mubr.bf16.gmra.mxu0 %v3246
    %v5435 = vpop.f32.mrf.mxu0
    %v5436 = vadd.f32 %v3583, %v5435
    %v5437 = vpop.f32.mrf.mxu0
    %v5438 = vadd.f32 %v3587, %v5437
    %v5439 = vpop.f32.mrf.mxu0
    %v5440 = vadd.f32 %v3583, %v5439
    %v5441 = vpop.f32.mrf.mxu0
    %v5442 = vadd.f32 %v3587, %v5441
    %5443 = vmatprep.mubr.bf16.mxu0 %v3253
    %5444 = vmatmul.mubr.bf16.gmra.mxu0 %v3252
    %v5445 = vpop.f32.mrf.mxu0
    %v5446 = vadd.f32 %v3583, %v5445
    %v5447 = vpop.f32.mrf.mxu0
    %v5448 = vadd.f32 %v3587, %v5447
    %v5449 = vpop.f32.mrf.mxu0
    %v5450 = vadd.f32 %v3583, %v5449
    %v5451 = vpop.f32.mrf.mxu0
    %v5452 = vadd.f32 %v3587, %v5451
    %5453 = vmatprep.mubr.bf16.mxu0 %v3259
    %5454 = vmatmul.mubr.bf16.gmra.mxu0 %v3258
    %v5455 = vpop.f32.mrf.mxu0
    %v5456 = vadd.f32 %v3583, %v5455
    %v5457 = vpop.f32.mrf.mxu0
    %v5458 = vadd.f32 %v3587, %v5457
    %v5459 = vpop.f32.mrf.mxu0
    %v5460 = vadd.f32 %v3583, %v5459
    %v5461 = vpop.f32.mrf.mxu0
    %v5462 = vadd.f32 %v3587, %v5461
    %5463 = vmatprep.mubr.bf16.mxu0 %v3265
    %5464 = vmatmul.mubr.bf16.gmra.mxu0 %v3264
    %v5465 = vpop.f32.mrf.mxu0
    %v5466 = vadd.f32 %v3583, %v5465
    %v5467 = vpop.f32.mrf.mxu0
    %v5468 = vadd.f32 %v3587, %v5467
    %v5469 = vpop.f32.mrf.mxu0
    %v5470 = vadd.f32 %v3583, %v5469
    %v5471 = vpop.f32.mrf.mxu0
    %v5472 = vadd.f32 %v3587, %v5471
    %5473 = vmatprep.mubr.bf16.mxu0 %v3271
    %5474 = vmatmul.mubr.bf16.gmra.mxu0 %v3270
    %v5475 = vpop.f32.mrf.mxu0
    %v5476 = vadd.f32 %v3583, %v5475
    %v5477 = vpop.f32.mrf.mxu0
    %v5478 = vadd.f32 %v3587, %v5477
    %v5479 = vpop.f32.mrf.mxu0
    %v5480 = vadd.f32 %v3583, %v5479
    %v5481 = vpop.f32.mrf.mxu0
    %v5482 = vadd.f32 %v3587, %v5481
    %5483 = vmatprep.mubr.bf16.mxu0 %v3277
    %5484 = vmatmul.mubr.bf16.gmra.mxu0 %v3276
    %v5485 = vpop.f32.mrf.mxu0
    %v5486 = vadd.f32 %v3583, %v5485
    %v5487 = vpop.f32.mrf.mxu0
    %v5488 = vadd.f32 %v3587, %v5487
    %v5489 = vpop.f32.mrf.mxu0
    %v5490 = vadd.f32 %v3583, %v5489
    %v5491 = vpop.f32.mrf.mxu0
    %v5492 = vadd.f32 %v3587, %v5491
    %5493 = vdwg.mxu0
    %5494 = vmatprep.subr.bf16.mxu0 %v4607
    %5495 = vmatpush1.bf16.msra.mxu0 %v4606
    %5496 = vmatprep.subr.bf16.mxu0 %v4601
    %5497 = vmatpush1.bf16.msra.mxu0 %v4600
    %5498 = vmatprep.subr.bf16.mxu0 %v4595
    %5499 = vmatpush1.bf16.msra.mxu0 %v4594
    %5500 = vmatprep.subr.bf16.mxu0 %v4589
    %5501 = vmatpush1.bf16.msra.mxu0 %v4588
    %5502 = vmatprep.subr.bf16.mxu0 %v4583
    %5503 = vmatpush1.bf16.msra.mxu0 %v4582
    %5504 = vmatprep.subr.bf16.mxu0 %v4577
    %5505 = vmatpush1.bf16.msra.mxu0 %v4576
    %5506 = vmatprep.subr.bf16.mxu0 %v4571
    %5507 = vmatpush1.bf16.msra.mxu0 %v4570
    %5508 = vmatprep.subr.bf16.mxu0 %v4565
    %5509 = vmatpush1.bf16.msra.mxu0 %v4564
    %5510 = vmatprep.subr.bf16.mxu0 %v4655
    %5511 = vmatpush2.bf16.msra.mxu0 %v4654
    %5512 = vmatprep.subr.bf16.mxu0 %v4649
    %5513 = vmatpush2.bf16.msra.mxu0 %v4648
    %5514 = vmatprep.subr.bf16.mxu0 %v4643
    %5515 = vmatpush2.bf16.msra.mxu0 %v4642
    %5516 = vmatprep.subr.bf16.mxu0 %v4637
    %5517 = vmatpush2.bf16.msra.mxu0 %v4636
    %5518 = vmatprep.subr.bf16.mxu0 %v4631
    %5519 = vmatpush2.bf16.msra.mxu0 %v4630
    %5520 = vmatprep.subr.bf16.mxu0 %v4625
    %5521 = vmatpush2.bf16.msra.mxu0 %v4624
    %5522 = vmatprep.subr.bf16.mxu0 %v4619
    %5523 = vmatpush2.bf16.msra.mxu0 %v4618
    %5524 = vmatprep.subr.bf16.mxu0 %v4613
    %5525 = vmatpush2.bf16.msra.mxu0 %v4612
    %5526 = vmatprep.mubr.bf16.mxu0 %v3237
    %5527 = vmatmul.mubr.bf16.gmra.mxu0 %v3236
    %v5528 = vpop.f32.mrf.mxu0
    %v5529 = vadd.f32 %v5416, %v5528
    %v5530 = vpop.f32.mrf.mxu0
    %v5531 = vadd.f32 %v5418, %v5530
    %v5532 = vpop.f32.mrf.mxu0
    %v5533 = vadd.f32 %v5420, %v5532
    %v5534 = vpop.f32.mrf.mxu0
    %v5535 = vadd.f32 %v5422, %v5534
    %5536 = vmatprep.mubr.bf16.mxu0 %v3243
    %5537 = vmatmul.mubr.bf16.gmra.mxu0 %v3242
    %v5538 = vpop.f32.mrf.mxu0
    %v5539 = vadd.f32 %v5426, %v5538
    %v5540 = vpop.f32.mrf.mxu0
    %v5541 = vadd.f32 %v5428, %v5540
    %v5542 = vpop.f32.mrf.mxu0
    %v5543 = vadd.f32 %v5430, %v5542
    %v5544 = vpop.f32.mrf.mxu0
    %v5545 = vadd.f32 %v5432, %v5544
    %5546 = vmatprep.mubr.bf16.mxu0 %v3249
    %5547 = vmatmul.mubr.bf16.gmra.mxu0 %v3248
    %v5548 = vpop.f32.mrf.mxu0
    %v5549 = vadd.f32 %v5436, %v5548
    %v5550 = vpop.f32.mrf.mxu0
    %v5551 = vadd.f32 %v5438, %v5550
    %v5552 = vpop.f32.mrf.mxu0
    %v5553 = vadd.f32 %v5440, %v5552
    %v5554 = vpop.f32.mrf.mxu0
    %v5555 = vadd.f32 %v5442, %v5554
    %5556 = vmatprep.mubr.bf16.mxu0 %v3255
    %5557 = vmatmul.mubr.bf16.gmra.mxu0 %v3254
    %v5558 = vpop.f32.mrf.mxu0
    %v5559 = vadd.f32 %v5446, %v5558
    %v5560 = vpop.f32.mrf.mxu0
    %v5561 = vadd.f32 %v5448, %v5560
    %v5562 = vpop.f32.mrf.mxu0
    %v5563 = vadd.f32 %v5450, %v5562
    %v5564 = vpop.f32.mrf.mxu0
    %v5565 = vadd.f32 %v5452, %v5564
    %5566 = vmatprep.mubr.bf16.mxu0 %v3261
    %5567 = vmatmul.mubr.bf16.gmra.mxu0 %v3260
    %v5568 = vpop.f32.mrf.mxu0
    %v5569 = vadd.f32 %v5456, %v5568
    %v5570 = vpop.f32.mrf.mxu0
    %v5571 = vadd.f32 %v5458, %v5570
    %v5572 = vpop.f32.mrf.mxu0
    %v5573 = vadd.f32 %v5460, %v5572
    %v5574 = vpop.f32.mrf.mxu0
    %v5575 = vadd.f32 %v5462, %v5574
    %5576 = vmatprep.mubr.bf16.mxu0 %v3267
    %5577 = vmatmul.mubr.bf16.gmra.mxu0 %v3266
    %v5578 = vpop.f32.mrf.mxu0
    %v5579 = vadd.f32 %v5466, %v5578
    %v5580 = vpop.f32.mrf.mxu0
    %v5581 = vadd.f32 %v5468, %v5580
    %v5582 = vpop.f32.mrf.mxu0
    %v5583 = vadd.f32 %v5470, %v5582
    %v5584 = vpop.f32.mrf.mxu0
    %v5585 = vadd.f32 %v5472, %v5584
    %5586 = vmatprep.mubr.bf16.mxu0 %v3273
    %5587 = vmatmul.mubr.bf16.gmra.mxu0 %v3272
    %v5588 = vpop.f32.mrf.mxu0
    %v5589 = vadd.f32 %v5476, %v5588
    %v5590 = vpop.f32.mrf.mxu0
    %v5591 = vadd.f32 %v5478, %v5590
    %v5592 = vpop.f32.mrf.mxu0
    %v5593 = vadd.f32 %v5480, %v5592
    %v5594 = vpop.f32.mrf.mxu0
    %v5595 = vadd.f32 %v5482, %v5594
    %5596 = vmatprep.mubr.bf16.mxu0 %v3279
    %5597 = vmatmul.mubr.bf16.gmra.mxu0 %v3278
    %v5598 = vpop.f32.mrf.mxu0
    %v5599 = vadd.f32 %v5486, %v5598
    %v5600 = vpop.f32.mrf.mxu0
    %v5601 = vadd.f32 %v5488, %v5600
    %v5602 = vpop.f32.mrf.mxu0
    %v5603 = vadd.f32 %v5490, %v5602
    %v5604 = vpop.f32.mrf.mxu0
    %v5605 = vadd.f32 %v5492, %v5604
    %5606 = vdwg.mxu0
    %5607 = vmatprep.subr.bf16.mxu0 %v4703
    %5608 = vmatpush1.bf16.msra.mxu0 %v4702
    %5609 = vmatprep.subr.bf16.mxu0 %v4697
    %5610 = vmatpush1.bf16.msra.mxu0 %v4696
    %5611 = vmatprep.subr.bf16.mxu0 %v4691
    %5612 = vmatpush1.bf16.msra.mxu0 %v4690
    %5613 = vmatprep.subr.bf16.mxu0 %v4685
    %5614 = vmatpush1.bf16.msra.mxu0 %v4684
    %5615 = vmatprep.subr.bf16.mxu0 %v4679
    %5616 = vmatpush1.bf16.msra.mxu0 %v4678
    %5617 = vmatprep.subr.bf16.mxu0 %v4673
    %5618 = vmatpush1.bf16.msra.mxu0 %v4672
    %5619 = vmatprep.subr.bf16.mxu0 %v4667
    %5620 = vmatpush1.bf16.msra.mxu0 %v4666
    %5621 = vmatprep.subr.bf16.mxu0 %v4661
    %5622 = vmatpush1.bf16.msra.mxu0 %v4660
    %5623 = vmatprep.subr.bf16.mxu0 %v4751
    %5624 = vmatpush2.bf16.msra.mxu0 %v4750
    %5625 = vmatprep.subr.bf16.mxu0 %v4745
    %5626 = vmatpush2.bf16.msra.mxu0 %v4744
    %5627 = vmatprep.subr.bf16.mxu0 %v4739
    %5628 = vmatpush2.bf16.msra.mxu0 %v4738
    %5629 = vmatprep.subr.bf16.mxu0 %v4733
    %5630 = vmatpush2.bf16.msra.mxu0 %v4732
    %5631 = vmatprep.subr.bf16.mxu0 %v4727
    %5632 = vmatpush2.bf16.msra.mxu0 %v4726
    %5633 = vmatprep.subr.bf16.mxu0 %v4721
    %5634 = vmatpush2.bf16.msra.mxu0 %v4720
    %5635 = vmatprep.subr.bf16.mxu0 %v4715
    %5636 = vmatpush2.bf16.msra.mxu0 %v4714
    %5637 = vmatprep.subr.bf16.mxu0 %v4709
    %5638 = vmatpush2.bf16.msra.mxu0 %v4708
    %5639 = vmatprep.mubr.bf16.mxu0 %v3239
    %5640 = vmatmul.mubr.bf16.gmra.mxu0 %v3238
    %v5641 = vpop.f32.mrf.mxu0
    %v5642 = vadd.f32 %v5529, %v5641
    %v5643 = vpop.f32.mrf.mxu0
    %v5644 = vadd.f32 %v5531, %v5643
    %v5645 = vpop.f32.mrf.mxu0
    %v5646 = vadd.f32 %v5533, %v5645
    %v5647 = vpop.f32.mrf.mxu0
    %v5648 = vadd.f32 %v5535, %v5647
    %5649 = vmatprep.mubr.bf16.mxu0 %v3245
    %5650 = vmatmul.mubr.bf16.gmra.mxu0 %v3244
    %v5651 = vpop.f32.mrf.mxu0
    %v5652 = vadd.f32 %v5539, %v5651
    %v5653 = vpop.f32.mrf.mxu0
    %v5654 = vadd.f32 %v5541, %v5653
    %v5655 = vpop.f32.mrf.mxu0
    %v5656 = vadd.f32 %v5543, %v5655
    %v5657 = vpop.f32.mrf.mxu0
    %v5658 = vadd.f32 %v5545, %v5657
    %5659 = vmatprep.mubr.bf16.mxu0 %v3251
    %5660 = vmatmul.mubr.bf16.gmra.mxu0 %v3250
    %v5661 = vpop.f32.mrf.mxu0
    %v5662 = vadd.f32 %v5549, %v5661
    %v5663 = vpop.f32.mrf.mxu0
    %v5664 = vadd.f32 %v5551, %v5663
    %v5665 = vpop.f32.mrf.mxu0
    %v5666 = vadd.f32 %v5553, %v5665
    %v5667 = vpop.f32.mrf.mxu0
    %v5668 = vadd.f32 %v5555, %v5667
    %5669 = vmatprep.mubr.bf16.mxu0 %v3257
    %5670 = vmatmul.mubr.bf16.gmra.mxu0 %v3256
    %v5671 = vpop.f32.mrf.mxu0
    %v5672 = vadd.f32 %v5559, %v5671
    %v5673 = vpop.f32.mrf.mxu0
    %v5674 = vadd.f32 %v5561, %v5673
    %v5675 = vpop.f32.mrf.mxu0
    %v5676 = vadd.f32 %v5563, %v5675
    %v5677 = vpop.f32.mrf.mxu0
    %v5678 = vadd.f32 %v5565, %v5677
    %5679 = vmatprep.mubr.bf16.mxu0 %v3263
    %5680 = vmatmul.mubr.bf16.gmra.mxu0 %v3262
    %v5681 = vpop.f32.mrf.mxu0
    %v5682 = vadd.f32 %v5569, %v5681
    %v5683 = vpop.f32.mrf.mxu0
    %v5684 = vadd.f32 %v5571, %v5683
    %v5685 = vpop.f32.mrf.mxu0
    %v5686 = vadd.f32 %v5573, %v5685
    %v5687 = vpop.f32.mrf.mxu0
    %v5688 = vadd.f32 %v5575, %v5687
    %5689 = vmatprep.mubr.bf16.mxu0 %v3269
    %5690 = vmatmul.mubr.bf16.gmra.mxu0 %v3268
    %v5691 = vpop.f32.mrf.mxu0
    %v5692 = vadd.f32 %v5579, %v5691
    %v5693 = vpop.f32.mrf.mxu0
    %v5694 = vadd.f32 %v5581, %v5693
    %v5695 = vpop.f32.mrf.mxu0
    %v5696 = vadd.f32 %v5583, %v5695
    %v5697 = vpop.f32.mrf.mxu0
    %v5698 = vadd.f32 %v5585, %v5697
    %5699 = vmatprep.mubr.bf16.mxu0 %v3275
    %5700 = vmatmul.mubr.bf16.gmra.mxu0 %v3274
    %v5701 = vpop.f32.mrf.mxu0
    %v5702 = vadd.f32 %v5589, %v5701
    %v5703 = vpop.f32.mrf.mxu0
    %v5704 = vadd.f32 %v5591, %v5703
    %v5705 = vpop.f32.mrf.mxu0
    %v5706 = vadd.f32 %v5593, %v5705
    %v5707 = vpop.f32.mrf.mxu0
    %v5708 = vadd.f32 %v5595, %v5707
    %5709 = vmatprep.mubr.bf16.mxu0 %v3281
    %5710 = vmatmul.mubr.bf16.gmra.mxu0 %v3280
    %v5711 = vpop.f32.mrf.mxu0
    %v5712 = vadd.f32 %v5599, %v5711
    %v5713 = vpop.f32.mrf.mxu0
    %v5714 = vadd.f32 %v5601, %v5713
    %v5715 = vpop.f32.mrf.mxu0
    %v5716 = vadd.f32 %v5603, %v5715
    %v5717 = vpop.f32.mrf.mxu0
    %v5718 = vadd.f32 %v5605, %v5717
    %5719 = vdwg.mxu0
    %5720 = vmatprep.subr.bf16.mxu0 %v4513
    %5721 = vmatpush1.bf16.msra.mxu0 %v4512
    %5722 = vmatprep.subr.bf16.mxu0 %v4507
    %5723 = vmatpush1.bf16.msra.mxu0 %v4506
    %5724 = vmatprep.subr.bf16.mxu0 %v4501
    %5725 = vmatpush1.bf16.msra.mxu0 %v4500
    %5726 = vmatprep.subr.bf16.mxu0 %v4495
    %5727 = vmatpush1.bf16.msra.mxu0 %v4494
    %5728 = vmatprep.subr.bf16.mxu0 %v4489
    %5729 = vmatpush1.bf16.msra.mxu0 %v4488
    %5730 = vmatprep.subr.bf16.mxu0 %v4483
    %5731 = vmatpush1.bf16.msra.mxu0 %v4482
    %5732 = vmatprep.subr.bf16.mxu0 %v4477
    %5733 = vmatpush1.bf16.msra.mxu0 %v4476
    %5734 = vmatprep.subr.bf16.mxu0 %v4471
    %5735 = vmatpush1.bf16.msra.mxu0 %v4470
    %5736 = vmatprep.subr.bf16.mxu0 %v4561
    %5737 = vmatpush2.bf16.msra.mxu0 %v4560
    %5738 = vmatprep.subr.bf16.mxu0 %v4555
    %5739 = vmatpush2.bf16.msra.mxu0 %v4554
    %5740 = vmatprep.subr.bf16.mxu0 %v4549
    %5741 = vmatpush2.bf16.msra.mxu0 %v4548
    %5742 = vmatprep.subr.bf16.mxu0 %v4543
    %5743 = vmatpush2.bf16.msra.mxu0 %v4542
    %5744 = vmatprep.subr.bf16.mxu0 %v4537
    %5745 = vmatpush2.bf16.msra.mxu0 %v4536
    %5746 = vmatprep.subr.bf16.mxu0 %v4531
    %5747 = vmatpush2.bf16.msra.mxu0 %v4530
    %5748 = vmatprep.subr.bf16.mxu0 %v4525
    %5749 = vmatpush2.bf16.msra.mxu0 %v4524
    %5750 = vmatprep.subr.bf16.mxu0 %v4519
    %5751 = vmatpush2.bf16.msra.mxu0 %v4518
    %5752 = vmatprep.mubr.bf16.mxu0 %v3235
    %5753 = vmatmul.mubr.bf16.gmra.mxu0 %v3234
    %v5754 = vpop.f32.mrf.mxu0
    %v5755 = vadd.f32 %v3591, %v5754
    %v5756 = vpop.f32.mrf.mxu0
    %v5757 = vadd.f32 %v3595, %v5756
    %v5758 = vpop.f32.mrf.mxu0
    %v5759 = vadd.f32 %v3591, %v5758
    %v5760 = vpop.f32.mrf.mxu0
    %v5761 = vadd.f32 %v3595, %v5760
    %5762 = vmatprep.mubr.bf16.mxu0 %v3241
    %5763 = vmatmul.mubr.bf16.gmra.mxu0 %v3240
    %v5764 = vpop.f32.mrf.mxu0
    %v5765 = vadd.f32 %v3591, %v5764
    %v5766 = vpop.f32.mrf.mxu0
    %v5767 = vadd.f32 %v3595, %v5766
    %v5768 = vpop.f32.mrf.mxu0
    %v5769 = vadd.f32 %v3591, %v5768
    %v5770 = vpop.f32.mrf.mxu0
    %v5771 = vadd.f32 %v3595, %v5770
    %5772 = vmatprep.mubr.bf16.mxu0 %v3247
    %5773 = vmatmul.mubr.bf16.gmra.mxu0 %v3246
    %v5774 = vpop.f32.mrf.mxu0
    %v5775 = vadd.f32 %v3591, %v5774
    %v5776 = vpop.f32.mrf.mxu0
    %v5777 = vadd.f32 %v3595, %v5776
    %v5778 = vpop.f32.mrf.mxu0
    %v5779 = vadd.f32 %v3591, %v5778
    %v5780 = vpop.f32.mrf.mxu0
    %v5781 = vadd.f32 %v3595, %v5780
    %5782 = vmatprep.mubr.bf16.mxu0 %v3253
    %5783 = vmatmul.mubr.bf16.gmra.mxu0 %v3252
    %v5784 = vpop.f32.mrf.mxu0
    %v5785 = vadd.f32 %v3591, %v5784
    %v5786 = vpop.f32.mrf.mxu0
    %v5787 = vadd.f32 %v3595, %v5786
    %v5788 = vpop.f32.mrf.mxu0
    %v5789 = vadd.f32 %v3591, %v5788
    %v5790 = vpop.f32.mrf.mxu0
    %v5791 = vadd.f32 %v3595, %v5790
    %5792 = vmatprep.mubr.bf16.mxu0 %v3259
    %5793 = vmatmul.mubr.bf16.gmra.mxu0 %v3258
    %v5794 = vpop.f32.mrf.mxu0
    %v5795 = vadd.f32 %v3591, %v5794
    %v5796 = vpop.f32.mrf.mxu0
    %v5797 = vadd.f32 %v3595, %v5796
    %v5798 = vpop.f32.mrf.mxu0
    %v5799 = vadd.f32 %v3591, %v5798
    %v5800 = vpop.f32.mrf.mxu0
    %v5801 = vadd.f32 %v3595, %v5800
    %5802 = vmatprep.mubr.bf16.mxu0 %v3265
    %5803 = vmatmul.mubr.bf16.gmra.mxu0 %v3264
    %v5804 = vpop.f32.mrf.mxu0
    %v5805 = vadd.f32 %v3591, %v5804
    %v5806 = vpop.f32.mrf.mxu0
    %v5807 = vadd.f32 %v3595, %v5806
    %v5808 = vpop.f32.mrf.mxu0
    %v5809 = vadd.f32 %v3591, %v5808
    %v5810 = vpop.f32.mrf.mxu0
    %v5811 = vadd.f32 %v3595, %v5810
    %5812 = vmatprep.mubr.bf16.mxu0 %v3271
    %5813 = vmatmul.mubr.bf16.gmra.mxu0 %v3270
    %v5814 = vpop.f32.mrf.mxu0
    %v5815 = vadd.f32 %v3591, %v5814
    %v5816 = vpop.f32.mrf.mxu0
    %v5817 = vadd.f32 %v3595, %v5816
    %v5818 = vpop.f32.mrf.mxu0
    %v5819 = vadd.f32 %v3591, %v5818
    %v5820 = vpop.f32.mrf.mxu0
    %v5821 = vadd.f32 %v3595, %v5820
    %5822 = vmatprep.mubr.bf16.mxu0 %v3277
    %5823 = vmatmul.mubr.bf16.gmra.mxu0 %v3276
    %v5824 = vpop.f32.mrf.mxu0
    %v5825 = vadd.f32 %v3591, %v5824
    %v5826 = vpop.f32.mrf.mxu0
    %v5827 = vadd.f32 %v3595, %v5826
    %v5828 = vpop.f32.mrf.mxu0
    %v5829 = vadd.f32 %v3591, %v5828
    %v5830 = vpop.f32.mrf.mxu0
    %v5831 = vadd.f32 %v3595, %v5830
    %5832 = vdwg.mxu0
    %5833 = vmatprep.subr.bf16.mxu0 %v4609
    %5834 = vmatpush1.bf16.msra.mxu0 %v4608
    %5835 = vmatprep.subr.bf16.mxu0 %v4603
    %5836 = vmatpush1.bf16.msra.mxu0 %v4602
    %5837 = vmatprep.subr.bf16.mxu0 %v4597
    %5838 = vmatpush1.bf16.msra.mxu0 %v4596
    %5839 = vmatprep.subr.bf16.mxu0 %v4591
    %5840 = vmatpush1.bf16.msra.mxu0 %v4590
    %5841 = vmatprep.subr.bf16.mxu0 %v4585
    %5842 = vmatpush1.bf16.msra.mxu0 %v4584
    %5843 = vmatprep.subr.bf16.mxu0 %v4579
    %5844 = vmatpush1.bf16.msra.mxu0 %v4578
    %5845 = vmatprep.subr.bf16.mxu0 %v4573
    %5846 = vmatpush1.bf16.msra.mxu0 %v4572
    %5847 = vmatprep.subr.bf16.mxu0 %v4567
    %5848 = vmatpush1.bf16.msra.mxu0 %v4566
    %5849 = vmatprep.subr.bf16.mxu0 %v4657
    %5850 = vmatpush2.bf16.msra.mxu0 %v4656
    %5851 = vmatprep.subr.bf16.mxu0 %v4651
    %5852 = vmatpush2.bf16.msra.mxu0 %v4650
    %5853 = vmatprep.subr.bf16.mxu0 %v4645
    %5854 = vmatpush2.bf16.msra.mxu0 %v4644
    %5855 = vmatprep.subr.bf16.mxu0 %v4639
    %5856 = vmatpush2.bf16.msra.mxu0 %v4638
    %5857 = vmatprep.subr.bf16.mxu0 %v4633
    %5858 = vmatpush2.bf16.msra.mxu0 %v4632
    %5859 = vmatprep.subr.bf16.mxu0 %v4627
    %5860 = vmatpush2.bf16.msra.mxu0 %v4626
    %5861 = vmatprep.subr.bf16.mxu0 %v4621
    %5862 = vmatpush2.bf16.msra.mxu0 %v4620
    %5863 = vmatprep.subr.bf16.mxu0 %v4615
    %5864 = vmatpush2.bf16.msra.mxu0 %v4614
    %5865 = vmatprep.mubr.bf16.mxu0 %v3237
    %5866 = vmatmul.mubr.bf16.gmra.mxu0 %v3236
    %v5867 = vpop.f32.mrf.mxu0
    %v5868 = vadd.f32 %v5755, %v5867
    %v5869 = vpop.f32.mrf.mxu0
    %v5870 = vadd.f32 %v5757, %v5869
    %v5871 = vpop.f32.mrf.mxu0
    %v5872 = vadd.f32 %v5759, %v5871
    %v5873 = vpop.f32.mrf.mxu0
    %v5874 = vadd.f32 %v5761, %v5873
    %5875 = vmatprep.mubr.bf16.mxu0 %v3243
    %5876 = vmatmul.mubr.bf16.gmra.mxu0 %v3242
    %v5877 = vpop.f32.mrf.mxu0
    %v5878 = vadd.f32 %v5765, %v5877
    %v5879 = vpop.f32.mrf.mxu0
    %v5880 = vadd.f32 %v5767, %v5879
    %v5881 = vpop.f32.mrf.mxu0
    %v5882 = vadd.f32 %v5769, %v5881
    %v5883 = vpop.f32.mrf.mxu0
    %v5884 = vadd.f32 %v5771, %v5883
    %5885 = vmatprep.mubr.bf16.mxu0 %v3249
    %5886 = vmatmul.mubr.bf16.gmra.mxu0 %v3248
    %v5887 = vpop.f32.mrf.mxu0
    %v5888 = vadd.f32 %v5775, %v5887
    %v5889 = vpop.f32.mrf.mxu0
    %v5890 = vadd.f32 %v5777, %v5889
    %v5891 = vpop.f32.mrf.mxu0
    %v5892 = vadd.f32 %v5779, %v5891
    %v5893 = vpop.f32.mrf.mxu0
    %v5894 = vadd.f32 %v5781, %v5893
    %5895 = vmatprep.mubr.bf16.mxu0 %v3255
    %5896 = vmatmul.mubr.bf16.gmra.mxu0 %v3254
    %v5897 = vpop.f32.mrf.mxu0
    %v5898 = vadd.f32 %v5785, %v5897
    %v5899 = vpop.f32.mrf.mxu0
    %v5900 = vadd.f32 %v5787, %v5899
    %v5901 = vpop.f32.mrf.mxu0
    %v5902 = vadd.f32 %v5789, %v5901
    %v5903 = vpop.f32.mrf.mxu0
    %v5904 = vadd.f32 %v5791, %v5903
    %5905 = vmatprep.mubr.bf16.mxu0 %v3261
    %5906 = vmatmul.mubr.bf16.gmra.mxu0 %v3260
    %v5907 = vpop.f32.mrf.mxu0
    %v5908 = vadd.f32 %v5795, %v5907
    %v5909 = vpop.f32.mrf.mxu0
    %v5910 = vadd.f32 %v5797, %v5909
    %v5911 = vpop.f32.mrf.mxu0
    %v5912 = vadd.f32 %v5799, %v5911
    %v5913 = vpop.f32.mrf.mxu0
    %v5914 = vadd.f32 %v5801, %v5913
    %5915 = vmatprep.mubr.bf16.mxu0 %v3267
    %5916 = vmatmul.mubr.bf16.gmra.mxu0 %v3266
    %v5917 = vpop.f32.mrf.mxu0
    %v5918 = vadd.f32 %v5805, %v5917
    %v5919 = vpop.f32.mrf.mxu0
    %v5920 = vadd.f32 %v5807, %v5919
    %v5921 = vpop.f32.mrf.mxu0
    %v5922 = vadd.f32 %v5809, %v5921
    %v5923 = vpop.f32.mrf.mxu0
    %v5924 = vadd.f32 %v5811, %v5923
    %5925 = vmatprep.mubr.bf16.mxu0 %v3273
    %5926 = vmatmul.mubr.bf16.gmra.mxu0 %v3272
    %v5927 = vpop.f32.mrf.mxu0
    %v5928 = vadd.f32 %v5815, %v5927
    %v5929 = vpop.f32.mrf.mxu0
    %v5930 = vadd.f32 %v5817, %v5929
    %v5931 = vpop.f32.mrf.mxu0
    %v5932 = vadd.f32 %v5819, %v5931
    %v5933 = vpop.f32.mrf.mxu0
    %v5934 = vadd.f32 %v5821, %v5933
    %5935 = vmatprep.mubr.bf16.mxu0 %v3279
    %5936 = vmatmul.mubr.bf16.gmra.mxu0 %v3278
    %v5937 = vpop.f32.mrf.mxu0
    %v5938 = vadd.f32 %v5825, %v5937
    %v5939 = vpop.f32.mrf.mxu0
    %v5940 = vadd.f32 %v5827, %v5939
    %v5941 = vpop.f32.mrf.mxu0
    %v5942 = vadd.f32 %v5829, %v5941
    %v5943 = vpop.f32.mrf.mxu0
    %v5944 = vadd.f32 %v5831, %v5943
    %5945 = vdwg.mxu0
    %5946 = vmatprep.subr.bf16.mxu0 %v4705
    %5947 = vmatpush1.bf16.msra.mxu0 %v4704
    %5948 = vmatprep.subr.bf16.mxu0 %v4699
    %5949 = vmatpush1.bf16.msra.mxu0 %v4698
    %5950 = vmatprep.subr.bf16.mxu0 %v4693
    %5951 = vmatpush1.bf16.msra.mxu0 %v4692
    %5952 = vmatprep.subr.bf16.mxu0 %v4687
    %5953 = vmatpush1.bf16.msra.mxu0 %v4686
    %5954 = vmatprep.subr.bf16.mxu0 %v4681
    %5955 = vmatpush1.bf16.msra.mxu0 %v4680
    %5956 = vmatprep.subr.bf16.mxu0 %v4675
    %5957 = vmatpush1.bf16.msra.mxu0 %v4674
    %5958 = vmatprep.subr.bf16.mxu0 %v4669
    %5959 = vmatpush1.bf16.msra.mxu0 %v4668
    %5960 = vmatprep.subr.bf16.mxu0 %v4663
    %5961 = vmatpush1.bf16.msra.mxu0 %v4662
    %5962 = vmatprep.subr.bf16.mxu0 %v4753
    %5963 = vmatpush2.bf16.msra.mxu0 %v4752
    %5964 = vmatprep.subr.bf16.mxu0 %v4747
    %5965 = vmatpush2.bf16.msra.mxu0 %v4746
    %5966 = vmatprep.subr.bf16.mxu0 %v4741
    %5967 = vmatpush2.bf16.msra.mxu0 %v4740
    %5968 = vmatprep.subr.bf16.mxu0 %v4735
    %5969 = vmatpush2.bf16.msra.mxu0 %v4734
    %5970 = vmatprep.subr.bf16.mxu0 %v4729
    %5971 = vmatpush2.bf16.msra.mxu0 %v4728
    %5972 = vmatprep.subr.bf16.mxu0 %v4723
    %5973 = vmatpush2.bf16.msra.mxu0 %v4722
    %5974 = vmatprep.subr.bf16.mxu0 %v4717
    %5975 = vmatpush2.bf16.msra.mxu0 %v4716
    %5976 = vmatprep.subr.bf16.mxu0 %v4711
    %5977 = vmatpush2.bf16.msra.mxu0 %v4710
    %5978 = vmatprep.mubr.bf16.mxu0 %v3239
    %5979 = vmatmul.mubr.bf16.gmra.mxu0 %v3238
    %v5980 = vpop.f32.mrf.mxu0
    %v5981 = vadd.f32 %v5868, %v5980
    %v5982 = vpop.f32.mrf.mxu0
    %v5983 = vadd.f32 %v5870, %v5982
    %v5984 = vpop.f32.mrf.mxu0
    %v5985 = vadd.f32 %v5872, %v5984
    %v5986 = vpop.f32.mrf.mxu0
    %v5987 = vadd.f32 %v5874, %v5986
    %5988 = vmatprep.mubr.bf16.mxu0 %v3245
    %5989 = vmatmul.mubr.bf16.gmra.mxu0 %v3244
    %v5990 = vpop.f32.mrf.mxu0
    %v5991 = vadd.f32 %v5878, %v5990
    %v5992 = vpop.f32.mrf.mxu0
    %v5993 = vadd.f32 %v5880, %v5992
    %v5994 = vpop.f32.mrf.mxu0
    %v5995 = vadd.f32 %v5882, %v5994
    %v5996 = vpop.f32.mrf.mxu0
    %v5997 = vadd.f32 %v5884, %v5996
    %5998 = vmatprep.mubr.bf16.mxu0 %v3251
    %5999 = vmatmul.mubr.bf16.gmra.mxu0 %v3250
    %v6000 = vpop.f32.mrf.mxu0
    %v6001 = vadd.f32 %v5888, %v6000
    %v6002 = vpop.f32.mrf.mxu0
    %v6003 = vadd.f32 %v5890, %v6002
    %v6004 = vpop.f32.mrf.mxu0
    %v6005 = vadd.f32 %v5892, %v6004
    %v6006 = vpop.f32.mrf.mxu0
    %v6007 = vadd.f32 %v5894, %v6006
    %6008 = vmatprep.mubr.bf16.mxu0 %v3257
    %6009 = vmatmul.mubr.bf16.gmra.mxu0 %v3256
    %v6010 = vpop.f32.mrf.mxu0
    %v6011 = vadd.f32 %v5898, %v6010
    %v6012 = vpop.f32.mrf.mxu0
    %v6013 = vadd.f32 %v5900, %v6012
    %v6014 = vpop.f32.mrf.mxu0
    %v6015 = vadd.f32 %v5902, %v6014
    %v6016 = vpop.f32.mrf.mxu0
    %v6017 = vadd.f32 %v5904, %v6016
    %6018 = vmatprep.mubr.bf16.mxu0 %v3263
    %6019 = vmatmul.mubr.bf16.gmra.mxu0 %v3262
    %v6020 = vpop.f32.mrf.mxu0
    %v6021 = vadd.f32 %v5908, %v6020
    %v6022 = vpop.f32.mrf.mxu0
    %v6023 = vadd.f32 %v5910, %v6022
    %v6024 = vpop.f32.mrf.mxu0
    %v6025 = vadd.f32 %v5912, %v6024
    %v6026 = vpop.f32.mrf.mxu0
    %v6027 = vadd.f32 %v5914, %v6026
    %6028 = vmatprep.mubr.bf16.mxu0 %v3269
    %6029 = vmatmul.mubr.bf16.gmra.mxu0 %v3268
    %v6030 = vpop.f32.mrf.mxu0
    %v6031 = vadd.f32 %v5918, %v6030
    %v6032 = vpop.f32.mrf.mxu0
    %v6033 = vadd.f32 %v5920, %v6032
    %v6034 = vpop.f32.mrf.mxu0
    %v6035 = vadd.f32 %v5922, %v6034
    %v6036 = vpop.f32.mrf.mxu0
    %v6037 = vadd.f32 %v5924, %v6036
    %6038 = vmatprep.mubr.bf16.mxu0 %v3275
    %6039 = vmatmul.mubr.bf16.gmra.mxu0 %v3274
    %v6040 = vpop.f32.mrf.mxu0
    %v6041 = vadd.f32 %v5928, %v6040
    %v6042 = vpop.f32.mrf.mxu0
    %v6043 = vadd.f32 %v5930, %v6042
    %v6044 = vpop.f32.mrf.mxu0
    %v6045 = vadd.f32 %v5932, %v6044
    %v6046 = vpop.f32.mrf.mxu0
    %v6047 = vadd.f32 %v5934, %v6046
    %6048 = vmatprep.mubr.bf16.mxu0 %v3281
    %6049 = vmatmul.mubr.bf16.gmra.mxu0 %v3280
    %v6050 = vpop.f32.mrf.mxu0
    %v6051 = vadd.f32 %v5938, %v6050
    %v6052 = vpop.f32.mrf.mxu0
    %v6053 = vadd.f32 %v5940, %v6052
    %v6054 = vpop.f32.mrf.mxu0
    %v6055 = vadd.f32 %v5942, %v6054
    %v6056 = vpop.f32.mrf.mxu0
    %v6057 = vadd.f32 %v5944, %v6056
    %6058 = vdwg.mxu0
    %v6059 = vmul.f32 %v5303, %v5303
    %v6060 = vmul.f32 %v5305, %v5305
    %v6061 = vmul.f32 %v5642, %v5642
    %v6062 = vmul.f32 %v5644, %v5644
    %v6063 = vmul.f32 %v5981, %v5981
    %v6064 = vmul.f32 %v5983, %v5983
    %v6065 = vmul.f32 %v5307, %v5307
    %v6066 = vmul.f32 %v5309, %v5309
    %v6067 = vmul.f32 %v5646, %v5646
    %v6068 = vmul.f32 %v5648, %v5648
    %v6069 = vmul.f32 %v5985, %v5985
    %v6070 = vmul.f32 %v5987, %v5987
    %v6071 = vmul.f32 %v5313, %v5313
    %v6072 = vmul.f32 %v5315, %v5315
    %v6073 = vmul.f32 %v5652, %v5652
    %v6074 = vmul.f32 %v5654, %v5654
    %v6075 = vmul.f32 %v5991, %v5991
    %v6076 = vmul.f32 %v5993, %v5993
    %v6077 = vmul.f32 %v5317, %v5317
    %v6078 = vmul.f32 %v5319, %v5319
    %v6079 = vmul.f32 %v5656, %v5656
    %v6080 = vmul.f32 %v5658, %v5658
    %v6081 = vmul.f32 %v5995, %v5995
    %v6082 = vmul.f32 %v5997, %v5997
    %v6083 = vmul.f32 %v5323, %v5323
    %v6084 = vmul.f32 %v5325, %v5325
    %v6085 = vmul.f32 %v5662, %v5662
    %v6086 = vmul.f32 %v5664, %v5664
    %v6087 = vmul.f32 %v6001, %v6001
    %v6088 = vmul.f32 %v6003, %v6003
    %v6089 = vmul.f32 %v5327, %v5327
    %v6090 = vmul.f32 %v5329, %v5329
    %v6091 = vmul.f32 %v5666, %v5666
    %v6092 = vmul.f32 %v5668, %v5668
    %v6093 = vmul.f32 %v6005, %v6005
    %v6094 = vmul.f32 %v6007, %v6007
    %v6095 = vmul.f32 %v5333, %v5333
    %v6096 = vmul.f32 %v5335, %v5335
    %v6097 = vmul.f32 %v5672, %v5672
    %v6098 = vmul.f32 %v5674, %v5674
    %v6099 = vmul.f32 %v6011, %v6011
    %v6100 = vmul.f32 %v6013, %v6013
    %v6101 = vmul.f32 %v5337, %v5337
    %v6102 = vmul.f32 %v5339, %v5339
    %v6103 = vmul.f32 %v5676, %v5676
    %v6104 = vmul.f32 %v5678, %v5678
    %v6105 = vmul.f32 %v6015, %v6015
    %v6106 = vmul.f32 %v6017, %v6017
    %v6107 = vmul.f32 %v5343, %v5343
    %v6108 = vmul.f32 %v5345, %v5345
    %v6109 = vmul.f32 %v5682, %v5682
    %v6110 = vmul.f32 %v5684, %v5684
    %v6111 = vmul.f32 %v6021, %v6021
    %v6112 = vmul.f32 %v6023, %v6023
    %v6113 = vmul.f32 %v5347, %v5347
    %v6114 = vmul.f32 %v5349, %v5349
    %v6115 = vmul.f32 %v5686, %v5686
    %v6116 = vmul.f32 %v5688, %v5688
    %v6117 = vmul.f32 %v6025, %v6025
    %v6118 = vmul.f32 %v6027, %v6027
    %v6119 = vmul.f32 %v5353, %v5353
    %v6120 = vmul.f32 %v5355, %v5355
    %v6121 = vmul.f32 %v5692, %v5692
    %v6122 = vmul.f32 %v5694, %v5694
    %v6123 = vmul.f32 %v6031, %v6031
    %v6124 = vmul.f32 %v6033, %v6033
    %v6125 = vmul.f32 %v5357, %v5357
    %v6126 = vmul.f32 %v5359, %v5359
    %v6127 = vmul.f32 %v5696, %v5696
    %v6128 = vmul.f32 %v5698, %v5698
    %v6129 = vmul.f32 %v6035, %v6035
    %v6130 = vmul.f32 %v6037, %v6037
    %v6131 = vmul.f32 %v5363, %v5363
    %v6132 = vmul.f32 %v5365, %v5365
    %v6133 = vmul.f32 %v5702, %v5702
    %v6134 = vmul.f32 %v5704, %v5704
    %v6135 = vmul.f32 %v6041, %v6041
    %v6136 = vmul.f32 %v6043, %v6043
    %v6137 = vmul.f32 %v5367, %v5367
    %v6138 = vmul.f32 %v5369, %v5369
    %v6139 = vmul.f32 %v5706, %v5706
    %v6140 = vmul.f32 %v5708, %v5708
    %v6141 = vmul.f32 %v6045, %v6045
    %v6142 = vmul.f32 %v6047, %v6047
    %v6143 = vmul.f32 %v5373, %v5373
    %v6144 = vmul.f32 %v5375, %v5375
    %v6145 = vmul.f32 %v5712, %v5712
    %v6146 = vmul.f32 %v5714, %v5714
    %v6147 = vmul.f32 %v6051, %v6051
    %v6148 = vmul.f32 %v6053, %v6053
    %v6149 = vmul.f32 %v5377, %v5377
    %v6150 = vmul.f32 %v5379, %v5379
    %v6151 = vmul.f32 %v5716, %v5716
    %v6152 = vmul.f32 %v5718, %v5718
    %v6153 = vmul.f32 %v6055, %v6055
    %v6154 = vmul.f32 %v6057, %v6057
    %v6155 = vadd.f32 %v6059, %v6060
    %v6156 = vadd.f32 %v6155, %v6061
    %v6157 = vadd.f32 %v6156, %v6062
    %v6158 = vadd.f32 %v6157, %v6063
    %v6159 = vadd.f32 %v6158, %v6064
    %6160 = vadd.xlane.f32.xlu0 %v6159
    %v6161 = vpop.xlane.xlu0 %6160
    %v6162 = vadd.f32 %v6065, %v6066
    %v6163 = vadd.f32 %v6162, %v6067
    %v6164 = vadd.f32 %v6163, %v6068
    %v6165 = vadd.f32 %v6164, %v6069
    %v6166 = vadd.f32 %v6165, %v6070
    %6167 = vadd.xlane.f32.xlu0 %v6166
    %v6168 = vpop.xlane.xlu0 %6167
    %v6169 = vadd.f32 %v6071, %v6072
    %v6170 = vadd.f32 %v6169, %v6073
    %v6171 = vadd.f32 %v6170, %v6074
    %v6172 = vadd.f32 %v6171, %v6075
    %v6173 = vadd.f32 %v6172, %v6076
    %6174 = vadd.xlane.f32.xlu0 %v6173
    %v6175 = vpop.xlane.xlu0 %6174
    %v6176 = vadd.f32 %v6077, %v6078
    %v6177 = vadd.f32 %v6176, %v6079
    %v6178 = vadd.f32 %v6177, %v6080
    %v6179 = vadd.f32 %v6178, %v6081
    %v6180 = vadd.f32 %v6179, %v6082
    %6181 = vadd.xlane.f32.xlu0 %v6180
    %v6182 = vpop.xlane.xlu0 %6181
    %v6183 = vadd.f32 %v6083, %v6084
    %v6184 = vadd.f32 %v6183, %v6085
    %v6185 = vadd.f32 %v6184, %v6086
    %v6186 = vadd.f32 %v6185, %v6087
    %v6187 = vadd.f32 %v6186, %v6088
    %6188 = vadd.xlane.f32.xlu0 %v6187
    %v6189 = vpop.xlane.xlu0 %6188
    %v6190 = vadd.f32 %v6089, %v6090
    %v6191 = vadd.f32 %v6190, %v6091
    %v6192 = vadd.f32 %v6191, %v6092
    %v6193 = vadd.f32 %v6192, %v6093
    %v6194 = vadd.f32 %v6193, %v6094
    %6195 = vadd.xlane.f32.xlu0 %v6194
    %v6196 = vpop.xlane.xlu0 %6195
    %v6197 = vadd.f32 %v6095, %v6096
    %v6198 = vadd.f32 %v6197, %v6097
    %v6199 = vadd.f32 %v6198, %v6098
    %v6200 = vadd.f32 %v6199, %v6099
    %v6201 = vadd.f32 %v6200, %v6100
    %6202 = vadd.xlane.f32.xlu0 %v6201
    %v6203 = vpop.xlane.xlu0 %6202
    %v6204 = vadd.f32 %v6101, %v6102
    %v6205 = vadd.f32 %v6204, %v6103
    %v6206 = vadd.f32 %v6205, %v6104
    %v6207 = vadd.f32 %v6206, %v6105
    %v6208 = vadd.f32 %v6207, %v6106
    %6209 = vadd.xlane.f32.xlu0 %v6208
    %v6210 = vpop.xlane.xlu0 %6209
    %v6211 = vadd.f32 %v6107, %v6108
    %v6212 = vadd.f32 %v6211, %v6109
    %v6213 = vadd.f32 %v6212, %v6110
    %v6214 = vadd.f32 %v6213, %v6111
    %v6215 = vadd.f32 %v6214, %v6112
    %6216 = vadd.xlane.f32.xlu0 %v6215
    %v6217 = vpop.xlane.xlu0 %6216
    %v6218 = vadd.f32 %v6113, %v6114
    %v6219 = vadd.f32 %v6218, %v6115
    %v6220 = vadd.f32 %v6219, %v6116
    %v6221 = vadd.f32 %v6220, %v6117
    %v6222 = vadd.f32 %v6221, %v6118
    %6223 = vadd.xlane.f32.xlu0 %v6222
    %v6224 = vpop.xlane.xlu0 %6223
    %v6225 = vadd.f32 %v6119, %v6120
    %v6226 = vadd.f32 %v6225, %v6121
    %v6227 = vadd.f32 %v6226, %v6122
    %v6228 = vadd.f32 %v6227, %v6123
    %v6229 = vadd.f32 %v6228, %v6124
    %6230 = vadd.xlane.f32.xlu0 %v6229
    %v6231 = vpop.xlane.xlu0 %6230
    %v6232 = vadd.f32 %v6125, %v6126
    %v6233 = vadd.f32 %v6232, %v6127
    %v6234 = vadd.f32 %v6233, %v6128
    %v6235 = vadd.f32 %v6234, %v6129
    %v6236 = vadd.f32 %v6235, %v6130
    %6237 = vadd.xlane.f32.xlu0 %v6236
    %v6238 = vpop.xlane.xlu0 %6237
    %v6239 = vadd.f32 %v6131, %v6132
    %v6240 = vadd.f32 %v6239, %v6133
    %v6241 = vadd.f32 %v6240, %v6134
    %v6242 = vadd.f32 %v6241, %v6135
    %v6243 = vadd.f32 %v6242, %v6136
    %6244 = vadd.xlane.f32.xlu0 %v6243
    %v6245 = vpop.xlane.xlu0 %6244
    %v6246 = vadd.f32 %v6137, %v6138
    %v6247 = vadd.f32 %v6246, %v6139
    %v6248 = vadd.f32 %v6247, %v6140
    %v6249 = vadd.f32 %v6248, %v6141
    %v6250 = vadd.f32 %v6249, %v6142
    %6251 = vadd.xlane.f32.xlu0 %v6250
    %v6252 = vpop.xlane.xlu0 %6251
    %v6253 = vadd.f32 %v6143, %v6144
    %v6254 = vadd.f32 %v6253, %v6145
    %v6255 = vadd.f32 %v6254, %v6146
    %v6256 = vadd.f32 %v6255, %v6147
    %v6257 = vadd.f32 %v6256, %v6148
    %6258 = vadd.xlane.f32.xlu0 %v6257
    %v6259 = vpop.xlane.xlu0 %6258
    %v6260 = vadd.f32 %v6149, %v6150
    %v6261 = vadd.f32 %v6260, %v6151
    %v6262 = vadd.f32 %v6261, %v6152
    %v6263 = vadd.f32 %v6262, %v6153
    %v6264 = vadd.f32 %v6263, %v6154
    %6265 = vadd.xlane.f32.xlu0 %v6264
    %v6266 = vpop.xlane.xlu0 %6265
    %v6267 = vmax.f32 %v6161, 1e-24
    %v6268 = vmax.f32 %v6168, 1e-24
    %v6269 = vmax.f32 %v6175, 1e-24
    %v6270 = vmax.f32 %v6182, 1e-24
    %v6271 = vmax.f32 %v6189, 1e-24
    %v6272 = vmax.f32 %v6196, 1e-24
    %v6273 = vmax.f32 %v6203, 1e-24
    %v6274 = vmax.f32 %v6210, 1e-24
    %v6275 = vmax.f32 %v6217, 1e-24
    %v6276 = vmax.f32 %v6224, 1e-24
    %v6277 = vmax.f32 %v6231, 1e-24
    %v6278 = vmax.f32 %v6238, 1e-24
    %v6279 = vmax.f32 %v6245, 1e-24
    %v6280 = vmax.f32 %v6252, 1e-24
    %v6281 = vmax.f32 %v6259, 1e-24
    %v6282 = vmax.f32 %v6266, 1e-24
    %v6283 = vrsqrt.pop %v6267
    %v6284 = vrsqrt.pop %v6268
    %v6285 = vrsqrt.pop %v6269
    %v6286 = vrsqrt.pop %v6270
    %v6287 = vrsqrt.pop %v6271
    %v6288 = vrsqrt.pop %v6272
    %v6289 = vrsqrt.pop %v6273
    %v6290 = vrsqrt.pop %v6274
    %v6291 = vrsqrt.pop %v6275
    %v6292 = vrsqrt.pop %v6276
    %v6293 = vrsqrt.pop %v6277
    %v6294 = vrsqrt.pop %v6278
    %v6295 = vrsqrt.pop %v6279
    %v6296 = vrsqrt.pop %v6280
    %v6297 = vrsqrt.pop %v6281
    %v6298 = vrsqrt.pop %v6282
    %v6299 = vmul.f32 %v5303, %v6283
    %v6300 = vmul.f32 %v5305, %v6283
    %v6301 = vmul.f32 %v5642, %v6283
    %v6302 = vmul.f32 %v5644, %v6283
    %v6303 = vmul.f32 %v5981, %v6283
    %v6304 = vmul.f32 %v5983, %v6283
    %v6305 = vmul.f32 %v5307, %v6284
    %v6306 = vmul.f32 %v5309, %v6284
    %v6307 = vmul.f32 %v5646, %v6284
    %v6308 = vmul.f32 %v5648, %v6284
    %v6309 = vmul.f32 %v5985, %v6284
    %v6310 = vmul.f32 %v5987, %v6284
    %v6311 = vmul.f32 %v5313, %v6285
    %v6312 = vmul.f32 %v5315, %v6285
    %v6313 = vmul.f32 %v5652, %v6285
    %v6314 = vmul.f32 %v5654, %v6285
    %v6315 = vmul.f32 %v5991, %v6285
    %v6316 = vmul.f32 %v5993, %v6285
    %v6317 = vmul.f32 %v5317, %v6286
    %v6318 = vmul.f32 %v5319, %v6286
    %v6319 = vmul.f32 %v5656, %v6286
    %v6320 = vmul.f32 %v5658, %v6286
    %v6321 = vmul.f32 %v5995, %v6286
    %v6322 = vmul.f32 %v5997, %v6286
    %v6323 = vmul.f32 %v5323, %v6287
    %v6324 = vmul.f32 %v5325, %v6287
    %v6325 = vmul.f32 %v5662, %v6287
    %v6326 = vmul.f32 %v5664, %v6287
    %v6327 = vmul.f32 %v6001, %v6287
    %v6328 = vmul.f32 %v6003, %v6287
    %v6329 = vmul.f32 %v5327, %v6288
    %v6330 = vmul.f32 %v5329, %v6288
    %v6331 = vmul.f32 %v5666, %v6288
    %v6332 = vmul.f32 %v5668, %v6288
    %v6333 = vmul.f32 %v6005, %v6288
    %v6334 = vmul.f32 %v6007, %v6288
    %v6335 = vmul.f32 %v5333, %v6289
    %v6336 = vmul.f32 %v5335, %v6289
    %v6337 = vmul.f32 %v5672, %v6289
    %v6338 = vmul.f32 %v5674, %v6289
    %v6339 = vmul.f32 %v6011, %v6289
    %v6340 = vmul.f32 %v6013, %v6289
    %v6341 = vmul.f32 %v5337, %v6290
    %v6342 = vmul.f32 %v5339, %v6290
    %v6343 = vmul.f32 %v5676, %v6290
    %v6344 = vmul.f32 %v5678, %v6290
    %v6345 = vmul.f32 %v6015, %v6290
    %v6346 = vmul.f32 %v6017, %v6290
    %v6347 = vmul.f32 %v5343, %v6291
    %v6348 = vmul.f32 %v5345, %v6291
    %v6349 = vmul.f32 %v5682, %v6291
    %v6350 = vmul.f32 %v5684, %v6291
    %v6351 = vmul.f32 %v6021, %v6291
    %v6352 = vmul.f32 %v6023, %v6291
    %v6353 = vmul.f32 %v5347, %v6292
    %v6354 = vmul.f32 %v5349, %v6292
    %v6355 = vmul.f32 %v5686, %v6292
    %v6356 = vmul.f32 %v5688, %v6292
    %v6357 = vmul.f32 %v6025, %v6292
    %v6358 = vmul.f32 %v6027, %v6292
    %v6359 = vmul.f32 %v5353, %v6293
    %v6360 = vmul.f32 %v5355, %v6293
    %v6361 = vmul.f32 %v5692, %v6293
    %v6362 = vmul.f32 %v5694, %v6293
    %v6363 = vmul.f32 %v6031, %v6293
    %v6364 = vmul.f32 %v6033, %v6293
    %v6365 = vmul.f32 %v5357, %v6294
    %v6366 = vmul.f32 %v5359, %v6294
    %v6367 = vmul.f32 %v5696, %v6294
    %v6368 = vmul.f32 %v5698, %v6294
    %v6369 = vmul.f32 %v6035, %v6294
    %v6370 = vmul.f32 %v6037, %v6294
    %v6371 = vmul.f32 %v5363, %v6295
    %v6372 = vmul.f32 %v5365, %v6295
    %v6373 = vmul.f32 %v5702, %v6295
    %v6374 = vmul.f32 %v5704, %v6295
    %v6375 = vmul.f32 %v6041, %v6295
    %v6376 = vmul.f32 %v6043, %v6295
    %v6377 = vmul.f32 %v5367, %v6296
    %v6378 = vmul.f32 %v5369, %v6296
    %v6379 = vmul.f32 %v5706, %v6296
    %v6380 = vmul.f32 %v5708, %v6296
    %v6381 = vmul.f32 %v6045, %v6296
    %v6382 = vmul.f32 %v6047, %v6296
    %v6383 = vmul.f32 %v5373, %v6297
    %v6384 = vmul.f32 %v5375, %v6297
    %v6385 = vmul.f32 %v5712, %v6297
    %v6386 = vmul.f32 %v5714, %v6297
    %v6387 = vmul.f32 %v6051, %v6297
    %v6388 = vmul.f32 %v6053, %v6297
    %v6389 = vmul.f32 %v5377, %v6298
    %v6390 = vmul.f32 %v5379, %v6298
    %v6391 = vmul.f32 %v5716, %v6298
    %v6392 = vmul.f32 %v5718, %v6298
    %v6393 = vmul.f32 %v6055, %v6298
    %v6394 = vmul.f32 %v6057, %v6298
    %v6395 = vpack.c.bf16 %v6305, %v6299
    %v6396 = vpack.c.bf16 %v6306, %v6300
    %v6397 = vpack.c.bf16 %v6307, %v6301
    %v6398 = vpack.c.bf16 %v6308, %v6302
    %v6399 = vpack.c.bf16 %v6309, %v6303
    %v6400 = vpack.c.bf16 %v6310, %v6304
    %v6401 = vpack.c.bf16 %v6317, %v6311
    %v6402 = vpack.c.bf16 %v6318, %v6312
    %v6403 = vpack.c.bf16 %v6319, %v6313
    %v6404 = vpack.c.bf16 %v6320, %v6314
    %v6405 = vpack.c.bf16 %v6321, %v6315
    %v6406 = vpack.c.bf16 %v6322, %v6316
    %v6407 = vpack.c.bf16 %v6329, %v6323
    %v6408 = vpack.c.bf16 %v6330, %v6324
    %v6409 = vpack.c.bf16 %v6331, %v6325
    %v6410 = vpack.c.bf16 %v6332, %v6326
    %v6411 = vpack.c.bf16 %v6333, %v6327
    %v6412 = vpack.c.bf16 %v6334, %v6328
    %v6413 = vpack.c.bf16 %v6341, %v6335
    %v6414 = vpack.c.bf16 %v6342, %v6336
    %v6415 = vpack.c.bf16 %v6343, %v6337
    %v6416 = vpack.c.bf16 %v6344, %v6338
    %v6417 = vpack.c.bf16 %v6345, %v6339
    %v6418 = vpack.c.bf16 %v6346, %v6340
    %v6419 = vpack.c.bf16 %v6353, %v6347
    %v6420 = vpack.c.bf16 %v6354, %v6348
    %v6421 = vpack.c.bf16 %v6355, %v6349
    %v6422 = vpack.c.bf16 %v6356, %v6350
    %v6423 = vpack.c.bf16 %v6357, %v6351
    %v6424 = vpack.c.bf16 %v6358, %v6352
    %v6425 = vpack.c.bf16 %v6365, %v6359
    %v6426 = vpack.c.bf16 %v6366, %v6360
    %v6427 = vpack.c.bf16 %v6367, %v6361
    %v6428 = vpack.c.bf16 %v6368, %v6362
    %v6429 = vpack.c.bf16 %v6369, %v6363
    %v6430 = vpack.c.bf16 %v6370, %v6364
    %v6431 = vpack.c.bf16 %v6377, %v6371
    %v6432 = vpack.c.bf16 %v6378, %v6372
    %v6433 = vpack.c.bf16 %v6379, %v6373
    %v6434 = vpack.c.bf16 %v6380, %v6374
    %v6435 = vpack.c.bf16 %v6381, %v6375
    %v6436 = vpack.c.bf16 %v6382, %v6376
    %v6437 = vpack.c.bf16 %v6389, %v6383
    %v6438 = vpack.c.bf16 %v6390, %v6384
    %v6439 = vpack.c.bf16 %v6391, %v6385
    %v6440 = vpack.c.bf16 %v6392, %v6386
    %v6441 = vpack.c.bf16 %v6393, %v6387
    %v6442 = vpack.c.bf16 %v6394, %v6388
    %6443 = vmatprep.subr.bf16.mxu0 %v6438
    %6444 = vmatpush1.bf16.xpose.msra.mxu0 %v6437
    %6445 = vmatprep.subr.bf16.mxu0 %v6432
    %6446 = vmatpush1.bf16.xpose.msra.mxu0 %v6431
    %6447 = vmatprep.subr.bf16.mxu0 %v6426
    %6448 = vmatpush1.bf16.xpose.msra.mxu0 %v6425
    %6449 = vmatprep.subr.bf16.mxu0 %v6420
    %6450 = vmatpush1.bf16.xpose.msra.mxu0 %v6419
    %6451 = vmatprep.subr.bf16.mxu0 %v6414
    %6452 = vmatpush1.bf16.xpose.msra.mxu0 %v6413
    %6453 = vmatprep.subr.bf16.mxu0 %v6408
    %6454 = vmatpush1.bf16.xpose.msra.mxu0 %v6407
    %6455 = vmatprep.subr.bf16.mxu0 %v6402
    %6456 = vmatpush1.bf16.xpose.msra.mxu0 %v6401
    %6457 = vmatprep.subr.bf16.mxu0 %v6396
    %6458 = vmatpush1.bf16.xpose.msra.mxu0 %v6395
    %6459 = vmatprep.subr.bf16.mxu0 0
    %6460 = vmatpush2.bf16.xpose.msra.mxu0 0
    %6461 = vmatprep.subr.bf16.mxu0 0
    %6462 = vmatpush2.bf16.xpose.msra.mxu0 0
    %6463 = vmatprep.subr.bf16.mxu0 0
    %6464 = vmatpush2.bf16.xpose.msra.mxu0 0
    %6465 = vmatprep.subr.bf16.mxu0 0
    %6466 = vmatpush2.bf16.xpose.msra.mxu0 0
    %6467 = vmatprep.subr.bf16.mxu0 0
    %6468 = vmatpush2.bf16.xpose.msra.mxu0 0
    %6469 = vmatprep.subr.bf16.mxu0 0
    %6470 = vmatpush2.bf16.xpose.msra.mxu0 0
    %6471 = vmatprep.subr.bf16.mxu0 0
    %6472 = vmatpush2.bf16.xpose.msra.mxu0 0
    %6473 = vmatprep.subr.bf16.mxu0 0
    %6474 = vmatpush2.bf16.xpose.msra.mxu0 0
    %6475 = vmatprep.mubr.bf16.mxu0 %v6396
    %6476 = vmatmul.mubr.bf16.gmra.mxu0 %v6395
    %v6477 = vpop.f32.mrf.mxu0
    %v6478 = vadd.f32 0.0, %v6477
    %v6479 = vpop.f32.mrf.mxu0
    %v6480 = vpop.f32.mrf.mxu0
    %v6481 = vadd.f32 0.0, %v6480
    %v6482 = vpop.f32.mrf.mxu0
    %6483 = vmatprep.mubr.bf16.mxu0 %v6402
    %6484 = vmatmul.mubr.bf16.gmra.mxu0 %v6401
    %v6485 = vpop.f32.mrf.mxu0
    %v6486 = vadd.f32 0.0, %v6485
    %v6487 = vpop.f32.mrf.mxu0
    %v6488 = vpop.f32.mrf.mxu0
    %v6489 = vadd.f32 0.0, %v6488
    %v6490 = vpop.f32.mrf.mxu0
    %6491 = vmatprep.mubr.bf16.mxu0 %v6408
    %6492 = vmatmul.mubr.bf16.gmra.mxu0 %v6407
    %v6493 = vpop.f32.mrf.mxu0
    %v6494 = vadd.f32 0.0, %v6493
    %v6495 = vpop.f32.mrf.mxu0
    %v6496 = vpop.f32.mrf.mxu0
    %v6497 = vadd.f32 0.0, %v6496
    %v6498 = vpop.f32.mrf.mxu0
    %6499 = vmatprep.mubr.bf16.mxu0 %v6414
    %6500 = vmatmul.mubr.bf16.gmra.mxu0 %v6413
    %v6501 = vpop.f32.mrf.mxu0
    %v6502 = vadd.f32 0.0, %v6501
    %v6503 = vpop.f32.mrf.mxu0
    %v6504 = vpop.f32.mrf.mxu0
    %v6505 = vadd.f32 0.0, %v6504
    %v6506 = vpop.f32.mrf.mxu0
    %6507 = vmatprep.mubr.bf16.mxu0 %v6420
    %6508 = vmatmul.mubr.bf16.gmra.mxu0 %v6419
    %v6509 = vpop.f32.mrf.mxu0
    %v6510 = vadd.f32 0.0, %v6509
    %v6511 = vpop.f32.mrf.mxu0
    %v6512 = vpop.f32.mrf.mxu0
    %v6513 = vadd.f32 0.0, %v6512
    %v6514 = vpop.f32.mrf.mxu0
    %6515 = vmatprep.mubr.bf16.mxu0 %v6426
    %6516 = vmatmul.mubr.bf16.gmra.mxu0 %v6425
    %v6517 = vpop.f32.mrf.mxu0
    %v6518 = vadd.f32 0.0, %v6517
    %v6519 = vpop.f32.mrf.mxu0
    %v6520 = vpop.f32.mrf.mxu0
    %v6521 = vadd.f32 0.0, %v6520
    %v6522 = vpop.f32.mrf.mxu0
    %6523 = vmatprep.mubr.bf16.mxu0 %v6432
    %6524 = vmatmul.mubr.bf16.gmra.mxu0 %v6431
    %v6525 = vpop.f32.mrf.mxu0
    %v6526 = vadd.f32 0.0, %v6525
    %v6527 = vpop.f32.mrf.mxu0
    %v6528 = vpop.f32.mrf.mxu0
    %v6529 = vadd.f32 0.0, %v6528
    %v6530 = vpop.f32.mrf.mxu0
    %6531 = vmatprep.mubr.bf16.mxu0 %v6438
    %6532 = vmatmul.mubr.bf16.gmra.mxu0 %v6437
    %v6533 = vpop.f32.mrf.mxu0
    %v6534 = vadd.f32 0.0, %v6533
    %v6535 = vpop.f32.mrf.mxu0
    %v6536 = vpop.f32.mrf.mxu0
    %v6537 = vadd.f32 0.0, %v6536
    %v6538 = vpop.f32.mrf.mxu0
    %6539 = vdwg.mxu0
    %6540 = vmatprep.subr.bf16.mxu0 %v6440
    %6541 = vmatpush1.bf16.xpose.msra.mxu0 %v6439
    %6542 = vmatprep.subr.bf16.mxu0 %v6434
    %6543 = vmatpush1.bf16.xpose.msra.mxu0 %v6433
    %6544 = vmatprep.subr.bf16.mxu0 %v6428
    %6545 = vmatpush1.bf16.xpose.msra.mxu0 %v6427
    %6546 = vmatprep.subr.bf16.mxu0 %v6422
    %6547 = vmatpush1.bf16.xpose.msra.mxu0 %v6421
    %6548 = vmatprep.subr.bf16.mxu0 %v6416
    %6549 = vmatpush1.bf16.xpose.msra.mxu0 %v6415
    %6550 = vmatprep.subr.bf16.mxu0 %v6410
    %6551 = vmatpush1.bf16.xpose.msra.mxu0 %v6409
    %6552 = vmatprep.subr.bf16.mxu0 %v6404
    %6553 = vmatpush1.bf16.xpose.msra.mxu0 %v6403
    %6554 = vmatprep.subr.bf16.mxu0 %v6398
    %6555 = vmatpush1.bf16.xpose.msra.mxu0 %v6397
    %6556 = vmatprep.subr.bf16.mxu0 0
    %6557 = vmatpush2.bf16.xpose.msra.mxu0 0
    %6558 = vmatprep.subr.bf16.mxu0 0
    %6559 = vmatpush2.bf16.xpose.msra.mxu0 0
    %6560 = vmatprep.subr.bf16.mxu0 0
    %6561 = vmatpush2.bf16.xpose.msra.mxu0 0
    %6562 = vmatprep.subr.bf16.mxu0 0
    %6563 = vmatpush2.bf16.xpose.msra.mxu0 0
    %6564 = vmatprep.subr.bf16.mxu0 0
    %6565 = vmatpush2.bf16.xpose.msra.mxu0 0
    %6566 = vmatprep.subr.bf16.mxu0 0
    %6567 = vmatpush2.bf16.xpose.msra.mxu0 0
    %6568 = vmatprep.subr.bf16.mxu0 0
    %6569 = vmatpush2.bf16.xpose.msra.mxu0 0
    %6570 = vmatprep.subr.bf16.mxu0 0
    %6571 = vmatpush2.bf16.xpose.msra.mxu0 0
    %6572 = vmatprep.mubr.bf16.mxu0 %v6398
    %6573 = vmatmul.mubr.bf16.gmra.mxu0 %v6397
    %v6574 = vpop.f32.mrf.mxu0
    %v6575 = vadd.f32 %v6478, %v6574
    %v6576 = vpop.f32.mrf.mxu0
    %v6577 = vpop.f32.mrf.mxu0
    %v6578 = vadd.f32 %v6481, %v6577
    %v6579 = vpop.f32.mrf.mxu0
    %6580 = vmatprep.mubr.bf16.mxu0 %v6404
    %6581 = vmatmul.mubr.bf16.gmra.mxu0 %v6403
    %v6582 = vpop.f32.mrf.mxu0
    %v6583 = vadd.f32 %v6486, %v6582
    %v6584 = vpop.f32.mrf.mxu0
    %v6585 = vpop.f32.mrf.mxu0
    %v6586 = vadd.f32 %v6489, %v6585
    %v6587 = vpop.f32.mrf.mxu0
    %6588 = vmatprep.mubr.bf16.mxu0 %v6410
    %6589 = vmatmul.mubr.bf16.gmra.mxu0 %v6409
    %v6590 = vpop.f32.mrf.mxu0
    %v6591 = vadd.f32 %v6494, %v6590
    %v6592 = vpop.f32.mrf.mxu0
    %v6593 = vpop.f32.mrf.mxu0
    %v6594 = vadd.f32 %v6497, %v6593
    %v6595 = vpop.f32.mrf.mxu0
    %6596 = vmatprep.mubr.bf16.mxu0 %v6416
    %6597 = vmatmul.mubr.bf16.gmra.mxu0 %v6415
    %v6598 = vpop.f32.mrf.mxu0
    %v6599 = vadd.f32 %v6502, %v6598
    %v6600 = vpop.f32.mrf.mxu0
    %v6601 = vpop.f32.mrf.mxu0
    %v6602 = vadd.f32 %v6505, %v6601
    %v6603 = vpop.f32.mrf.mxu0
    %6604 = vmatprep.mubr.bf16.mxu0 %v6422
    %6605 = vmatmul.mubr.bf16.gmra.mxu0 %v6421
    %v6606 = vpop.f32.mrf.mxu0
    %v6607 = vadd.f32 %v6510, %v6606
    %v6608 = vpop.f32.mrf.mxu0
    %v6609 = vpop.f32.mrf.mxu0
    %v6610 = vadd.f32 %v6513, %v6609
    %v6611 = vpop.f32.mrf.mxu0
    %6612 = vmatprep.mubr.bf16.mxu0 %v6428
    %6613 = vmatmul.mubr.bf16.gmra.mxu0 %v6427
    %v6614 = vpop.f32.mrf.mxu0
    %v6615 = vadd.f32 %v6518, %v6614
    %v6616 = vpop.f32.mrf.mxu0
    %v6617 = vpop.f32.mrf.mxu0
    %v6618 = vadd.f32 %v6521, %v6617
    %v6619 = vpop.f32.mrf.mxu0
    %6620 = vmatprep.mubr.bf16.mxu0 %v6434
    %6621 = vmatmul.mubr.bf16.gmra.mxu0 %v6433
    %v6622 = vpop.f32.mrf.mxu0
    %v6623 = vadd.f32 %v6526, %v6622
    %v6624 = vpop.f32.mrf.mxu0
    %v6625 = vpop.f32.mrf.mxu0
    %v6626 = vadd.f32 %v6529, %v6625
    %v6627 = vpop.f32.mrf.mxu0
    %6628 = vmatprep.mubr.bf16.mxu0 %v6440
    %6629 = vmatmul.mubr.bf16.gmra.mxu0 %v6439
    %v6630 = vpop.f32.mrf.mxu0
    %v6631 = vadd.f32 %v6534, %v6630
    %v6632 = vpop.f32.mrf.mxu0
    %v6633 = vpop.f32.mrf.mxu0
    %v6634 = vadd.f32 %v6537, %v6633
    %v6635 = vpop.f32.mrf.mxu0
    %6636 = vdwg.mxu0
    %6637 = vmatprep.subr.bf16.mxu0 %v6442
    %6638 = vmatpush1.bf16.xpose.msra.mxu0 %v6441
    %6639 = vmatprep.subr.bf16.mxu0 %v6436
    %6640 = vmatpush1.bf16.xpose.msra.mxu0 %v6435
    %6641 = vmatprep.subr.bf16.mxu0 %v6430
    %6642 = vmatpush1.bf16.xpose.msra.mxu0 %v6429
    %6643 = vmatprep.subr.bf16.mxu0 %v6424
    %6644 = vmatpush1.bf16.xpose.msra.mxu0 %v6423
    %6645 = vmatprep.subr.bf16.mxu0 %v6418
    %6646 = vmatpush1.bf16.xpose.msra.mxu0 %v6417
    %6647 = vmatprep.subr.bf16.mxu0 %v6412
    %6648 = vmatpush1.bf16.xpose.msra.mxu0 %v6411
    %6649 = vmatprep.subr.bf16.mxu0 %v6406
    %6650 = vmatpush1.bf16.xpose.msra.mxu0 %v6405
    %6651 = vmatprep.subr.bf16.mxu0 %v6400
    %6652 = vmatpush1.bf16.xpose.msra.mxu0 %v6399
    %6653 = vmatprep.subr.bf16.mxu0 0
    %6654 = vmatpush2.bf16.xpose.msra.mxu0 0
    %6655 = vmatprep.subr.bf16.mxu0 0
    %6656 = vmatpush2.bf16.xpose.msra.mxu0 0
    %6657 = vmatprep.subr.bf16.mxu0 0
    %6658 = vmatpush2.bf16.xpose.msra.mxu0 0
    %6659 = vmatprep.subr.bf16.mxu0 0
    %6660 = vmatpush2.bf16.xpose.msra.mxu0 0
    %6661 = vmatprep.subr.bf16.mxu0 0
    %6662 = vmatpush2.bf16.xpose.msra.mxu0 0
    %6663 = vmatprep.subr.bf16.mxu0 0
    %6664 = vmatpush2.bf16.xpose.msra.mxu0 0
    %6665 = vmatprep.subr.bf16.mxu0 0
    %6666 = vmatpush2.bf16.xpose.msra.mxu0 0
    %6667 = vmatprep.subr.bf16.mxu0 0
    %6668 = vmatpush2.bf16.xpose.msra.mxu0 0
    %6669 = vmatprep.mubr.bf16.mxu0 %v6400
    %6670 = vmatmul.mubr.bf16.gmra.mxu0 %v6399
    %v6671 = vpop.f32.mrf.mxu0
    %v6672 = vadd.f32 %v6575, %v6671
    %v6673 = vpop.f32.mrf.mxu0
    %v6674 = vpop.f32.mrf.mxu0
    %v6675 = vadd.f32 %v6578, %v6674
    %v6676 = vpop.f32.mrf.mxu0
    %6677 = vmatprep.mubr.bf16.mxu0 %v6406
    %6678 = vmatmul.mubr.bf16.gmra.mxu0 %v6405
    %v6679 = vpop.f32.mrf.mxu0
    %v6680 = vadd.f32 %v6583, %v6679
    %v6681 = vpop.f32.mrf.mxu0
    %v6682 = vpop.f32.mrf.mxu0
    %v6683 = vadd.f32 %v6586, %v6682
    %v6684 = vpop.f32.mrf.mxu0
    %6685 = vmatprep.mubr.bf16.mxu0 %v6412
    %6686 = vmatmul.mubr.bf16.gmra.mxu0 %v6411
    %v6687 = vpop.f32.mrf.mxu0
    %v6688 = vadd.f32 %v6591, %v6687
    %v6689 = vpop.f32.mrf.mxu0
    %v6690 = vpop.f32.mrf.mxu0
    %v6691 = vadd.f32 %v6594, %v6690
    %v6692 = vpop.f32.mrf.mxu0
    %6693 = vmatprep.mubr.bf16.mxu0 %v6418
    %6694 = vmatmul.mubr.bf16.gmra.mxu0 %v6417
    %v6695 = vpop.f32.mrf.mxu0
    %v6696 = vadd.f32 %v6599, %v6695
    %v6697 = vpop.f32.mrf.mxu0
    %v6698 = vpop.f32.mrf.mxu0
    %v6699 = vadd.f32 %v6602, %v6698
    %v6700 = vpop.f32.mrf.mxu0
    %6701 = vmatprep.mubr.bf16.mxu0 %v6424
    %6702 = vmatmul.mubr.bf16.gmra.mxu0 %v6423
    %v6703 = vpop.f32.mrf.mxu0
    %v6704 = vadd.f32 %v6607, %v6703
    %v6705 = vpop.f32.mrf.mxu0
    %v6706 = vpop.f32.mrf.mxu0
    %v6707 = vadd.f32 %v6610, %v6706
    %v6708 = vpop.f32.mrf.mxu0
    %6709 = vmatprep.mubr.bf16.mxu0 %v6430
    %6710 = vmatmul.mubr.bf16.gmra.mxu0 %v6429
    %v6711 = vpop.f32.mrf.mxu0
    %v6712 = vadd.f32 %v6615, %v6711
    %v6713 = vpop.f32.mrf.mxu0
    %v6714 = vpop.f32.mrf.mxu0
    %v6715 = vadd.f32 %v6618, %v6714
    %v6716 = vpop.f32.mrf.mxu0
    %6717 = vmatprep.mubr.bf16.mxu0 %v6436
    %6718 = vmatmul.mubr.bf16.gmra.mxu0 %v6435
    %v6719 = vpop.f32.mrf.mxu0
    %v6720 = vadd.f32 %v6623, %v6719
    %v6721 = vpop.f32.mrf.mxu0
    %v6722 = vpop.f32.mrf.mxu0
    %v6723 = vadd.f32 %v6626, %v6722
    %v6724 = vpop.f32.mrf.mxu0
    %6725 = vmatprep.mubr.bf16.mxu0 %v6442
    %6726 = vmatmul.mubr.bf16.gmra.mxu0 %v6441
    %v6727 = vpop.f32.mrf.mxu0
    %v6728 = vadd.f32 %v6631, %v6727
    %v6729 = vpop.f32.mrf.mxu0
    %v6730 = vpop.f32.mrf.mxu0
    %v6731 = vadd.f32 %v6634, %v6730
    %v6732 = vpop.f32.mrf.mxu0
    %6733 = vdwg.mxu0
    %v6734 = vmul.f32 %v6672, 20.0
    %v6735 = vmul.f32 %v6675, 20.0
    %v6736 = vmul.f32 %v6680, 20.0
    %v6737 = vmul.f32 %v6683, 20.0
    %v6738 = vmul.f32 %v6688, 20.0
    %v6739 = vmul.f32 %v6691, 20.0
    %v6740 = vmul.f32 %v6696, 20.0
    %v6741 = vmul.f32 %v6699, 20.0
    %v6742 = vmul.f32 %v6704, 20.0
    %v6743 = vmul.f32 %v6707, 20.0
    %v6744 = vmul.f32 %v6712, 20.0
    %v6745 = vmul.f32 %v6715, 20.0
    %v6746 = vmul.f32 %v6720, 20.0
    %v6747 = vmul.f32 %v6723, 20.0
    %v6748 = vmul.f32 %v6728, 20.0
    %v6749 = vmul.f32 %v6731, 20.0
    %v6750 = vlaneseq
    %v6751 = vshrl.u32 %v6750, 7
    %v6752 = vadd.s32 %v6751, 8
    %v6753 = vadd.s32 %v6751, 16
    %v6754 = vadd.s32 %v6751, 24
    %v6755 = vadd.s32 %v6751, 32
    %v6756 = vadd.s32 %v6751, 40
    %v6757 = vadd.s32 %v6751, 48
    %v6758 = vadd.s32 %v6751, 56
    %v6759 = vadd.s32 %v6751, 64
    %v6760 = vadd.s32 %v6751, 72
    %v6761 = vadd.s32 %v6751, 80
    %v6762 = vadd.s32 %v6751, 88
    %v6763 = vadd.s32 %v6751, 96
    %v6764 = vadd.s32 %v6751, 104
    %v6765 = vadd.s32 %v6751, 112
    %v6766 = vadd.s32 %v6751, 120
    %v6767 = vlaneseq
    %v6768 = vand.u32 %v6767, 127
    %vm6769 = vcmp.eq.s32.totalorder %v6751, %v6768
    %vm6770 = vcmp.eq.s32.totalorder %v6752, %v6768
    %vm6771 = vcmp.eq.s32.totalorder %v6753, %v6768
    %vm6772 = vcmp.eq.s32.totalorder %v6754, %v6768
    %vm6773 = vcmp.eq.s32.totalorder %v6755, %v6768
    %vm6774 = vcmp.eq.s32.totalorder %v6756, %v6768
    %vm6775 = vcmp.eq.s32.totalorder %v6757, %v6768
    %vm6776 = vcmp.eq.s32.totalorder %v6758, %v6768
    %vm6777 = vcmp.eq.s32.totalorder %v6759, %v6768
    %vm6778 = vcmp.eq.s32.totalorder %v6760, %v6768
    %vm6779 = vcmp.eq.s32.totalorder %v6761, %v6768
    %vm6780 = vcmp.eq.s32.totalorder %v6762, %v6768
    %vm6781 = vcmp.eq.s32.totalorder %v6763, %v6768
    %vm6782 = vcmp.eq.s32.totalorder %v6764, %v6768
    %vm6783 = vcmp.eq.s32.totalorder %v6765, %v6768
    %vm6784 = vcmp.eq.s32.totalorder %v6766, %v6768
    %vm6785 = vcmp.ge.s32.totalorder %v6751, 4
    %vm6786 = vcmp.ge.s32.totalorder %v6752, 4
    %vm6787 = vcmp.ge.s32.totalorder %v6753, 4
    %vm6788 = vcmp.ge.s32.totalorder %v6754, 4
    %vm6789 = vcmp.ge.s32.totalorder %v6755, 4
    %vm6790 = vcmp.ge.s32.totalorder %v6756, 4
    %vm6791 = vcmp.ge.s32.totalorder %v6757, 4
    %vm6792 = vcmp.ge.s32.totalorder %v6758, 4
    %vm6793 = vcmp.ge.s32.totalorder %v6759, 4
    %vm6794 = vcmp.ge.s32.totalorder %v6760, 4
    %vm6795 = vcmp.ge.s32.totalorder %v6761, 4
    %vm6796 = vcmp.ge.s32.totalorder %v6762, 4
    %vm6797 = vcmp.ge.s32.totalorder %v6763, 4
    %vm6798 = vcmp.ge.s32.totalorder %v6764, 4
    %vm6799 = vcmp.ge.s32.totalorder %v6765, 4
    %vm6800 = vcmp.ge.s32.totalorder %v6766, 4
    %vm6801 = vmor %vm6769, %vm6785
    %vm6802 = vmor %vm6770, %vm6786
    %vm6803 = vmor %vm6771, %vm6787
    %vm6804 = vmor %vm6772, %vm6788
    %vm6805 = vmor %vm6773, %vm6789
    %vm6806 = vmor %vm6774, %vm6790
    %vm6807 = vmor %vm6775, %vm6791
    %vm6808 = vmor %vm6776, %vm6792
    %vm6809 = vmor %vm6777, %vm6793
    %vm6810 = vmor %vm6778, %vm6794
    %vm6811 = vmor %vm6779, %vm6795
    %vm6812 = vmor %vm6780, %vm6796
    %vm6813 = vmor %vm6781, %vm6797
    %vm6814 = vmor %vm6782, %vm6798
    %vm6815 = vmor %vm6783, %vm6799
    %vm6816 = vmor %vm6784, %vm6800
    %vm6817 = vcmp.ge.s32.totalorder %v6768, 4
    %vm6818 = vmor %vm6801, %vm6817
    %vm6819 = vmor %vm6802, %vm6817
    %vm6820 = vmor %vm6803, %vm6817
    %vm6821 = vmor %vm6804, %vm6817
    %vm6822 = vmor %vm6805, %vm6817
    %vm6823 = vmor %vm6806, %vm6817
    %vm6824 = vmor %vm6807, %vm6817
    %vm6825 = vmor %vm6808, %vm6817
    %vm6826 = vmor %vm6809, %vm6817
    %vm6827 = vmor %vm6810, %vm6817
    %vm6828 = vmor %vm6811, %vm6817
    %vm6829 = vmor %vm6812, %vm6817
    %vm6830 = vmor %vm6813, %vm6817
    %vm6831 = vmor %vm6814, %vm6817
    %vm6832 = vmor %vm6815, %vm6817
    %vm6833 = vmor %vm6816, %vm6817
    %v6834 = vsel %vm6818, -1e+30, %v6734
    %v6835 = vsel %vm6819, -1e+30, %v6735
    %v6836 = vsel %vm6820, -1e+30, %v6736
    %v6837 = vsel %vm6821, -1e+30, %v6737
    %v6838 = vsel %vm6822, -1e+30, %v6738
    %v6839 = vsel %vm6823, -1e+30, %v6739
    %v6840 = vsel %vm6824, -1e+30, %v6740
    %v6841 = vsel %vm6825, -1e+30, %v6741
    %v6842 = vsel %vm6826, -1e+30, %v6742
    %v6843 = vsel %vm6827, -1e+30, %v6743
    %v6844 = vsel %vm6828, -1e+30, %v6744
    %v6845 = vsel %vm6829, -1e+30, %v6745
    %v6846 = vsel %vm6830, -1e+30, %v6746
    %v6847 = vsel %vm6831, -1e+30, %v6747
    %v6848 = vsel %vm6832, -1e+30, %v6748
    %v6849 = vsel %vm6833, -1e+30, %v6749
    %6850 = vmax.xlane.f32.xlu0 %v6834
    %v6851 = vpop.xlane.xlu0 %6850
    %6852 = vmax.xlane.f32.xlu0 %v6835
    %v6853 = vpop.xlane.xlu0 %6852
    %6854 = vmax.xlane.f32.xlu0 %v6836
    %v6855 = vpop.xlane.xlu0 %6854
    %6856 = vmax.xlane.f32.xlu0 %v6837
    %v6857 = vpop.xlane.xlu0 %6856
    %6858 = vmax.xlane.f32.xlu0 %v6838
    %v6859 = vpop.xlane.xlu0 %6858
    %6860 = vmax.xlane.f32.xlu0 %v6839
    %v6861 = vpop.xlane.xlu0 %6860
    %6862 = vmax.xlane.f32.xlu0 %v6840
    %v6863 = vpop.xlane.xlu0 %6862
    %6864 = vmax.xlane.f32.xlu0 %v6841
    %v6865 = vpop.xlane.xlu0 %6864
    %6866 = vmax.xlane.f32.xlu0 %v6842
    %v6867 = vpop.xlane.xlu0 %6866
    %6868 = vmax.xlane.f32.xlu0 %v6843
    %v6869 = vpop.xlane.xlu0 %6868
    %6870 = vmax.xlane.f32.xlu0 %v6844
    %v6871 = vpop.xlane.xlu0 %6870
    %6872 = vmax.xlane.f32.xlu0 %v6845
    %v6873 = vpop.xlane.xlu0 %6872
    %6874 = vmax.xlane.f32.xlu0 %v6846
    %v6875 = vpop.xlane.xlu0 %6874
    %6876 = vmax.xlane.f32.xlu0 %v6847
    %v6877 = vpop.xlane.xlu0 %6876
    %6878 = vmax.xlane.f32.xlu0 %v6848
    %v6879 = vpop.xlane.xlu0 %6878
    %6880 = vmax.xlane.f32.xlu0 %v6849
    %v6881 = vpop.xlane.xlu0 %6880
    %v6882 = vsub.f32 %v6834, %v6851
    %v6883 = vsub.f32 %v6835, %v6853
    %v6884 = vsub.f32 %v6836, %v6855
    %v6885 = vsub.f32 %v6837, %v6857
    %v6886 = vsub.f32 %v6838, %v6859
    %v6887 = vsub.f32 %v6839, %v6861
    %v6888 = vsub.f32 %v6840, %v6863
    %v6889 = vsub.f32 %v6841, %v6865
    %v6890 = vsub.f32 %v6842, %v6867
    %v6891 = vsub.f32 %v6843, %v6869
    %v6892 = vsub.f32 %v6844, %v6871
    %v6893 = vsub.f32 %v6845, %v6873
    %v6894 = vsub.f32 %v6846, %v6875
    %v6895 = vsub.f32 %v6847, %v6877
    %v6896 = vsub.f32 %v6848, %v6879
    %v6897 = vsub.f32 %v6849, %v6881
    %v6898 = vmul.f32 %v6882, 1.442695
    %v6899 = vpow.pop %v6898
    %v6900 = vmul.f32 %v6883, 1.442695
    %v6901 = vpow.pop %v6900
    %v6902 = vmul.f32 %v6884, 1.442695
    %v6903 = vpow.pop %v6902
    %v6904 = vmul.f32 %v6885, 1.442695
    %v6905 = vpow.pop %v6904
    %v6906 = vmul.f32 %v6886, 1.442695
    %v6907 = vpow.pop %v6906
    %v6908 = vmul.f32 %v6887, 1.442695
    %v6909 = vpow.pop %v6908
    %v6910 = vmul.f32 %v6888, 1.442695
    %v6911 = vpow.pop %v6910
    %v6912 = vmul.f32 %v6889, 1.442695
    %v6913 = vpow.pop %v6912
    %v6914 = vmul.f32 %v6890, 1.442695
    %v6915 = vpow.pop %v6914
    %v6916 = vmul.f32 %v6891, 1.442695
    %v6917 = vpow.pop %v6916
    %v6918 = vmul.f32 %v6892, 1.442695
    %v6919 = vpow.pop %v6918
    %v6920 = vmul.f32 %v6893, 1.442695
    %v6921 = vpow.pop %v6920
    %v6922 = vmul.f32 %v6894, 1.442695
    %v6923 = vpow.pop %v6922
    %v6924 = vmul.f32 %v6895, 1.442695
    %v6925 = vpow.pop %v6924
    %v6926 = vmul.f32 %v6896, 1.442695
    %v6927 = vpow.pop %v6926
    %v6928 = vmul.f32 %v6897, 1.442695
    %v6929 = vpow.pop %v6928
    %6930 = vadd.xlane.f32.xlu0 %v6899
    %v6931 = vpop.xlane.xlu0 %6930
    %6932 = vadd.xlane.f32.xlu0 %v6901
    %v6933 = vpop.xlane.xlu0 %6932
    %6934 = vadd.xlane.f32.xlu0 %v6903
    %v6935 = vpop.xlane.xlu0 %6934
    %6936 = vadd.xlane.f32.xlu0 %v6905
    %v6937 = vpop.xlane.xlu0 %6936
    %6938 = vadd.xlane.f32.xlu0 %v6907
    %v6939 = vpop.xlane.xlu0 %6938
    %6940 = vadd.xlane.f32.xlu0 %v6909
    %v6941 = vpop.xlane.xlu0 %6940
    %6942 = vadd.xlane.f32.xlu0 %v6911
    %v6943 = vpop.xlane.xlu0 %6942
    %6944 = vadd.xlane.f32.xlu0 %v6913
    %v6945 = vpop.xlane.xlu0 %6944
    %6946 = vadd.xlane.f32.xlu0 %v6915
    %v6947 = vpop.xlane.xlu0 %6946
    %6948 = vadd.xlane.f32.xlu0 %v6917
    %v6949 = vpop.xlane.xlu0 %6948
    %6950 = vadd.xlane.f32.xlu0 %v6919
    %v6951 = vpop.xlane.xlu0 %6950
    %6952 = vadd.xlane.f32.xlu0 %v6921
    %v6953 = vpop.xlane.xlu0 %6952
    %6954 = vadd.xlane.f32.xlu0 %v6923
    %v6955 = vpop.xlane.xlu0 %6954
    %6956 = vadd.xlane.f32.xlu0 %v6925
    %v6957 = vpop.xlane.xlu0 %6956
    %6958 = vadd.xlane.f32.xlu0 %v6927
    %v6959 = vpop.xlane.xlu0 %6958
    %6960 = vadd.xlane.f32.xlu0 %v6929
    %v6961 = vpop.xlane.xlu0 %6960
    %v6962 = vlog2.pop %v6931
    %v6963 = vmul.f32 %v6962, 0.6931472
    %v6964 = vlog2.pop %v6933
    %v6965 = vmul.f32 %v6964, 0.6931472
    %v6966 = vlog2.pop %v6935
    %v6967 = vmul.f32 %v6966, 0.6931472
    %v6968 = vlog2.pop %v6937
    %v6969 = vmul.f32 %v6968, 0.6931472
    %v6970 = vlog2.pop %v6939
    %v6971 = vmul.f32 %v6970, 0.6931472
    %v6972 = vlog2.pop %v6941
    %v6973 = vmul.f32 %v6972, 0.6931472
    %v6974 = vlog2.pop %v6943
    %v6975 = vmul.f32 %v6974, 0.6931472
    %v6976 = vlog2.pop %v6945
    %v6977 = vmul.f32 %v6976, 0.6931472
    %v6978 = vlog2.pop %v6947
    %v6979 = vmul.f32 %v6978, 0.6931472
    %v6980 = vlog2.pop %v6949
    %v6981 = vmul.f32 %v6980, 0.6931472
    %v6982 = vlog2.pop %v6951
    %v6983 = vmul.f32 %v6982, 0.6931472
    %v6984 = vlog2.pop %v6953
    %v6985 = vmul.f32 %v6984, 0.6931472
    %v6986 = vlog2.pop %v6955
    %v6987 = vmul.f32 %v6986, 0.6931472
    %v6988 = vlog2.pop %v6957
    %v6989 = vmul.f32 %v6988, 0.6931472
    %v6990 = vlog2.pop %v6959
    %v6991 = vmul.f32 %v6990, 0.6931472
    %v6992 = vlog2.pop %v6961
    %v6993 = vmul.f32 %v6992, 0.6931472
    %v6994 = vadd.f32 %v6851, %v6963
    %v6995 = vadd.f32 %v6853, %v6965
    %v6996 = vadd.f32 %v6855, %v6967
    %v6997 = vadd.f32 %v6857, %v6969
    %v6998 = vadd.f32 %v6859, %v6971
    %v6999 = vadd.f32 %v6861, %v6973
    %v7000 = vadd.f32 %v6863, %v6975
    %v7001 = vadd.f32 %v6865, %v6977
    %v7002 = vadd.f32 %v6867, %v6979
    %v7003 = vadd.f32 %v6869, %v6981
    %v7004 = vadd.f32 %v6871, %v6983
    %v7005 = vadd.f32 %v6873, %v6985
    %v7006 = vadd.f32 %v6875, %v6987
    %v7007 = vadd.f32 %v6877, %v6989
    %v7008 = vadd.f32 %v6879, %v6991
    %v7009 = vadd.f32 %v6881, %v6993
    %vm7010 = vcmp.lt.s32.totalorder %v6751, 2
    %vm7011 = vcmp.lt.s32.totalorder %v6752, 2
    %vm7012 = vcmp.lt.s32.totalorder %v6753, 2
    %vm7013 = vcmp.lt.s32.totalorder %v6754, 2
    %vm7014 = vcmp.lt.s32.totalorder %v6755, 2
    %vm7015 = vcmp.lt.s32.totalorder %v6756, 2
    %vm7016 = vcmp.lt.s32.totalorder %v6757, 2
    %vm7017 = vcmp.lt.s32.totalorder %v6758, 2
    %vm7018 = vcmp.lt.s32.totalorder %v6759, 2
    %vm7019 = vcmp.lt.s32.totalorder %v6760, 2
    %vm7020 = vcmp.lt.s32.totalorder %v6761, 2
    %vm7021 = vcmp.lt.s32.totalorder %v6762, 2
    %vm7022 = vcmp.lt.s32.totalorder %v6763, 2
    %vm7023 = vcmp.lt.s32.totalorder %v6764, 2
    %vm7024 = vcmp.lt.s32.totalorder %v6765, 2
    %vm7025 = vcmp.lt.s32.totalorder %v6766, 2
    %v7026 = vadd.s32 %v6751, 2
    %v7027 = vadd.s32 %v6752, 2
    %v7028 = vadd.s32 %v6753, 2
    %v7029 = vadd.s32 %v6754, 2
    %v7030 = vadd.s32 %v6755, 2
    %v7031 = vadd.s32 %v6756, 2
    %v7032 = vadd.s32 %v6757, 2
    %v7033 = vadd.s32 %v6758, 2
    %v7034 = vadd.s32 %v6759, 2
    %v7035 = vadd.s32 %v6760, 2
    %v7036 = vadd.s32 %v6761, 2
    %v7037 = vadd.s32 %v6762, 2
    %v7038 = vadd.s32 %v6763, 2
    %v7039 = vadd.s32 %v6764, 2
    %v7040 = vadd.s32 %v6765, 2
    %v7041 = vadd.s32 %v6766, 2
    %v7042 = vsub.s32 %v6751, 2
    %v7043 = vsub.s32 %v6752, 2
    %v7044 = vsub.s32 %v6753, 2
    %v7045 = vsub.s32 %v6754, 2
    %v7046 = vsub.s32 %v6755, 2
    %v7047 = vsub.s32 %v6756, 2
    %v7048 = vsub.s32 %v6757, 2
    %v7049 = vsub.s32 %v6758, 2
    %v7050 = vsub.s32 %v6759, 2
    %v7051 = vsub.s32 %v6760, 2
    %v7052 = vsub.s32 %v6761, 2
    %v7053 = vsub.s32 %v6762, 2
    %v7054 = vsub.s32 %v6763, 2
    %v7055 = vsub.s32 %v6764, 2
    %v7056 = vsub.s32 %v6765, 2
    %v7057 = vsub.s32 %v6766, 2
    %v7058 = vsel %vm7010, %v7026, %v7042
    %v7059 = vsel %vm7011, %v7027, %v7043
    %v7060 = vsel %vm7012, %v7028, %v7044
    %v7061 = vsel %vm7013, %v7029, %v7045
    %v7062 = vsel %vm7014, %v7030, %v7046
    %v7063 = vsel %vm7015, %v7031, %v7047
    %v7064 = vsel %vm7016, %v7032, %v7048
    %v7065 = vsel %vm7017, %v7033, %v7049
    %v7066 = vsel %vm7018, %v7034, %v7050
    %v7067 = vsel %vm7019, %v7035, %v7051
    %v7068 = vsel %vm7020, %v7036, %v7052
    %v7069 = vsel %vm7021, %v7037, %v7053
    %v7070 = vsel %vm7022, %v7038, %v7054
    %v7071 = vsel %vm7023, %v7039, %v7055
    %v7072 = vsel %vm7024, %v7040, %v7056
    %v7073 = vsel %vm7025, %v7041, %v7057
    %vm7074 = vcmp.eq.s32.totalorder %v6768, %v7058
    %vm7075 = vcmp.eq.s32.totalorder %v6768, %v7059
    %vm7076 = vcmp.eq.s32.totalorder %v6768, %v7060
    %vm7077 = vcmp.eq.s32.totalorder %v6768, %v7061
    %vm7078 = vcmp.eq.s32.totalorder %v6768, %v7062
    %vm7079 = vcmp.eq.s32.totalorder %v6768, %v7063
    %vm7080 = vcmp.eq.s32.totalorder %v6768, %v7064
    %vm7081 = vcmp.eq.s32.totalorder %v6768, %v7065
    %vm7082 = vcmp.eq.s32.totalorder %v6768, %v7066
    %vm7083 = vcmp.eq.s32.totalorder %v6768, %v7067
    %vm7084 = vcmp.eq.s32.totalorder %v6768, %v7068
    %vm7085 = vcmp.eq.s32.totalorder %v6768, %v7069
    %vm7086 = vcmp.eq.s32.totalorder %v6768, %v7070
    %vm7087 = vcmp.eq.s32.totalorder %v6768, %v7071
    %vm7088 = vcmp.eq.s32.totalorder %v6768, %v7072
    %vm7089 = vcmp.eq.s32.totalorder %v6768, %v7073
    %v7090 = vsel %vm7074, %v6834, 0.0
    %v7091 = vsel %vm7075, %v6835, 0.0
    %v7092 = vsel %vm7076, %v6836, 0.0
    %v7093 = vsel %vm7077, %v6837, 0.0
    %v7094 = vsel %vm7078, %v6838, 0.0
    %v7095 = vsel %vm7079, %v6839, 0.0
    %v7096 = vsel %vm7080, %v6840, 0.0
    %v7097 = vsel %vm7081, %v6841, 0.0
    %v7098 = vsel %vm7082, %v6842, 0.0
    %v7099 = vsel %vm7083, %v6843, 0.0
    %v7100 = vsel %vm7084, %v6844, 0.0
    %v7101 = vsel %vm7085, %v6845, 0.0
    %v7102 = vsel %vm7086, %v6846, 0.0
    %v7103 = vsel %vm7087, %v6847, 0.0
    %v7104 = vsel %vm7088, %v6848, 0.0
    %v7105 = vsel %vm7089, %v6849, 0.0
    %7106 = vadd.xlane.f32.xlu0 %v7090
    %v7107 = vpop.xlane.xlu0 %7106
    %7108 = vadd.xlane.f32.xlu0 %v7091
    %v7109 = vpop.xlane.xlu0 %7108
    %7110 = vadd.xlane.f32.xlu0 %v7092
    %v7111 = vpop.xlane.xlu0 %7110
    %7112 = vadd.xlane.f32.xlu0 %v7093
    %v7113 = vpop.xlane.xlu0 %7112
    %7114 = vadd.xlane.f32.xlu0 %v7094
    %v7115 = vpop.xlane.xlu0 %7114
    %7116 = vadd.xlane.f32.xlu0 %v7095
    %v7117 = vpop.xlane.xlu0 %7116
    %7118 = vadd.xlane.f32.xlu0 %v7096
    %v7119 = vpop.xlane.xlu0 %7118
    %7120 = vadd.xlane.f32.xlu0 %v7097
    %v7121 = vpop.xlane.xlu0 %7120
    %7122 = vadd.xlane.f32.xlu0 %v7098
    %v7123 = vpop.xlane.xlu0 %7122
    %7124 = vadd.xlane.f32.xlu0 %v7099
    %v7125 = vpop.xlane.xlu0 %7124
    %7126 = vadd.xlane.f32.xlu0 %v7100
    %v7127 = vpop.xlane.xlu0 %7126
    %7128 = vadd.xlane.f32.xlu0 %v7101
    %v7129 = vpop.xlane.xlu0 %7128
    %7130 = vadd.xlane.f32.xlu0 %v7102
    %v7131 = vpop.xlane.xlu0 %7130
    %7132 = vadd.xlane.f32.xlu0 %v7103
    %v7133 = vpop.xlane.xlu0 %7132
    %7134 = vadd.xlane.f32.xlu0 %v7104
    %v7135 = vpop.xlane.xlu0 %7134
    %7136 = vadd.xlane.f32.xlu0 %v7105
    %v7137 = vpop.xlane.xlu0 %7136
    %vm7138 = vcmp.lt.s32.totalorder %v6751, 4
    %vm7139 = vcmp.lt.s32.totalorder %v6752, 4
    %vm7140 = vcmp.lt.s32.totalorder %v6753, 4
    %vm7141 = vcmp.lt.s32.totalorder %v6754, 4
    %vm7142 = vcmp.lt.s32.totalorder %v6755, 4
    %vm7143 = vcmp.lt.s32.totalorder %v6756, 4
    %vm7144 = vcmp.lt.s32.totalorder %v6757, 4
    %vm7145 = vcmp.lt.s32.totalorder %v6758, 4
    %vm7146 = vcmp.lt.s32.totalorder %v6759, 4
    %vm7147 = vcmp.lt.s32.totalorder %v6760, 4
    %vm7148 = vcmp.lt.s32.totalorder %v6761, 4
    %vm7149 = vcmp.lt.s32.totalorder %v6762, 4
    %vm7150 = vcmp.lt.s32.totalorder %v6763, 4
    %vm7151 = vcmp.lt.s32.totalorder %v6764, 4
    %vm7152 = vcmp.lt.s32.totalorder %v6765, 4
    %vm7153 = vcmp.lt.s32.totalorder %v6766, 4
    %v7154 = vsub.f32 %v6994, %v7107
    %v7155 = vsub.f32 %v6995, %v7109
    %v7156 = vsub.f32 %v6996, %v7111
    %v7157 = vsub.f32 %v6997, %v7113
    %v7158 = vsub.f32 %v6998, %v7115
    %v7159 = vsub.f32 %v6999, %v7117
    %v7160 = vsub.f32 %v7000, %v7119
    %v7161 = vsub.f32 %v7001, %v7121
    %v7162 = vsub.f32 %v7002, %v7123
    %v7163 = vsub.f32 %v7003, %v7125
    %v7164 = vsub.f32 %v7004, %v7127
    %v7165 = vsub.f32 %v7005, %v7129
    %v7166 = vsub.f32 %v7006, %v7131
    %v7167 = vsub.f32 %v7007, %v7133
    %v7168 = vsub.f32 %v7008, %v7135
    %v7169 = vsub.f32 %v7009, %v7137
    %v7170 = vsel %vm7138, %v7154, 0.0
    %v7171 = vsel %vm7139, %v7155, 0.0
    %v7172 = vsel %vm7140, %v7156, 0.0
    %v7173 = vsel %vm7141, %v7157, 0.0
    %v7174 = vsel %vm7142, %v7158, 0.0
    %v7175 = vsel %vm7143, %v7159, 0.0
    %v7176 = vsel %vm7144, %v7160, 0.0
    %v7177 = vsel %vm7145, %v7161, 0.0
    %v7178 = vsel %vm7146, %v7162, 0.0
    %v7179 = vsel %vm7147, %v7163, 0.0
    %v7180 = vsel %vm7148, %v7164, 0.0
    %v7181 = vsel %vm7149, %v7165, 0.0
    %v7182 = vsel %vm7150, %v7166, 0.0
    %v7183 = vsel %vm7151, %v7167, 0.0
    %v7184 = vsel %vm7152, %v7168, 0.0
    %v7185 = vsel %vm7153, %v7169, 0.0
    %vm7186 = vcmask 7168
    %v7187 = vsel %vm7186, %v7170, 0.0
    %v7188 = vsel %vm7186, %v7171, 0.0
    %v7189 = vadd.f32 %v7187, %v7188
    %v7190 = vsel %vm7186, %v7172, 0.0
    %v7191 = vadd.f32 %v7189, %v7190
    %v7192 = vsel %vm7186, %v7173, 0.0
    %v7193 = vadd.f32 %v7191, %v7192
    %v7194 = vsel %vm7186, %v7174, 0.0
    %v7195 = vadd.f32 %v7193, %v7194
    %v7196 = vsel %vm7186, %v7175, 0.0
    %v7197 = vadd.f32 %v7195, %v7196
    %v7198 = vsel %vm7186, %v7176, 0.0
    %v7199 = vadd.f32 %v7197, %v7198
    %v7200 = vsel %vm7186, %v7177, 0.0
    %v7201 = vadd.f32 %v7199, %v7200
    %v7202 = vsel %vm7186, %v7178, 0.0
    %v7203 = vadd.f32 %v7201, %v7202
    %v7204 = vsel %vm7186, %v7179, 0.0
    %v7205 = vadd.f32 %v7203, %v7204
    %v7206 = vsel %vm7186, %v7180, 0.0
    %v7207 = vadd.f32 %v7205, %v7206
    %v7208 = vsel %vm7186, %v7181, 0.0
    %v7209 = vadd.f32 %v7207, %v7208
    %v7210 = vsel %vm7186, %v7182, 0.0
    %v7211 = vadd.f32 %v7209, %v7210
    %v7212 = vsel %vm7186, %v7183, 0.0
    %v7213 = vadd.f32 %v7211, %v7212
    %v7214 = vsel %vm7186, %v7184, 0.0
    %v7215 = vadd.f32 %v7213, %v7214
    %v7216 = vsel %vm7186, %v7185, 0.0
    %v7217 = vadd.f32 %v7215, %v7216
    %7218 = vadd.xlane.f32.xlu0 %v7217
    %v7219 = vpop.xlane.xlu0 %7218
    %v7220 = vrot.slane %v7219, 4
    %v7221 = vadd.f32 %v7219, %v7220
    %v7222 = vrot.slane %v7221, 2
    %v7223 = vadd.f32 %v7221, %v7222
    %v7224 = vrot.slane %v7223, 1
    %v7225 = vadd.f32 %v7223, %v7224
    %s7226 = vtos %v7225
    %v7227 = vstv %s7226
    %v7228 = vrcp.pop 4.0
    %v7229 = vmul.f32 %v7227, %v7228
    %vm7230 = vcmask 0
    %7231 = vst.msk [vmem:[#allocation10] sm:$0x1] %vm7230, %v7229
    // Predicated region
    $region38: #{forward.5} parent=1 // pred_check
      _
    $region39: #{forward.5} parent=1 // pred_check_branch
      %7233 = sbr.rel (0) target = $region41
    $region40: #{forward.5} parent=1 // pred_region
      %s7235 = ssub.s32 16, 16
      %7236 = vsyncadd [#allocation4], %s7235
      %s7238 = sshll.u32 [#allocation10], 4
      %s7239 = int_to_ptr.vmem [resolvable:$true] %s7238
      %7241 = dma.vmem_to_hbm [thread:$0]  %s7239, 16, %s5, [#allocation4]
    $region41: #{forward.5} parent=1 // pred_fallthru
      _
    // Predicated region
    $region42: #{forward.5} parent=1 // pred_check
      _
    $region43: #{forward.5} parent=1 // pred_check_branch
      %7243 = sbr.rel (0) target = $region45
    $region44: #{forward.5} parent=1 // pred_region
      %7244 = dma.done [#allocation4], 16
    $region45: #{forward.5} parent=1 // pred_fallthru
      _
    %7245 = vsyncpa [#allocation3], 1
    %7246 = vsyncpa [#allocation6], 1
    %7247 = vsyncpa [#allocation9], 1
    %7248 = vsyncpa [#allocation4], 1

</llo_original>
